<compile_context>
chip_gen: v5e
topology: v5e:2x2
jax: 0.10.0
libtpu: 0.0.40
codegen_flags: <defaults>
</compile_context>

<pallas_src>
import functools

import numpy as np

import jax
import jax.numpy as jnp
from jax.experimental import pallas as pl
from jax.experimental.pallas import tpu as pltpu

HID = 64  # conv1 output channels / feature-map channels (fixed by the module)


# ----------------------------------------------------------------------------
# The single fused kernel
# ----------------------------------------------------------------------------
def _began_disc_kernel(x_ref, a_ref, b1_ref, fc1w_ref, g1_ref, be1_ref,
                       fc2w_ref, g2_ref, be2_ref, d_ref, b2_ref,
                       o_ref, h2_ref, *, batch, down, channels, img_size,
                       eps1, eps2):
    f32 = jnp.float32
    bf16 = jnp.bfloat16

    # ---- down: Conv2d(C, 64, 3, stride=2, pad=1) + ReLU ---------------------
    # x_ref[ky] holds, for every (output row oy, batch b), the padded input row
    # 2*oy + ky flattened as (W_pad * C); the banded matrix a_ref[ky] applies
    # all kx taps + channel mixing at once.  Rows of h1 are ordered (oy, b),
    # columns (ox, o).
    h1 = jnp.dot(x_ref[0], a_ref[0], preferred_element_type=f32)
    h1 = h1 + jnp.dot(x_ref[1], a_ref[1], preferred_element_type=f32)
    h1 = h1 + jnp.dot(x_ref[2], a_ref[2], preferred_element_type=f32)
    h1 = jnp.maximum(h1 + b1_ref[...], 0.0).astype(bf16)     # (down*B, down*HID)

    # ---- fc1: Linear(down_dim -> 32); bias dropped (BN1 cancels it) ---------
    z = jnp.zeros((batch, 32), f32)
    for oy in range(down):
        z = z + jnp.dot(h1[oy * batch:(oy + 1) * batch, :], fc1w_ref[oy],
                        preferred_element_type=f32)
    # BN1 (training-mode batch stats, biased variance) + ReLU
    m1 = jnp.mean(z, axis=0, keepdims=True)
    v1 = jnp.mean(jnp.square(z - m1), axis=0, keepdims=True)
    y1 = (z - m1) * jax.lax.rsqrt(v1 + eps1) * g1_ref[...] + be1_ref[...]
    y1 = jnp.maximum(y1, 0.0).astype(bf16)                    # (B, 32)

    # ---- fc2: Linear(32 -> down_dim) + BN2 + ReLU, one down-row at a time ---
    # h2 scratch layout: per batch image, rows [pad, ry=0..down-1, pad] so the
    # conv2 stage below can read ry-1 / ry / ry+1 as contiguous slices.
    h2_ref[...] = jnp.zeros_like(h2_ref)
    stride = down + 2
    for ry in range(down):
        blk = jnp.dot(y1, fc2w_ref[ry], preferred_element_type=f32)  # (B, down*HID)
        m2 = jnp.mean(blk, axis=0, keepdims=True)
        v2 = jnp.mean(jnp.square(blk - m2), axis=0, keepdims=True)
        blk = (blk - m2) * jax.lax.rsqrt(v2 + eps2) * g2_ref[ry] + be2_ref[ry]
        blk = jnp.maximum(blk, 0.0).astype(bf16)
        for b in range(batch):
            row = b * stride + 1 + ry
            h2_ref[row:row + 1, :] = blk[b:b + 1, :]

    # ---- up: Upsample(x2 nearest) + Conv2d(64, C, 3, 1, 1), folded ----------
    # Phase decomposition of the upsampled conv: output rows y = 2*ry + py only
    # touch h rows ry-1, ry, ry+1.  d_ref[dy+1] carries the kx / channel mixing
    # for source row ry+dy; its columns are ordered (co, py, x).
    d_m1 = d_ref[0]
    d_0 = d_ref[1]
    d_p1 = d_ref[2]
    bias2 = b2_ref[...]
    two_w = 2 * img_size
    for b in range(batch):
        base = b * stride
        rows_m1 = h2_ref[base:base + down, :]
        rows_0 = h2_ref[base + 1:base + 1 + down, :]
        rows_p1 = h2_ref[base + 2:base + 2 + down, :]
        zz = jnp.dot(rows_m1, d_m1, preferred_element_type=f32)
        zz = zz + jnp.dot(rows_0, d_0, preferred_element_type=f32)
        zz = zz + jnp.dot(rows_p1, d_p1, preferred_element_type=f32)
        zz = zz + bias2                                       # (down, C*2*img_size)
        for co in range(channels):
            o_ref[b, co] = zz[:, co * two_w:(co + 1) * two_w]


# ----------------------------------------------------------------------------
# One-time weight repack (offline): build the banded conv matrices and
# pre-permute fc / BN params to the kernel's layouts.
# ----------------------------------------------------------------------------
def prepare_params(p, img_size, channels):
    down = img_size // 2
    wp = img_size + 2
    f32, bf16 = jnp.float32, jnp.bfloat16

    W1 = np.asarray(p["conv1_w"], np.float32)        # (HID, C, 3, 3)
    b1 = np.asarray(p["conv1_b"], np.float32)        # (HID,)
    fc1w = np.asarray(p["fc1_w"], np.float32)        # (HID*down*down, 32)
    g1 = np.asarray(p["bn1_g"], np.float32)
    be1 = np.asarray(p["bn1_b"], np.float32)
    fc2w = np.asarray(p["fc2_w"], np.float32)        # (32, HID*down*down)
    g2 = np.asarray(p["bn2_g"], np.float32)
    be2 = np.asarray(p["bn2_b"], np.float32)
    W2 = np.asarray(p["conv2_w"], np.float32)        # (C, HID, 3, 3)
    b2 = np.asarray(p["conv2_b"], np.float32)        # (C,)

    # conv1 as banded matmuls: A[ky] maps one padded input row (wp*C,) to all
    # (ox, o) outputs of one conv1 output row.  Entries are single W1 elements.
    A = np.zeros((3, wp * channels, down * HID), np.float32)
    for ky in range(3):
        for kx in range(3):
            for ox in range(down):
                w = 2 * ox + kx
                A[ky, w * channels:(w + 1) * channels,
                  ox * HID:(ox + 1) * HID] = W1[:, :, ky, kx].T
    bias1 = np.tile(b1, down).reshape(1, down * HID)

    # fc1: per-oy weight blocks, row order (ox, o) to match h1's columns.
    fc1w_blk = (fc1w.reshape(HID, down, down, 32)
                .transpose(1, 2, 0, 3).reshape(down, down * HID, 32))

    # fc2: per-ry blocks, output columns in (rx, ci) order; BN2 params likewise.
    fc2w_blk = (fc2w.reshape(32, HID, down, down)
                .transpose(2, 0, 3, 1).reshape(down, 32, down * HID))
    g2_blk = g2.reshape(HID, down, down).transpose(1, 2, 0).reshape(down, 1, down * HID)
    be2_blk = be2.reshape(HID, down, down).transpose(1, 2, 0).reshape(down, 1, down * HID)

    # Upsample(x2 nearest) + conv2 folded into 3 phase matrices D[dy+1]:
    # rows ordered (rx, ci), columns ordered (co, py, x).
    D = np.zeros((3, down * HID, channels * 2 * img_size), np.float32)
    contrib = {(-1, 0): [0], (0, 0): [1, 2], (0, 1): [0, 1], (1, 1): [2]}
    for (dy, py), kys in contrib.items():
        for ky in kys:
            for kx in range(3):
                for x in range(img_size):
                    u = x + kx - 1                    # column in upsampled space
                    if u < 0 or u >= img_size:
                        continue                      # conv2 zero padding
                    rx = u // 2                       # nearest-upsample source col
                    for co in range(channels):
                        col = co * 2 * img_size + py * img_size + x
                        D[dy + 1, rx * HID:(rx + 1) * HID, col] += W2[co, :, ky, kx]
    bias2 = np.repeat(b2, 2 * img_size).reshape(1, channels * 2 * img_size)

    return {
        "a": jnp.asarray(A, bf16),
        "b1": jnp.asarray(bias1, f32),
        "fc1w": jnp.asarray(fc1w_blk, bf16),
        "g1": jnp.asarray(g1.reshape(1, 32), f32),
        "be1": jnp.asarray(be1.reshape(1, 32), f32),
        "fc2w": jnp.asarray(fc2w_blk, bf16),
        "g2": jnp.asarray(g2_blk, f32),
        "be2": jnp.asarray(be2_blk, f32),
        "d": jnp.asarray(D, bf16),
        "b2": jnp.asarray(bias2, f32),
    }


# ----------------------------------------------------------------------------
# Discriminator forward (single fused Pallas call)
# ----------------------------------------------------------------------------
def discriminator_forward(img_nchw, q, *, img_size, channels):
    B = img_nchw.shape[0]
    down = img_size // 2
    wp = img_size + 2

    # conv1 input prep (the only XLA glue left, <6 KB): NCHW -> padded NHWC,
    # then the three stride-2 row sets (oy-major, batch-minor) the kernel needs.
    x = jnp.transpose(img_nchw, (0, 2, 3, 1)).astype(jnp.bfloat16)
    x = jnp.pad(x, ((0, 0), (1, 1), (1, 1), (0, 0)))
    x = x.reshape(B, wp, wp * channels)
    taps = [jnp.transpose(x[:, ky:ky + 2 * down:2, :], (1, 0, 2))
            .reshape(down * B, wp * channels) for ky in range(3)]
    xsel = jnp.stack(taps, axis=0)                    # (3, down*B, wp*C)

    kernel = functools.partial(
        _began_disc_kernel, batch=B, down=down, channels=channels,
        img_size=img_size, eps1=0.8, eps2=1e-5)

    operands = (xsel, q["a"], q["b1"], q["fc1w"], q["g1"], q["be1"],
                q["fc2w"], q["g2"], q["be2"], q["d"], q["b2"])

    def full_spec(arr):
        zeros = (0,) * arr.ndim
        return pl.BlockSpec(arr.shape, lambda i: zeros)

    out5 = pl.pallas_call(
        kernel,
        out_shape=jax.ShapeDtypeStruct((B, channels, down, 2 * img_size),
                                       jnp.float32),
        grid_spec=pltpu.PrefetchScalarGridSpec(
            num_scalar_prefetch=0,
            grid=(1,),
            in_specs=[full_spec(a) for a in operands],
            out_specs=pl.BlockSpec((B, channels, down, 2 * img_size),
                                   lambda i: (0, 0, 0, 0)),
            scratch_shapes=[pltpu.VMEM((B * (down + 2), down * HID),
                                       jnp.bfloat16)],
        ),
        compiler_params=pltpu.CompilerParams(
            dimension_semantics=("arbitrary",),
            vmem_limit_bytes=32 * 1024 * 1024),
    )(*operands)

    # (b, co, ry, (py, x)) -> (b, co, y=2*ry+py, x): pure metadata reshape.
    return out5.reshape(B, channels, img_size, img_size)


# ----------------------------------------------------------------------------
# Pure-JAX reference (module semantics, bf16 operands / f32 accumulation).
# ----------------------------------------------------------------------------
def reference_forward(img, p, img_size, channels):
    bf16, f32 = jnp.bfloat16, jnp.float32
    B = img.shape[0]
    down = img_size // 2

    def bn(y, g, b, eps):
        m = jnp.mean(y, axis=0, keepdims=True)
        v = jnp.mean(jnp.square(y - m), axis=0, keepdims=True)
        return (y - m) * jax.lax.rsqrt(v + eps) * g + b

    x = jax.lax.conv_general_dilated(
        img.astype(bf16), p["conv1_w"].astype(bf16), (2, 2), ((1, 1), (1, 1)),
        dimension_numbers=("NCHW", "OIHW", "NCHW"), preferred_element_type=f32)
    x = jax.nn.relu(x + p["conv1_b"].reshape(1, -1, 1, 1))
    h = x.reshape(B, -1)
    h = jnp.dot(h.astype(bf16), p["fc1_w"].astype(bf16),
                preferred_element_type=f32) + p["fc1_b"]
    h = jax.nn.relu(bn(h, p["bn1_g"], p["bn1_b"], 0.8))
    h = jnp.dot(h.astype(bf16), p["fc2_w"].astype(bf16),
                preferred_element_type=f32) + p["fc2_b"]
    h = jax.nn.relu(bn(h, p["bn2_g"], p["bn2_b"], 1e-5))
    h = h.reshape(B, HID, down, down)
    h = jnp.repeat(jnp.repeat(h, 2, axis=2), 2, axis=3)
    y = jax.lax.conv_general_dilated(
        h.astype(bf16), p["conv2_w"].astype(bf16), (1, 1), ((1, 1), (1, 1)),
        dimension_numbers=("NCHW", "OIHW", "NCHW"), preferred_element_type=f32)
    return y + p["conv2_b"].reshape(1, -1, 1, 1)


# ----------------------------------------------------------------------------
if __name__ == "__main__":
    img_size, channels, B = 16, 4, 2
    down = img_size // 2
    down_dim = HID * down * down                      # 64 * 8 * 8 = 4096

    keys = jax.random.split(jax.random.PRNGKey(0), 13)
    f32 = jnp.float32
    p = {
        "conv1_w": 0.05 * jax.random.normal(keys[0], (HID, channels, 3, 3), f32),
        "conv1_b": 0.05 * jax.random.normal(keys[1], (HID,), f32),
        "fc1_w":   0.05 * jax.random.normal(keys[2], (down_dim, 32), f32),
        "fc1_b":   0.05 * jax.random.normal(keys[3], (32,), f32),
        "bn1_g":   1.0 + 0.1 * jax.random.normal(keys[4], (32,), f32),
        "bn1_b":   0.05 * jax.random.normal(keys[5], (32,), f32),
        "fc2_w":   0.05 * jax.random.normal(keys[6], (32, down_dim), f32),
        "fc2_b":   0.05 * jax.random.normal(keys[7], (down_dim,), f32),
        "bn2_g":   1.0 + 0.1 * jax.random.normal(keys[8], (down_dim,), f32),
        "bn2_b":   0.05 * jax.random.normal(keys[9], (down_dim,), f32),
        "conv2_w": 0.05 * jax.random.normal(keys[10], (channels, HID, 3, 3), f32),
        "conv2_b": 0.05 * jax.random.normal(keys[11], (channels,), f32),
    }
    img = jax.random.normal(keys[12], (B, channels, img_size, img_size), f32)

    q = prepare_params(p, img_size, channels)          # one-time weight repack

    fwd = jax.jit(functools.partial(discriminator_forward,
                                    img_size=img_size, channels=channels))
    out = jax.block_until_ready(fwd(img, q))
    ref = jax.block_until_ready(reference_forward(img, p, img_size, channels))

    assert out.shape == (B, channels, img_size, img_size), out.shape
    assert out.dtype == jnp.float32

    # Tolerance: both paths use bf16 operands with f32 accumulation, but
    # summation order differs and BatchNorm(eps=1e-5) over a batch of 2
    # amplifies tiny differences by up to 1/(2*sqrt(eps)) ~ 158x; folding the
    # upsample into the conv2 weights adds one extra bf16 rounding on taps
    # that hit the same source pixel.  Real layout/indexing bugs produce
    # errors O(0.1..1), so a 2e-2 bound on O(1) outputs is still meaningful.
    max_err = float(jnp.max(jnp.abs(out - ref)))
    assert max_err < 2e-2, f"max abs err {max_err}"
    print("KERNEL_OK")
</pallas_src>

<mosaic_0001>
module attributes {stable_mosaic.version = 11 : i64} {
  func.func @_began_disc_kernel(%arg0: i32, %arg1: memref<3x16x72xbf16, #tpu.memory_space<vmem>>, %arg2: memref<3x72x512xbf16, #tpu.memory_space<vmem>>, %arg3: memref<1x512xf32, #tpu.memory_space<vmem>>, %arg4: memref<8x512x32xbf16, #tpu.memory_space<vmem>>, %arg5: memref<1x32xf32, #tpu.memory_space<vmem>>, %arg6: memref<1x32xf32, #tpu.memory_space<vmem>>, %arg7: memref<8x32x512xbf16, #tpu.memory_space<vmem>>, %arg8: memref<8x1x512xf32, #tpu.memory_space<vmem>>, %arg9: memref<8x1x512xf32, #tpu.memory_space<vmem>>, %arg10: memref<3x512x128xbf16, #tpu.memory_space<vmem>>, %arg11: memref<1x128xf32, #tpu.memory_space<vmem>>, %arg12: memref<2x4x8x32xf32, #tpu.memory_space<vmem>>, %arg13: memref<20x512xbf16, #tpu.memory_space<vmem>>) attributes {dimension_semantics = [#tpu.dimension_semantics<arbitrary>], iteration_bounds = array<i64: 1>, scalar_prefetch = 0 : i64, scratch_operands = 1 : i64, tpu.core_type = #tpu.core_type<tc>, window_params = [{pipeline_mode = #tpu.pipeline_mode<synchronous>, transform_indices = @transform_0, window_bounds = array<i64: 3, 16, 72>}, {pipeline_mode = #tpu.pipeline_mode<synchronous>, transform_indices = @transform_1, window_bounds = array<i64: 3, 72, 512>}, {pipeline_mode = #tpu.pipeline_mode<synchronous>, transform_indices = @transform_2, window_bounds = array<i64: 1, 512>}, {pipeline_mode = #tpu.pipeline_mode<synchronous>, transform_indices = @transform_3, window_bounds = array<i64: 8, 512, 32>}, {pipeline_mode = #tpu.pipeline_mode<synchronous>, transform_indices = @transform_4, window_bounds = array<i64: 1, 32>}, {pipeline_mode = #tpu.pipeline_mode<synchronous>, transform_indices = @transform_5, window_bounds = array<i64: 1, 32>}, {pipeline_mode = #tpu.pipeline_mode<synchronous>, transform_indices = @transform_6, window_bounds = array<i64: 8, 32, 512>}, {pipeline_mode = #tpu.pipeline_mode<synchronous>, transform_indices = @transform_7, window_bounds = array<i64: 8, 1, 512>}, {pipeline_mode = #tpu.pipeline_mode<synchronous>, transform_indices = @transform_8, window_bounds = array<i64: 8, 1, 512>}, {pipeline_mode = #tpu.pipeline_mode<synchronous>, transform_indices = @transform_9, window_bounds = array<i64: 3, 512, 128>}, {pipeline_mode = #tpu.pipeline_mode<synchronous>, transform_indices = @transform_10, window_bounds = array<i64: 1, 128>}, {pipeline_mode = #tpu.pipeline_mode<synchronous>, transform_indices = @transform_11, window_bounds = array<i64: 2, 4, 8, 32>}]} {
    %c0 = arith.constant 0 : index
    %c0_0 = arith.constant 0 : index
    %c0_1 = arith.constant 0 : index
    %0 = vector.load %arg1[%c0, %c0_0, %c0_1] : memref<3x16x72xbf16, #tpu.memory_space<vmem>>, vector<1x16x72xbf16>
    %1 = vector.shape_cast %0 : vector<1x16x72xbf16> to vector<16x72xbf16>
    %c0_2 = arith.constant 0 : index
    %c0_3 = arith.constant 0 : index
    %c0_4 = arith.constant 0 : index
    %2 = vector.load %arg2[%c0_2, %c0_3, %c0_4] : memref<3x72x512xbf16, #tpu.memory_space<vmem>>, vector<1x72x512xbf16>
    %3 = vector.shape_cast %2 : vector<1x72x512xbf16> to vector<72x512xbf16>
    %cst = arith.constant dense<0.000000e+00> : vector<16x512xf32>
    %4 = tpu.matmul %1, %3, %cst {dimension_numbers = #tpu.dot_dimension_numbers<[1], [0], [0], [1], [0, 0, 1, 1], [], []>} : vector<16x72xbf16>, vector<72x512xbf16>, vector<16x512xf32> -> vector<16x512xf32>
    %c1 = arith.constant 1 : index
    %c0_5 = arith.constant 0 : index
    %c0_6 = arith.constant 0 : index
    %5 = vector.load %arg1[%c1, %c0_5, %c0_6] : memref<3x16x72xbf16, #tpu.memory_space<vmem>>, vector<1x16x72xbf16>
    %6 = vector.shape_cast %5 : vector<1x16x72xbf16> to vector<16x72xbf16>
    %c1_7 = arith.constant 1 : index
    %c0_8 = arith.constant 0 : index
    %c0_9 = arith.constant 0 : index
    %7 = vector.load %arg2[%c1_7, %c0_8, %c0_9] : memref<3x72x512xbf16, #tpu.memory_space<vmem>>, vector<1x72x512xbf16>
    %8 = vector.shape_cast %7 : vector<1x72x512xbf16> to vector<72x512xbf16>
    %cst_10 = arith.constant dense<0.000000e+00> : vector<16x512xf32>
    %9 = tpu.matmul %6, %8, %cst_10 {dimension_numbers = #tpu.dot_dimension_numbers<[1], [0], [0], [1], [0, 0, 1, 1], [], []>} : vector<16x72xbf16>, vector<72x512xbf16>, vector<16x512xf32> -> vector<16x512xf32>
    %10 = arith.addf %4, %9 : vector<16x512xf32>
    %c2 = arith.constant 2 : index
    %c0_11 = arith.constant 0 : index
    %c0_12 = arith.constant 0 : index
    %11 = vector.load %arg1[%c2, %c0_11, %c0_12] : memref<3x16x72xbf16, #tpu.memory_space<vmem>>, vector<1x16x72xbf16>
    %12 = vector.shape_cast %11 : vector<1x16x72xbf16> to vector<16x72xbf16>
    %c2_13 = arith.constant 2 : index
    %c0_14 = arith.constant 0 : index
    %c0_15 = arith.constant 0 : index
    %13 = vector.load %arg2[%c2_13, %c0_14, %c0_15] : memref<3x72x512xbf16, #tpu.memory_space<vmem>>, vector<1x72x512xbf16>
    %14 = vector.shape_cast %13 : vector<1x72x512xbf16> to vector<72x512xbf16>
    %cst_16 = arith.constant dense<0.000000e+00> : vector<16x512xf32>
    %15 = tpu.matmul %12, %14, %cst_16 {dimension_numbers = #tpu.dot_dimension_numbers<[1], [0], [0], [1], [0, 0, 1, 1], [], []>} : vector<16x72xbf16>, vector<72x512xbf16>, vector<16x512xf32> -> vector<16x512xf32>
    %16 = arith.addf %10, %15 : vector<16x512xf32>
    %c0_17 = arith.constant 0 : index
    %c0_18 = arith.constant 0 : index
    %17 = vector.load %arg3[%c0_17, %c0_18] : memref<1x512xf32, #tpu.memory_space<vmem>>, vector<1x512xf32>
    %18 = vector.broadcast %17 : vector<1x512xf32> to vector<16x512xf32>
    %19 = arith.addf %16, %18 : vector<16x512xf32>
    %cst_19 = arith.constant 0.000000e+00 : f32
    %20 = vector.broadcast %cst_19 : f32 to vector<16x512xf32>
    %21 = arith.maximumf %19, %20 : vector<16x512xf32>
    %22 = arith.truncf %21 : vector<16x512xf32> to vector<16x512xbf16>
    %cst_20 = arith.constant 0.000000e+00 : f32
    %23 = vector.broadcast %cst_20 : f32 to vector<2x32xf32>
    %24 = vector.extract_strided_slice %22 {offsets = [0, 0], sizes = [2, 512], strides = [1, 1]} : vector<16x512xbf16> to vector<2x512xbf16>
    %c0_21 = arith.constant 0 : index
    %c0_22 = arith.constant 0 : index
    %c0_23 = arith.constant 0 : index
    %25 = vector.load %arg4[%c0_21, %c0_22, %c0_23] : memref<8x512x32xbf16, #tpu.memory_space<vmem>>, vector<1x512x32xbf16>
    %26 = vector.shape_cast %25 : vector<1x512x32xbf16> to vector<512x32xbf16>
    %cst_24 = arith.constant dense<0.000000e+00> : vector<2x32xf32>
    %27 = tpu.matmul %24, %26, %cst_24 {dimension_numbers = #tpu.dot_dimension_numbers<[1], [0], [0], [1], [0, 0, 1, 1], [], []>} : vector<2x512xbf16>, vector<512x32xbf16>, vector<2x32xf32> -> vector<2x32xf32>
    %28 = arith.addf %23, %27 : vector<2x32xf32>
    %29 = vector.extract_strided_slice %22 {offsets = [2, 0], sizes = [2, 512], strides = [1, 1]} : vector<16x512xbf16> to vector<2x512xbf16>
    %c1_25 = arith.constant 1 : index
    %c0_26 = arith.constant 0 : index
    %c0_27 = arith.constant 0 : index
    %30 = vector.load %arg4[%c1_25, %c0_26, %c0_27] : memref<8x512x32xbf16, #tpu.memory_space<vmem>>, vector<1x512x32xbf16>
    %31 = vector.shape_cast %30 : vector<1x512x32xbf16> to vector<512x32xbf16>
    %cst_28 = arith.constant dense<0.000000e+00> : vector<2x32xf32>
    %32 = tpu.matmul %29, %31, %cst_28 {dimension_numbers = #tpu.dot_dimension_numbers<[1], [0], [0], [1], [0, 0, 1, 1], [], []>} : vector<2x512xbf16>, vector<512x32xbf16>, vector<2x32xf32> -> vector<2x32xf32>
    %33 = arith.addf %28, %32 : vector<2x32xf32>
    %34 = vector.extract_strided_slice %22 {offsets = [4, 0], sizes = [2, 512], strides = [1, 1]} : vector<16x512xbf16> to vector<2x512xbf16>
    %c2_29 = arith.constant 2 : index
    %c0_30 = arith.constant 0 : index
    %c0_31 = arith.constant 0 : index
    %35 = vector.load %arg4[%c2_29, %c0_30, %c0_31] : memref<8x512x32xbf16, #tpu.memory_space<vmem>>, vector<1x512x32xbf16>
    %36 = vector.shape_cast %35 : vector<1x512x32xbf16> to vector<512x32xbf16>
    %cst_32 = arith.constant dense<0.000000e+00> : vector<2x32xf32>
    %37 = tpu.matmul %34, %36, %cst_32 {dimension_numbers = #tpu.dot_dimension_numbers<[1], [0], [0], [1], [0, 0, 1, 1], [], []>} : vector<2x512xbf16>, vector<512x32xbf16>, vector<2x32xf32> -> vector<2x32xf32>
    %38 = arith.addf %33, %37 : vector<2x32xf32>
    %39 = vector.extract_strided_slice %22 {offsets = [6, 0], sizes = [2, 512], strides = [1, 1]} : vector<16x512xbf16> to vector<2x512xbf16>
    %c3 = arith.constant 3 : index
    %c0_33 = arith.constant 0 : index
    %c0_34 = arith.constant 0 : index
    %40 = vector.load %arg4[%c3, %c0_33, %c0_34] : memref<8x512x32xbf16, #tpu.memory_space<vmem>>, vector<1x512x32xbf16>
    %41 = vector.shape_cast %40 : vector<1x512x32xbf16> to vector<512x32xbf16>
    %cst_35 = arith.constant dense<0.000000e+00> : vector<2x32xf32>
    %42 = tpu.matmul %39, %41, %cst_35 {dimension_numbers = #tpu.dot_dimension_numbers<[1], [0], [0], [1], [0, 0, 1, 1], [], []>} : vector<2x512xbf16>, vector<512x32xbf16>, vector<2x32xf32> -> vector<2x32xf32>
    %43 = arith.addf %38, %42 : vector<2x32xf32>
    %44 = vector.extract_strided_slice %22 {offsets = [8, 0], sizes = [2, 512], strides = [1, 1]} : vector<16x512xbf16> to vector<2x512xbf16>
    %c4 = arith.constant 4 : index
    %c0_36 = arith.constant 0 : index
    %c0_37 = arith.constant 0 : index
    %45 = vector.load %arg4[%c4, %c0_36, %c0_37] : memref<8x512x32xbf16, #tpu.memory_space<vmem>>, vector<1x512x32xbf16>
    %46 = vector.shape_cast %45 : vector<1x512x32xbf16> to vector<512x32xbf16>
    %cst_38 = arith.constant dense<0.000000e+00> : vector<2x32xf32>
    %47 = tpu.matmul %44, %46, %cst_38 {dimension_numbers = #tpu.dot_dimension_numbers<[1], [0], [0], [1], [0, 0, 1, 1], [], []>} : vector<2x512xbf16>, vector<512x32xbf16>, vector<2x32xf32> -> vector<2x32xf32>
    %48 = arith.addf %43, %47 : vector<2x32xf32>
    %49 = vector.extract_strided_slice %22 {offsets = [10, 0], sizes = [2, 512], strides = [1, 1]} : vector<16x512xbf16> to vector<2x512xbf16>
    %c5 = arith.constant 5 : index
    %c0_39 = arith.constant 0 : index
    %c0_40 = arith.constant 0 : index
    %50 = vector.load %arg4[%c5, %c0_39, %c0_40] : memref<8x512x32xbf16, #tpu.memory_space<vmem>>, vector<1x512x32xbf16>
    %51 = vector.shape_cast %50 : vector<1x512x32xbf16> to vector<512x32xbf16>
    %cst_41 = arith.constant dense<0.000000e+00> : vector<2x32xf32>
    %52 = tpu.matmul %49, %51, %cst_41 {dimension_numbers = #tpu.dot_dimension_numbers<[1], [0], [0], [1], [0, 0, 1, 1], [], []>} : vector<2x512xbf16>, vector<512x32xbf16>, vector<2x32xf32> -> vector<2x32xf32>
    %53 = arith.addf %48, %52 : vector<2x32xf32>
    %54 = vector.extract_strided_slice %22 {offsets = [12, 0], sizes = [2, 512], strides = [1, 1]} : vector<16x512xbf16> to vector<2x512xbf16>
    %c6 = arith.constant 6 : index
    %c0_42 = arith.constant 0 : index
    %c0_43 = arith.constant 0 : index
    %55 = vector.load %arg4[%c6, %c0_42, %c0_43] : memref<8x512x32xbf16, #tpu.memory_space<vmem>>, vector<1x512x32xbf16>
    %56 = vector.shape_cast %55 : vector<1x512x32xbf16> to vector<512x32xbf16>
    %cst_44 = arith.constant dense<0.000000e+00> : vector<2x32xf32>
    %57 = tpu.matmul %54, %56, %cst_44 {dimension_numbers = #tpu.dot_dimension_numbers<[1], [0], [0], [1], [0, 0, 1, 1], [], []>} : vector<2x512xbf16>, vector<512x32xbf16>, vector<2x32xf32> -> vector<2x32xf32>
    %58 = arith.addf %53, %57 : vector<2x32xf32>
    %59 = vector.extract_strided_slice %22 {offsets = [14, 0], sizes = [2, 512], strides = [1, 1]} : vector<16x512xbf16> to vector<2x512xbf16>
    %c7 = arith.constant 7 : index
    %c0_45 = arith.constant 0 : index
    %c0_46 = arith.constant 0 : index
    %60 = vector.load %arg4[%c7, %c0_45, %c0_46] : memref<8x512x32xbf16, #tpu.memory_space<vmem>>, vector<1x512x32xbf16>
    %61 = vector.shape_cast %60 : vector<1x512x32xbf16> to vector<512x32xbf16>
    %cst_47 = arith.constant dense<0.000000e+00> : vector<2x32xf32>
    %62 = tpu.matmul %59, %61, %cst_47 {dimension_numbers = #tpu.dot_dimension_numbers<[1], [0], [0], [1], [0, 0, 1, 1], [], []>} : vector<2x512xbf16>, vector<512x32xbf16>, vector<2x32xf32> -> vector<2x32xf32>
    %63 = arith.addf %58, %62 : vector<2x32xf32>
    %cst_48 = arith.constant dense<0.000000e+00> : vector<32xf32>
    %64 = vector.multi_reduction <add>, %63, %cst_48 [0] : vector<2x32xf32> to vector<32xf32>
    %65 = vector.shape_cast %64 : vector<32xf32> to vector<1x32xf32>
    %cst_49 = arith.constant 2.000000e+00 : f32
    %66 = vector.broadcast %cst_49 : f32 to vector<1x32xf32>
    %67 = arith.divf %65, %66 : vector<1x32xf32>
    %68 = vector.broadcast %67 : vector<1x32xf32> to vector<2x32xf32>
    %69 = arith.subf %63, %68 : vector<2x32xf32>
    %70 = arith.mulf %69, %69 : vector<2x32xf32>
    %cst_50 = arith.constant dense<0.000000e+00> : vector<32xf32>
    %71 = vector.multi_reduction <add>, %70, %cst_50 [0] : vector<2x32xf32> to vector<32xf32>
    %72 = vector.shape_cast %71 : vector<32xf32> to vector<1x32xf32>
    %cst_51 = arith.constant 2.000000e+00 : f32
    %73 = vector.broadcast %cst_51 : f32 to vector<1x32xf32>
    %74 = arith.divf %72, %73 : vector<1x32xf32>
    %75 = vector.broadcast %67 : vector<1x32xf32> to vector<2x32xf32>
    %76 = arith.subf %63, %75 : vector<2x32xf32>
    %cst_52 = arith.constant 8.000000e-01 : f32
    %77 = vector.broadcast %cst_52 : f32 to vector<1x32xf32>
    %78 = arith.addf %74, %77 : vector<1x32xf32>
    %79 = math.rsqrt %78 : vector<1x32xf32>
    %80 = vector.broadcast %79 : vector<1x32xf32> to vector<2x32xf32>
    %81 = arith.mulf %76, %80 : vector<2x32xf32>
    %c0_53 = arith.constant 0 : index
    %c0_54 = arith.constant 0 : index
    %82 = vector.load %arg5[%c0_53, %c0_54] : memref<1x32xf32, #tpu.memory_space<vmem>>, vector<1x32xf32>
    %83 = vector.broadcast %82 : vector<1x32xf32> to vector<2x32xf32>
    %84 = arith.mulf %81, %83 : vector<2x32xf32>
    %c0_55 = arith.constant 0 : index
    %c0_56 = arith.constant 0 : index
    %85 = vector.load %arg6[%c0_55, %c0_56] : memref<1x32xf32, #tpu.memory_space<vmem>>, vector<1x32xf32>
    %86 = vector.broadcast %85 : vector<1x32xf32> to vector<2x32xf32>
    %87 = arith.addf %84, %86 : vector<2x32xf32>
    %cst_57 = arith.constant 0.000000e+00 : f32
    %88 = vector.broadcast %cst_57 : f32 to vector<2x32xf32>
    %89 = arith.maximumf %87, %88 : vector<2x32xf32>
    %90 = arith.truncf %89 : vector<2x32xf32> to vector<2x32xbf16>
    %cst_58 = arith.constant 0.000000e+00 : bf16
    %91 = vector.broadcast %cst_58 : bf16 to vector<20x512xbf16>
    %c0_59 = arith.constant 0 : index
    %c0_60 = arith.constant 0 : index
    %92 = vector.load %arg13[%c0_59, %c0_60] : memref<20x512xbf16, #tpu.memory_space<vmem>>, vector<20x512xbf16>
    tpu.vector_store %arg13[%c0_59, %c0_60], %91 {strides = array<i32>} : memref<20x512xbf16, #tpu.memory_space<vmem>>, vector<20x512xbf16>,
    %c0_61 = arith.constant 0 : index
    %c0_62 = arith.constant 0 : index
    %c0_63 = arith.constant 0 : index
    %93 = vector.load %arg7[%c0_61, %c0_62, %c0_63] : memref<8x32x512xbf16, #tpu.memory_space<vmem>>, vector<1x32x512xbf16>
    %94 = vector.shape_cast %93 : vector<1x32x512xbf16> to vector<32x512xbf16>
    %cst_64 = arith.constant dense<0.000000e+00> : vector<2x512xf32>
    %95 = tpu.matmul %90, %94, %cst_64 {dimension_numbers = #tpu.dot_dimension_numbers<[1], [0], [0], [1], [0, 0, 1, 1], [], []>} : vector<2x32xbf16>, vector<32x512xbf16>, vector<2x512xf32> -> vector<2x512xf32>
    %cst_65 = arith.constant dense<0.000000e+00> : vector<512xf32>
    %96 = vector.multi_reduction <add>, %95, %cst_65 [0] : vector<2x512xf32> to vector<512xf32>
    %97 = vector.shape_cast %96 : vector<512xf32> to vector<1x512xf32>
    %cst_66 = arith.constant 2.000000e+00 : f32
    %98 = vector.broadcast %cst_66 : f32 to vector<1x512xf32>
    %99 = arith.divf %97, %98 : vector<1x512xf32>
    %100 = vector.broadcast %99 : vector<1x512xf32> to vector<2x512xf32>
    %101 = arith.subf %95, %100 : vector<2x512xf32>
    %102 = arith.mulf %101, %101 : vector<2x512xf32>
    %cst_67 = arith.constant dense<0.000000e+00> : vector<512xf32>
    %103 = vector.multi_reduction <add>, %102, %cst_67 [0] : vector<2x512xf32> to vector<512xf32>
    %104 = vector.shape_cast %103 : vector<512xf32> to vector<1x512xf32>
    %cst_68 = arith.constant 2.000000e+00 : f32
    %105 = vector.broadcast %cst_68 : f32 to vector<1x512xf32>
    %106 = arith.divf %104, %105 : vector<1x512xf32>
    %107 = vector.broadcast %99 : vector<1x512xf32> to vector<2x512xf32>
    %108 = arith.subf %95, %107 : vector<2x512xf32>
    %cst_69 = arith.constant 9.99999974E-6 : f32
    %109 = vector.broadcast %cst_69 : f32 to vector<1x512xf32>
    %110 = arith.addf %106, %109 : vector<1x512xf32>
    %111 = math.rsqrt %110 : vector<1x512xf32>
    %112 = vector.broadcast %111 : vector<1x512xf32> to vector<2x512xf32>
    %113 = arith.mulf %108, %112 : vector<2x512xf32>
    %c0_70 = arith.constant 0 : index
    %c0_71 = arith.constant 0 : index
    %c0_72 = arith.constant 0 : index
    %114 = vector.load %arg8[%c0_70, %c0_71, %c0_72] : memref<8x1x512xf32, #tpu.memory_space<vmem>>, vector<1x1x512xf32>
    %115 = vector.shape_cast %114 : vector<1x1x512xf32> to vector<1x512xf32>
    %116 = vector.broadcast %115 : vector<1x512xf32> to vector<2x512xf32>
    %117 = arith.mulf %113, %116 : vector<2x512xf32>
    %c0_73 = arith.constant 0 : index
    %c0_74 = arith.constant 0 : index
    %c0_75 = arith.constant 0 : index
    %118 = vector.load %arg9[%c0_73, %c0_74, %c0_75] : memref<8x1x512xf32, #tpu.memory_space<vmem>>, vector<1x1x512xf32>
    %119 = vector.shape_cast %118 : vector<1x1x512xf32> to vector<1x512xf32>
    %120 = vector.broadcast %119 : vector<1x512xf32> to vector<2x512xf32>
    %121 = arith.addf %117, %120 : vector<2x512xf32>
    %cst_76 = arith.constant 0.000000e+00 : f32
    %122 = vector.broadcast %cst_76 : f32 to vector<2x512xf32>
    %123 = arith.maximumf %121, %122 : vector<2x512xf32>
    %124 = arith.truncf %123 : vector<2x512xf32> to vector<2x512xbf16>
    %125 = vector.extract_strided_slice %124 {offsets = [0, 0], sizes = [1, 512], strides = [1, 1]} : vector<2x512xbf16> to vector<1x512xbf16>
    %c1_77 = arith.constant 1 : index
    %c0_78 = arith.constant 0 : index
    %126 = vector.load %arg13[%c1_77, %c0_78] : memref<20x512xbf16, #tpu.memory_space<vmem>>, vector<1x512xbf16>
    tpu.vector_store %arg13[%c1_77, %c0_78], %125 {strides = array<i32>} : memref<20x512xbf16, #tpu.memory_space<vmem>>, vector<1x512xbf16>,
    %127 = vector.extract_strided_slice %124 {offsets = [1, 0], sizes = [1, 512], strides = [1, 1]} : vector<2x512xbf16> to vector<1x512xbf16>
    %c11 = arith.constant 11 : index
    %c0_79 = arith.constant 0 : index
    %128 = vector.load %arg13[%c11, %c0_79] : memref<20x512xbf16, #tpu.memory_space<vmem>>, vector<1x512xbf16>
    tpu.vector_store %arg13[%c11, %c0_79], %127 {strides = array<i32>} : memref<20x512xbf16, #tpu.memory_space<vmem>>, vector<1x512xbf16>,
    %c1_80 = arith.constant 1 : index
    %c0_81 = arith.constant 0 : index
    %c0_82 = arith.constant 0 : index
    %129 = vector.load %arg7[%c1_80, %c0_81, %c0_82] : memref<8x32x512xbf16, #tpu.memory_space<vmem>>, vector<1x32x512xbf16>
    %130 = vector.shape_cast %129 : vector<1x32x512xbf16> to vector<32x512xbf16>
    %cst_83 = arith.constant dense<0.000000e+00> : vector<2x512xf32>
    %131 = tpu.matmul %90, %130, %cst_83 {dimension_numbers = #tpu.dot_dimension_numbers<[1], [0], [0], [1], [0, 0, 1, 1], [], []>} : vector<2x32xbf16>, vector<32x512xbf16>, vector<2x512xf32> -> vector<2x512xf32>
    %cst_84 = arith.constant dense<0.000000e+00> : vector<512xf32>
    %132 = vector.multi_reduction <add>, %131, %cst_84 [0] : vector<2x512xf32> to vector<512xf32>
    %133 = vector.shape_cast %132 : vector<512xf32> to vector<1x512xf32>
    %cst_85 = arith.constant 2.000000e+00 : f32
    %134 = vector.broadcast %cst_85 : f32 to vector<1x512xf32>
    %135 = arith.divf %133, %134 : vector<1x512xf32>
    %136 = vector.broadcast %135 : vector<1x512xf32> to vector<2x512xf32>
    %137 = arith.subf %131, %136 : vector<2x512xf32>
    %138 = arith.mulf %137, %137 : vector<2x512xf32>
    %cst_86 = arith.constant dense<0.000000e+00> : vector<512xf32>
    %139 = vector.multi_reduction <add>, %138, %cst_86 [0] : vector<2x512xf32> to vector<512xf32>
    %140 = vector.shape_cast %139 : vector<512xf32> to vector<1x512xf32>
    %cst_87 = arith.constant 2.000000e+00 : f32
    %141 = vector.broadcast %cst_87 : f32 to vector<1x512xf32>
    %142 = arith.divf %140, %141 : vector<1x512xf32>
    %143 = vector.broadcast %135 : vector<1x512xf32> to vector<2x512xf32>
    %144 = arith.subf %131, %143 : vector<2x512xf32>
    %cst_88 = arith.constant 9.99999974E-6 : f32
    %145 = vector.broadcast %cst_88 : f32 to vector<1x512xf32>
    %146 = arith.addf %142, %145 : vector<1x512xf32>
    %147 = math.rsqrt %146 : vector<1x512xf32>
    %148 = vector.broadcast %147 : vector<1x512xf32> to vector<2x512xf32>
    %149 = arith.mulf %144, %148 : vector<2x512xf32>
    %c1_89 = arith.constant 1 : index
    %c0_90 = arith.constant 0 : index
    %c0_91 = arith.constant 0 : index
    %150 = vector.load %arg8[%c1_89, %c0_90, %c0_91] : memref<8x1x512xf32, #tpu.memory_space<vmem>>, vector<1x1x512xf32>
    %151 = vector.shape_cast %150 : vector<1x1x512xf32> to vector<1x512xf32>
    %152 = vector.broadcast %151 : vector<1x512xf32> to vector<2x512xf32>
    %153 = arith.mulf %149, %152 : vector<2x512xf32>
    %c1_92 = arith.constant 1 : index
    %c0_93 = arith.constant 0 : index
    %c0_94 = arith.constant 0 : index
    %154 = vector.load %arg9[%c1_92, %c0_93, %c0_94] : memref<8x1x512xf32, #tpu.memory_space<vmem>>, vector<1x1x512xf32>
    %155 = vector.shape_cast %154 : vector<1x1x512xf32> to vector<1x512xf32>
    %156 = vector.broadcast %155 : vector<1x512xf32> to vector<2x512xf32>
    %157 = arith.addf %153, %156 : vector<2x512xf32>
    %cst_95 = arith.constant 0.000000e+00 : f32
    %158 = vector.broadcast %cst_95 : f32 to vector<2x512xf32>
    %159 = arith.maximumf %157, %158 : vector<2x512xf32>
    %160 = arith.truncf %159 : vector<2x512xf32> to vector<2x512xbf16>
    %161 = vector.extract_strided_slice %160 {offsets = [0, 0], sizes = [1, 512], strides = [1, 1]} : vector<2x512xbf16> to vector<1x512xbf16>
    %c2_96 = arith.constant 2 : index
    %c0_97 = arith.constant 0 : index
    %162 = vector.load %arg13[%c2_96, %c0_97] : memref<20x512xbf16, #tpu.memory_space<vmem>>, vector<1x512xbf16>
    tpu.vector_store %arg13[%c2_96, %c0_97], %161 {strides = array<i32>} : memref<20x512xbf16, #tpu.memory_space<vmem>>, vector<1x512xbf16>,
    %163 = vector.extract_strided_slice %160 {offsets = [1, 0], sizes = [1, 512], strides = [1, 1]} : vector<2x512xbf16> to vector<1x512xbf16>
    %c12 = arith.constant 12 : index
    %c0_98 = arith.constant 0 : index
    %164 = vector.load %arg13[%c12, %c0_98] : memref<20x512xbf16, #tpu.memory_space<vmem>>, vector<1x512xbf16>
    tpu.vector_store %arg13[%c12, %c0_98], %163 {strides = array<i32>} : memref<20x512xbf16, #tpu.memory_space<vmem>>, vector<1x512xbf16>,
    %c2_99 = arith.constant 2 : index
    %c0_100 = arith.constant 0 : index
    %c0_101 = arith.constant 0 : index
    %165 = vector.load %arg7[%c2_99, %c0_100, %c0_101] : memref<8x32x512xbf16, #tpu.memory_space<vmem>>, vector<1x32x512xbf16>
    %166 = vector.shape_cast %165 : vector<1x32x512xbf16> to vector<32x512xbf16>
    %cst_102 = arith.constant dense<0.000000e+00> : vector<2x512xf32>
    %167 = tpu.matmul %90, %166, %cst_102 {dimension_numbers = #tpu.dot_dimension_numbers<[1], [0], [0], [1], [0, 0, 1, 1], [], []>} : vector<2x32xbf16>, vector<32x512xbf16>, vector<2x512xf32> -> vector<2x512xf32>
    %cst_103 = arith.constant dense<0.000000e+00> : vector<512xf32>
    %168 = vector.multi_reduction <add>, %167, %cst_103 [0] : vector<2x512xf32> to vector<512xf32>
    %169 = vector.shape_cast %168 : vector<512xf32> to vector<1x512xf32>
    %cst_104 = arith.constant 2.000000e+00 : f32
    %170 = vector.broadcast %cst_104 : f32 to vector<1x512xf32>
    %171 = arith.divf %169, %170 : vector<1x512xf32>
    %172 = vector.broadcast %171 : vector<1x512xf32> to vector<2x512xf32>
    %173 = arith.subf %167, %172 : vector<2x512xf32>
    %174 = arith.mulf %173, %173 : vector<2x512xf32>
    %cst_105 = arith.constant dense<0.000000e+00> : vector<512xf32>
    %175 = vector.multi_reduction <add>, %174, %cst_105 [0] : vector<2x512xf32> to vector<512xf32>
    %176 = vector.shape_cast %175 : vector<512xf32> to vector<1x512xf32>
    %cst_106 = arith.constant 2.000000e+00 : f32
    %177 = vector.broadcast %cst_106 : f32 to vector<1x512xf32>
    %178 = arith.divf %176, %177 : vector<1x512xf32>
    %179 = vector.broadcast %171 : vector<1x512xf32> to vector<2x512xf32>
    %180 = arith.subf %167, %179 : vector<2x512xf32>
    %cst_107 = arith.constant 9.99999974E-6 : f32
    %181 = vector.broadcast %cst_107 : f32 to vector<1x512xf32>
    %182 = arith.addf %178, %181 : vector<1x512xf32>
    %183 = math.rsqrt %182 : vector<1x512xf32>
    %184 = vector.broadcast %183 : vector<1x512xf32> to vector<2x512xf32>
    %185 = arith.mulf %180, %184 : vector<2x512xf32>
    %c2_108 = arith.constant 2 : index
    %c0_109 = arith.constant 0 : index
    %c0_110 = arith.constant 0 : index
    %186 = vector.load %arg8[%c2_108, %c0_109, %c0_110] : memref<8x1x512xf32, #tpu.memory_space<vmem>>, vector<1x1x512xf32>
    %187 = vector.shape_cast %186 : vector<1x1x512xf32> to vector<1x512xf32>
    %188 = vector.broadcast %187 : vector<1x512xf32> to vector<2x512xf32>
    %189 = arith.mulf %185, %188 : vector<2x512xf32>
    %c2_111 = arith.constant 2 : index
    %c0_112 = arith.constant 0 : index
    %c0_113 = arith.constant 0 : index
    %190 = vector.load %arg9[%c2_111, %c0_112, %c0_113] : memref<8x1x512xf32, #tpu.memory_space<vmem>>, vector<1x1x512xf32>
    %191 = vector.shape_cast %190 : vector<1x1x512xf32> to vector<1x512xf32>
    %192 = vector.broadcast %191 : vector<1x512xf32> to vector<2x512xf32>
    %193 = arith.addf %189, %192 : vector<2x512xf32>
    %cst_114 = arith.constant 0.000000e+00 : f32
    %194 = vector.broadcast %cst_114 : f32 to vector<2x512xf32>
    %195 = arith.maximumf %193, %194 : vector<2x512xf32>
    %196 = arith.truncf %195 : vector<2x512xf32> to vector<2x512xbf16>
    %197 = vector.extract_strided_slice %196 {offsets = [0, 0], sizes = [1, 512], strides = [1, 1]} : vector<2x512xbf16> to vector<1x512xbf16>
    %c3_115 = arith.constant 3 : index
    %c0_116 = arith.constant 0 : index
    %198 = vector.load %arg13[%c3_115, %c0_116] : memref<20x512xbf16, #tpu.memory_space<vmem>>, vector<1x512xbf16>
    tpu.vector_store %arg13[%c3_115, %c0_116], %197 {strides = array<i32>} : memref<20x512xbf16, #tpu.memory_space<vmem>>, vector<1x512xbf16>,
    %199 = vector.extract_strided_slice %196 {offsets = [1, 0], sizes = [1, 512], strides = [1, 1]} : vector<2x512xbf16> to vector<1x512xbf16>
    %c13 = arith.constant 13 : index
    %c0_117 = arith.constant 0 : index
    %200 = vector.load %arg13[%c13, %c0_117] : memref<20x512xbf16, #tpu.memory_space<vmem>>, vector<1x512xbf16>
    tpu.vector_store %arg13[%c13, %c0_117], %199 {strides = array<i32>} : memref<20x512xbf16, #tpu.memory_space<vmem>>, vector<1x512xbf16>,
    %c3_118 = arith.constant 3 : index
    %c0_119 = arith.constant 0 : index
    %c0_120 = arith.constant 0 : index
    %201 = vector.load %arg7[%c3_118, %c0_119, %c0_120] : memref<8x32x512xbf16, #tpu.memory_space<vmem>>, vector<1x32x512xbf16>
    %202 = vector.shape_cast %201 : vector<1x32x512xbf16> to vector<32x512xbf16>
    %cst_121 = arith.constant dense<0.000000e+00> : vector<2x512xf32>
    %203 = tpu.matmul %90, %202, %cst_121 {dimension_numbers = #tpu.dot_dimension_numbers<[1], [0], [0], [1], [0, 0, 1, 1], [], []>} : vector<2x32xbf16>, vector<32x512xbf16>, vector<2x512xf32> -> vector<2x512xf32>
    %cst_122 = arith.constant dense<0.000000e+00> : vector<512xf32>
    %204 = vector.multi_reduction <add>, %203, %cst_122 [0] : vector<2x512xf32> to vector<512xf32>
    %205 = vector.shape_cast %204 : vector<512xf32> to vector<1x512xf32>
    %cst_123 = arith.constant 2.000000e+00 : f32
    %206 = vector.broadcast %cst_123 : f32 to vector<1x512xf32>
    %207 = arith.divf %205, %206 : vector<1x512xf32>
    %208 = vector.broadcast %207 : vector<1x512xf32> to vector<2x512xf32>
    %209 = arith.subf %203, %208 : vector<2x512xf32>
    %210 = arith.mulf %209, %209 : vector<2x512xf32>
    %cst_124 = arith.constant dense<0.000000e+00> : vector<512xf32>
    %211 = vector.multi_reduction <add>, %210, %cst_124 [0] : vector<2x512xf32> to vector<512xf32>
    %212 = vector.shape_cast %211 : vector<512xf32> to vector<1x512xf32>
    %cst_125 = arith.constant 2.000000e+00 : f32
    %213 = vector.broadcast %cst_125 : f32 to vector<1x512xf32>
    %214 = arith.divf %212, %213 : vector<1x512xf32>
    %215 = vector.broadcast %207 : vector<1x512xf32> to vector<2x512xf32>
    %216 = arith.subf %203, %215 : vector<2x512xf32>
    %cst_126 = arith.constant 9.99999974E-6 : f32
    %217 = vector.broadcast %cst_126 : f32 to vector<1x512xf32>
    %218 = arith.addf %214, %217 : vector<1x512xf32>
    %219 = math.rsqrt %218 : vector<1x512xf32>
    %220 = vector.broadcast %219 : vector<1x512xf32> to vector<2x512xf32>
    %221 = arith.mulf %216, %220 : vector<2x512xf32>
    %c3_127 = arith.constant 3 : index
    %c0_128 = arith.constant 0 : index
    %c0_129 = arith.constant 0 : index
    %222 = vector.load %arg8[%c3_127, %c0_128, %c0_129] : memref<8x1x512xf32, #tpu.memory_space<vmem>>, vector<1x1x512xf32>
    %223 = vector.shape_cast %222 : vector<1x1x512xf32> to vector<1x512xf32>
    %224 = vector.broadcast %223 : vector<1x512xf32> to vector<2x512xf32>
    %225 = arith.mulf %221, %224 : vector<2x512xf32>
    %c3_130 = arith.constant 3 : index
    %c0_131 = arith.constant 0 : index
    %c0_132 = arith.constant 0 : index
    %226 = vector.load %arg9[%c3_130, %c0_131, %c0_132] : memref<8x1x512xf32, #tpu.memory_space<vmem>>, vector<1x1x512xf32>
    %227 = vector.shape_cast %226 : vector<1x1x512xf32> to vector<1x512xf32>
    %228 = vector.broadcast %227 : vector<1x512xf32> to vector<2x512xf32>
    %229 = arith.addf %225, %228 : vector<2x512xf32>
    %cst_133 = arith.constant 0.000000e+00 : f32
    %230 = vector.broadcast %cst_133 : f32 to vector<2x512xf32>
    %231 = arith.maximumf %229, %230 : vector<2x512xf32>
    %232 = arith.truncf %231 : vector<2x512xf32> to vector<2x512xbf16>
    %233 = vector.extract_strided_slice %232 {offsets = [0, 0], sizes = [1, 512], strides = [1, 1]} : vector<2x512xbf16> to vector<1x512xbf16>
    %c4_134 = arith.constant 4 : index
    %c0_135 = arith.constant 0 : index
    %234 = vector.load %arg13[%c4_134, %c0_135] : memref<20x512xbf16, #tpu.memory_space<vmem>>, vector<1x512xbf16>
    tpu.vector_store %arg13[%c4_134, %c0_135], %233 {strides = array<i32>} : memref<20x512xbf16, #tpu.memory_space<vmem>>, vector<1x512xbf16>,
    %235 = vector.extract_strided_slice %232 {offsets = [1, 0], sizes = [1, 512], strides = [1, 1]} : vector<2x512xbf16> to vector<1x512xbf16>
    %c14 = arith.constant 14 : index
    %c0_136 = arith.constant 0 : index
    %236 = vector.load %arg13[%c14, %c0_136] : memref<20x512xbf16, #tpu.memory_space<vmem>>, vector<1x512xbf16>
    tpu.vector_store %arg13[%c14, %c0_136], %235 {strides = array<i32>} : memref<20x512xbf16, #tpu.memory_space<vmem>>, vector<1x512xbf16>,
    %c4_137 = arith.constant 4 : index
    %c0_138 = arith.constant 0 : index
    %c0_139 = arith.constant 0 : index
    %237 = vector.load %arg7[%c4_137, %c0_138, %c0_139] : memref<8x32x512xbf16, #tpu.memory_space<vmem>>, vector<1x32x512xbf16>
    %238 = vector.shape_cast %237 : vector<1x32x512xbf16> to vector<32x512xbf16>
    %cst_140 = arith.constant dense<0.000000e+00> : vector<2x512xf32>
    %239 = tpu.matmul %90, %238, %cst_140 {dimension_numbers = #tpu.dot_dimension_numbers<[1], [0], [0], [1], [0, 0, 1, 1], [], []>} : vector<2x32xbf16>, vector<32x512xbf16>, vector<2x512xf32> -> vector<2x512xf32>
    %cst_141 = arith.constant dense<0.000000e+00> : vector<512xf32>
    %240 = vector.multi_reduction <add>, %239, %cst_141 [0] : vector<2x512xf32> to vector<512xf32>
    %241 = vector.shape_cast %240 : vector<512xf32> to vector<1x512xf32>
    %cst_142 = arith.constant 2.000000e+00 : f32
    %242 = vector.broadcast %cst_142 : f32 to vector<1x512xf32>
    %243 = arith.divf %241, %242 : vector<1x512xf32>
    %244 = vector.broadcast %243 : vector<1x512xf32> to vector<2x512xf32>
    %245 = arith.subf %239, %244 : vector<2x512xf32>
    %246 = arith.mulf %245, %245 : vector<2x512xf32>
    %cst_143 = arith.constant dense<0.000000e+00> : vector<512xf32>
    %247 = vector.multi_reduction <add>, %246, %cst_143 [0] : vector<2x512xf32> to vector<512xf32>
    %248 = vector.shape_cast %247 : vector<512xf32> to vector<1x512xf32>
    %cst_144 = arith.constant 2.000000e+00 : f32
    %249 = vector.broadcast %cst_144 : f32 to vector<1x512xf32>
    %250 = arith.divf %248, %249 : vector<1x512xf32>
    %251 = vector.broadcast %243 : vector<1x512xf32> to vector<2x512xf32>
    %252 = arith.subf %239, %251 : vector<2x512xf32>
    %cst_145 = arith.constant 9.99999974E-6 : f32
    %253 = vector.broadcast %cst_145 : f32 to vector<1x512xf32>
    %254 = arith.addf %250, %253 : vector<1x512xf32>
    %255 = math.rsqrt %254 : vector<1x512xf32>
    %256 = vector.broadcast %255 : vector<1x512xf32> to vector<2x512xf32>
    %257 = arith.mulf %252, %256 : vector<2x512xf32>
    %c4_146 = arith.constant 4 : index
    %c0_147 = arith.constant 0 : index
    %c0_148 = arith.constant 0 : index
    %258 = vector.load %arg8[%c4_146, %c0_147, %c0_148] : memref<8x1x512xf32, #tpu.memory_space<vmem>>, vector<1x1x512xf32>
    %259 = vector.shape_cast %258 : vector<1x1x512xf32> to vector<1x512xf32>
    %260 = vector.broadcast %259 : vector<1x512xf32> to vector<2x512xf32>
    %261 = arith.mulf %257, %260 : vector<2x512xf32>
    %c4_149 = arith.constant 4 : index
    %c0_150 = arith.constant 0 : index
    %c0_151 = arith.constant 0 : index
    %262 = vector.load %arg9[%c4_149, %c0_150, %c0_151] : memref<8x1x512xf32, #tpu.memory_space<vmem>>, vector<1x1x512xf32>
    %263 = vector.shape_cast %262 : vector<1x1x512xf32> to vector<1x512xf32>
    %264 = vector.broadcast %263 : vector<1x512xf32> to vector<2x512xf32>
    %265 = arith.addf %261, %264 : vector<2x512xf32>
    %cst_152 = arith.constant 0.000000e+00 : f32
    %266 = vector.broadcast %cst_152 : f32 to vector<2x512xf32>
    %267 = arith.maximumf %265, %266 : vector<2x512xf32>
    %268 = arith.truncf %267 : vector<2x512xf32> to vector<2x512xbf16>
    %269 = vector.extract_strided_slice %268 {offsets = [0, 0], sizes = [1, 512], strides = [1, 1]} : vector<2x512xbf16> to vector<1x512xbf16>
    %c5_153 = arith.constant 5 : index
    %c0_154 = arith.constant 0 : index
    %270 = vector.load %arg13[%c5_153, %c0_154] : memref<20x512xbf16, #tpu.memory_space<vmem>>, vector<1x512xbf16>
    tpu.vector_store %arg13[%c5_153, %c0_154], %269 {strides = array<i32>} : memref<20x512xbf16, #tpu.memory_space<vmem>>, vector<1x512xbf16>,
    %271 = vector.extract_strided_slice %268 {offsets = [1, 0], sizes = [1, 512], strides = [1, 1]} : vector<2x512xbf16> to vector<1x512xbf16>
    %c15 = arith.constant 15 : index
    %c0_155 = arith.constant 0 : index
    %272 = vector.load %arg13[%c15, %c0_155] : memref<20x512xbf16, #tpu.memory_space<vmem>>, vector<1x512xbf16>
    tpu.vector_store %arg13[%c15, %c0_155], %271 {strides = array<i32>} : memref<20x512xbf16, #tpu.memory_space<vmem>>, vector<1x512xbf16>,
    %c5_156 = arith.constant 5 : index
    %c0_157 = arith.constant 0 : index
    %c0_158 = arith.constant 0 : index
    %273 = vector.load %arg7[%c5_156, %c0_157, %c0_158] : memref<8x32x512xbf16, #tpu.memory_space<vmem>>, vector<1x32x512xbf16>
    %274 = vector.shape_cast %273 : vector<1x32x512xbf16> to vector<32x512xbf16>
    %cst_159 = arith.constant dense<0.000000e+00> : vector<2x512xf32>
    %275 = tpu.matmul %90, %274, %cst_159 {dimension_numbers = #tpu.dot_dimension_numbers<[1], [0], [0], [1], [0, 0, 1, 1], [], []>} : vector<2x32xbf16>, vector<32x512xbf16>, vector<2x512xf32> -> vector<2x512xf32>
    %cst_160 = arith.constant dense<0.000000e+00> : vector<512xf32>
    %276 = vector.multi_reduction <add>, %275, %cst_160 [0] : vector<2x512xf32> to vector<512xf32>
    %277 = vector.shape_cast %276 : vector<512xf32> to vector<1x512xf32>
    %cst_161 = arith.constant 2.000000e+00 : f32
    %278 = vector.broadcast %cst_161 : f32 to vector<1x512xf32>
    %279 = arith.divf %277, %278 : vector<1x512xf32>
    %280 = vector.broadcast %279 : vector<1x512xf32> to vector<2x512xf32>
    %281 = arith.subf %275, %280 : vector<2x512xf32>
    %282 = arith.mulf %281, %281 : vector<2x512xf32>
    %cst_162 = arith.constant dense<0.000000e+00> : vector<512xf32>
    %283 = vector.multi_reduction <add>, %282, %cst_162 [0] : vector<2x512xf32> to vector<512xf32>
    %284 = vector.shape_cast %283 : vector<512xf32> to vector<1x512xf32>
    %cst_163 = arith.constant 2.000000e+00 : f32
    %285 = vector.broadcast %cst_163 : f32 to vector<1x512xf32>
    %286 = arith.divf %284, %285 : vector<1x512xf32>
    %287 = vector.broadcast %279 : vector<1x512xf32> to vector<2x512xf32>
    %288 = arith.subf %275, %287 : vector<2x512xf32>
    %cst_164 = arith.constant 9.99999974E-6 : f32
    %289 = vector.broadcast %cst_164 : f32 to vector<1x512xf32>
    %290 = arith.addf %286, %289 : vector<1x512xf32>
    %291 = math.rsqrt %290 : vector<1x512xf32>
    %292 = vector.broadcast %291 : vector<1x512xf32> to vector<2x512xf32>
    %293 = arith.mulf %288, %292 : vector<2x512xf32>
    %c5_165 = arith.constant 5 : index
    %c0_166 = arith.constant 0 : index
    %c0_167 = arith.constant 0 : index
    %294 = vector.load %arg8[%c5_165, %c0_166, %c0_167] : memref<8x1x512xf32, #tpu.memory_space<vmem>>, vector<1x1x512xf32>
    %295 = vector.shape_cast %294 : vector<1x1x512xf32> to vector<1x512xf32>
    %296 = vector.broadcast %295 : vector<1x512xf32> to vector<2x512xf32>
    %297 = arith.mulf %293, %296 : vector<2x512xf32>
    %c5_168 = arith.constant 5 : index
    %c0_169 = arith.constant 0 : index
    %c0_170 = arith.constant 0 : index
    %298 = vector.load %arg9[%c5_168, %c0_169, %c0_170] : memref<8x1x512xf32, #tpu.memory_space<vmem>>, vector<1x1x512xf32>
    %299 = vector.shape_cast %298 : vector<1x1x512xf32> to vector<1x512xf32>
    %300 = vector.broadcast %299 : vector<1x512xf32> to vector<2x512xf32>
    %301 = arith.addf %297, %300 : vector<2x512xf32>
    %cst_171 = arith.constant 0.000000e+00 : f32
    %302 = vector.broadcast %cst_171 : f32 to vector<2x512xf32>
    %303 = arith.maximumf %301, %302 : vector<2x512xf32>
    %304 = arith.truncf %303 : vector<2x512xf32> to vector<2x512xbf16>
    %305 = vector.extract_strided_slice %304 {offsets = [0, 0], sizes = [1, 512], strides = [1, 1]} : vector<2x512xbf16> to vector<1x512xbf16>
    %c6_172 = arith.constant 6 : index
    %c0_173 = arith.constant 0 : index
    %306 = vector.load %arg13[%c6_172, %c0_173] : memref<20x512xbf16, #tpu.memory_space<vmem>>, vector<1x512xbf16>
    tpu.vector_store %arg13[%c6_172, %c0_173], %305 {strides = array<i32>} : memref<20x512xbf16, #tpu.memory_space<vmem>>, vector<1x512xbf16>,
    %307 = vector.extract_strided_slice %304 {offsets = [1, 0], sizes = [1, 512], strides = [1, 1]} : vector<2x512xbf16> to vector<1x512xbf16>
    %c16 = arith.constant 16 : index
    %c0_174 = arith.constant 0 : index
    %308 = vector.load %arg13[%c16, %c0_174] : memref<20x512xbf16, #tpu.memory_space<vmem>>, vector<1x512xbf16>
    tpu.vector_store %arg13[%c16, %c0_174], %307 {strides = array<i32>} : memref<20x512xbf16, #tpu.memory_space<vmem>>, vector<1x512xbf16>,
    %c6_175 = arith.constant 6 : index
    %c0_176 = arith.constant 0 : index
    %c0_177 = arith.constant 0 : index
    %309 = vector.load %arg7[%c6_175, %c0_176, %c0_177] : memref<8x32x512xbf16, #tpu.memory_space<vmem>>, vector<1x32x512xbf16>
    %310 = vector.shape_cast %309 : vector<1x32x512xbf16> to vector<32x512xbf16>
    %cst_178 = arith.constant dense<0.000000e+00> : vector<2x512xf32>
    %311 = tpu.matmul %90, %310, %cst_178 {dimension_numbers = #tpu.dot_dimension_numbers<[1], [0], [0], [1], [0, 0, 1, 1], [], []>} : vector<2x32xbf16>, vector<32x512xbf16>, vector<2x512xf32> -> vector<2x512xf32>
    %cst_179 = arith.constant dense<0.000000e+00> : vector<512xf32>
    %312 = vector.multi_reduction <add>, %311, %cst_179 [0] : vector<2x512xf32> to vector<512xf32>
    %313 = vector.shape_cast %312 : vector<512xf32> to vector<1x512xf32>
    %cst_180 = arith.constant 2.000000e+00 : f32
    %314 = vector.broadcast %cst_180 : f32 to vector<1x512xf32>
    %315 = arith.divf %313, %314 : vector<1x512xf32>
    %316 = vector.broadcast %315 : vector<1x512xf32> to vector<2x512xf32>
    %317 = arith.subf %311, %316 : vector<2x512xf32>
    %318 = arith.mulf %317, %317 : vector<2x512xf32>
    %cst_181 = arith.constant dense<0.000000e+00> : vector<512xf32>
    %319 = vector.multi_reduction <add>, %318, %cst_181 [0] : vector<2x512xf32> to vector<512xf32>
    %320 = vector.shape_cast %319 : vector<512xf32> to vector<1x512xf32>
    %cst_182 = arith.constant 2.000000e+00 : f32
    %321 = vector.broadcast %cst_182 : f32 to vector<1x512xf32>
    %322 = arith.divf %320, %321 : vector<1x512xf32>
    %323 = vector.broadcast %315 : vector<1x512xf32> to vector<2x512xf32>
    %324 = arith.subf %311, %323 : vector<2x512xf32>
    %cst_183 = arith.constant 9.99999974E-6 : f32
    %325 = vector.broadcast %cst_183 : f32 to vector<1x512xf32>
    %326 = arith.addf %322, %325 : vector<1x512xf32>
    %327 = math.rsqrt %326 : vector<1x512xf32>
    %328 = vector.broadcast %327 : vector<1x512xf32> to vector<2x512xf32>
    %329 = arith.mulf %324, %328 : vector<2x512xf32>
    %c6_184 = arith.constant 6 : index
    %c0_185 = arith.constant 0 : index
    %c0_186 = arith.constant 0 : index
    %330 = vector.load %arg8[%c6_184, %c0_185, %c0_186] : memref<8x1x512xf32, #tpu.memory_space<vmem>>, vector<1x1x512xf32>
    %331 = vector.shape_cast %330 : vector<1x1x512xf32> to vector<1x512xf32>
    %332 = vector.broadcast %331 : vector<1x512xf32> to vector<2x512xf32>
    %333 = arith.mulf %329, %332 : vector<2x512xf32>
    %c6_187 = arith.constant 6 : index
    %c0_188 = arith.constant 0 : index
    %c0_189 = arith.constant 0 : index
    %334 = vector.load %arg9[%c6_187, %c0_188, %c0_189] : memref<8x1x512xf32, #tpu.memory_space<vmem>>, vector<1x1x512xf32>
    %335 = vector.shape_cast %334 : vector<1x1x512xf32> to vector<1x512xf32>
    %336 = vector.broadcast %335 : vector<1x512xf32> to vector<2x512xf32>
    %337 = arith.addf %333, %336 : vector<2x512xf32>
    %cst_190 = arith.constant 0.000000e+00 : f32
    %338 = vector.broadcast %cst_190 : f32 to vector<2x512xf32>
    %339 = arith.maximumf %337, %338 : vector<2x512xf32>
    %340 = arith.truncf %339 : vector<2x512xf32> to vector<2x512xbf16>
    %341 = vector.extract_strided_slice %340 {offsets = [0, 0], sizes = [1, 512], strides = [1, 1]} : vector<2x512xbf16> to vector<1x512xbf16>
    %c7_191 = arith.constant 7 : index
    %c0_192 = arith.constant 0 : index
    %342 = vector.load %arg13[%c7_191, %c0_192] : memref<20x512xbf16, #tpu.memory_space<vmem>>, vector<1x512xbf16>
    tpu.vector_store %arg13[%c7_191, %c0_192], %341 {strides = array<i32>} : memref<20x512xbf16, #tpu.memory_space<vmem>>, vector<1x512xbf16>,
    %343 = vector.extract_strided_slice %340 {offsets = [1, 0], sizes = [1, 512], strides = [1, 1]} : vector<2x512xbf16> to vector<1x512xbf16>
    %c17 = arith.constant 17 : index
    %c0_193 = arith.constant 0 : index
    %344 = vector.load %arg13[%c17, %c0_193] : memref<20x512xbf16, #tpu.memory_space<vmem>>, vector<1x512xbf16>
    tpu.vector_store %arg13[%c17, %c0_193], %343 {strides = array<i32>} : memref<20x512xbf16, #tpu.memory_space<vmem>>, vector<1x512xbf16>,
    %c7_194 = arith.constant 7 : index
    %c0_195 = arith.constant 0 : index
    %c0_196 = arith.constant 0 : index
    %345 = vector.load %arg7[%c7_194, %c0_195, %c0_196] : memref<8x32x512xbf16, #tpu.memory_space<vmem>>, vector<1x32x512xbf16>
    %346 = vector.shape_cast %345 : vector<1x32x512xbf16> to vector<32x512xbf16>
    %cst_197 = arith.constant dense<0.000000e+00> : vector<2x512xf32>
    %347 = tpu.matmul %90, %346, %cst_197 {dimension_numbers = #tpu.dot_dimension_numbers<[1], [0], [0], [1], [0, 0, 1, 1], [], []>} : vector<2x32xbf16>, vector<32x512xbf16>, vector<2x512xf32> -> vector<2x512xf32>
    %cst_198 = arith.constant dense<0.000000e+00> : vector<512xf32>
    %348 = vector.multi_reduction <add>, %347, %cst_198 [0] : vector<2x512xf32> to vector<512xf32>
    %349 = vector.shape_cast %348 : vector<512xf32> to vector<1x512xf32>
    %cst_199 = arith.constant 2.000000e+00 : f32
    %350 = vector.broadcast %cst_199 : f32 to vector<1x512xf32>
    %351 = arith.divf %349, %350 : vector<1x512xf32>
    %352 = vector.broadcast %351 : vector<1x512xf32> to vector<2x512xf32>
    %353 = arith.subf %347, %352 : vector<2x512xf32>
    %354 = arith.mulf %353, %353 : vector<2x512xf32>
    %cst_200 = arith.constant dense<0.000000e+00> : vector<512xf32>
    %355 = vector.multi_reduction <add>, %354, %cst_200 [0] : vector<2x512xf32> to vector<512xf32>
    %356 = vector.shape_cast %355 : vector<512xf32> to vector<1x512xf32>
    %cst_201 = arith.constant 2.000000e+00 : f32
    %357 = vector.broadcast %cst_201 : f32 to vector<1x512xf32>
    %358 = arith.divf %356, %357 : vector<1x512xf32>
    %359 = vector.broadcast %351 : vector<1x512xf32> to vector<2x512xf32>
    %360 = arith.subf %347, %359 : vector<2x512xf32>
    %cst_202 = arith.constant 9.99999974E-6 : f32
    %361 = vector.broadcast %cst_202 : f32 to vector<1x512xf32>
    %362 = arith.addf %358, %361 : vector<1x512xf32>
    %363 = math.rsqrt %362 : vector<1x512xf32>
    %364 = vector.broadcast %363 : vector<1x512xf32> to vector<2x512xf32>
    %365 = arith.mulf %360, %364 : vector<2x512xf32>
    %c7_203 = arith.constant 7 : index
    %c0_204 = arith.constant 0 : index
    %c0_205 = arith.constant 0 : index
    %366 = vector.load %arg8[%c7_203, %c0_204, %c0_205] : memref<8x1x512xf32, #tpu.memory_space<vmem>>, vector<1x1x512xf32>
    %367 = vector.shape_cast %366 : vector<1x1x512xf32> to vector<1x512xf32>
    %368 = vector.broadcast %367 : vector<1x512xf32> to vector<2x512xf32>
    %369 = arith.mulf %365, %368 : vector<2x512xf32>
    %c7_206 = arith.constant 7 : index
    %c0_207 = arith.constant 0 : index
    %c0_208 = arith.constant 0 : index
    %370 = vector.load %arg9[%c7_206, %c0_207, %c0_208] : memref<8x1x512xf32, #tpu.memory_space<vmem>>, vector<1x1x512xf32>
    %371 = vector.shape_cast %370 : vector<1x1x512xf32> to vector<1x512xf32>
    %372 = vector.broadcast %371 : vector<1x512xf32> to vector<2x512xf32>
    %373 = arith.addf %369, %372 : vector<2x512xf32>
    %cst_209 = arith.constant 0.000000e+00 : f32
    %374 = vector.broadcast %cst_209 : f32 to vector<2x512xf32>
    %375 = arith.maximumf %373, %374 : vector<2x512xf32>
    %376 = arith.truncf %375 : vector<2x512xf32> to vector<2x512xbf16>
    %377 = vector.extract_strided_slice %376 {offsets = [0, 0], sizes = [1, 512], strides = [1, 1]} : vector<2x512xbf16> to vector<1x512xbf16>
    %c8 = arith.constant 8 : index
    %c0_210 = arith.constant 0 : index
    %378 = vector.load %arg13[%c8, %c0_210] : memref<20x512xbf16, #tpu.memory_space<vmem>>, vector<1x512xbf16>
    tpu.vector_store %arg13[%c8, %c0_210], %377 {strides = array<i32>} : memref<20x512xbf16, #tpu.memory_space<vmem>>, vector<1x512xbf16>,
    %379 = vector.extract_strided_slice %376 {offsets = [1, 0], sizes = [1, 512], strides = [1, 1]} : vector<2x512xbf16> to vector<1x512xbf16>
    %c18 = arith.constant 18 : index
    %c0_211 = arith.constant 0 : index
    %380 = vector.load %arg13[%c18, %c0_211] : memref<20x512xbf16, #tpu.memory_space<vmem>>, vector<1x512xbf16>
    tpu.vector_store %arg13[%c18, %c0_211], %379 {strides = array<i32>} : memref<20x512xbf16, #tpu.memory_space<vmem>>, vector<1x512xbf16>,
    %c0_212 = arith.constant 0 : index
    %c0_213 = arith.constant 0 : index
    %c0_214 = arith.constant 0 : index
    %381 = vector.load %arg10[%c0_212, %c0_213, %c0_214] : memref<3x512x128xbf16, #tpu.memory_space<vmem>>, vector<1x512x128xbf16>
    %382 = vector.shape_cast %381 : vector<1x512x128xbf16> to vector<512x128xbf16>
    %c1_215 = arith.constant 1 : index
    %c0_216 = arith.constant 0 : index
    %c0_217 = arith.constant 0 : index
    %383 = vector.load %arg10[%c1_215, %c0_216, %c0_217] : memref<3x512x128xbf16, #tpu.memory_space<vmem>>, vector<1x512x128xbf16>
    %384 = vector.shape_cast %383 : vector<1x512x128xbf16> to vector<512x128xbf16>
    %c2_218 = arith.constant 2 : index
    %c0_219 = arith.constant 0 : index
    %c0_220 = arith.constant 0 : index
    %385 = vector.load %arg10[%c2_218, %c0_219, %c0_220] : memref<3x512x128xbf16, #tpu.memory_space<vmem>>, vector<1x512x128xbf16>
    %386 = vector.shape_cast %385 : vector<1x512x128xbf16> to vector<512x128xbf16>
    %c0_221 = arith.constant 0 : index
    %c0_222 = arith.constant 0 : index
    %387 = vector.load %arg11[%c0_221, %c0_222] : memref<1x128xf32, #tpu.memory_space<vmem>>, vector<1x128xf32>
    %c0_223 = arith.constant 0 : index
    %c0_224 = arith.constant 0 : index
    %388 = vector.load %arg13[%c0_223, %c0_224] : memref<20x512xbf16, #tpu.memory_space<vmem>>, vector<8x512xbf16>
    %c1_225 = arith.constant 1 : index
    %c0_226 = arith.constant 0 : index
    %389 = vector.load %arg13[%c1_225, %c0_226] : memref<20x512xbf16, #tpu.memory_space<vmem>>, vector<8x512xbf16>
    %c2_227 = arith.constant 2 : index
    %c0_228 = arith.constant 0 : index
    %390 = vector.load %arg13[%c2_227, %c0_228] : memref<20x512xbf16, #tpu.memory_space<vmem>>, vector<8x512xbf16>
    %cst_229 = arith.constant dense<0.000000e+00> : vector<8x128xf32>
    %391 = tpu.matmul %388, %382, %cst_229 {dimension_numbers = #tpu.dot_dimension_numbers<[1], [0], [0], [1], [0, 0, 1, 1], [], []>} : vector<8x512xbf16>, vector<512x128xbf16>, vector<8x128xf32> -> vector<8x128xf32>
    %cst_230 = arith.constant dense<0.000000e+00> : vector<8x128xf32>
    %392 = tpu.matmul %389, %384, %cst_230 {dimension_numbers = #tpu.dot_dimension_numbers<[1], [0], [0], [1], [0, 0, 1, 1], [], []>} : vector<8x512xbf16>, vector<512x128xbf16>, vector<8x128xf32> -> vector<8x128xf32>
    %393 = arith.addf %391, %392 : vector<8x128xf32>
    %cst_231 = arith.constant dense<0.000000e+00> : vector<8x128xf32>
    %394 = tpu.matmul %390, %386, %cst_231 {dimension_numbers = #tpu.dot_dimension_numbers<[1], [0], [0], [1], [0, 0, 1, 1], [], []>} : vector<8x512xbf16>, vector<512x128xbf16>, vector<8x128xf32> -> vector<8x128xf32>
    %395 = arith.addf %393, %394 : vector<8x128xf32>
    %396 = vector.broadcast %387 : vector<1x128xf32> to vector<8x128xf32>
    %397 = arith.addf %395, %396 : vector<8x128xf32>
    %398 = vector.extract_strided_slice %397 {offsets = [0, 0], sizes = [8, 32], strides = [1, 1]} : vector<8x128xf32> to vector<8x32xf32>
    %c0_232 = arith.constant 0 : index
    %c0_233 = arith.constant 0 : index
    %c0_234 = arith.constant 0 : index
    %c0_235 = arith.constant 0 : index
    %399 = vector.load %arg12[%c0_232, %c0_233, %c0_234, %c0_235] : memref<2x4x8x32xf32, #tpu.memory_space<vmem>>, vector<1x1x8x32xf32>
    %400 = vector.shape_cast %399 : vector<1x1x8x32xf32> to vector<8x32xf32>
    %401 = vector.shape_cast %398 : vector<8x32xf32> to vector<1x1x8x32xf32>
    tpu.vector_store %arg12[%c0_232, %c0_233, %c0_234, %c0_235], %401 {strides = array<i32>} : memref<2x4x8x32xf32, #tpu.memory_space<vmem>>, vector<1x1x8x32xf32>,
    %402 = vector.extract_strided_slice %397 {offsets = [0, 32], sizes = [8, 32], strides = [1, 1]} : vector<8x128xf32> to vector<8x32xf32>
    %c0_236 = arith.constant 0 : index
    %c1_237 = arith.constant 1 : index
    %c0_238 = arith.constant 0 : index
    %c0_239 = arith.constant 0 : index
    %403 = vector.load %arg12[%c0_236, %c1_237, %c0_238, %c0_239] : memref<2x4x8x32xf32, #tpu.memory_space<vmem>>, vector<1x1x8x32xf32>
    %404 = vector.shape_cast %403 : vector<1x1x8x32xf32> to vector<8x32xf32>
    %405 = vector.shape_cast %402 : vector<8x32xf32> to vector<1x1x8x32xf32>
    tpu.vector_store %arg12[%c0_236, %c1_237, %c0_238, %c0_239], %405 {strides = array<i32>} : memref<2x4x8x32xf32, #tpu.memory_space<vmem>>, vector<1x1x8x32xf32>,
    %406 = vector.extract_strided_slice %397 {offsets = [0, 64], sizes = [8, 32], strides = [1, 1]} : vector<8x128xf32> to vector<8x32xf32>
    %c0_240 = arith.constant 0 : index
    %c2_241 = arith.constant 2 : index
    %c0_242 = arith.constant 0 : index
    %c0_243 = arith.constant 0 : index
    %407 = vector.load %arg12[%c0_240, %c2_241, %c0_242, %c0_243] : memref<2x4x8x32xf32, #tpu.memory_space<vmem>>, vector<1x1x8x32xf32>
    %408 = vector.shape_cast %407 : vector<1x1x8x32xf32> to vector<8x32xf32>
    %409 = vector.shape_cast %406 : vector<8x32xf32> to vector<1x1x8x32xf32>
    tpu.vector_store %arg12[%c0_240, %c2_241, %c0_242, %c0_243], %409 {strides = array<i32>} : memref<2x4x8x32xf32, #tpu.memory_space<vmem>>, vector<1x1x8x32xf32>,
    %410 = vector.extract_strided_slice %397 {offsets = [0, 96], sizes = [8, 32], strides = [1, 1]} : vector<8x128xf32> to vector<8x32xf32>
    %c0_244 = arith.constant 0 : index
    %c3_245 = arith.constant 3 : index
    %c0_246 = arith.constant 0 : index
    %c0_247 = arith.constant 0 : index
    %411 = vector.load %arg12[%c0_244, %c3_245, %c0_246, %c0_247] : memref<2x4x8x32xf32, #tpu.memory_space<vmem>>, vector<1x1x8x32xf32>
    %412 = vector.shape_cast %411 : vector<1x1x8x32xf32> to vector<8x32xf32>
    %413 = vector.shape_cast %410 : vector<8x32xf32> to vector<1x1x8x32xf32>
    tpu.vector_store %arg12[%c0_244, %c3_245, %c0_246, %c0_247], %413 {strides = array<i32>} : memref<2x4x8x32xf32, #tpu.memory_space<vmem>>, vector<1x1x8x32xf32>,
    %c10 = arith.constant 10 : index
    %c0_248 = arith.constant 0 : index
    %414 = vector.load %arg13[%c10, %c0_248] : memref<20x512xbf16, #tpu.memory_space<vmem>>, vector<8x512xbf16>
    %c11_249 = arith.constant 11 : index
    %c0_250 = arith.constant 0 : index
    %415 = vector.load %arg13[%c11_249, %c0_250] : memref<20x512xbf16, #tpu.memory_space<vmem>>, vector<8x512xbf16>
    %c12_251 = arith.constant 12 : index
    %c0_252 = arith.constant 0 : index
    %416 = vector.load %arg13[%c12_251, %c0_252] : memref<20x512xbf16, #tpu.memory_space<vmem>>, vector<8x512xbf16>
    %cst_253 = arith.constant dense<0.000000e+00> : vector<8x128xf32>
    %417 = tpu.matmul %414, %382, %cst_253 {dimension_numbers = #tpu.dot_dimension_numbers<[1], [0], [0], [1], [0, 0, 1, 1], [], []>} : vector<8x512xbf16>, vector<512x128xbf16>, vector<8x128xf32> -> vector<8x128xf32>
    %cst_254 = arith.constant dense<0.000000e+00> : vector<8x128xf32>
    %418 = tpu.matmul %415, %384, %cst_254 {dimension_numbers = #tpu.dot_dimension_numbers<[1], [0], [0], [1], [0, 0, 1, 1], [], []>} : vector<8x512xbf16>, vector<512x128xbf16>, vector<8x128xf32> -> vector<8x128xf32>
    %419 = arith.addf %417, %418 : vector<8x128xf32>
    %cst_255 = arith.constant dense<0.000000e+00> : vector<8x128xf32>
    %420 = tpu.matmul %416, %386, %cst_255 {dimension_numbers = #tpu.dot_dimension_numbers<[1], [0], [0], [1], [0, 0, 1, 1], [], []>} : vector<8x512xbf16>, vector<512x128xbf16>, vector<8x128xf32> -> vector<8x128xf32>
    %421 = arith.addf %419, %420 : vector<8x128xf32>
    %422 = vector.broadcast %387 : vector<1x128xf32> to vector<8x128xf32>
    %423 = arith.addf %421, %422 : vector<8x128xf32>
    %424 = vector.extract_strided_slice %423 {offsets = [0, 0], sizes = [8, 32], strides = [1, 1]} : vector<8x128xf32> to vector<8x32xf32>
    %c1_256 = arith.constant 1 : index
    %c0_257 = arith.constant 0 : index
    %c0_258 = arith.constant 0 : index
    %c0_259 = arith.constant 0 : index
    %425 = vector.load %arg12[%c1_256, %c0_257, %c0_258, %c0_259] : memref<2x4x8x32xf32, #tpu.memory_space<vmem>>, vector<1x1x8x32xf32>
    %426 = vector.shape_cast %425 : vector<1x1x8x32xf32> to vector<8x32xf32>
    %427 = vector.shape_cast %424 : vector<8x32xf32> to vector<1x1x8x32xf32>
    tpu.vector_store %arg12[%c1_256, %c0_257, %c0_258, %c0_259], %427 {strides = array<i32>} : memref<2x4x8x32xf32, #tpu.memory_space<vmem>>, vector<1x1x8x32xf32>,
    %428 = vector.extract_strided_slice %423 {offsets = [0, 32], sizes = [8, 32], strides = [1, 1]} : vector<8x128xf32> to vector<8x32xf32>
    %c1_260 = arith.constant 1 : index
    %c1_261 = arith.constant 1 : index
    %c0_262 = arith.constant 0 : index
    %c0_263 = arith.constant 0 : index
    %429 = vector.load %arg12[%c1_260, %c1_261, %c0_262, %c0_263] : memref<2x4x8x32xf32, #tpu.memory_space<vmem>>, vector<1x1x8x32xf32>
    %430 = vector.shape_cast %429 : vector<1x1x8x32xf32> to vector<8x32xf32>
    %431 = vector.shape_cast %428 : vector<8x32xf32> to vector<1x1x8x32xf32>
    tpu.vector_store %arg12[%c1_260, %c1_261, %c0_262, %c0_263], %431 {strides = array<i32>} : memref<2x4x8x32xf32, #tpu.memory_space<vmem>>, vector<1x1x8x32xf32>,
    %432 = vector.extract_strided_slice %423 {offsets = [0, 64], sizes = [8, 32], strides = [1, 1]} : vector<8x128xf32> to vector<8x32xf32>
    %c1_264 = arith.constant 1 : index
    %c2_265 = arith.constant 2 : index
    %c0_266 = arith.constant 0 : index
    %c0_267 = arith.constant 0 : index
    %433 = vector.load %arg12[%c1_264, %c2_265, %c0_266, %c0_267] : memref<2x4x8x32xf32, #tpu.memory_space<vmem>>, vector<1x1x8x32xf32>
    %434 = vector.shape_cast %433 : vector<1x1x8x32xf32> to vector<8x32xf32>
    %435 = vector.shape_cast %432 : vector<8x32xf32> to vector<1x1x8x32xf32>
    tpu.vector_store %arg12[%c1_264, %c2_265, %c0_266, %c0_267], %435 {strides = array<i32>} : memref<2x4x8x32xf32, #tpu.memory_space<vmem>>, vector<1x1x8x32xf32>,
    %436 = vector.extract_strided_slice %423 {offsets = [0, 96], sizes = [8, 32], strides = [1, 1]} : vector<8x128xf32> to vector<8x32xf32>
    %c1_268 = arith.constant 1 : index
    %c3_269 = arith.constant 3 : index
    %c0_270 = arith.constant 0 : index
    %c0_271 = arith.constant 0 : index
    %437 = vector.load %arg12[%c1_268, %c3_269, %c0_270, %c0_271] : memref<2x4x8x32xf32, #tpu.memory_space<vmem>>, vector<1x1x8x32xf32>
    %438 = vector.shape_cast %437 : vector<1x1x8x32xf32> to vector<8x32xf32>
    %439 = vector.shape_cast %436 : vector<8x32xf32> to vector<1x1x8x32xf32>
    tpu.vector_store %arg12[%c1_268, %c3_269, %c0_270, %c0_271], %439 {strides = array<i32>} : memref<2x4x8x32xf32, #tpu.memory_space<vmem>>, vector<1x1x8x32xf32>,
    return
  }
  func.func @transform_0(%arg0: i32) -> (i32, i32, i32) {
    %c0_i32 = arith.constant 0 : i32
    %c0_i32_0 = arith.constant 0 : i32
    %c0_i32_1 = arith.constant 0 : i32
    %c0_i32_2 = arith.constant 0 : i32
    return %c0_i32, %c0_i32_0, %c0_i32_1 : i32, i32, i32
  }
  func.func @transform_1(%arg0: i32) -> (i32, i32, i32) {
    %c0_i32 = arith.constant 0 : i32
    %c0_i32_0 = arith.constant 0 : i32
    %c0_i32_1 = arith.constant 0 : i32
    %c0_i32_2 = arith.constant 0 : i32
    return %c0_i32, %c0_i32_0, %c0_i32_1 : i32, i32, i32
  }
  func.func @transform_2(%arg0: i32) -> (i32, i32) {
    %c0_i32 = arith.constant 0 : i32
    %c0_i32_0 = arith.constant 0 : i32
    %c0_i32_1 = arith.constant 0 : i32
    return %c0_i32, %c0_i32_0 : i32, i32
  }
  func.func @transform_3(%arg0: i32) -> (i32, i32, i32) {
    %c0_i32 = arith.constant 0 : i32
    %c0_i32_0 = arith.constant 0 : i32
    %c0_i32_1 = arith.constant 0 : i32
    %c0_i32_2 = arith.constant 0 : i32
    return %c0_i32, %c0_i32_0, %c0_i32_1 : i32, i32, i32
  }
  func.func @transform_4(%arg0: i32) -> (i32, i32) {
    %c0_i32 = arith.constant 0 : i32
    %c0_i32_0 = arith.constant 0 : i32
    %c0_i32_1 = arith.constant 0 : i32
    return %c0_i32, %c0_i32_0 : i32, i32
  }
  func.func @transform_5(%arg0: i32) -> (i32, i32) {
    %c0_i32 = arith.constant 0 : i32
    %c0_i32_0 = arith.constant 0 : i32
    %c0_i32_1 = arith.constant 0 : i32
    return %c0_i32, %c0_i32_0 : i32, i32
  }
  func.func @transform_6(%arg0: i32) -> (i32, i32, i32) {
    %c0_i32 = arith.constant 0 : i32
    %c0_i32_0 = arith.constant 0 : i32
    %c0_i32_1 = arith.constant 0 : i32
    %c0_i32_2 = arith.constant 0 : i32
    return %c0_i32, %c0_i32_0, %c0_i32_1 : i32, i32, i32
  }
  func.func @transform_7(%arg0: i32) -> (i32, i32, i32) {
    %c0_i32 = arith.constant 0 : i32
    %c0_i32_0 = arith.constant 0 : i32
    %c0_i32_1 = arith.constant 0 : i32
    %c0_i32_2 = arith.constant 0 : i32
    return %c0_i32, %c0_i32_0, %c0_i32_1 : i32, i32, i32
  }
  func.func @transform_8(%arg0: i32) -> (i32, i32, i32) {
    %c0_i32 = arith.constant 0 : i32
    %c0_i32_0 = arith.constant 0 : i32
    %c0_i32_1 = arith.constant 0 : i32
    %c0_i32_2 = arith.constant 0 : i32
    return %c0_i32, %c0_i32_0, %c0_i32_1 : i32, i32, i32
  }
  func.func @transform_9(%arg0: i32) -> (i32, i32, i32) {
    %c0_i32 = arith.constant 0 : i32
    %c0_i32_0 = arith.constant 0 : i32
    %c0_i32_1 = arith.constant 0 : i32
    %c0_i32_2 = arith.constant 0 : i32
    return %c0_i32, %c0_i32_0, %c0_i32_1 : i32, i32, i32
  }
  func.func @transform_10(%arg0: i32) -> (i32, i32) {
    %c0_i32 = arith.constant 0 : i32
    %c0_i32_0 = arith.constant 0 : i32
    %c0_i32_1 = arith.constant 0 : i32
    return %c0_i32, %c0_i32_0 : i32, i32
  }
  func.func @transform_11(%arg0: i32) -> (i32, i32, i32, i32) {
    %c0_i32 = arith.constant 0 : i32
    %c0_i32_0 = arith.constant 0 : i32
    %c0_i32_1 = arith.constant 0 : i32
    %c0_i32_2 = arith.constant 0 : i32
    %c0_i32_3 = arith.constant 0 : i32
    return %c0_i32, %c0_i32_0, %c0_i32_1, %c0_i32_2 : i32, i32, i32, i32
  }
}

</mosaic_0001>

<llo_original>
// kernel: discriminator_forward.1
$region0: #{discriminator_forward.1}
  #allocation0 [shape = 'u32[]', space=smem, size = 0x4, offset = 0x4, fixed_abs, tag = 'smem constant byte address 0x4 - core index']
  #allocation1 [shape = 'u32[72,128]{1,0:T(1,128)}', space=vmem, size = 0x9000, scoped, tag = 'internal scratch']
  #allocation2 [shape = 'bf16[20,512]{1,0:T(8,128)(2,1)}', space=vmem, size = 0x6000, scoped, tag = 'scratch operand']
  %s0 = inlined_call_operand.vmem [shape: bf16[3,16,72], index: 0, kind: input, shape index: {}]
  %s1 = inlined_call_operand.vmem [shape: bf16[3,72,512], index: 1, kind: input, shape index: {}]
  %s2 = inlined_call_operand.vmem [shape: f32[1,512], index: 2, kind: input, shape index: {}]
  %s3 = inlined_call_operand.vmem [shape: bf16[8,512,32], index: 3, kind: input, shape index: {}]
  %s4 = inlined_call_operand.vmem [shape: f32[1,32], index: 4, kind: input, shape index: {}]
  %s5 = inlined_call_operand.vmem [shape: f32[1,32], index: 5, kind: input, shape index: {}]
  %s6 = inlined_call_operand.vmem [shape: bf16[8,32,512], index: 6, kind: input, shape index: {}]
  %s7 = inlined_call_operand.vmem [shape: f32[8,1,512], index: 7, kind: input, shape index: {}]
  %s8 = inlined_call_operand.vmem [shape: f32[8,1,512], index: 8, kind: input, shape index: {}]
  %s9 = inlined_call_operand.vmem [shape: bf16[3,512,128], index: 9, kind: input, shape index: {}]
  %s10 = inlined_call_operand.vmem [shape: f32[1,128], index: 10, kind: input, shape index: {}]
  %s11 = inlined_call_operand.vmem [shape: f32[2,4,8,32], index: 11, kind: output, shape index: {}]
  %s12 = sld [smem:[#allocation0]]
  $region54: #{discriminator_forward.1} parent=0
    _
  %s14 = ssub.s32 1, %s12
  %s15 = scalar_select 0, %s14, %s12
  // Predicated region
  $region2: #{discriminator_forward.1} parent=0 // pred_check
    _
  $region3: #{discriminator_forward.1} parent=0 // pred_check_branch
    %17 = sbr.rel (0) target = $region5
  $region4: #{discriminator_forward.1} parent=0 // pred_region
    _
  $region5: #{discriminator_forward.1} parent=0 // pred_fallthru
    _
  // Predicated region
  $region6: #{discriminator_forward.1} parent=0 // pred_check
    _
  $region7: #{discriminator_forward.1} parent=0 // pred_check_branch
    %19 = sbr.rel (0) target = $region9
  $region8: #{discriminator_forward.1} parent=0 // pred_region
    _
  $region9: #{discriminator_forward.1} parent=0 // pred_fallthru
    _
  // Predicated region
  $region10: #{discriminator_forward.1} parent=0 // pred_check
    _
  $region11: #{discriminator_forward.1} parent=0 // pred_check_branch
    %21 = sbr.rel (0) target = $region13
  $region12: #{discriminator_forward.1} parent=0 // pred_region
    _
  $region13: #{discriminator_forward.1} parent=0 // pred_fallthru
    _
  // Predicated region
  $region14: #{discriminator_forward.1} parent=0 // pred_check
    _
  $region15: #{discriminator_forward.1} parent=0 // pred_check_branch
    %23 = sbr.rel (0) target = $region17
  $region16: #{discriminator_forward.1} parent=0 // pred_region
    _
  $region17: #{discriminator_forward.1} parent=0 // pred_fallthru
    _
  // Predicated region
  $region18: #{discriminator_forward.1} parent=0 // pred_check
    _
  $region19: #{discriminator_forward.1} parent=0 // pred_check_branch
    %25 = sbr.rel (0) target = $region21
  $region20: #{discriminator_forward.1} parent=0 // pred_region
    _
  $region21: #{discriminator_forward.1} parent=0 // pred_fallthru
    _
  // Predicated region
  $region22: #{discriminator_forward.1} parent=0 // pred_check
    _
  $region23: #{discriminator_forward.1} parent=0 // pred_check_branch
    %27 = sbr.rel (0) target = $region25
  $region24: #{discriminator_forward.1} parent=0 // pred_region
    _
  $region25: #{discriminator_forward.1} parent=0 // pred_fallthru
    _
  // Predicated region
  $region26: #{discriminator_forward.1} parent=0 // pred_check
    _
  $region27: #{discriminator_forward.1} parent=0 // pred_check_branch
    %29 = sbr.rel (0) target = $region29
  $region28: #{discriminator_forward.1} parent=0 // pred_region
    _
  $region29: #{discriminator_forward.1} parent=0 // pred_fallthru
    _
  // Predicated region
  $region30: #{discriminator_forward.1} parent=0 // pred_check
    _
  $region31: #{discriminator_forward.1} parent=0 // pred_check_branch
    %31 = sbr.rel (0) target = $region33
  $region32: #{discriminator_forward.1} parent=0 // pred_region
    _
  $region33: #{discriminator_forward.1} parent=0 // pred_fallthru
    _
  // Predicated region
  $region34: #{discriminator_forward.1} parent=0 // pred_check
    _
  $region35: #{discriminator_forward.1} parent=0 // pred_check_branch
    %33 = sbr.rel (0) target = $region37
  $region36: #{discriminator_forward.1} parent=0 // pred_region
    _
  $region37: #{discriminator_forward.1} parent=0 // pred_fallthru
    _
  // Predicated region
  $region38: #{discriminator_forward.1} parent=0 // pred_check
    _
  $region39: #{discriminator_forward.1} parent=0 // pred_check_branch
    %35 = sbr.rel (0) target = $region41
  $region40: #{discriminator_forward.1} parent=0 // pred_region
    _
  $region41: #{discriminator_forward.1} parent=0 // pred_fallthru
    _
  // Predicated region
  $region42: #{discriminator_forward.1} parent=0 // pred_check
    _
  $region43: #{discriminator_forward.1} parent=0 // pred_check_branch
    %37 = sbr.rel (0) target = $region45
  $region44: #{discriminator_forward.1} parent=0 // pred_region
    _
  $region45: #{discriminator_forward.1} parent=0 // pred_fallthru
    _
  %v39 = vld [vmem:[%s0] sm:$0xf]
  %v40 = vld [vmem:[%s0 + $0x4] sm:$0xf]
  %v41 = vld [vmem:[%s1] sm:$0xff]
  %v42 = vld [vmem:[%s1 + $0x8] sm:$0xff]
  %v43 = vld [vmem:[%s1 + $0x10] sm:$0xff]
  %v44 = vld [vmem:[%s1 + $0x18] sm:$0xff]
  %v45 = vld [vmem:[%s1 + $0x20] sm:$0xff]
  %v46 = vld [vmem:[%s1 + $0x28] sm:$0xff]
  %v47 = vld [vmem:[%s1 + $0x30] sm:$0xff]
  %v48 = vld [vmem:[%s1 + $0x38] sm:$0xff]
  %v49 = vld [vmem:[%s1 + $0x40] sm:$0xff]
  %v50 = vld [vmem:[%s1 + $0x48] sm:$0xff]
  %v51 = vld [vmem:[%s1 + $0x50] sm:$0xff]
  %v52 = vld [vmem:[%s1 + $0x58] sm:$0xff]
  %v53 = vld [vmem:[%s1 + $0x60] sm:$0xff]
  %v54 = vld [vmem:[%s1 + $0x68] sm:$0xff]
  %v55 = vld [vmem:[%s1 + $0x70] sm:$0xff]
  %v56 = vld [vmem:[%s1 + $0x78] sm:$0xff]
  %v57 = vld [vmem:[%s1 + $0x80] sm:$0xff]
  %v58 = vld [vmem:[%s1 + $0x88] sm:$0xff]
  %s59 = scalar_lea.vmem %s0, 8
  %v60 = vld [vmem:[%s59] sm:$0xf]
  %v61 = vld [vmem:[%s59 + $0x4] sm:$0xf]
  %s62 = scalar_lea.vmem %s1, 144
  %v63 = vld [vmem:[%s62] sm:$0xff]
  %v64 = vld [vmem:[%s62 + $0x8] sm:$0xff]
  %v65 = vld [vmem:[%s62 + $0x10] sm:$0xff]
  %v66 = vld [vmem:[%s62 + $0x18] sm:$0xff]
  %v67 = vld [vmem:[%s62 + $0x20] sm:$0xff]
  %v68 = vld [vmem:[%s62 + $0x28] sm:$0xff]
  %v69 = vld [vmem:[%s62 + $0x30] sm:$0xff]
  %v70 = vld [vmem:[%s62 + $0x38] sm:$0xff]
  %v71 = vld [vmem:[%s62 + $0x40] sm:$0xff]
  %v72 = vld [vmem:[%s62 + $0x48] sm:$0xff]
  %v73 = vld [vmem:[%s62 + $0x50] sm:$0xff]
  %v74 = vld [vmem:[%s62 + $0x58] sm:$0xff]
  %v75 = vld [vmem:[%s62 + $0x60] sm:$0xff]
  %v76 = vld [vmem:[%s62 + $0x68] sm:$0xff]
  %v77 = vld [vmem:[%s62 + $0x70] sm:$0xff]
  %v78 = vld [vmem:[%s62 + $0x78] sm:$0xff]
  %v79 = vld [vmem:[%s62 + $0x80] sm:$0xff]
  %v80 = vld [vmem:[%s62 + $0x88] sm:$0xff]
  %v83 = vunpack.c.l.b16 %v60
  %v84 = vunpack.c.l.b16 %v61
  %v85 = vpack.c.b16 %v84, %v83
  %v104 = vunpack.c.l.b16 %v63
  %v105 = vunpack.c.h.b16 %v63
  %v106 = vunpack.c.l.b16 %v64
  %v107 = vunpack.c.h.b16 %v64
  %v108 = vunpack.c.l.b16 %v65
  %v109 = vunpack.c.h.b16 %v65
  %v110 = vunpack.c.l.b16 %v66
  %v111 = vunpack.c.h.b16 %v66
  %v112 = vunpack.c.l.b16 %v67
  %v113 = vunpack.c.h.b16 %v67
  %v114 = vunpack.c.l.b16 %v68
  %v115 = vunpack.c.h.b16 %v68
  %v116 = vunpack.c.l.b16 %v69
  %v117 = vunpack.c.h.b16 %v69
  %v118 = vunpack.c.l.b16 %v70
  %v119 = vunpack.c.h.b16 %v70
  %v120 = vunpack.c.l.b16 %v71
  %v121 = vunpack.c.h.b16 %v71
  %v122 = vunpack.c.l.b16 %v72
  %v123 = vunpack.c.h.b16 %v72
  %v124 = vunpack.c.l.b16 %v73
  %v125 = vunpack.c.h.b16 %v73
  %v126 = vunpack.c.l.b16 %v74
  %v127 = vunpack.c.h.b16 %v74
  %v128 = vunpack.c.l.b16 %v75
  %v129 = vunpack.c.h.b16 %v75
  %v130 = vunpack.c.l.b16 %v76
  %v131 = vunpack.c.h.b16 %v76
  %v132 = vunpack.c.l.b16 %v77
  %v133 = vunpack.c.h.b16 %v77
  %v134 = vunpack.c.l.b16 %v78
  %v135 = vunpack.c.h.b16 %v78
  %v136 = vunpack.c.l.b16 %v79
  %v137 = vunpack.c.h.b16 %v79
  %v138 = vunpack.c.l.b16 %v80
  %v139 = vunpack.c.h.b16 %v80
  %v140 = vpack.c.b16 %v108, %v104
  %v141 = vpack.c.b16 %v109, %v105
  %v142 = vpack.c.b16 %v110, %v106
  %v143 = vpack.c.b16 %v111, %v107
  %v144 = vpack.c.b16 %v116, %v112
  %v145 = vpack.c.b16 %v117, %v113
  %v146 = vpack.c.b16 %v118, %v114
  %v147 = vpack.c.b16 %v119, %v115
  %v148 = vpack.c.b16 %v124, %v120
  %v149 = vpack.c.b16 %v125, %v121
  %v150 = vpack.c.b16 %v126, %v122
  %v151 = vpack.c.b16 %v127, %v123
  %v152 = vpack.c.b16 %v132, %v128
  %v153 = vpack.c.b16 %v133, %v129
  %v154 = vpack.c.b16 %v134, %v130
  %v155 = vpack.c.b16 %v135, %v131
  %v156 = vpack.c.b16 %v136, %v136
  %v157 = vpack.c.b16 %v137, %v137
  %v158 = vpack.c.b16 %v138, %v138
  %v159 = vpack.c.b16 %v139, %v139
  %vm176 = vcmask 588800
  %v178 = vsel %vm176, %v85, 0
  %vm180 = vcmask 1043456
  %v182 = vsel %vm180, %v156, 0
  %v185 = vsel %vm180, %v157, 0
  %v188 = vsel %vm180, %v158, 0
  %v191 = vsel %vm180, %v159, 0
  %193 = vmatpush.bf16.msra.mxu0 0
  %194 = vmatpush.bf16.msra.mxu0 0
  %195 = vmatpush.bf16.msra.mxu0 0
  %196 = vmatpush.bf16.msra.mxu0 %v182
  %197 = vmatpush.bf16.msra.mxu0 %v152
  %198 = vmatpush.bf16.msra.mxu0 %v148
  %199 = vmatpush.bf16.msra.mxu0 %v144
  %200 = vmatpush.bf16.msra.mxu0 %v140
  %201 = vmatmul.bf16.gmra.mxu0 %v178
  %v202 = vpop.f32.mrf.mxu0
  %v203 = vadd.f32 0.0, %v202
  %v204 = vpop.f32.mrf.mxu0
  %v205 = vadd.f32 0.0, %v204
  %206 = vdwg.mxu0
  %207 = vmatpush.bf16.msra.mxu0 0
  %208 = vmatpush.bf16.msra.mxu0 0
  %209 = vmatpush.bf16.msra.mxu0 0
  %210 = vmatpush.bf16.msra.mxu0 %v185
  %211 = vmatpush.bf16.msra.mxu0 %v153
  %212 = vmatpush.bf16.msra.mxu0 %v149
  %213 = vmatpush.bf16.msra.mxu0 %v145
  %214 = vmatpush.bf16.msra.mxu0 %v141
  %215 = vmatmul.bf16.gmra.mxu0 %v178
  %v216 = vpop.f32.mrf.mxu0
  %v217 = vadd.f32 0.0, %v216
  %v218 = vpop.f32.mrf.mxu0
  %v219 = vadd.f32 0.0, %v218
  %220 = vdwg.mxu0
  %221 = vmatpush.bf16.msra.mxu0 0
  %222 = vmatpush.bf16.msra.mxu0 0
  %223 = vmatpush.bf16.msra.mxu0 0
  %224 = vmatpush.bf16.msra.mxu0 %v188
  %225 = vmatpush.bf16.msra.mxu0 %v154
  %226 = vmatpush.bf16.msra.mxu0 %v150
  %227 = vmatpush.bf16.msra.mxu0 %v146
  %228 = vmatpush.bf16.msra.mxu0 %v142
  %229 = vmatmul.bf16.gmra.mxu0 %v178
  %v230 = vpop.f32.mrf.mxu0
  %v231 = vadd.f32 0.0, %v230
  %v232 = vpop.f32.mrf.mxu0
  %v233 = vadd.f32 0.0, %v232
  %234 = vdwg.mxu0
  %235 = vmatpush.bf16.msra.mxu0 0
  %236 = vmatpush.bf16.msra.mxu0 0
  %237 = vmatpush.bf16.msra.mxu0 0
  %238 = vmatpush.bf16.msra.mxu0 %v191
  %239 = vmatpush.bf16.msra.mxu0 %v155
  %240 = vmatpush.bf16.msra.mxu0 %v151
  %241 = vmatpush.bf16.msra.mxu0 %v147
  %242 = vmatpush.bf16.msra.mxu0 %v143
  %243 = vmatmul.bf16.gmra.mxu0 %v178
  %v244 = vpop.f32.mrf.mxu0
  %v245 = vadd.f32 0.0, %v244
  %v246 = vpop.f32.mrf.mxu0
  %v247 = vadd.f32 0.0, %v246
  %248 = vdwg.mxu0
  %v251 = vunpack.c.l.b16 %v39
  %v252 = vunpack.c.l.b16 %v40
  %v253 = vpack.c.b16 %v252, %v251
  %v272 = vunpack.c.l.b16 %v41
  %v273 = vunpack.c.h.b16 %v41
  %v274 = vunpack.c.l.b16 %v42
  %v275 = vunpack.c.h.b16 %v42
  %v276 = vunpack.c.l.b16 %v43
  %v277 = vunpack.c.h.b16 %v43
  %v278 = vunpack.c.l.b16 %v44
  %v279 = vunpack.c.h.b16 %v44
  %v280 = vunpack.c.l.b16 %v45
  %v281 = vunpack.c.h.b16 %v45
  %v282 = vunpack.c.l.b16 %v46
  %v283 = vunpack.c.h.b16 %v46
  %v284 = vunpack.c.l.b16 %v47
  %v285 = vunpack.c.h.b16 %v47
  %v286 = vunpack.c.l.b16 %v48
  %v287 = vunpack.c.h.b16 %v48
  %v288 = vunpack.c.l.b16 %v49
  %v289 = vunpack.c.h.b16 %v49
  %v290 = vunpack.c.l.b16 %v50
  %v291 = vunpack.c.h.b16 %v50
  %v292 = vunpack.c.l.b16 %v51
  %v293 = vunpack.c.h.b16 %v51
  %v294 = vunpack.c.l.b16 %v52
  %v295 = vunpack.c.h.b16 %v52
  %v296 = vunpack.c.l.b16 %v53
  %v297 = vunpack.c.h.b16 %v53
  %v298 = vunpack.c.l.b16 %v54
  %v299 = vunpack.c.h.b16 %v54
  %v300 = vunpack.c.l.b16 %v55
  %v301 = vunpack.c.h.b16 %v55
  %v302 = vunpack.c.l.b16 %v56
  %v303 = vunpack.c.h.b16 %v56
  %v304 = vunpack.c.l.b16 %v57
  %v305 = vunpack.c.h.b16 %v57
  %v306 = vunpack.c.l.b16 %v58
  %v307 = vunpack.c.h.b16 %v58
  %v308 = vpack.c.b16 %v276, %v272
  %v309 = vpack.c.b16 %v277, %v273
  %v310 = vpack.c.b16 %v278, %v274
  %v311 = vpack.c.b16 %v279, %v275
  %v312 = vpack.c.b16 %v284, %v280
  %v313 = vpack.c.b16 %v285, %v281
  %v314 = vpack.c.b16 %v286, %v282
  %v315 = vpack.c.b16 %v287, %v283
  %v316 = vpack.c.b16 %v292, %v288
  %v317 = vpack.c.b16 %v293, %v289
  %v318 = vpack.c.b16 %v294, %v290
  %v319 = vpack.c.b16 %v295, %v291
  %v320 = vpack.c.b16 %v300, %v296
  %v321 = vpack.c.b16 %v301, %v297
  %v322 = vpack.c.b16 %v302, %v298
  %v323 = vpack.c.b16 %v303, %v299
  %v324 = vpack.c.b16 %v304, %v304
  %v325 = vpack.c.b16 %v305, %v305
  %v326 = vpack.c.b16 %v306, %v306
  %v327 = vpack.c.b16 %v307, %v307
  %v345 = vsel %vm176, %v253, 0
  %v348 = vsel %vm180, %v324, 0
  %v351 = vsel %vm180, %v325, 0
  %v354 = vsel %vm180, %v326, 0
  %v357 = vsel %vm180, %v327, 0
  %359 = vmatpush.bf16.msra.mxu0 0
  %360 = vmatpush.bf16.msra.mxu0 0
  %361 = vmatpush.bf16.msra.mxu0 0
  %362 = vmatpush.bf16.msra.mxu0 %v348
  %363 = vmatpush.bf16.msra.mxu0 %v320
  %364 = vmatpush.bf16.msra.mxu0 %v316
  %365 = vmatpush.bf16.msra.mxu0 %v312
  %366 = vmatpush.bf16.msra.mxu0 %v308
  %367 = vmatmul.bf16.gmra.mxu0 %v345
  %v368 = vpop.f32.mrf.mxu0
  %v369 = vadd.f32 %v203, %v368
  %v370 = vpop.f32.mrf.mxu0
  %v371 = vadd.f32 %v205, %v370
  %372 = vdwg.mxu0
  %373 = vmatpush.bf16.msra.mxu0 0
  %374 = vmatpush.bf16.msra.mxu0 0
  %375 = vmatpush.bf16.msra.mxu0 0
  %376 = vmatpush.bf16.msra.mxu0 %v351
  %377 = vmatpush.bf16.msra.mxu0 %v321
  %378 = vmatpush.bf16.msra.mxu0 %v317
  %379 = vmatpush.bf16.msra.mxu0 %v313
  %380 = vmatpush.bf16.msra.mxu0 %v309
  %381 = vmatmul.bf16.gmra.mxu0 %v345
  %v382 = vpop.f32.mrf.mxu0
  %v383 = vadd.f32 %v217, %v382
  %v384 = vpop.f32.mrf.mxu0
  %v385 = vadd.f32 %v219, %v384
  %386 = vdwg.mxu0
  %387 = vmatpush.bf16.msra.mxu0 0
  %388 = vmatpush.bf16.msra.mxu0 0
  %389 = vmatpush.bf16.msra.mxu0 0
  %390 = vmatpush.bf16.msra.mxu0 %v354
  %391 = vmatpush.bf16.msra.mxu0 %v322
  %392 = vmatpush.bf16.msra.mxu0 %v318
  %393 = vmatpush.bf16.msra.mxu0 %v314
  %394 = vmatpush.bf16.msra.mxu0 %v310
  %395 = vmatmul.bf16.gmra.mxu0 %v345
  %v396 = vpop.f32.mrf.mxu0
  %v397 = vadd.f32 %v231, %v396
  %v398 = vpop.f32.mrf.mxu0
  %v399 = vadd.f32 %v233, %v398
  %400 = vdwg.mxu0
  %401 = vmatpush.bf16.msra.mxu0 0
  %402 = vmatpush.bf16.msra.mxu0 0
  %403 = vmatpush.bf16.msra.mxu0 0
  %404 = vmatpush.bf16.msra.mxu0 %v357
  %405 = vmatpush.bf16.msra.mxu0 %v323
  %406 = vmatpush.bf16.msra.mxu0 %v319
  %407 = vmatpush.bf16.msra.mxu0 %v315
  %408 = vmatpush.bf16.msra.mxu0 %v311
  %409 = vmatmul.bf16.gmra.mxu0 %v345
  %v410 = vpop.f32.mrf.mxu0
  %v411 = vadd.f32 %v245, %v410
  %v412 = vpop.f32.mrf.mxu0
  %v413 = vadd.f32 %v247, %v412
  %414 = vdwg.mxu0
  %s415 = scalar_lea.vmem %s0, 16
  %v416 = vld [vmem:[%s415] sm:$0xf]
  %v417 = vld [vmem:[%s415 + $0x4] sm:$0xf]
  %s418 = scalar_lea.vmem %s1, 288
  %v419 = vld [vmem:[%s418] sm:$0xff]
  %v420 = vld [vmem:[%s418 + $0x8] sm:$0xff]
  %v421 = vld [vmem:[%s418 + $0x10] sm:$0xff]
  %v422 = vld [vmem:[%s418 + $0x18] sm:$0xff]
  %v423 = vld [vmem:[%s418 + $0x20] sm:$0xff]
  %v424 = vld [vmem:[%s418 + $0x28] sm:$0xff]
  %v425 = vld [vmem:[%s418 + $0x30] sm:$0xff]
  %v426 = vld [vmem:[%s418 + $0x38] sm:$0xff]
  %v427 = vld [vmem:[%s418 + $0x40] sm:$0xff]
  %v428 = vld [vmem:[%s418 + $0x48] sm:$0xff]
  %v429 = vld [vmem:[%s418 + $0x50] sm:$0xff]
  %v430 = vld [vmem:[%s418 + $0x58] sm:$0xff]
  %v431 = vld [vmem:[%s418 + $0x60] sm:$0xff]
  %v432 = vld [vmem:[%s418 + $0x68] sm:$0xff]
  %v433 = vld [vmem:[%s418 + $0x70] sm:$0xff]
  %v434 = vld [vmem:[%s418 + $0x78] sm:$0xff]
  %v435 = vld [vmem:[%s418 + $0x80] sm:$0xff]
  %v436 = vld [vmem:[%s418 + $0x88] sm:$0xff]
  %v439 = vunpack.c.l.b16 %v416
  %v440 = vunpack.c.l.b16 %v417
  %v441 = vpack.c.b16 %v440, %v439
  %v460 = vunpack.c.l.b16 %v419
  %v461 = vunpack.c.h.b16 %v419
  %v462 = vunpack.c.l.b16 %v420
  %v463 = vunpack.c.h.b16 %v420
  %v464 = vunpack.c.l.b16 %v421
  %v465 = vunpack.c.h.b16 %v421
  %v466 = vunpack.c.l.b16 %v422
  %v467 = vunpack.c.h.b16 %v422
  %v468 = vunpack.c.l.b16 %v423
  %v469 = vunpack.c.h.b16 %v423
  %v470 = vunpack.c.l.b16 %v424
  %v471 = vunpack.c.h.b16 %v424
  %v472 = vunpack.c.l.b16 %v425
  %v473 = vunpack.c.h.b16 %v425
  %v474 = vunpack.c.l.b16 %v426
  %v475 = vunpack.c.h.b16 %v426
  %v476 = vunpack.c.l.b16 %v427
  %v477 = vunpack.c.h.b16 %v427
  %v478 = vunpack.c.l.b16 %v428
  %v479 = vunpack.c.h.b16 %v428
  %v480 = vunpack.c.l.b16 %v429
  %v481 = vunpack.c.h.b16 %v429
  %v482 = vunpack.c.l.b16 %v430
  %v483 = vunpack.c.h.b16 %v430
  %v484 = vunpack.c.l.b16 %v431
  %v485 = vunpack.c.h.b16 %v431
  %v486 = vunpack.c.l.b16 %v432
  %v487 = vunpack.c.h.b16 %v432
  %v488 = vunpack.c.l.b16 %v433
  %v489 = vunpack.c.h.b16 %v433
  %v490 = vunpack.c.l.b16 %v434
  %v491 = vunpack.c.h.b16 %v434
  %v492 = vunpack.c.l.b16 %v435
  %v493 = vunpack.c.h.b16 %v435
  %v494 = vunpack.c.l.b16 %v436
  %v495 = vunpack.c.h.b16 %v436
  %v496 = vpack.c.b16 %v464, %v460
  %v497 = vpack.c.b16 %v465, %v461
  %v498 = vpack.c.b16 %v466, %v462
  %v499 = vpack.c.b16 %v467, %v463
  %v500 = vpack.c.b16 %v472, %v468
  %v501 = vpack.c.b16 %v473, %v469
  %v502 = vpack.c.b16 %v474, %v470
  %v503 = vpack.c.b16 %v475, %v471
  %v504 = vpack.c.b16 %v480, %v476
  %v505 = vpack.c.b16 %v481, %v477
  %v506 = vpack.c.b16 %v482, %v478
  %v507 = vpack.c.b16 %v483, %v479
  %v508 = vpack.c.b16 %v488, %v484
  %v509 = vpack.c.b16 %v489, %v485
  %v510 = vpack.c.b16 %v490, %v486
  %v511 = vpack.c.b16 %v491, %v487
  %v512 = vpack.c.b16 %v492, %v492
  %v513 = vpack.c.b16 %v493, %v493
  %v514 = vpack.c.b16 %v494, %v494
  %v515 = vpack.c.b16 %v495, %v495
  %v533 = vsel %vm176, %v441, 0
  %v536 = vsel %vm180, %v512, 0
  %v539 = vsel %vm180, %v513, 0
  %v542 = vsel %vm180, %v514, 0
  %v545 = vsel %vm180, %v515, 0
  %547 = vmatpush.bf16.msra.mxu0 0
  %548 = vmatpush.bf16.msra.mxu0 0
  %549 = vmatpush.bf16.msra.mxu0 0
  %550 = vmatpush.bf16.msra.mxu0 %v536
  %551 = vmatpush.bf16.msra.mxu0 %v508
  %552 = vmatpush.bf16.msra.mxu0 %v504
  %553 = vmatpush.bf16.msra.mxu0 %v500
  %554 = vmatpush.bf16.msra.mxu0 %v496
  %555 = vmatmul.bf16.gmra.mxu0 %v533
  %v556 = vpop.f32.mrf.mxu0
  %v557 = vadd.f32 0.0, %v556
  %v558 = vpop.f32.mrf.mxu0
  %v559 = vadd.f32 0.0, %v558
  %560 = vdwg.mxu0
  %561 = vmatpush.bf16.msra.mxu0 0
  %562 = vmatpush.bf16.msra.mxu0 0
  %563 = vmatpush.bf16.msra.mxu0 0
  %564 = vmatpush.bf16.msra.mxu0 %v539
  %565 = vmatpush.bf16.msra.mxu0 %v509
  %566 = vmatpush.bf16.msra.mxu0 %v505
  %567 = vmatpush.bf16.msra.mxu0 %v501
  %568 = vmatpush.bf16.msra.mxu0 %v497
  %569 = vmatmul.bf16.gmra.mxu0 %v533
  %v570 = vpop.f32.mrf.mxu0
  %v571 = vadd.f32 0.0, %v570
  %v572 = vpop.f32.mrf.mxu0
  %v573 = vadd.f32 0.0, %v572
  %574 = vdwg.mxu0
  %575 = vmatpush.bf16.msra.mxu0 0
  %576 = vmatpush.bf16.msra.mxu0 0
  %577 = vmatpush.bf16.msra.mxu0 0
  %578 = vmatpush.bf16.msra.mxu0 %v542
  %579 = vmatpush.bf16.msra.mxu0 %v510
  %580 = vmatpush.bf16.msra.mxu0 %v506
  %581 = vmatpush.bf16.msra.mxu0 %v502
  %582 = vmatpush.bf16.msra.mxu0 %v498
  %583 = vmatmul.bf16.gmra.mxu0 %v533
  %v584 = vpop.f32.mrf.mxu0
  %v585 = vadd.f32 0.0, %v584
  %v586 = vpop.f32.mrf.mxu0
  %v587 = vadd.f32 0.0, %v586
  %588 = vdwg.mxu0
  %589 = vmatpush.bf16.msra.mxu0 0
  %590 = vmatpush.bf16.msra.mxu0 0
  %591 = vmatpush.bf16.msra.mxu0 0
  %592 = vmatpush.bf16.msra.mxu0 %v545
  %593 = vmatpush.bf16.msra.mxu0 %v511
  %594 = vmatpush.bf16.msra.mxu0 %v507
  %595 = vmatpush.bf16.msra.mxu0 %v503
  %596 = vmatpush.bf16.msra.mxu0 %v499
  %597 = vmatmul.bf16.gmra.mxu0 %v533
  %v598 = vpop.f32.mrf.mxu0
  %v599 = vadd.f32 0.0, %v598
  %v600 = vpop.f32.mrf.mxu0
  %v601 = vadd.f32 0.0, %v600
  %602 = vdwg.mxu0
  %v603 = vadd.f32 %v369, %v557
  %v604 = vadd.f32 %v383, %v571
  %v605 = vadd.f32 %v397, %v585
  %v606 = vadd.f32 %v411, %v599
  %v607 = vadd.f32 %v371, %v559
  %v608 = vadd.f32 %v385, %v573
  %v609 = vadd.f32 %v399, %v587
  %v610 = vadd.f32 %v413, %v601
  %v611 = vld [vmem:[%s2] sm:$0xf]
  %v613 = vperm.slane %v611, 0
  %v614 = vperm.slane %v611, 1
  %v615 = vperm.slane %v611, 2
  %v616 = vperm.slane %v611, 3
  %v621 = vadd.f32 %v603, %v613
  %v622 = vadd.f32 %v604, %v614
  %v623 = vadd.f32 %v605, %v615
  %v624 = vadd.f32 %v606, %v616
  %v625 = vadd.f32 %v607, %v613
  %v626 = vadd.f32 %v608, %v614
  %v627 = vadd.f32 %v609, %v615
  %v628 = vadd.f32 %v610, %v616
  %v629 = vmax.f32 %v621, 0.0
  %v630 = vmax.f32 %v622, 0.0
  %v631 = vmax.f32 %v623, 0.0
  %v632 = vmax.f32 %v624, 0.0
  %v633 = vmax.f32 %v625, 0.0
  %v634 = vmax.f32 %v626, 0.0
  %v635 = vmax.f32 %v627, 0.0
  %v636 = vmax.f32 %v628, 0.0
  %v637 = vpack.c.bf16 %v630, %v629
  %v638 = vpack.c.bf16 %v632, %v631
  %v639 = vpack.c.bf16 %v634, %v633
  %v640 = vpack.c.bf16 %v636, %v635
  %v641 = vld [vmem:[%s3] sm:$0xf]
  %v642 = vld [vmem:[%s3 + $0x4] sm:$0xf]
  %v643 = vld [vmem:[%s3 + $0x8] sm:$0xf]
  %v644 = vld [vmem:[%s3 + $0xc] sm:$0xf]
  %v645 = vld [vmem:[%s3 + $0x10] sm:$0xf]
  %v646 = vld [vmem:[%s3 + $0x14] sm:$0xf]
  %v647 = vld [vmem:[%s3 + $0x18] sm:$0xf]
  %v648 = vld [vmem:[%s3 + $0x1c] sm:$0xf]
  %v649 = vld [vmem:[%s3 + $0x20] sm:$0xf]
  %v650 = vld [vmem:[%s3 + $0x24] sm:$0xf]
  %v651 = vld [vmem:[%s3 + $0x28] sm:$0xf]
  %v652 = vld [vmem:[%s3 + $0x2c] sm:$0xf]
  %v653 = vld [vmem:[%s3 + $0x30] sm:$0xf]
  %v654 = vld [vmem:[%s3 + $0x34] sm:$0xf]
  %v655 = vld [vmem:[%s3 + $0x38] sm:$0xf]
  %v656 = vld [vmem:[%s3 + $0x3c] sm:$0xf]
  %v657 = vld [vmem:[%s3 + $0x40] sm:$0xf]
  %v658 = vld [vmem:[%s3 + $0x44] sm:$0xf]
  %v659 = vld [vmem:[%s3 + $0x48] sm:$0xf]
  %v660 = vld [vmem:[%s3 + $0x4c] sm:$0xf]
  %v661 = vld [vmem:[%s3 + $0x50] sm:$0xf]
  %v662 = vld [vmem:[%s3 + $0x54] sm:$0xf]
  %v663 = vld [vmem:[%s3 + $0x58] sm:$0xf]
  %v664 = vld [vmem:[%s3 + $0x5c] sm:$0xf]
  %v665 = vld [vmem:[%s3 + $0x60] sm:$0xf]
  %v666 = vld [vmem:[%s3 + $0x64] sm:$0xf]
  %v667 = vld [vmem:[%s3 + $0x68] sm:$0xf]
  %v668 = vld [vmem:[%s3 + $0x6c] sm:$0xf]
  %v669 = vld [vmem:[%s3 + $0x70] sm:$0xf]
  %v670 = vld [vmem:[%s3 + $0x74] sm:$0xf]
  %v671 = vld [vmem:[%s3 + $0x78] sm:$0xf]
  %v672 = vld [vmem:[%s3 + $0x7c] sm:$0xf]
  %v673 = vld [vmem:[%s3 + $0x80] sm:$0xf]
  %v674 = vld [vmem:[%s3 + $0x84] sm:$0xf]
  %v675 = vld [vmem:[%s3 + $0x88] sm:$0xf]
  %v676 = vld [vmem:[%s3 + $0x8c] sm:$0xf]
  %v677 = vld [vmem:[%s3 + $0x90] sm:$0xf]
  %v678 = vld [vmem:[%s3 + $0x94] sm:$0xf]
  %v679 = vld [vmem:[%s3 + $0x98] sm:$0xf]
  %v680 = vld [vmem:[%s3 + $0x9c] sm:$0xf]
  %v681 = vld [vmem:[%s3 + $0xa0] sm:$0xf]
  %v682 = vld [vmem:[%s3 + $0xa4] sm:$0xf]
  %v683 = vld [vmem:[%s3 + $0xa8] sm:$0xf]
  %v684 = vld [vmem:[%s3 + $0xac] sm:$0xf]
  %v685 = vld [vmem:[%s3 + $0xb0] sm:$0xf]
  %v686 = vld [vmem:[%s3 + $0xb4] sm:$0xf]
  %v687 = vld [vmem:[%s3 + $0xb8] sm:$0xf]
  %v688 = vld [vmem:[%s3 + $0xbc] sm:$0xf]
  %v689 = vld [vmem:[%s3 + $0xc0] sm:$0xf]
  %v690 = vld [vmem:[%s3 + $0xc4] sm:$0xf]
  %v691 = vld [vmem:[%s3 + $0xc8] sm:$0xf]
  %v692 = vld [vmem:[%s3 + $0xcc] sm:$0xf]
  %v693 = vld [vmem:[%s3 + $0xd0] sm:$0xf]
  %v694 = vld [vmem:[%s3 + $0xd4] sm:$0xf]
  %v695 = vld [vmem:[%s3 + $0xd8] sm:$0xf]
  %v696 = vld [vmem:[%s3 + $0xdc] sm:$0xf]
  %v697 = vld [vmem:[%s3 + $0xe0] sm:$0xf]
  %v698 = vld [vmem:[%s3 + $0xe4] sm:$0xf]
  %v699 = vld [vmem:[%s3 + $0xe8] sm:$0xf]
  %v700 = vld [vmem:[%s3 + $0xec] sm:$0xf]
  %v701 = vld [vmem:[%s3 + $0xf0] sm:$0xf]
  %v702 = vld [vmem:[%s3 + $0xf4] sm:$0xf]
  %v703 = vld [vmem:[%s3 + $0xf8] sm:$0xf]
  %v704 = vld [vmem:[%s3 + $0xfc] sm:$0xf]
  %s705 = scalar_lea.vmem %s3, 256
  %v706 = vld [vmem:[%s705] sm:$0xf]
  %v707 = vld [vmem:[%s705 + $0x4] sm:$0xf]
  %v708 = vld [vmem:[%s705 + $0x8] sm:$0xf]
  %v709 = vld [vmem:[%s705 + $0xc] sm:$0xf]
  %v710 = vld [vmem:[%s705 + $0x10] sm:$0xf]
  %v711 = vld [vmem:[%s705 + $0x14] sm:$0xf]
  %v712 = vld [vmem:[%s705 + $0x18] sm:$0xf]
  %v713 = vld [vmem:[%s705 + $0x1c] sm:$0xf]
  %v714 = vld [vmem:[%s705 + $0x20] sm:$0xf]
  %v715 = vld [vmem:[%s705 + $0x24] sm:$0xf]
  %v716 = vld [vmem:[%s705 + $0x28] sm:$0xf]
  %v717 = vld [vmem:[%s705 + $0x2c] sm:$0xf]
  %v718 = vld [vmem:[%s705 + $0x30] sm:$0xf]
  %v719 = vld [vmem:[%s705 + $0x34] sm:$0xf]
  %v720 = vld [vmem:[%s705 + $0x38] sm:$0xf]
  %v721 = vld [vmem:[%s705 + $0x3c] sm:$0xf]
  %v722 = vld [vmem:[%s705 + $0x40] sm:$0xf]
  %v723 = vld [vmem:[%s705 + $0x44] sm:$0xf]
  %v724 = vld [vmem:[%s705 + $0x48] sm:$0xf]
  %v725 = vld [vmem:[%s705 + $0x4c] sm:$0xf]
  %v726 = vld [vmem:[%s705 + $0x50] sm:$0xf]
  %v727 = vld [vmem:[%s705 + $0x54] sm:$0xf]
  %v728 = vld [vmem:[%s705 + $0x58] sm:$0xf]
  %v729 = vld [vmem:[%s705 + $0x5c] sm:$0xf]
  %v730 = vld [vmem:[%s705 + $0x60] sm:$0xf]
  %v731 = vld [vmem:[%s705 + $0x64] sm:$0xf]
  %v732 = vld [vmem:[%s705 + $0x68] sm:$0xf]
  %v733 = vld [vmem:[%s705 + $0x6c] sm:$0xf]
  %v734 = vld [vmem:[%s705 + $0x70] sm:$0xf]
  %v735 = vld [vmem:[%s705 + $0x74] sm:$0xf]
  %v736 = vld [vmem:[%s705 + $0x78] sm:$0xf]
  %v737 = vld [vmem:[%s705 + $0x7c] sm:$0xf]
  %v738 = vld [vmem:[%s705 + $0x80] sm:$0xf]
  %v739 = vld [vmem:[%s705 + $0x84] sm:$0xf]
  %v740 = vld [vmem:[%s705 + $0x88] sm:$0xf]
  %v741 = vld [vmem:[%s705 + $0x8c] sm:$0xf]
  %v742 = vld [vmem:[%s705 + $0x90] sm:$0xf]
  %v743 = vld [vmem:[%s705 + $0x94] sm:$0xf]
  %v744 = vld [vmem:[%s705 + $0x98] sm:$0xf]
  %v745 = vld [vmem:[%s705 + $0x9c] sm:$0xf]
  %v746 = vld [vmem:[%s705 + $0xa0] sm:$0xf]
  %v747 = vld [vmem:[%s705 + $0xa4] sm:$0xf]
  %v748 = vld [vmem:[%s705 + $0xa8] sm:$0xf]
  %v749 = vld [vmem:[%s705 + $0xac] sm:$0xf]
  %v750 = vld [vmem:[%s705 + $0xb0] sm:$0xf]
  %v751 = vld [vmem:[%s705 + $0xb4] sm:$0xf]
  %v752 = vld [vmem:[%s705 + $0xb8] sm:$0xf]
  %v753 = vld [vmem:[%s705 + $0xbc] sm:$0xf]
  %v754 = vld [vmem:[%s705 + $0xc0] sm:$0xf]
  %v755 = vld [vmem:[%s705 + $0xc4] sm:$0xf]
  %v756 = vld [vmem:[%s705 + $0xc8] sm:$0xf]
  %v757 = vld [vmem:[%s705 + $0xcc] sm:$0xf]
  %v758 = vld [vmem:[%s705 + $0xd0] sm:$0xf]
  %v759 = vld [vmem:[%s705 + $0xd4] sm:$0xf]
  %v760 = vld [vmem:[%s705 + $0xd8] sm:$0xf]
  %v761 = vld [vmem:[%s705 + $0xdc] sm:$0xf]
  %v762 = vld [vmem:[%s705 + $0xe0] sm:$0xf]
  %v763 = vld [vmem:[%s705 + $0xe4] sm:$0xf]
  %v764 = vld [vmem:[%s705 + $0xe8] sm:$0xf]
  %v765 = vld [vmem:[%s705 + $0xec] sm:$0xf]
  %v766 = vld [vmem:[%s705 + $0xf0] sm:$0xf]
  %v767 = vld [vmem:[%s705 + $0xf4] sm:$0xf]
  %v768 = vld [vmem:[%s705 + $0xf8] sm:$0xf]
  %v769 = vld [vmem:[%s705 + $0xfc] sm:$0xf]
  %v772 = vunpack.c.l.b16 %v637
  %v773 = vunpack.c.h.b16 %v637
  %v774 = vunpack.c.l.b16 %v638
  %v775 = vunpack.c.h.b16 %v638
  %v776 = vpack.c.b16 %v772, %v772
  %v777 = vpack.c.b16 %v773, %v773
  %v778 = vpack.c.b16 %v774, %v774
  %v779 = vpack.c.b16 %v775, %v775
  %v780 = vrot.slane %v776, 1
  %v781 = vrot.slane %v777, 1
  %v782 = vrot.slane %v778, 1
  %v783 = vrot.slane %v779, 1
  %v852 = vunpack.c.l.b16 %v706
  %v853 = vunpack.c.l.b16 %v707
  %v854 = vunpack.c.l.b16 %v708
  %v855 = vunpack.c.l.b16 %v709
  %v856 = vunpack.c.l.b16 %v710
  %v857 = vunpack.c.l.b16 %v711
  %v858 = vunpack.c.l.b16 %v712
  %v859 = vunpack.c.l.b16 %v713
  %v860 = vunpack.c.l.b16 %v714
  %v861 = vunpack.c.l.b16 %v715
  %v862 = vunpack.c.l.b16 %v716
  %v863 = vunpack.c.l.b16 %v717
  %v864 = vunpack.c.l.b16 %v718
  %v865 = vunpack.c.l.b16 %v719
  %v866 = vunpack.c.l.b16 %v720
  %v867 = vunpack.c.l.b16 %v721
  %v868 = vunpack.c.l.b16 %v722
  %v869 = vunpack.c.l.b16 %v723
  %v870 = vunpack.c.l.b16 %v724
  %v871 = vunpack.c.l.b16 %v725
  %v872 = vunpack.c.l.b16 %v726
  %v873 = vunpack.c.l.b16 %v727
  %v874 = vunpack.c.l.b16 %v728
  %v875 = vunpack.c.l.b16 %v729
  %v876 = vunpack.c.l.b16 %v730
  %v877 = vunpack.c.l.b16 %v731
  %v878 = vunpack.c.l.b16 %v732
  %v879 = vunpack.c.l.b16 %v733
  %v880 = vunpack.c.l.b16 %v734
  %v881 = vunpack.c.l.b16 %v735
  %v882 = vunpack.c.l.b16 %v736
  %v883 = vunpack.c.l.b16 %v737
  %v884 = vunpack.c.l.b16 %v738
  %v885 = vunpack.c.l.b16 %v739
  %v886 = vunpack.c.l.b16 %v740
  %v887 = vunpack.c.l.b16 %v741
  %v888 = vunpack.c.l.b16 %v742
  %v889 = vunpack.c.l.b16 %v743
  %v890 = vunpack.c.l.b16 %v744
  %v891 = vunpack.c.l.b16 %v745
  %v892 = vunpack.c.l.b16 %v746
  %v893 = vunpack.c.l.b16 %v747
  %v894 = vunpack.c.l.b16 %v748
  %v895 = vunpack.c.l.b16 %v749
  %v896 = vunpack.c.l.b16 %v750
  %v897 = vunpack.c.l.b16 %v751
  %v898 = vunpack.c.l.b16 %v752
  %v899 = vunpack.c.l.b16 %v753
  %v900 = vunpack.c.l.b16 %v754
  %v901 = vunpack.c.l.b16 %v755
  %v902 = vunpack.c.l.b16 %v756
  %v903 = vunpack.c.l.b16 %v757
  %v904 = vunpack.c.l.b16 %v758
  %v905 = vunpack.c.l.b16 %v759
  %v906 = vunpack.c.l.b16 %v760
  %v907 = vunpack.c.l.b16 %v761
  %v908 = vunpack.c.l.b16 %v762
  %v909 = vunpack.c.l.b16 %v763
  %v910 = vunpack.c.l.b16 %v764
  %v911 = vunpack.c.l.b16 %v765
  %v912 = vunpack.c.l.b16 %v766
  %v913 = vunpack.c.l.b16 %v767
  %v914 = vunpack.c.l.b16 %v768
  %v915 = vunpack.c.l.b16 %v769
  %v916 = vpack.c.b16 %v853, %v852
  %v917 = vpack.c.b16 %v855, %v854
  %v918 = vpack.c.b16 %v857, %v856
  %v919 = vpack.c.b16 %v859, %v858
  %v920 = vpack.c.b16 %v861, %v860
  %v921 = vpack.c.b16 %v863, %v862
  %v922 = vpack.c.b16 %v865, %v864
  %v923 = vpack.c.b16 %v867, %v866
  %v924 = vpack.c.b16 %v869, %v868
  %v925 = vpack.c.b16 %v871, %v870
  %v926 = vpack.c.b16 %v873, %v872
  %v927 = vpack.c.b16 %v875, %v874
  %v928 = vpack.c.b16 %v877, %v876
  %v929 = vpack.c.b16 %v879, %v878
  %v930 = vpack.c.b16 %v881, %v880
  %v931 = vpack.c.b16 %v883, %v882
  %v932 = vpack.c.b16 %v885, %v884
  %v933 = vpack.c.b16 %v887, %v886
  %v934 = vpack.c.b16 %v889, %v888
  %v935 = vpack.c.b16 %v891, %v890
  %v936 = vpack.c.b16 %v893, %v892
  %v937 = vpack.c.b16 %v895, %v894
  %v938 = vpack.c.b16 %v897, %v896
  %v939 = vpack.c.b16 %v899, %v898
  %v940 = vpack.c.b16 %v901, %v900
  %v941 = vpack.c.b16 %v903, %v902
  %v942 = vpack.c.b16 %v905, %v904
  %v943 = vpack.c.b16 %v907, %v906
  %v944 = vpack.c.b16 %v909, %v908
  %v945 = vpack.c.b16 %v911, %v910
  %v946 = vpack.c.b16 %v913, %v912
  %v947 = vpack.c.b16 %v915, %v914
  %980 = vmatpush.bf16.msra.mxu0 %v923
  %981 = vmatpush.bf16.msra.mxu0 %v922
  %982 = vmatpush.bf16.msra.mxu0 %v921
  %983 = vmatpush.bf16.msra.mxu0 %v920
  %984 = vmatpush.bf16.msra.mxu0 %v919
  %985 = vmatpush.bf16.msra.mxu0 %v918
  %986 = vmatpush.bf16.msra.mxu0 %v917
  %987 = vmatpush.bf16.msra.mxu0 %v916
  %988 = vmatmul.bf16.gmra.mxu0 %v780
  %v989 = vpop.f32.mrf.mxu0
  %v990 = vadd.f32 0.0, %v989
  %v991 = vpop.f32.mrf.mxu0
  %992 = vdwg.mxu0
  %993 = vmatpush.bf16.msra.mxu0 %v931
  %994 = vmatpush.bf16.msra.mxu0 %v930
  %995 = vmatpush.bf16.msra.mxu0 %v929
  %996 = vmatpush.bf16.msra.mxu0 %v928
  %997 = vmatpush.bf16.msra.mxu0 %v927
  %998 = vmatpush.bf16.msra.mxu0 %v926
  %999 = vmatpush.bf16.msra.mxu0 %v925
  %1000 = vmatpush.bf16.msra.mxu0 %v924
  %1001 = vmatmul.bf16.gmra.mxu0 %v781
  %v1002 = vpop.f32.mrf.mxu0
  %v1003 = vadd.f32 %v990, %v1002
  %v1004 = vpop.f32.mrf.mxu0
  %1005 = vdwg.mxu0
  %1006 = vmatpush.bf16.msra.mxu0 %v939
  %1007 = vmatpush.bf16.msra.mxu0 %v938
  %1008 = vmatpush.bf16.msra.mxu0 %v937
  %1009 = vmatpush.bf16.msra.mxu0 %v936
  %1010 = vmatpush.bf16.msra.mxu0 %v935
  %1011 = vmatpush.bf16.msra.mxu0 %v934
  %1012 = vmatpush.bf16.msra.mxu0 %v933
  %1013 = vmatpush.bf16.msra.mxu0 %v932
  %1014 = vmatmul.bf16.gmra.mxu0 %v782
  %v1015 = vpop.f32.mrf.mxu0
  %v1016 = vadd.f32 %v1003, %v1015
  %v1017 = vpop.f32.mrf.mxu0
  %1018 = vdwg.mxu0
  %1019 = vmatpush.bf16.msra.mxu0 %v947
  %1020 = vmatpush.bf16.msra.mxu0 %v946
  %1021 = vmatpush.bf16.msra.mxu0 %v945
  %1022 = vmatpush.bf16.msra.mxu0 %v944
  %1023 = vmatpush.bf16.msra.mxu0 %v943
  %1024 = vmatpush.bf16.msra.mxu0 %v942
  %1025 = vmatpush.bf16.msra.mxu0 %v941
  %1026 = vmatpush.bf16.msra.mxu0 %v940
  %1027 = vmatmul.bf16.gmra.mxu0 %v783
  %v1028 = vpop.f32.mrf.mxu0
  %v1029 = vadd.f32 %v1016, %v1028
  %v1030 = vpop.f32.mrf.mxu0
  %1031 = vdwg.mxu0
  %v1100 = vunpack.c.l.b16 %v641
  %v1101 = vunpack.c.l.b16 %v642
  %v1102 = vunpack.c.l.b16 %v643
  %v1103 = vunpack.c.l.b16 %v644
  %v1104 = vunpack.c.l.b16 %v645
  %v1105 = vunpack.c.l.b16 %v646
  %v1106 = vunpack.c.l.b16 %v647
  %v1107 = vunpack.c.l.b16 %v648
  %v1108 = vunpack.c.l.b16 %v649
  %v1109 = vunpack.c.l.b16 %v650
  %v1110 = vunpack.c.l.b16 %v651
  %v1111 = vunpack.c.l.b16 %v652
  %v1112 = vunpack.c.l.b16 %v653
  %v1113 = vunpack.c.l.b16 %v654
  %v1114 = vunpack.c.l.b16 %v655
  %v1115 = vunpack.c.l.b16 %v656
  %v1116 = vunpack.c.l.b16 %v657
  %v1117 = vunpack.c.l.b16 %v658
  %v1118 = vunpack.c.l.b16 %v659
  %v1119 = vunpack.c.l.b16 %v660
  %v1120 = vunpack.c.l.b16 %v661
  %v1121 = vunpack.c.l.b16 %v662
  %v1122 = vunpack.c.l.b16 %v663
  %v1123 = vunpack.c.l.b16 %v664
  %v1124 = vunpack.c.l.b16 %v665
  %v1125 = vunpack.c.l.b16 %v666
  %v1126 = vunpack.c.l.b16 %v667
  %v1127 = vunpack.c.l.b16 %v668
  %v1128 = vunpack.c.l.b16 %v669
  %v1129 = vunpack.c.l.b16 %v670
  %v1130 = vunpack.c.l.b16 %v671
  %v1131 = vunpack.c.l.b16 %v672
  %v1132 = vunpack.c.l.b16 %v673
  %v1133 = vunpack.c.l.b16 %v674
  %v1134 = vunpack.c.l.b16 %v675
  %v1135 = vunpack.c.l.b16 %v676
  %v1136 = vunpack.c.l.b16 %v677
  %v1137 = vunpack.c.l.b16 %v678
  %v1138 = vunpack.c.l.b16 %v679
  %v1139 = vunpack.c.l.b16 %v680
  %v1140 = vunpack.c.l.b16 %v681
  %v1141 = vunpack.c.l.b16 %v682
  %v1142 = vunpack.c.l.b16 %v683
  %v1143 = vunpack.c.l.b16 %v684
  %v1144 = vunpack.c.l.b16 %v685
  %v1145 = vunpack.c.l.b16 %v686
  %v1146 = vunpack.c.l.b16 %v687
  %v1147 = vunpack.c.l.b16 %v688
  %v1148 = vunpack.c.l.b16 %v689
  %v1149 = vunpack.c.l.b16 %v690
  %v1150 = vunpack.c.l.b16 %v691
  %v1151 = vunpack.c.l.b16 %v692
  %v1152 = vunpack.c.l.b16 %v693
  %v1153 = vunpack.c.l.b16 %v694
  %v1154 = vunpack.c.l.b16 %v695
  %v1155 = vunpack.c.l.b16 %v696
  %v1156 = vunpack.c.l.b16 %v697
  %v1157 = vunpack.c.l.b16 %v698
  %v1158 = vunpack.c.l.b16 %v699
  %v1159 = vunpack.c.l.b16 %v700
  %v1160 = vunpack.c.l.b16 %v701
  %v1161 = vunpack.c.l.b16 %v702
  %v1162 = vunpack.c.l.b16 %v703
  %v1163 = vunpack.c.l.b16 %v704
  %v1164 = vpack.c.b16 %v1101, %v1100
  %v1165 = vpack.c.b16 %v1103, %v1102
  %v1166 = vpack.c.b16 %v1105, %v1104
  %v1167 = vpack.c.b16 %v1107, %v1106
  %v1168 = vpack.c.b16 %v1109, %v1108
  %v1169 = vpack.c.b16 %v1111, %v1110
  %v1170 = vpack.c.b16 %v1113, %v1112
  %v1171 = vpack.c.b16 %v1115, %v1114
  %v1172 = vpack.c.b16 %v1117, %v1116
  %v1173 = vpack.c.b16 %v1119, %v1118
  %v1174 = vpack.c.b16 %v1121, %v1120
  %v1175 = vpack.c.b16 %v1123, %v1122
  %v1176 = vpack.c.b16 %v1125, %v1124
  %v1177 = vpack.c.b16 %v1127, %v1126
  %v1178 = vpack.c.b16 %v1129, %v1128
  %v1179 = vpack.c.b16 %v1131, %v1130
  %v1180 = vpack.c.b16 %v1133, %v1132
  %v1181 = vpack.c.b16 %v1135, %v1134
  %v1182 = vpack.c.b16 %v1137, %v1136
  %v1183 = vpack.c.b16 %v1139, %v1138
  %v1184 = vpack.c.b16 %v1141, %v1140
  %v1185 = vpack.c.b16 %v1143, %v1142
  %v1186 = vpack.c.b16 %v1145, %v1144
  %v1187 = vpack.c.b16 %v1147, %v1146
  %v1188 = vpack.c.b16 %v1149, %v1148
  %v1189 = vpack.c.b16 %v1151, %v1150
  %v1190 = vpack.c.b16 %v1153, %v1152
  %v1191 = vpack.c.b16 %v1155, %v1154
  %v1192 = vpack.c.b16 %v1157, %v1156
  %v1193 = vpack.c.b16 %v1159, %v1158
  %v1194 = vpack.c.b16 %v1161, %v1160
  %v1195 = vpack.c.b16 %v1163, %v1162
  %1228 = vmatpush.bf16.msra.mxu0 %v1171
  %1229 = vmatpush.bf16.msra.mxu0 %v1170
  %1230 = vmatpush.bf16.msra.mxu0 %v1169
  %1231 = vmatpush.bf16.msra.mxu0 %v1168
  %1232 = vmatpush.bf16.msra.mxu0 %v1167
  %1233 = vmatpush.bf16.msra.mxu0 %v1166
  %1234 = vmatpush.bf16.msra.mxu0 %v1165
  %1235 = vmatpush.bf16.msra.mxu0 %v1164
  %1236 = vmatmul.bf16.gmra.mxu0 %v776
  %v1237 = vpop.f32.mrf.mxu0
  %v1238 = vadd.f32 %v1029, %v1237
  %v1239 = vpop.f32.mrf.mxu0
  %1240 = vdwg.mxu0
  %1241 = vmatpush.bf16.msra.mxu0 %v1179
  %1242 = vmatpush.bf16.msra.mxu0 %v1178
  %1243 = vmatpush.bf16.msra.mxu0 %v1177
  %1244 = vmatpush.bf16.msra.mxu0 %v1176
  %1245 = vmatpush.bf16.msra.mxu0 %v1175
  %1246 = vmatpush.bf16.msra.mxu0 %v1174
  %1247 = vmatpush.bf16.msra.mxu0 %v1173
  %1248 = vmatpush.bf16.msra.mxu0 %v1172
  %1249 = vmatmul.bf16.gmra.mxu0 %v777
  %v1250 = vpop.f32.mrf.mxu0
  %v1251 = vadd.f32 %v1238, %v1250
  %v1252 = vpop.f32.mrf.mxu0
  %1253 = vdwg.mxu0
  %1254 = vmatpush.bf16.msra.mxu0 %v1187
  %1255 = vmatpush.bf16.msra.mxu0 %v1186
  %1256 = vmatpush.bf16.msra.mxu0 %v1185
  %1257 = vmatpush.bf16.msra.mxu0 %v1184
  %1258 = vmatpush.bf16.msra.mxu0 %v1183
  %1259 = vmatpush.bf16.msra.mxu0 %v1182
  %1260 = vmatpush.bf16.msra.mxu0 %v1181
  %1261 = vmatpush.bf16.msra.mxu0 %v1180
  %1262 = vmatmul.bf16.gmra.mxu0 %v778
  %v1263 = vpop.f32.mrf.mxu0
  %v1264 = vadd.f32 %v1251, %v1263
  %v1265 = vpop.f32.mrf.mxu0
  %1266 = vdwg.mxu0
  %1267 = vmatpush.bf16.msra.mxu0 %v1195
  %1268 = vmatpush.bf16.msra.mxu0 %v1194
  %1269 = vmatpush.bf16.msra.mxu0 %v1193
  %1270 = vmatpush.bf16.msra.mxu0 %v1192
  %1271 = vmatpush.bf16.msra.mxu0 %v1191
  %1272 = vmatpush.bf16.msra.mxu0 %v1190
  %1273 = vmatpush.bf16.msra.mxu0 %v1189
  %1274 = vmatpush.bf16.msra.mxu0 %v1188
  %1275 = vmatmul.bf16.gmra.mxu0 %v779
  %v1276 = vpop.f32.mrf.mxu0
  %v1277 = vadd.f32 %v1264, %v1276
  %v1278 = vpop.f32.mrf.mxu0
  %1279 = vdwg.mxu0
  %s1280 = scalar_lea.vmem %s3, 512
  %v1281 = vld [vmem:[%s1280] sm:$0xf]
  %v1282 = vld [vmem:[%s1280 + $0x4] sm:$0xf]
  %v1283 = vld [vmem:[%s1280 + $0x8] sm:$0xf]
  %v1284 = vld [vmem:[%s1280 + $0xc] sm:$0xf]
  %v1285 = vld [vmem:[%s1280 + $0x10] sm:$0xf]
  %v1286 = vld [vmem:[%s1280 + $0x14] sm:$0xf]
  %v1287 = vld [vmem:[%s1280 + $0x18] sm:$0xf]
  %v1288 = vld [vmem:[%s1280 + $0x1c] sm:$0xf]
  %v1289 = vld [vmem:[%s1280 + $0x20] sm:$0xf]
  %v1290 = vld [vmem:[%s1280 + $0x24] sm:$0xf]
  %v1291 = vld [vmem:[%s1280 + $0x28] sm:$0xf]
  %v1292 = vld [vmem:[%s1280 + $0x2c] sm:$0xf]
  %v1293 = vld [vmem:[%s1280 + $0x30] sm:$0xf]
  %v1294 = vld [vmem:[%s1280 + $0x34] sm:$0xf]
  %v1295 = vld [vmem:[%s1280 + $0x38] sm:$0xf]
  %v1296 = vld [vmem:[%s1280 + $0x3c] sm:$0xf]
  %v1297 = vld [vmem:[%s1280 + $0x40] sm:$0xf]
  %v1298 = vld [vmem:[%s1280 + $0x44] sm:$0xf]
  %v1299 = vld [vmem:[%s1280 + $0x48] sm:$0xf]
  %v1300 = vld [vmem:[%s1280 + $0x4c] sm:$0xf]
  %v1301 = vld [vmem:[%s1280 + $0x50] sm:$0xf]
  %v1302 = vld [vmem:[%s1280 + $0x54] sm:$0xf]
  %v1303 = vld [vmem:[%s1280 + $0x58] sm:$0xf]
  %v1304 = vld [vmem:[%s1280 + $0x5c] sm:$0xf]
  %v1305 = vld [vmem:[%s1280 + $0x60] sm:$0xf]
  %v1306 = vld [vmem:[%s1280 + $0x64] sm:$0xf]
  %v1307 = vld [vmem:[%s1280 + $0x68] sm:$0xf]
  %v1308 = vld [vmem:[%s1280 + $0x6c] sm:$0xf]
  %v1309 = vld [vmem:[%s1280 + $0x70] sm:$0xf]
  %v1310 = vld [vmem:[%s1280 + $0x74] sm:$0xf]
  %v1311 = vld [vmem:[%s1280 + $0x78] sm:$0xf]
  %v1312 = vld [vmem:[%s1280 + $0x7c] sm:$0xf]
  %v1313 = vld [vmem:[%s1280 + $0x80] sm:$0xf]
  %v1314 = vld [vmem:[%s1280 + $0x84] sm:$0xf]
  %v1315 = vld [vmem:[%s1280 + $0x88] sm:$0xf]
  %v1316 = vld [vmem:[%s1280 + $0x8c] sm:$0xf]
  %v1317 = vld [vmem:[%s1280 + $0x90] sm:$0xf]
  %v1318 = vld [vmem:[%s1280 + $0x94] sm:$0xf]
  %v1319 = vld [vmem:[%s1280 + $0x98] sm:$0xf]
  %v1320 = vld [vmem:[%s1280 + $0x9c] sm:$0xf]
  %v1321 = vld [vmem:[%s1280 + $0xa0] sm:$0xf]
  %v1322 = vld [vmem:[%s1280 + $0xa4] sm:$0xf]
  %v1323 = vld [vmem:[%s1280 + $0xa8] sm:$0xf]
  %v1324 = vld [vmem:[%s1280 + $0xac] sm:$0xf]
  %v1325 = vld [vmem:[%s1280 + $0xb0] sm:$0xf]
  %v1326 = vld [vmem:[%s1280 + $0xb4] sm:$0xf]
  %v1327 = vld [vmem:[%s1280 + $0xb8] sm:$0xf]
  %v1328 = vld [vmem:[%s1280 + $0xbc] sm:$0xf]
  %v1329 = vld [vmem:[%s1280 + $0xc0] sm:$0xf]
  %v1330 = vld [vmem:[%s1280 + $0xc4] sm:$0xf]
  %v1331 = vld [vmem:[%s1280 + $0xc8] sm:$0xf]
  %v1332 = vld [vmem:[%s1280 + $0xcc] sm:$0xf]
  %v1333 = vld [vmem:[%s1280 + $0xd0] sm:$0xf]
  %v1334 = vld [vmem:[%s1280 + $0xd4] sm:$0xf]
  %v1335 = vld [vmem:[%s1280 + $0xd8] sm:$0xf]
  %v1336 = vld [vmem:[%s1280 + $0xdc] sm:$0xf]
  %v1337 = vld [vmem:[%s1280 + $0xe0] sm:$0xf]
  %v1338 = vld [vmem:[%s1280 + $0xe4] sm:$0xf]
  %v1339 = vld [vmem:[%s1280 + $0xe8] sm:$0xf]
  %v1340 = vld [vmem:[%s1280 + $0xec] sm:$0xf]
  %v1341 = vld [vmem:[%s1280 + $0xf0] sm:$0xf]
  %v1342 = vld [vmem:[%s1280 + $0xf4] sm:$0xf]
  %v1343 = vld [vmem:[%s1280 + $0xf8] sm:$0xf]
  %v1344 = vld [vmem:[%s1280 + $0xfc] sm:$0xf]
  %v1345 = vrot.slane %v776, 2
  %v1346 = vrot.slane %v777, 2
  %v1347 = vrot.slane %v778, 2
  %v1348 = vrot.slane %v779, 2
  %v1417 = vunpack.c.l.b16 %v1281
  %v1418 = vunpack.c.l.b16 %v1282
  %v1419 = vunpack.c.l.b16 %v1283
  %v1420 = vunpack.c.l.b16 %v1284
  %v1421 = vunpack.c.l.b16 %v1285
  %v1422 = vunpack.c.l.b16 %v1286
  %v1423 = vunpack.c.l.b16 %v1287
  %v1424 = vunpack.c.l.b16 %v1288
  %v1425 = vunpack.c.l.b16 %v1289
  %v1426 = vunpack.c.l.b16 %v1290
  %v1427 = vunpack.c.l.b16 %v1291
  %v1428 = vunpack.c.l.b16 %v1292
  %v1429 = vunpack.c.l.b16 %v1293
  %v1430 = vunpack.c.l.b16 %v1294
  %v1431 = vunpack.c.l.b16 %v1295
  %v1432 = vunpack.c.l.b16 %v1296
  %v1433 = vunpack.c.l.b16 %v1297
  %v1434 = vunpack.c.l.b16 %v1298
  %v1435 = vunpack.c.l.b16 %v1299
  %v1436 = vunpack.c.l.b16 %v1300
  %v1437 = vunpack.c.l.b16 %v1301
  %v1438 = vunpack.c.l.b16 %v1302
  %v1439 = vunpack.c.l.b16 %v1303
  %v1440 = vunpack.c.l.b16 %v1304
  %v1441 = vunpack.c.l.b16 %v1305
  %v1442 = vunpack.c.l.b16 %v1306
  %v1443 = vunpack.c.l.b16 %v1307
  %v1444 = vunpack.c.l.b16 %v1308
  %v1445 = vunpack.c.l.b16 %v1309
  %v1446 = vunpack.c.l.b16 %v1310
  %v1447 = vunpack.c.l.b16 %v1311
  %v1448 = vunpack.c.l.b16 %v1312
  %v1449 = vunpack.c.l.b16 %v1313
  %v1450 = vunpack.c.l.b16 %v1314
  %v1451 = vunpack.c.l.b16 %v1315
  %v1452 = vunpack.c.l.b16 %v1316
  %v1453 = vunpack.c.l.b16 %v1317
  %v1454 = vunpack.c.l.b16 %v1318
  %v1455 = vunpack.c.l.b16 %v1319
  %v1456 = vunpack.c.l.b16 %v1320
  %v1457 = vunpack.c.l.b16 %v1321
  %v1458 = vunpack.c.l.b16 %v1322
  %v1459 = vunpack.c.l.b16 %v1323
  %v1460 = vunpack.c.l.b16 %v1324
  %v1461 = vunpack.c.l.b16 %v1325
  %v1462 = vunpack.c.l.b16 %v1326
  %v1463 = vunpack.c.l.b16 %v1327
  %v1464 = vunpack.c.l.b16 %v1328
  %v1465 = vunpack.c.l.b16 %v1329
  %v1466 = vunpack.c.l.b16 %v1330
  %v1467 = vunpack.c.l.b16 %v1331
  %v1468 = vunpack.c.l.b16 %v1332
  %v1469 = vunpack.c.l.b16 %v1333
  %v1470 = vunpack.c.l.b16 %v1334
  %v1471 = vunpack.c.l.b16 %v1335
  %v1472 = vunpack.c.l.b16 %v1336
  %v1473 = vunpack.c.l.b16 %v1337
  %v1474 = vunpack.c.l.b16 %v1338
  %v1475 = vunpack.c.l.b16 %v1339
  %v1476 = vunpack.c.l.b16 %v1340
  %v1477 = vunpack.c.l.b16 %v1341
  %v1478 = vunpack.c.l.b16 %v1342
  %v1479 = vunpack.c.l.b16 %v1343
  %v1480 = vunpack.c.l.b16 %v1344
  %v1481 = vpack.c.b16 %v1418, %v1417
  %v1482 = vpack.c.b16 %v1420, %v1419
  %v1483 = vpack.c.b16 %v1422, %v1421
  %v1484 = vpack.c.b16 %v1424, %v1423
  %v1485 = vpack.c.b16 %v1426, %v1425
  %v1486 = vpack.c.b16 %v1428, %v1427
  %v1487 = vpack.c.b16 %v1430, %v1429
  %v1488 = vpack.c.b16 %v1432, %v1431
  %v1489 = vpack.c.b16 %v1434, %v1433
  %v1490 = vpack.c.b16 %v1436, %v1435
  %v1491 = vpack.c.b16 %v1438, %v1437
  %v1492 = vpack.c.b16 %v1440, %v1439
  %v1493 = vpack.c.b16 %v1442, %v1441
  %v1494 = vpack.c.b16 %v1444, %v1443
  %v1495 = vpack.c.b16 %v1446, %v1445
  %v1496 = vpack.c.b16 %v1448, %v1447
  %v1497 = vpack.c.b16 %v1450, %v1449
  %v1498 = vpack.c.b16 %v1452, %v1451
  %v1499 = vpack.c.b16 %v1454, %v1453
  %v1500 = vpack.c.b16 %v1456, %v1455
  %v1501 = vpack.c.b16 %v1458, %v1457
  %v1502 = vpack.c.b16 %v1460, %v1459
  %v1503 = vpack.c.b16 %v1462, %v1461
  %v1504 = vpack.c.b16 %v1464, %v1463
  %v1505 = vpack.c.b16 %v1466, %v1465
  %v1506 = vpack.c.b16 %v1468, %v1467
  %v1507 = vpack.c.b16 %v1470, %v1469
  %v1508 = vpack.c.b16 %v1472, %v1471
  %v1509 = vpack.c.b16 %v1474, %v1473
  %v1510 = vpack.c.b16 %v1476, %v1475
  %v1511 = vpack.c.b16 %v1478, %v1477
  %v1512 = vpack.c.b16 %v1480, %v1479
  %1545 = vmatpush.bf16.msra.mxu0 %v1488
  %1546 = vmatpush.bf16.msra.mxu0 %v1487
  %1547 = vmatpush.bf16.msra.mxu0 %v1486
  %1548 = vmatpush.bf16.msra.mxu0 %v1485
  %1549 = vmatpush.bf16.msra.mxu0 %v1484
  %1550 = vmatpush.bf16.msra.mxu0 %v1483
  %1551 = vmatpush.bf16.msra.mxu0 %v1482
  %1552 = vmatpush.bf16.msra.mxu0 %v1481
  %1553 = vmatmul.bf16.gmra.mxu0 %v1345
  %v1554 = vpop.f32.mrf.mxu0
  %v1555 = vadd.f32 0.0, %v1554
  %v1556 = vpop.f32.mrf.mxu0
  %1557 = vdwg.mxu0
  %1558 = vmatpush.bf16.msra.mxu0 %v1496
  %1559 = vmatpush.bf16.msra.mxu0 %v1495
  %1560 = vmatpush.bf16.msra.mxu0 %v1494
  %1561 = vmatpush.bf16.msra.mxu0 %v1493
  %1562 = vmatpush.bf16.msra.mxu0 %v1492
  %1563 = vmatpush.bf16.msra.mxu0 %v1491
  %1564 = vmatpush.bf16.msra.mxu0 %v1490
  %1565 = vmatpush.bf16.msra.mxu0 %v1489
  %1566 = vmatmul.bf16.gmra.mxu0 %v1346
  %v1567 = vpop.f32.mrf.mxu0
  %v1568 = vadd.f32 %v1555, %v1567
  %v1569 = vpop.f32.mrf.mxu0
  %1570 = vdwg.mxu0
  %1571 = vmatpush.bf16.msra.mxu0 %v1504
  %1572 = vmatpush.bf16.msra.mxu0 %v1503
  %1573 = vmatpush.bf16.msra.mxu0 %v1502
  %1574 = vmatpush.bf16.msra.mxu0 %v1501
  %1575 = vmatpush.bf16.msra.mxu0 %v1500
  %1576 = vmatpush.bf16.msra.mxu0 %v1499
  %1577 = vmatpush.bf16.msra.mxu0 %v1498
  %1578 = vmatpush.bf16.msra.mxu0 %v1497
  %1579 = vmatmul.bf16.gmra.mxu0 %v1347
  %v1580 = vpop.f32.mrf.mxu0
  %v1581 = vadd.f32 %v1568, %v1580
  %v1582 = vpop.f32.mrf.mxu0
  %1583 = vdwg.mxu0
  %1584 = vmatpush.bf16.msra.mxu0 %v1512
  %1585 = vmatpush.bf16.msra.mxu0 %v1511
  %1586 = vmatpush.bf16.msra.mxu0 %v1510
  %1587 = vmatpush.bf16.msra.mxu0 %v1509
  %1588 = vmatpush.bf16.msra.mxu0 %v1508
  %1589 = vmatpush.bf16.msra.mxu0 %v1507
  %1590 = vmatpush.bf16.msra.mxu0 %v1506
  %1591 = vmatpush.bf16.msra.mxu0 %v1505
  %1592 = vmatmul.bf16.gmra.mxu0 %v1348
  %v1593 = vpop.f32.mrf.mxu0
  %v1594 = vadd.f32 %v1581, %v1593
  %v1595 = vpop.f32.mrf.mxu0
  %1596 = vdwg.mxu0
  %v1597 = vadd.f32 %v1277, %v1594
  %s1598 = scalar_lea.vmem %s3, 768
  %v1599 = vld [vmem:[%s1598] sm:$0xf]
  %v1600 = vld [vmem:[%s1598 + $0x4] sm:$0xf]
  %v1601 = vld [vmem:[%s1598 + $0x8] sm:$0xf]
  %v1602 = vld [vmem:[%s1598 + $0xc] sm:$0xf]
  %v1603 = vld [vmem:[%s1598 + $0x10] sm:$0xf]
  %v1604 = vld [vmem:[%s1598 + $0x14] sm:$0xf]
  %v1605 = vld [vmem:[%s1598 + $0x18] sm:$0xf]
  %v1606 = vld [vmem:[%s1598 + $0x1c] sm:$0xf]
  %v1607 = vld [vmem:[%s1598 + $0x20] sm:$0xf]
  %v1608 = vld [vmem:[%s1598 + $0x24] sm:$0xf]
  %v1609 = vld [vmem:[%s1598 + $0x28] sm:$0xf]
  %v1610 = vld [vmem:[%s1598 + $0x2c] sm:$0xf]
  %v1611 = vld [vmem:[%s1598 + $0x30] sm:$0xf]
  %v1612 = vld [vmem:[%s1598 + $0x34] sm:$0xf]
  %v1613 = vld [vmem:[%s1598 + $0x38] sm:$0xf]
  %v1614 = vld [vmem:[%s1598 + $0x3c] sm:$0xf]
  %v1615 = vld [vmem:[%s1598 + $0x40] sm:$0xf]
  %v1616 = vld [vmem:[%s1598 + $0x44] sm:$0xf]
  %v1617 = vld [vmem:[%s1598 + $0x48] sm:$0xf]
  %v1618 = vld [vmem:[%s1598 + $0x4c] sm:$0xf]
  %v1619 = vld [vmem:[%s1598 + $0x50] sm:$0xf]
  %v1620 = vld [vmem:[%s1598 + $0x54] sm:$0xf]
  %v1621 = vld [vmem:[%s1598 + $0x58] sm:$0xf]
  %v1622 = vld [vmem:[%s1598 + $0x5c] sm:$0xf]
  %v1623 = vld [vmem:[%s1598 + $0x60] sm:$0xf]
  %v1624 = vld [vmem:[%s1598 + $0x64] sm:$0xf]
  %v1625 = vld [vmem:[%s1598 + $0x68] sm:$0xf]
  %v1626 = vld [vmem:[%s1598 + $0x6c] sm:$0xf]
  %v1627 = vld [vmem:[%s1598 + $0x70] sm:$0xf]
  %v1628 = vld [vmem:[%s1598 + $0x74] sm:$0xf]
  %v1629 = vld [vmem:[%s1598 + $0x78] sm:$0xf]
  %v1630 = vld [vmem:[%s1598 + $0x7c] sm:$0xf]
  %v1631 = vld [vmem:[%s1598 + $0x80] sm:$0xf]
  %v1632 = vld [vmem:[%s1598 + $0x84] sm:$0xf]
  %v1633 = vld [vmem:[%s1598 + $0x88] sm:$0xf]
  %v1634 = vld [vmem:[%s1598 + $0x8c] sm:$0xf]
  %v1635 = vld [vmem:[%s1598 + $0x90] sm:$0xf]
  %v1636 = vld [vmem:[%s1598 + $0x94] sm:$0xf]
  %v1637 = vld [vmem:[%s1598 + $0x98] sm:$0xf]
  %v1638 = vld [vmem:[%s1598 + $0x9c] sm:$0xf]
  %v1639 = vld [vmem:[%s1598 + $0xa0] sm:$0xf]
  %v1640 = vld [vmem:[%s1598 + $0xa4] sm:$0xf]
  %v1641 = vld [vmem:[%s1598 + $0xa8] sm:$0xf]
  %v1642 = vld [vmem:[%s1598 + $0xac] sm:$0xf]
  %v1643 = vld [vmem:[%s1598 + $0xb0] sm:$0xf]
  %v1644 = vld [vmem:[%s1598 + $0xb4] sm:$0xf]
  %v1645 = vld [vmem:[%s1598 + $0xb8] sm:$0xf]
  %v1646 = vld [vmem:[%s1598 + $0xbc] sm:$0xf]
  %v1647 = vld [vmem:[%s1598 + $0xc0] sm:$0xf]
  %v1648 = vld [vmem:[%s1598 + $0xc4] sm:$0xf]
  %v1649 = vld [vmem:[%s1598 + $0xc8] sm:$0xf]
  %v1650 = vld [vmem:[%s1598 + $0xcc] sm:$0xf]
  %v1651 = vld [vmem:[%s1598 + $0xd0] sm:$0xf]
  %v1652 = vld [vmem:[%s1598 + $0xd4] sm:$0xf]
  %v1653 = vld [vmem:[%s1598 + $0xd8] sm:$0xf]
  %v1654 = vld [vmem:[%s1598 + $0xdc] sm:$0xf]
  %v1655 = vld [vmem:[%s1598 + $0xe0] sm:$0xf]
  %v1656 = vld [vmem:[%s1598 + $0xe4] sm:$0xf]
  %v1657 = vld [vmem:[%s1598 + $0xe8] sm:$0xf]
  %v1658 = vld [vmem:[%s1598 + $0xec] sm:$0xf]
  %v1659 = vld [vmem:[%s1598 + $0xf0] sm:$0xf]
  %v1660 = vld [vmem:[%s1598 + $0xf4] sm:$0xf]
  %v1661 = vld [vmem:[%s1598 + $0xf8] sm:$0xf]
  %v1662 = vld [vmem:[%s1598 + $0xfc] sm:$0xf]
  %v1663 = vrot.slane %v776, 3
  %v1664 = vrot.slane %v777, 3
  %v1665 = vrot.slane %v778, 3
  %v1666 = vrot.slane %v779, 3
  %v1735 = vunpack.c.l.b16 %v1599
  %v1736 = vunpack.c.l.b16 %v1600
  %v1737 = vunpack.c.l.b16 %v1601
  %v1738 = vunpack.c.l.b16 %v1602
  %v1739 = vunpack.c.l.b16 %v1603
  %v1740 = vunpack.c.l.b16 %v1604
  %v1741 = vunpack.c.l.b16 %v1605
  %v1742 = vunpack.c.l.b16 %v1606
  %v1743 = vunpack.c.l.b16 %v1607
  %v1744 = vunpack.c.l.b16 %v1608
  %v1745 = vunpack.c.l.b16 %v1609
  %v1746 = vunpack.c.l.b16 %v1610
  %v1747 = vunpack.c.l.b16 %v1611
  %v1748 = vunpack.c.l.b16 %v1612
  %v1749 = vunpack.c.l.b16 %v1613
  %v1750 = vunpack.c.l.b16 %v1614
  %v1751 = vunpack.c.l.b16 %v1615
  %v1752 = vunpack.c.l.b16 %v1616
  %v1753 = vunpack.c.l.b16 %v1617
  %v1754 = vunpack.c.l.b16 %v1618
  %v1755 = vunpack.c.l.b16 %v1619
  %v1756 = vunpack.c.l.b16 %v1620
  %v1757 = vunpack.c.l.b16 %v1621
  %v1758 = vunpack.c.l.b16 %v1622
  %v1759 = vunpack.c.l.b16 %v1623
  %v1760 = vunpack.c.l.b16 %v1624
  %v1761 = vunpack.c.l.b16 %v1625
  %v1762 = vunpack.c.l.b16 %v1626
  %v1763 = vunpack.c.l.b16 %v1627
  %v1764 = vunpack.c.l.b16 %v1628
  %v1765 = vunpack.c.l.b16 %v1629
  %v1766 = vunpack.c.l.b16 %v1630
  %v1767 = vunpack.c.l.b16 %v1631
  %v1768 = vunpack.c.l.b16 %v1632
  %v1769 = vunpack.c.l.b16 %v1633
  %v1770 = vunpack.c.l.b16 %v1634
  %v1771 = vunpack.c.l.b16 %v1635
  %v1772 = vunpack.c.l.b16 %v1636
  %v1773 = vunpack.c.l.b16 %v1637
  %v1774 = vunpack.c.l.b16 %v1638
  %v1775 = vunpack.c.l.b16 %v1639
  %v1776 = vunpack.c.l.b16 %v1640
  %v1777 = vunpack.c.l.b16 %v1641
  %v1778 = vunpack.c.l.b16 %v1642
  %v1779 = vunpack.c.l.b16 %v1643
  %v1780 = vunpack.c.l.b16 %v1644
  %v1781 = vunpack.c.l.b16 %v1645
  %v1782 = vunpack.c.l.b16 %v1646
  %v1783 = vunpack.c.l.b16 %v1647
  %v1784 = vunpack.c.l.b16 %v1648
  %v1785 = vunpack.c.l.b16 %v1649
  %v1786 = vunpack.c.l.b16 %v1650
  %v1787 = vunpack.c.l.b16 %v1651
  %v1788 = vunpack.c.l.b16 %v1652
  %v1789 = vunpack.c.l.b16 %v1653
  %v1790 = vunpack.c.l.b16 %v1654
  %v1791 = vunpack.c.l.b16 %v1655
  %v1792 = vunpack.c.l.b16 %v1656
  %v1793 = vunpack.c.l.b16 %v1657
  %v1794 = vunpack.c.l.b16 %v1658
  %v1795 = vunpack.c.l.b16 %v1659
  %v1796 = vunpack.c.l.b16 %v1660
  %v1797 = vunpack.c.l.b16 %v1661
  %v1798 = vunpack.c.l.b16 %v1662
  %v1799 = vpack.c.b16 %v1736, %v1735
  %v1800 = vpack.c.b16 %v1738, %v1737
  %v1801 = vpack.c.b16 %v1740, %v1739
  %v1802 = vpack.c.b16 %v1742, %v1741
  %v1803 = vpack.c.b16 %v1744, %v1743
  %v1804 = vpack.c.b16 %v1746, %v1745
  %v1805 = vpack.c.b16 %v1748, %v1747
  %v1806 = vpack.c.b16 %v1750, %v1749
  %v1807 = vpack.c.b16 %v1752, %v1751
  %v1808 = vpack.c.b16 %v1754, %v1753
  %v1809 = vpack.c.b16 %v1756, %v1755
  %v1810 = vpack.c.b16 %v1758, %v1757
  %v1811 = vpack.c.b16 %v1760, %v1759
  %v1812 = vpack.c.b16 %v1762, %v1761
  %v1813 = vpack.c.b16 %v1764, %v1763
  %v1814 = vpack.c.b16 %v1766, %v1765
  %v1815 = vpack.c.b16 %v1768, %v1767
  %v1816 = vpack.c.b16 %v1770, %v1769
  %v1817 = vpack.c.b16 %v1772, %v1771
  %v1818 = vpack.c.b16 %v1774, %v1773
  %v1819 = vpack.c.b16 %v1776, %v1775
  %v1820 = vpack.c.b16 %v1778, %v1777
  %v1821 = vpack.c.b16 %v1780, %v1779
  %v1822 = vpack.c.b16 %v1782, %v1781
  %v1823 = vpack.c.b16 %v1784, %v1783
  %v1824 = vpack.c.b16 %v1786, %v1785
  %v1825 = vpack.c.b16 %v1788, %v1787
  %v1826 = vpack.c.b16 %v1790, %v1789
  %v1827 = vpack.c.b16 %v1792, %v1791
  %v1828 = vpack.c.b16 %v1794, %v1793
  %v1829 = vpack.c.b16 %v1796, %v1795
  %v1830 = vpack.c.b16 %v1798, %v1797
  %1863 = vmatpush.bf16.msra.mxu0 %v1806
  %1864 = vmatpush.bf16.msra.mxu0 %v1805
  %1865 = vmatpush.bf16.msra.mxu0 %v1804
  %1866 = vmatpush.bf16.msra.mxu0 %v1803
  %1867 = vmatpush.bf16.msra.mxu0 %v1802
  %1868 = vmatpush.bf16.msra.mxu0 %v1801
  %1869 = vmatpush.bf16.msra.mxu0 %v1800
  %1870 = vmatpush.bf16.msra.mxu0 %v1799
  %1871 = vmatmul.bf16.gmra.mxu0 %v1663
  %v1872 = vpop.f32.mrf.mxu0
  %v1873 = vadd.f32 0.0, %v1872
  %v1874 = vpop.f32.mrf.mxu0
  %1875 = vdwg.mxu0
  %1876 = vmatpush.bf16.msra.mxu0 %v1814
  %1877 = vmatpush.bf16.msra.mxu0 %v1813
  %1878 = vmatpush.bf16.msra.mxu0 %v1812
  %1879 = vmatpush.bf16.msra.mxu0 %v1811
  %1880 = vmatpush.bf16.msra.mxu0 %v1810
  %1881 = vmatpush.bf16.msra.mxu0 %v1809
  %1882 = vmatpush.bf16.msra.mxu0 %v1808
  %1883 = vmatpush.bf16.msra.mxu0 %v1807
  %1884 = vmatmul.bf16.gmra.mxu0 %v1664
  %v1885 = vpop.f32.mrf.mxu0
  %v1886 = vadd.f32 %v1873, %v1885
  %v1887 = vpop.f32.mrf.mxu0
  %1888 = vdwg.mxu0
  %1889 = vmatpush.bf16.msra.mxu0 %v1822
  %1890 = vmatpush.bf16.msra.mxu0 %v1821
  %1891 = vmatpush.bf16.msra.mxu0 %v1820
  %1892 = vmatpush.bf16.msra.mxu0 %v1819
  %1893 = vmatpush.bf16.msra.mxu0 %v1818
  %1894 = vmatpush.bf16.msra.mxu0 %v1817
  %1895 = vmatpush.bf16.msra.mxu0 %v1816
  %1896 = vmatpush.bf16.msra.mxu0 %v1815
  %1897 = vmatmul.bf16.gmra.mxu0 %v1665
  %v1898 = vpop.f32.mrf.mxu0
  %v1899 = vadd.f32 %v1886, %v1898
  %v1900 = vpop.f32.mrf.mxu0
  %1901 = vdwg.mxu0
  %1902 = vmatpush.bf16.msra.mxu0 %v1830
  %1903 = vmatpush.bf16.msra.mxu0 %v1829
  %1904 = vmatpush.bf16.msra.mxu0 %v1828
  %1905 = vmatpush.bf16.msra.mxu0 %v1827
  %1906 = vmatpush.bf16.msra.mxu0 %v1826
  %1907 = vmatpush.bf16.msra.mxu0 %v1825
  %1908 = vmatpush.bf16.msra.mxu0 %v1824
  %1909 = vmatpush.bf16.msra.mxu0 %v1823
  %1910 = vmatmul.bf16.gmra.mxu0 %v1666
  %v1911 = vpop.f32.mrf.mxu0
  %v1912 = vadd.f32 %v1899, %v1911
  %v1913 = vpop.f32.mrf.mxu0
  %1914 = vdwg.mxu0
  %v1915 = vadd.f32 %v1597, %v1912
  %s1916 = scalar_lea.vmem %s3, 1024
  %v1917 = vld [vmem:[%s1916] sm:$0xf]
  %v1918 = vld [vmem:[%s1916 + $0x4] sm:$0xf]
  %v1919 = vld [vmem:[%s1916 + $0x8] sm:$0xf]
  %v1920 = vld [vmem:[%s1916 + $0xc] sm:$0xf]
  %v1921 = vld [vmem:[%s1916 + $0x10] sm:$0xf]
  %v1922 = vld [vmem:[%s1916 + $0x14] sm:$0xf]
  %v1923 = vld [vmem:[%s1916 + $0x18] sm:$0xf]
  %v1924 = vld [vmem:[%s1916 + $0x1c] sm:$0xf]
  %v1925 = vld [vmem:[%s1916 + $0x20] sm:$0xf]
  %v1926 = vld [vmem:[%s1916 + $0x24] sm:$0xf]
  %v1927 = vld [vmem:[%s1916 + $0x28] sm:$0xf]
  %v1928 = vld [vmem:[%s1916 + $0x2c] sm:$0xf]
  %v1929 = vld [vmem:[%s1916 + $0x30] sm:$0xf]
  %v1930 = vld [vmem:[%s1916 + $0x34] sm:$0xf]
  %v1931 = vld [vmem:[%s1916 + $0x38] sm:$0xf]
  %v1932 = vld [vmem:[%s1916 + $0x3c] sm:$0xf]
  %v1933 = vld [vmem:[%s1916 + $0x40] sm:$0xf]
  %v1934 = vld [vmem:[%s1916 + $0x44] sm:$0xf]
  %v1935 = vld [vmem:[%s1916 + $0x48] sm:$0xf]
  %v1936 = vld [vmem:[%s1916 + $0x4c] sm:$0xf]
  %v1937 = vld [vmem:[%s1916 + $0x50] sm:$0xf]
  %v1938 = vld [vmem:[%s1916 + $0x54] sm:$0xf]
  %v1939 = vld [vmem:[%s1916 + $0x58] sm:$0xf]
  %v1940 = vld [vmem:[%s1916 + $0x5c] sm:$0xf]
  %v1941 = vld [vmem:[%s1916 + $0x60] sm:$0xf]
  %v1942 = vld [vmem:[%s1916 + $0x64] sm:$0xf]
  %v1943 = vld [vmem:[%s1916 + $0x68] sm:$0xf]
  %v1944 = vld [vmem:[%s1916 + $0x6c] sm:$0xf]
  %v1945 = vld [vmem:[%s1916 + $0x70] sm:$0xf]
  %v1946 = vld [vmem:[%s1916 + $0x74] sm:$0xf]
  %v1947 = vld [vmem:[%s1916 + $0x78] sm:$0xf]
  %v1948 = vld [vmem:[%s1916 + $0x7c] sm:$0xf]
  %v1949 = vld [vmem:[%s1916 + $0x80] sm:$0xf]
  %v1950 = vld [vmem:[%s1916 + $0x84] sm:$0xf]
  %v1951 = vld [vmem:[%s1916 + $0x88] sm:$0xf]
  %v1952 = vld [vmem:[%s1916 + $0x8c] sm:$0xf]
  %v1953 = vld [vmem:[%s1916 + $0x90] sm:$0xf]
  %v1954 = vld [vmem:[%s1916 + $0x94] sm:$0xf]
  %v1955 = vld [vmem:[%s1916 + $0x98] sm:$0xf]
  %v1956 = vld [vmem:[%s1916 + $0x9c] sm:$0xf]
  %v1957 = vld [vmem:[%s1916 + $0xa0] sm:$0xf]
  %v1958 = vld [vmem:[%s1916 + $0xa4] sm:$0xf]
  %v1959 = vld [vmem:[%s1916 + $0xa8] sm:$0xf]
  %v1960 = vld [vmem:[%s1916 + $0xac] sm:$0xf]
  %v1961 = vld [vmem:[%s1916 + $0xb0] sm:$0xf]
  %v1962 = vld [vmem:[%s1916 + $0xb4] sm:$0xf]
  %v1963 = vld [vmem:[%s1916 + $0xb8] sm:$0xf]
  %v1964 = vld [vmem:[%s1916 + $0xbc] sm:$0xf]
  %v1965 = vld [vmem:[%s1916 + $0xc0] sm:$0xf]
  %v1966 = vld [vmem:[%s1916 + $0xc4] sm:$0xf]
  %v1967 = vld [vmem:[%s1916 + $0xc8] sm:$0xf]
  %v1968 = vld [vmem:[%s1916 + $0xcc] sm:$0xf]
  %v1969 = vld [vmem:[%s1916 + $0xd0] sm:$0xf]
  %v1970 = vld [vmem:[%s1916 + $0xd4] sm:$0xf]
  %v1971 = vld [vmem:[%s1916 + $0xd8] sm:$0xf]
  %v1972 = vld [vmem:[%s1916 + $0xdc] sm:$0xf]
  %v1973 = vld [vmem:[%s1916 + $0xe0] sm:$0xf]
  %v1974 = vld [vmem:[%s1916 + $0xe4] sm:$0xf]
  %v1975 = vld [vmem:[%s1916 + $0xe8] sm:$0xf]
  %v1976 = vld [vmem:[%s1916 + $0xec] sm:$0xf]
  %v1977 = vld [vmem:[%s1916 + $0xf0] sm:$0xf]
  %v1978 = vld [vmem:[%s1916 + $0xf4] sm:$0xf]
  %v1979 = vld [vmem:[%s1916 + $0xf8] sm:$0xf]
  %v1980 = vld [vmem:[%s1916 + $0xfc] sm:$0xf]
  %v1983 = vunpack.c.l.b16 %v639
  %v1984 = vunpack.c.h.b16 %v639
  %v1985 = vunpack.c.l.b16 %v640
  %v1986 = vunpack.c.h.b16 %v640
  %v1987 = vpack.c.b16 %v1983, %v1983
  %v1988 = vpack.c.b16 %v1984, %v1984
  %v1989 = vpack.c.b16 %v1985, %v1985
  %v1990 = vpack.c.b16 %v1986, %v1986
  %v2059 = vunpack.c.l.b16 %v1917
  %v2060 = vunpack.c.l.b16 %v1918
  %v2061 = vunpack.c.l.b16 %v1919
  %v2062 = vunpack.c.l.b16 %v1920
  %v2063 = vunpack.c.l.b16 %v1921
  %v2064 = vunpack.c.l.b16 %v1922
  %v2065 = vunpack.c.l.b16 %v1923
  %v2066 = vunpack.c.l.b16 %v1924
  %v2067 = vunpack.c.l.b16 %v1925
  %v2068 = vunpack.c.l.b16 %v1926
  %v2069 = vunpack.c.l.b16 %v1927
  %v2070 = vunpack.c.l.b16 %v1928
  %v2071 = vunpack.c.l.b16 %v1929
  %v2072 = vunpack.c.l.b16 %v1930
  %v2073 = vunpack.c.l.b16 %v1931
  %v2074 = vunpack.c.l.b16 %v1932
  %v2075 = vunpack.c.l.b16 %v1933
  %v2076 = vunpack.c.l.b16 %v1934
  %v2077 = vunpack.c.l.b16 %v1935
  %v2078 = vunpack.c.l.b16 %v1936
  %v2079 = vunpack.c.l.b16 %v1937
  %v2080 = vunpack.c.l.b16 %v1938
  %v2081 = vunpack.c.l.b16 %v1939
  %v2082 = vunpack.c.l.b16 %v1940
  %v2083 = vunpack.c.l.b16 %v1941
  %v2084 = vunpack.c.l.b16 %v1942
  %v2085 = vunpack.c.l.b16 %v1943
  %v2086 = vunpack.c.l.b16 %v1944
  %v2087 = vunpack.c.l.b16 %v1945
  %v2088 = vunpack.c.l.b16 %v1946
  %v2089 = vunpack.c.l.b16 %v1947
  %v2090 = vunpack.c.l.b16 %v1948
  %v2091 = vunpack.c.l.b16 %v1949
  %v2092 = vunpack.c.l.b16 %v1950
  %v2093 = vunpack.c.l.b16 %v1951
  %v2094 = vunpack.c.l.b16 %v1952
  %v2095 = vunpack.c.l.b16 %v1953
  %v2096 = vunpack.c.l.b16 %v1954
  %v2097 = vunpack.c.l.b16 %v1955
  %v2098 = vunpack.c.l.b16 %v1956
  %v2099 = vunpack.c.l.b16 %v1957
  %v2100 = vunpack.c.l.b16 %v1958
  %v2101 = vunpack.c.l.b16 %v1959
  %v2102 = vunpack.c.l.b16 %v1960
  %v2103 = vunpack.c.l.b16 %v1961
  %v2104 = vunpack.c.l.b16 %v1962
  %v2105 = vunpack.c.l.b16 %v1963
  %v2106 = vunpack.c.l.b16 %v1964
  %v2107 = vunpack.c.l.b16 %v1965
  %v2108 = vunpack.c.l.b16 %v1966
  %v2109 = vunpack.c.l.b16 %v1967
  %v2110 = vunpack.c.l.b16 %v1968
  %v2111 = vunpack.c.l.b16 %v1969
  %v2112 = vunpack.c.l.b16 %v1970
  %v2113 = vunpack.c.l.b16 %v1971
  %v2114 = vunpack.c.l.b16 %v1972
  %v2115 = vunpack.c.l.b16 %v1973
  %v2116 = vunpack.c.l.b16 %v1974
  %v2117 = vunpack.c.l.b16 %v1975
  %v2118 = vunpack.c.l.b16 %v1976
  %v2119 = vunpack.c.l.b16 %v1977
  %v2120 = vunpack.c.l.b16 %v1978
  %v2121 = vunpack.c.l.b16 %v1979
  %v2122 = vunpack.c.l.b16 %v1980
  %v2123 = vpack.c.b16 %v2060, %v2059
  %v2124 = vpack.c.b16 %v2062, %v2061
  %v2125 = vpack.c.b16 %v2064, %v2063
  %v2126 = vpack.c.b16 %v2066, %v2065
  %v2127 = vpack.c.b16 %v2068, %v2067
  %v2128 = vpack.c.b16 %v2070, %v2069
  %v2129 = vpack.c.b16 %v2072, %v2071
  %v2130 = vpack.c.b16 %v2074, %v2073
  %v2131 = vpack.c.b16 %v2076, %v2075
  %v2132 = vpack.c.b16 %v2078, %v2077
  %v2133 = vpack.c.b16 %v2080, %v2079
  %v2134 = vpack.c.b16 %v2082, %v2081
  %v2135 = vpack.c.b16 %v2084, %v2083
  %v2136 = vpack.c.b16 %v2086, %v2085
  %v2137 = vpack.c.b16 %v2088, %v2087
  %v2138 = vpack.c.b16 %v2090, %v2089
  %v2139 = vpack.c.b16 %v2092, %v2091
  %v2140 = vpack.c.b16 %v2094, %v2093
  %v2141 = vpack.c.b16 %v2096, %v2095
  %v2142 = vpack.c.b16 %v2098, %v2097
  %v2143 = vpack.c.b16 %v2100, %v2099
  %v2144 = vpack.c.b16 %v2102, %v2101
  %v2145 = vpack.c.b16 %v2104, %v2103
  %v2146 = vpack.c.b16 %v2106, %v2105
  %v2147 = vpack.c.b16 %v2108, %v2107
  %v2148 = vpack.c.b16 %v2110, %v2109
  %v2149 = vpack.c.b16 %v2112, %v2111
  %v2150 = vpack.c.b16 %v2114, %v2113
  %v2151 = vpack.c.b16 %v2116, %v2115
  %v2152 = vpack.c.b16 %v2118, %v2117
  %v2153 = vpack.c.b16 %v2120, %v2119
  %v2154 = vpack.c.b16 %v2122, %v2121
  %2187 = vmatpush.bf16.msra.mxu0 %v2130
  %2188 = vmatpush.bf16.msra.mxu0 %v2129
  %2189 = vmatpush.bf16.msra.mxu0 %v2128
  %2190 = vmatpush.bf16.msra.mxu0 %v2127
  %2191 = vmatpush.bf16.msra.mxu0 %v2126
  %2192 = vmatpush.bf16.msra.mxu0 %v2125
  %2193 = vmatpush.bf16.msra.mxu0 %v2124
  %2194 = vmatpush.bf16.msra.mxu0 %v2123
  %2195 = vmatmul.bf16.gmra.mxu0 %v1987
  %v2196 = vpop.f32.mrf.mxu0
  %v2197 = vadd.f32 0.0, %v2196
  %v2198 = vpop.f32.mrf.mxu0
  %2199 = vdwg.mxu0
  %2200 = vmatpush.bf16.msra.mxu0 %v2138
  %2201 = vmatpush.bf16.msra.mxu0 %v2137
  %2202 = vmatpush.bf16.msra.mxu0 %v2136
  %2203 = vmatpush.bf16.msra.mxu0 %v2135
  %2204 = vmatpush.bf16.msra.mxu0 %v2134
  %2205 = vmatpush.bf16.msra.mxu0 %v2133
  %2206 = vmatpush.bf16.msra.mxu0 %v2132
  %2207 = vmatpush.bf16.msra.mxu0 %v2131
  %2208 = vmatmul.bf16.gmra.mxu0 %v1988
  %v2209 = vpop.f32.mrf.mxu0
  %v2210 = vadd.f32 %v2197, %v2209
  %v2211 = vpop.f32.mrf.mxu0
  %2212 = vdwg.mxu0
  %2213 = vmatpush.bf16.msra.mxu0 %v2146
  %2214 = vmatpush.bf16.msra.mxu0 %v2145
  %2215 = vmatpush.bf16.msra.mxu0 %v2144
  %2216 = vmatpush.bf16.msra.mxu0 %v2143
  %2217 = vmatpush.bf16.msra.mxu0 %v2142
  %2218 = vmatpush.bf16.msra.mxu0 %v2141
  %2219 = vmatpush.bf16.msra.mxu0 %v2140
  %2220 = vmatpush.bf16.msra.mxu0 %v2139
  %2221 = vmatmul.bf16.gmra.mxu0 %v1989
  %v2222 = vpop.f32.mrf.mxu0
  %v2223 = vadd.f32 %v2210, %v2222
  %v2224 = vpop.f32.mrf.mxu0
  %2225 = vdwg.mxu0
  %2226 = vmatpush.bf16.msra.mxu0 %v2154
  %2227 = vmatpush.bf16.msra.mxu0 %v2153
  %2228 = vmatpush.bf16.msra.mxu0 %v2152
  %2229 = vmatpush.bf16.msra.mxu0 %v2151
  %2230 = vmatpush.bf16.msra.mxu0 %v2150
  %2231 = vmatpush.bf16.msra.mxu0 %v2149
  %2232 = vmatpush.bf16.msra.mxu0 %v2148
  %2233 = vmatpush.bf16.msra.mxu0 %v2147
  %2234 = vmatmul.bf16.gmra.mxu0 %v1990
  %v2235 = vpop.f32.mrf.mxu0
  %v2236 = vadd.f32 %v2223, %v2235
  %v2237 = vpop.f32.mrf.mxu0
  %2238 = vdwg.mxu0
  %v2239 = vadd.f32 %v1915, %v2236
  %s2240 = scalar_lea.vmem %s3, 1280
  %v2241 = vld [vmem:[%s2240] sm:$0xf]
  %v2242 = vld [vmem:[%s2240 + $0x4] sm:$0xf]
  %v2243 = vld [vmem:[%s2240 + $0x8] sm:$0xf]
  %v2244 = vld [vmem:[%s2240 + $0xc] sm:$0xf]
  %v2245 = vld [vmem:[%s2240 + $0x10] sm:$0xf]
  %v2246 = vld [vmem:[%s2240 + $0x14] sm:$0xf]
  %v2247 = vld [vmem:[%s2240 + $0x18] sm:$0xf]
  %v2248 = vld [vmem:[%s2240 + $0x1c] sm:$0xf]
  %v2249 = vld [vmem:[%s2240 + $0x20] sm:$0xf]
  %v2250 = vld [vmem:[%s2240 + $0x24] sm:$0xf]
  %v2251 = vld [vmem:[%s2240 + $0x28] sm:$0xf]
  %v2252 = vld [vmem:[%s2240 + $0x2c] sm:$0xf]
  %v2253 = vld [vmem:[%s2240 + $0x30] sm:$0xf]
  %v2254 = vld [vmem:[%s2240 + $0x34] sm:$0xf]
  %v2255 = vld [vmem:[%s2240 + $0x38] sm:$0xf]
  %v2256 = vld [vmem:[%s2240 + $0x3c] sm:$0xf]
  %v2257 = vld [vmem:[%s2240 + $0x40] sm:$0xf]
  %v2258 = vld [vmem:[%s2240 + $0x44] sm:$0xf]
  %v2259 = vld [vmem:[%s2240 + $0x48] sm:$0xf]
  %v2260 = vld [vmem:[%s2240 + $0x4c] sm:$0xf]
  %v2261 = vld [vmem:[%s2240 + $0x50] sm:$0xf]
  %v2262 = vld [vmem:[%s2240 + $0x54] sm:$0xf]
  %v2263 = vld [vmem:[%s2240 + $0x58] sm:$0xf]
  %v2264 = vld [vmem:[%s2240 + $0x5c] sm:$0xf]
  %v2265 = vld [vmem:[%s2240 + $0x60] sm:$0xf]
  %v2266 = vld [vmem:[%s2240 + $0x64] sm:$0xf]
  %v2267 = vld [vmem:[%s2240 + $0x68] sm:$0xf]
  %v2268 = vld [vmem:[%s2240 + $0x6c] sm:$0xf]
  %v2269 = vld [vmem:[%s2240 + $0x70] sm:$0xf]
  %v2270 = vld [vmem:[%s2240 + $0x74] sm:$0xf]
  %v2271 = vld [vmem:[%s2240 + $0x78] sm:$0xf]
  %v2272 = vld [vmem:[%s2240 + $0x7c] sm:$0xf]
  %v2273 = vld [vmem:[%s2240 + $0x80] sm:$0xf]
  %v2274 = vld [vmem:[%s2240 + $0x84] sm:$0xf]
  %v2275 = vld [vmem:[%s2240 + $0x88] sm:$0xf]
  %v2276 = vld [vmem:[%s2240 + $0x8c] sm:$0xf]
  %v2277 = vld [vmem:[%s2240 + $0x90] sm:$0xf]
  %v2278 = vld [vmem:[%s2240 + $0x94] sm:$0xf]
  %v2279 = vld [vmem:[%s2240 + $0x98] sm:$0xf]
  %v2280 = vld [vmem:[%s2240 + $0x9c] sm:$0xf]
  %v2281 = vld [vmem:[%s2240 + $0xa0] sm:$0xf]
  %v2282 = vld [vmem:[%s2240 + $0xa4] sm:$0xf]
  %v2283 = vld [vmem:[%s2240 + $0xa8] sm:$0xf]
  %v2284 = vld [vmem:[%s2240 + $0xac] sm:$0xf]
  %v2285 = vld [vmem:[%s2240 + $0xb0] sm:$0xf]
  %v2286 = vld [vmem:[%s2240 + $0xb4] sm:$0xf]
  %v2287 = vld [vmem:[%s2240 + $0xb8] sm:$0xf]
  %v2288 = vld [vmem:[%s2240 + $0xbc] sm:$0xf]
  %v2289 = vld [vmem:[%s2240 + $0xc0] sm:$0xf]
  %v2290 = vld [vmem:[%s2240 + $0xc4] sm:$0xf]
  %v2291 = vld [vmem:[%s2240 + $0xc8] sm:$0xf]
  %v2292 = vld [vmem:[%s2240 + $0xcc] sm:$0xf]
  %v2293 = vld [vmem:[%s2240 + $0xd0] sm:$0xf]
  %v2294 = vld [vmem:[%s2240 + $0xd4] sm:$0xf]
  %v2295 = vld [vmem:[%s2240 + $0xd8] sm:$0xf]
  %v2296 = vld [vmem:[%s2240 + $0xdc] sm:$0xf]
  %v2297 = vld [vmem:[%s2240 + $0xe0] sm:$0xf]
  %v2298 = vld [vmem:[%s2240 + $0xe4] sm:$0xf]
  %v2299 = vld [vmem:[%s2240 + $0xe8] sm:$0xf]
  %v2300 = vld [vmem:[%s2240 + $0xec] sm:$0xf]
  %v2301 = vld [vmem:[%s2240 + $0xf0] sm:$0xf]
  %v2302 = vld [vmem:[%s2240 + $0xf4] sm:$0xf]
  %v2303 = vld [vmem:[%s2240 + $0xf8] sm:$0xf]
  %v2304 = vld [vmem:[%s2240 + $0xfc] sm:$0xf]
  %v2305 = vrot.slane %v1987, 1
  %v2306 = vrot.slane %v1988, 1
  %v2307 = vrot.slane %v1989, 1
  %v2308 = vrot.slane %v1990, 1
  %v2377 = vunpack.c.l.b16 %v2241
  %v2378 = vunpack.c.l.b16 %v2242
  %v2379 = vunpack.c.l.b16 %v2243
  %v2380 = vunpack.c.l.b16 %v2244
  %v2381 = vunpack.c.l.b16 %v2245
  %v2382 = vunpack.c.l.b16 %v2246
  %v2383 = vunpack.c.l.b16 %v2247
  %v2384 = vunpack.c.l.b16 %v2248
  %v2385 = vunpack.c.l.b16 %v2249
  %v2386 = vunpack.c.l.b16 %v2250
  %v2387 = vunpack.c.l.b16 %v2251
  %v2388 = vunpack.c.l.b16 %v2252
  %v2389 = vunpack.c.l.b16 %v2253
  %v2390 = vunpack.c.l.b16 %v2254
  %v2391 = vunpack.c.l.b16 %v2255
  %v2392 = vunpack.c.l.b16 %v2256
  %v2393 = vunpack.c.l.b16 %v2257
  %v2394 = vunpack.c.l.b16 %v2258
  %v2395 = vunpack.c.l.b16 %v2259
  %v2396 = vunpack.c.l.b16 %v2260
  %v2397 = vunpack.c.l.b16 %v2261
  %v2398 = vunpack.c.l.b16 %v2262
  %v2399 = vunpack.c.l.b16 %v2263
  %v2400 = vunpack.c.l.b16 %v2264
  %v2401 = vunpack.c.l.b16 %v2265
  %v2402 = vunpack.c.l.b16 %v2266
  %v2403 = vunpack.c.l.b16 %v2267
  %v2404 = vunpack.c.l.b16 %v2268
  %v2405 = vunpack.c.l.b16 %v2269
  %v2406 = vunpack.c.l.b16 %v2270
  %v2407 = vunpack.c.l.b16 %v2271
  %v2408 = vunpack.c.l.b16 %v2272
  %v2409 = vunpack.c.l.b16 %v2273
  %v2410 = vunpack.c.l.b16 %v2274
  %v2411 = vunpack.c.l.b16 %v2275
  %v2412 = vunpack.c.l.b16 %v2276
  %v2413 = vunpack.c.l.b16 %v2277
  %v2414 = vunpack.c.l.b16 %v2278
  %v2415 = vunpack.c.l.b16 %v2279
  %v2416 = vunpack.c.l.b16 %v2280
  %v2417 = vunpack.c.l.b16 %v2281
  %v2418 = vunpack.c.l.b16 %v2282
  %v2419 = vunpack.c.l.b16 %v2283
  %v2420 = vunpack.c.l.b16 %v2284
  %v2421 = vunpack.c.l.b16 %v2285
  %v2422 = vunpack.c.l.b16 %v2286
  %v2423 = vunpack.c.l.b16 %v2287
  %v2424 = vunpack.c.l.b16 %v2288
  %v2425 = vunpack.c.l.b16 %v2289
  %v2426 = vunpack.c.l.b16 %v2290
  %v2427 = vunpack.c.l.b16 %v2291
  %v2428 = vunpack.c.l.b16 %v2292
  %v2429 = vunpack.c.l.b16 %v2293
  %v2430 = vunpack.c.l.b16 %v2294
  %v2431 = vunpack.c.l.b16 %v2295
  %v2432 = vunpack.c.l.b16 %v2296
  %v2433 = vunpack.c.l.b16 %v2297
  %v2434 = vunpack.c.l.b16 %v2298
  %v2435 = vunpack.c.l.b16 %v2299
  %v2436 = vunpack.c.l.b16 %v2300
  %v2437 = vunpack.c.l.b16 %v2301
  %v2438 = vunpack.c.l.b16 %v2302
  %v2439 = vunpack.c.l.b16 %v2303
  %v2440 = vunpack.c.l.b16 %v2304
  %v2441 = vpack.c.b16 %v2378, %v2377
  %v2442 = vpack.c.b16 %v2380, %v2379
  %v2443 = vpack.c.b16 %v2382, %v2381
  %v2444 = vpack.c.b16 %v2384, %v2383
  %v2445 = vpack.c.b16 %v2386, %v2385
  %v2446 = vpack.c.b16 %v2388, %v2387
  %v2447 = vpack.c.b16 %v2390, %v2389
  %v2448 = vpack.c.b16 %v2392, %v2391
  %v2449 = vpack.c.b16 %v2394, %v2393
  %v2450 = vpack.c.b16 %v2396, %v2395
  %v2451 = vpack.c.b16 %v2398, %v2397
  %v2452 = vpack.c.b16 %v2400, %v2399
  %v2453 = vpack.c.b16 %v2402, %v2401
  %v2454 = vpack.c.b16 %v2404, %v2403
  %v2455 = vpack.c.b16 %v2406, %v2405
  %v2456 = vpack.c.b16 %v2408, %v2407
  %v2457 = vpack.c.b16 %v2410, %v2409
  %v2458 = vpack.c.b16 %v2412, %v2411
  %v2459 = vpack.c.b16 %v2414, %v2413
  %v2460 = vpack.c.b16 %v2416, %v2415
  %v2461 = vpack.c.b16 %v2418, %v2417
  %v2462 = vpack.c.b16 %v2420, %v2419
  %v2463 = vpack.c.b16 %v2422, %v2421
  %v2464 = vpack.c.b16 %v2424, %v2423
  %v2465 = vpack.c.b16 %v2426, %v2425
  %v2466 = vpack.c.b16 %v2428, %v2427
  %v2467 = vpack.c.b16 %v2430, %v2429
  %v2468 = vpack.c.b16 %v2432, %v2431
  %v2469 = vpack.c.b16 %v2434, %v2433
  %v2470 = vpack.c.b16 %v2436, %v2435
  %v2471 = vpack.c.b16 %v2438, %v2437
  %v2472 = vpack.c.b16 %v2440, %v2439
  %2505 = vmatpush.bf16.msra.mxu0 %v2448
  %2506 = vmatpush.bf16.msra.mxu0 %v2447
  %2507 = vmatpush.bf16.msra.mxu0 %v2446
  %2508 = vmatpush.bf16.msra.mxu0 %v2445
  %2509 = vmatpush.bf16.msra.mxu0 %v2444
  %2510 = vmatpush.bf16.msra.mxu0 %v2443
  %2511 = vmatpush.bf16.msra.mxu0 %v2442
  %2512 = vmatpush.bf16.msra.mxu0 %v2441
  %2513 = vmatmul.bf16.gmra.mxu0 %v2305
  %v2514 = vpop.f32.mrf.mxu0
  %v2515 = vadd.f32 0.0, %v2514
  %v2516 = vpop.f32.mrf.mxu0
  %2517 = vdwg.mxu0
  %2518 = vmatpush.bf16.msra.mxu0 %v2456
  %2519 = vmatpush.bf16.msra.mxu0 %v2455
  %2520 = vmatpush.bf16.msra.mxu0 %v2454
  %2521 = vmatpush.bf16.msra.mxu0 %v2453
  %2522 = vmatpush.bf16.msra.mxu0 %v2452
  %2523 = vmatpush.bf16.msra.mxu0 %v2451
  %2524 = vmatpush.bf16.msra.mxu0 %v2450
  %2525 = vmatpush.bf16.msra.mxu0 %v2449
  %2526 = vmatmul.bf16.gmra.mxu0 %v2306
  %v2527 = vpop.f32.mrf.mxu0
  %v2528 = vadd.f32 %v2515, %v2527
  %v2529 = vpop.f32.mrf.mxu0
  %2530 = vdwg.mxu0
  %2531 = vmatpush.bf16.msra.mxu0 %v2464
  %2532 = vmatpush.bf16.msra.mxu0 %v2463
  %2533 = vmatpush.bf16.msra.mxu0 %v2462
  %2534 = vmatpush.bf16.msra.mxu0 %v2461
  %2535 = vmatpush.bf16.msra.mxu0 %v2460
  %2536 = vmatpush.bf16.msra.mxu0 %v2459
  %2537 = vmatpush.bf16.msra.mxu0 %v2458
  %2538 = vmatpush.bf16.msra.mxu0 %v2457
  %2539 = vmatmul.bf16.gmra.mxu0 %v2307
  %v2540 = vpop.f32.mrf.mxu0
  %v2541 = vadd.f32 %v2528, %v2540
  %v2542 = vpop.f32.mrf.mxu0
  %2543 = vdwg.mxu0
  %2544 = vmatpush.bf16.msra.mxu0 %v2472
  %2545 = vmatpush.bf16.msra.mxu0 %v2471
  %2546 = vmatpush.bf16.msra.mxu0 %v2470
  %2547 = vmatpush.bf16.msra.mxu0 %v2469
  %2548 = vmatpush.bf16.msra.mxu0 %v2468
  %2549 = vmatpush.bf16.msra.mxu0 %v2467
  %2550 = vmatpush.bf16.msra.mxu0 %v2466
  %2551 = vmatpush.bf16.msra.mxu0 %v2465
  %2552 = vmatmul.bf16.gmra.mxu0 %v2308
  %v2553 = vpop.f32.mrf.mxu0
  %v2554 = vadd.f32 %v2541, %v2553
  %v2555 = vpop.f32.mrf.mxu0
  %2556 = vdwg.mxu0
  %v2557 = vadd.f32 %v2239, %v2554
  %s2558 = scalar_lea.vmem %s3, 1536
  %v2559 = vld [vmem:[%s2558] sm:$0xf]
  %v2560 = vld [vmem:[%s2558 + $0x4] sm:$0xf]
  %v2561 = vld [vmem:[%s2558 + $0x8] sm:$0xf]
  %v2562 = vld [vmem:[%s2558 + $0xc] sm:$0xf]
  %v2563 = vld [vmem:[%s2558 + $0x10] sm:$0xf]
  %v2564 = vld [vmem:[%s2558 + $0x14] sm:$0xf]
  %v2565 = vld [vmem:[%s2558 + $0x18] sm:$0xf]
  %v2566 = vld [vmem:[%s2558 + $0x1c] sm:$0xf]
  %v2567 = vld [vmem:[%s2558 + $0x20] sm:$0xf]
  %v2568 = vld [vmem:[%s2558 + $0x24] sm:$0xf]
  %v2569 = vld [vmem:[%s2558 + $0x28] sm:$0xf]
  %v2570 = vld [vmem:[%s2558 + $0x2c] sm:$0xf]
  %v2571 = vld [vmem:[%s2558 + $0x30] sm:$0xf]
  %v2572 = vld [vmem:[%s2558 + $0x34] sm:$0xf]
  %v2573 = vld [vmem:[%s2558 + $0x38] sm:$0xf]
  %v2574 = vld [vmem:[%s2558 + $0x3c] sm:$0xf]
  %v2575 = vld [vmem:[%s2558 + $0x40] sm:$0xf]
  %v2576 = vld [vmem:[%s2558 + $0x44] sm:$0xf]
  %v2577 = vld [vmem:[%s2558 + $0x48] sm:$0xf]
  %v2578 = vld [vmem:[%s2558 + $0x4c] sm:$0xf]
  %v2579 = vld [vmem:[%s2558 + $0x50] sm:$0xf]
  %v2580 = vld [vmem:[%s2558 + $0x54] sm:$0xf]
  %v2581 = vld [vmem:[%s2558 + $0x58] sm:$0xf]
  %v2582 = vld [vmem:[%s2558 + $0x5c] sm:$0xf]
  %v2583 = vld [vmem:[%s2558 + $0x60] sm:$0xf]
  %v2584 = vld [vmem:[%s2558 + $0x64] sm:$0xf]
  %v2585 = vld [vmem:[%s2558 + $0x68] sm:$0xf]
  %v2586 = vld [vmem:[%s2558 + $0x6c] sm:$0xf]
  %v2587 = vld [vmem:[%s2558 + $0x70] sm:$0xf]
  %v2588 = vld [vmem:[%s2558 + $0x74] sm:$0xf]
  %v2589 = vld [vmem:[%s2558 + $0x78] sm:$0xf]
  %v2590 = vld [vmem:[%s2558 + $0x7c] sm:$0xf]
  %v2591 = vld [vmem:[%s2558 + $0x80] sm:$0xf]
  %v2592 = vld [vmem:[%s2558 + $0x84] sm:$0xf]
  %v2593 = vld [vmem:[%s2558 + $0x88] sm:$0xf]
  %v2594 = vld [vmem:[%s2558 + $0x8c] sm:$0xf]
  %v2595 = vld [vmem:[%s2558 + $0x90] sm:$0xf]
  %v2596 = vld [vmem:[%s2558 + $0x94] sm:$0xf]
  %v2597 = vld [vmem:[%s2558 + $0x98] sm:$0xf]
  %v2598 = vld [vmem:[%s2558 + $0x9c] sm:$0xf]
  %v2599 = vld [vmem:[%s2558 + $0xa0] sm:$0xf]
  %v2600 = vld [vmem:[%s2558 + $0xa4] sm:$0xf]
  %v2601 = vld [vmem:[%s2558 + $0xa8] sm:$0xf]
  %v2602 = vld [vmem:[%s2558 + $0xac] sm:$0xf]
  %v2603 = vld [vmem:[%s2558 + $0xb0] sm:$0xf]
  %v2604 = vld [vmem:[%s2558 + $0xb4] sm:$0xf]
  %v2605 = vld [vmem:[%s2558 + $0xb8] sm:$0xf]
  %v2606 = vld [vmem:[%s2558 + $0xbc] sm:$0xf]
  %v2607 = vld [vmem:[%s2558 + $0xc0] sm:$0xf]
  %v2608 = vld [vmem:[%s2558 + $0xc4] sm:$0xf]
  %v2609 = vld [vmem:[%s2558 + $0xc8] sm:$0xf]
  %v2610 = vld [vmem:[%s2558 + $0xcc] sm:$0xf]
  %v2611 = vld [vmem:[%s2558 + $0xd0] sm:$0xf]
  %v2612 = vld [vmem:[%s2558 + $0xd4] sm:$0xf]
  %v2613 = vld [vmem:[%s2558 + $0xd8] sm:$0xf]
  %v2614 = vld [vmem:[%s2558 + $0xdc] sm:$0xf]
  %v2615 = vld [vmem:[%s2558 + $0xe0] sm:$0xf]
  %v2616 = vld [vmem:[%s2558 + $0xe4] sm:$0xf]
  %v2617 = vld [vmem:[%s2558 + $0xe8] sm:$0xf]
  %v2618 = vld [vmem:[%s2558 + $0xec] sm:$0xf]
  %v2619 = vld [vmem:[%s2558 + $0xf0] sm:$0xf]
  %v2620 = vld [vmem:[%s2558 + $0xf4] sm:$0xf]
  %v2621 = vld [vmem:[%s2558 + $0xf8] sm:$0xf]
  %v2622 = vld [vmem:[%s2558 + $0xfc] sm:$0xf]
  %v2623 = vrot.slane %v1987, 2
  %v2624 = vrot.slane %v1988, 2
  %v2625 = vrot.slane %v1989, 2
  %v2626 = vrot.slane %v1990, 2
  %v2695 = vunpack.c.l.b16 %v2559
  %v2696 = vunpack.c.l.b16 %v2560
  %v2697 = vunpack.c.l.b16 %v2561
  %v2698 = vunpack.c.l.b16 %v2562
  %v2699 = vunpack.c.l.b16 %v2563
  %v2700 = vunpack.c.l.b16 %v2564
  %v2701 = vunpack.c.l.b16 %v2565
  %v2702 = vunpack.c.l.b16 %v2566
  %v2703 = vunpack.c.l.b16 %v2567
  %v2704 = vunpack.c.l.b16 %v2568
  %v2705 = vunpack.c.l.b16 %v2569
  %v2706 = vunpack.c.l.b16 %v2570
  %v2707 = vunpack.c.l.b16 %v2571
  %v2708 = vunpack.c.l.b16 %v2572
  %v2709 = vunpack.c.l.b16 %v2573
  %v2710 = vunpack.c.l.b16 %v2574
  %v2711 = vunpack.c.l.b16 %v2575
  %v2712 = vunpack.c.l.b16 %v2576
  %v2713 = vunpack.c.l.b16 %v2577
  %v2714 = vunpack.c.l.b16 %v2578
  %v2715 = vunpack.c.l.b16 %v2579
  %v2716 = vunpack.c.l.b16 %v2580
  %v2717 = vunpack.c.l.b16 %v2581
  %v2718 = vunpack.c.l.b16 %v2582
  %v2719 = vunpack.c.l.b16 %v2583
  %v2720 = vunpack.c.l.b16 %v2584
  %v2721 = vunpack.c.l.b16 %v2585
  %v2722 = vunpack.c.l.b16 %v2586
  %v2723 = vunpack.c.l.b16 %v2587
  %v2724 = vunpack.c.l.b16 %v2588
  %v2725 = vunpack.c.l.b16 %v2589
  %v2726 = vunpack.c.l.b16 %v2590
  %v2727 = vunpack.c.l.b16 %v2591
  %v2728 = vunpack.c.l.b16 %v2592
  %v2729 = vunpack.c.l.b16 %v2593
  %v2730 = vunpack.c.l.b16 %v2594
  %v2731 = vunpack.c.l.b16 %v2595
  %v2732 = vunpack.c.l.b16 %v2596
  %v2733 = vunpack.c.l.b16 %v2597
  %v2734 = vunpack.c.l.b16 %v2598
  %v2735 = vunpack.c.l.b16 %v2599
  %v2736 = vunpack.c.l.b16 %v2600
  %v2737 = vunpack.c.l.b16 %v2601
  %v2738 = vunpack.c.l.b16 %v2602
  %v2739 = vunpack.c.l.b16 %v2603
  %v2740 = vunpack.c.l.b16 %v2604
  %v2741 = vunpack.c.l.b16 %v2605
  %v2742 = vunpack.c.l.b16 %v2606
  %v2743 = vunpack.c.l.b16 %v2607
  %v2744 = vunpack.c.l.b16 %v2608
  %v2745 = vunpack.c.l.b16 %v2609
  %v2746 = vunpack.c.l.b16 %v2610
  %v2747 = vunpack.c.l.b16 %v2611
  %v2748 = vunpack.c.l.b16 %v2612
  %v2749 = vunpack.c.l.b16 %v2613
  %v2750 = vunpack.c.l.b16 %v2614
  %v2751 = vunpack.c.l.b16 %v2615
  %v2752 = vunpack.c.l.b16 %v2616
  %v2753 = vunpack.c.l.b16 %v2617
  %v2754 = vunpack.c.l.b16 %v2618
  %v2755 = vunpack.c.l.b16 %v2619
  %v2756 = vunpack.c.l.b16 %v2620
  %v2757 = vunpack.c.l.b16 %v2621
  %v2758 = vunpack.c.l.b16 %v2622
  %v2759 = vpack.c.b16 %v2696, %v2695
  %v2760 = vpack.c.b16 %v2698, %v2697
  %v2761 = vpack.c.b16 %v2700, %v2699
  %v2762 = vpack.c.b16 %v2702, %v2701
  %v2763 = vpack.c.b16 %v2704, %v2703
  %v2764 = vpack.c.b16 %v2706, %v2705
  %v2765 = vpack.c.b16 %v2708, %v2707
  %v2766 = vpack.c.b16 %v2710, %v2709
  %v2767 = vpack.c.b16 %v2712, %v2711
  %v2768 = vpack.c.b16 %v2714, %v2713
  %v2769 = vpack.c.b16 %v2716, %v2715
  %v2770 = vpack.c.b16 %v2718, %v2717
  %v2771 = vpack.c.b16 %v2720, %v2719
  %v2772 = vpack.c.b16 %v2722, %v2721
  %v2773 = vpack.c.b16 %v2724, %v2723
  %v2774 = vpack.c.b16 %v2726, %v2725
  %v2775 = vpack.c.b16 %v2728, %v2727
  %v2776 = vpack.c.b16 %v2730, %v2729
  %v2777 = vpack.c.b16 %v2732, %v2731
  %v2778 = vpack.c.b16 %v2734, %v2733
  %v2779 = vpack.c.b16 %v2736, %v2735
  %v2780 = vpack.c.b16 %v2738, %v2737
  %v2781 = vpack.c.b16 %v2740, %v2739
  %v2782 = vpack.c.b16 %v2742, %v2741
  %v2783 = vpack.c.b16 %v2744, %v2743
  %v2784 = vpack.c.b16 %v2746, %v2745
  %v2785 = vpack.c.b16 %v2748, %v2747
  %v2786 = vpack.c.b16 %v2750, %v2749
  %v2787 = vpack.c.b16 %v2752, %v2751
  %v2788 = vpack.c.b16 %v2754, %v2753
  %v2789 = vpack.c.b16 %v2756, %v2755
  %v2790 = vpack.c.b16 %v2758, %v2757
  %2823 = vmatpush.bf16.msra.mxu0 %v2766
  %2824 = vmatpush.bf16.msra.mxu0 %v2765
  %2825 = vmatpush.bf16.msra.mxu0 %v2764
  %2826 = vmatpush.bf16.msra.mxu0 %v2763
  %2827 = vmatpush.bf16.msra.mxu0 %v2762
  %2828 = vmatpush.bf16.msra.mxu0 %v2761
  %2829 = vmatpush.bf16.msra.mxu0 %v2760
  %2830 = vmatpush.bf16.msra.mxu0 %v2759
  %2831 = vmatmul.bf16.gmra.mxu0 %v2623
  %v2832 = vpop.f32.mrf.mxu0
  %v2833 = vadd.f32 0.0, %v2832
  %v2834 = vpop.f32.mrf.mxu0
  %2835 = vdwg.mxu0
  %2836 = vmatpush.bf16.msra.mxu0 %v2774
  %2837 = vmatpush.bf16.msra.mxu0 %v2773
  %2838 = vmatpush.bf16.msra.mxu0 %v2772
  %2839 = vmatpush.bf16.msra.mxu0 %v2771
  %2840 = vmatpush.bf16.msra.mxu0 %v2770
  %2841 = vmatpush.bf16.msra.mxu0 %v2769
  %2842 = vmatpush.bf16.msra.mxu0 %v2768
  %2843 = vmatpush.bf16.msra.mxu0 %v2767
  %2844 = vmatmul.bf16.gmra.mxu0 %v2624
  %v2845 = vpop.f32.mrf.mxu0
  %v2846 = vadd.f32 %v2833, %v2845
  %v2847 = vpop.f32.mrf.mxu0
  %2848 = vdwg.mxu0
  %2849 = vmatpush.bf16.msra.mxu0 %v2782
  %2850 = vmatpush.bf16.msra.mxu0 %v2781
  %2851 = vmatpush.bf16.msra.mxu0 %v2780
  %2852 = vmatpush.bf16.msra.mxu0 %v2779
  %2853 = vmatpush.bf16.msra.mxu0 %v2778
  %2854 = vmatpush.bf16.msra.mxu0 %v2777
  %2855 = vmatpush.bf16.msra.mxu0 %v2776
  %2856 = vmatpush.bf16.msra.mxu0 %v2775
  %2857 = vmatmul.bf16.gmra.mxu0 %v2625
  %v2858 = vpop.f32.mrf.mxu0
  %v2859 = vadd.f32 %v2846, %v2858
  %v2860 = vpop.f32.mrf.mxu0
  %2861 = vdwg.mxu0
  %2862 = vmatpush.bf16.msra.mxu0 %v2790
  %2863 = vmatpush.bf16.msra.mxu0 %v2789
  %2864 = vmatpush.bf16.msra.mxu0 %v2788
  %2865 = vmatpush.bf16.msra.mxu0 %v2787
  %2866 = vmatpush.bf16.msra.mxu0 %v2786
  %2867 = vmatpush.bf16.msra.mxu0 %v2785
  %2868 = vmatpush.bf16.msra.mxu0 %v2784
  %2869 = vmatpush.bf16.msra.mxu0 %v2783
  %2870 = vmatmul.bf16.gmra.mxu0 %v2626
  %v2871 = vpop.f32.mrf.mxu0
  %v2872 = vadd.f32 %v2859, %v2871
  %v2873 = vpop.f32.mrf.mxu0
  %2874 = vdwg.mxu0
  %v2875 = vadd.f32 %v2557, %v2872
  %s2876 = scalar_lea.vmem %s3, 1792
  %v2877 = vld [vmem:[%s2876] sm:$0xf]
  %v2878 = vld [vmem:[%s2876 + $0x4] sm:$0xf]
  %v2879 = vld [vmem:[%s2876 + $0x8] sm:$0xf]
  %v2880 = vld [vmem:[%s2876 + $0xc] sm:$0xf]
  %v2881 = vld [vmem:[%s2876 + $0x10] sm:$0xf]
  %v2882 = vld [vmem:[%s2876 + $0x14] sm:$0xf]
  %v2883 = vld [vmem:[%s2876 + $0x18] sm:$0xf]
  %v2884 = vld [vmem:[%s2876 + $0x1c] sm:$0xf]
  %v2885 = vld [vmem:[%s2876 + $0x20] sm:$0xf]
  %v2886 = vld [vmem:[%s2876 + $0x24] sm:$0xf]
  %v2887 = vld [vmem:[%s2876 + $0x28] sm:$0xf]
  %v2888 = vld [vmem:[%s2876 + $0x2c] sm:$0xf]
  %v2889 = vld [vmem:[%s2876 + $0x30] sm:$0xf]
  %v2890 = vld [vmem:[%s2876 + $0x34] sm:$0xf]
  %v2891 = vld [vmem:[%s2876 + $0x38] sm:$0xf]
  %v2892 = vld [vmem:[%s2876 + $0x3c] sm:$0xf]
  %v2893 = vld [vmem:[%s2876 + $0x40] sm:$0xf]
  %v2894 = vld [vmem:[%s2876 + $0x44] sm:$0xf]
  %v2895 = vld [vmem:[%s2876 + $0x48] sm:$0xf]
  %v2896 = vld [vmem:[%s2876 + $0x4c] sm:$0xf]
  %v2897 = vld [vmem:[%s2876 + $0x50] sm:$0xf]
  %v2898 = vld [vmem:[%s2876 + $0x54] sm:$0xf]
  %v2899 = vld [vmem:[%s2876 + $0x58] sm:$0xf]
  %v2900 = vld [vmem:[%s2876 + $0x5c] sm:$0xf]
  %v2901 = vld [vmem:[%s2876 + $0x60] sm:$0xf]
  %v2902 = vld [vmem:[%s2876 + $0x64] sm:$0xf]
  %v2903 = vld [vmem:[%s2876 + $0x68] sm:$0xf]
  %v2904 = vld [vmem:[%s2876 + $0x6c] sm:$0xf]
  %v2905 = vld [vmem:[%s2876 + $0x70] sm:$0xf]
  %v2906 = vld [vmem:[%s2876 + $0x74] sm:$0xf]
  %v2907 = vld [vmem:[%s2876 + $0x78] sm:$0xf]
  %v2908 = vld [vmem:[%s2876 + $0x7c] sm:$0xf]
  %v2909 = vld [vmem:[%s2876 + $0x80] sm:$0xf]
  %v2910 = vld [vmem:[%s2876 + $0x84] sm:$0xf]
  %v2911 = vld [vmem:[%s2876 + $0x88] sm:$0xf]
  %v2912 = vld [vmem:[%s2876 + $0x8c] sm:$0xf]
  %v2913 = vld [vmem:[%s2876 + $0x90] sm:$0xf]
  %v2914 = vld [vmem:[%s2876 + $0x94] sm:$0xf]
  %v2915 = vld [vmem:[%s2876 + $0x98] sm:$0xf]
  %v2916 = vld [vmem:[%s2876 + $0x9c] sm:$0xf]
  %v2917 = vld [vmem:[%s2876 + $0xa0] sm:$0xf]
  %v2918 = vld [vmem:[%s2876 + $0xa4] sm:$0xf]
  %v2919 = vld [vmem:[%s2876 + $0xa8] sm:$0xf]
  %v2920 = vld [vmem:[%s2876 + $0xac] sm:$0xf]
  %v2921 = vld [vmem:[%s2876 + $0xb0] sm:$0xf]
  %v2922 = vld [vmem:[%s2876 + $0xb4] sm:$0xf]
  %v2923 = vld [vmem:[%s2876 + $0xb8] sm:$0xf]
  %v2924 = vld [vmem:[%s2876 + $0xbc] sm:$0xf]
  %v2925 = vld [vmem:[%s2876 + $0xc0] sm:$0xf]
  %v2926 = vld [vmem:[%s2876 + $0xc4] sm:$0xf]
  %v2927 = vld [vmem:[%s2876 + $0xc8] sm:$0xf]
  %v2928 = vld [vmem:[%s2876 + $0xcc] sm:$0xf]
  %v2929 = vld [vmem:[%s2876 + $0xd0] sm:$0xf]
  %v2930 = vld [vmem:[%s2876 + $0xd4] sm:$0xf]
  %v2931 = vld [vmem:[%s2876 + $0xd8] sm:$0xf]
  %v2932 = vld [vmem:[%s2876 + $0xdc] sm:$0xf]
  %v2933 = vld [vmem:[%s2876 + $0xe0] sm:$0xf]
  %v2934 = vld [vmem:[%s2876 + $0xe4] sm:$0xf]
  %v2935 = vld [vmem:[%s2876 + $0xe8] sm:$0xf]
  %v2936 = vld [vmem:[%s2876 + $0xec] sm:$0xf]
  %v2937 = vld [vmem:[%s2876 + $0xf0] sm:$0xf]
  %v2938 = vld [vmem:[%s2876 + $0xf4] sm:$0xf]
  %v2939 = vld [vmem:[%s2876 + $0xf8] sm:$0xf]
  %v2940 = vld [vmem:[%s2876 + $0xfc] sm:$0xf]
  %v2941 = vrot.slane %v1987, 3
  %v2942 = vrot.slane %v1988, 3
  %v2943 = vrot.slane %v1989, 3
  %v2944 = vrot.slane %v1990, 3
  %v3013 = vunpack.c.l.b16 %v2877
  %v3014 = vunpack.c.l.b16 %v2878
  %v3015 = vunpack.c.l.b16 %v2879
  %v3016 = vunpack.c.l.b16 %v2880
  %v3017 = vunpack.c.l.b16 %v2881
  %v3018 = vunpack.c.l.b16 %v2882
  %v3019 = vunpack.c.l.b16 %v2883
  %v3020 = vunpack.c.l.b16 %v2884
  %v3021 = vunpack.c.l.b16 %v2885
  %v3022 = vunpack.c.l.b16 %v2886
  %v3023 = vunpack.c.l.b16 %v2887
  %v3024 = vunpack.c.l.b16 %v2888
  %v3025 = vunpack.c.l.b16 %v2889
  %v3026 = vunpack.c.l.b16 %v2890
  %v3027 = vunpack.c.l.b16 %v2891
  %v3028 = vunpack.c.l.b16 %v2892
  %v3029 = vunpack.c.l.b16 %v2893
  %v3030 = vunpack.c.l.b16 %v2894
  %v3031 = vunpack.c.l.b16 %v2895
  %v3032 = vunpack.c.l.b16 %v2896
  %v3033 = vunpack.c.l.b16 %v2897
  %v3034 = vunpack.c.l.b16 %v2898
  %v3035 = vunpack.c.l.b16 %v2899
  %v3036 = vunpack.c.l.b16 %v2900
  %v3037 = vunpack.c.l.b16 %v2901
  %v3038 = vunpack.c.l.b16 %v2902
  %v3039 = vunpack.c.l.b16 %v2903
  %v3040 = vunpack.c.l.b16 %v2904
  %v3041 = vunpack.c.l.b16 %v2905
  %v3042 = vunpack.c.l.b16 %v2906
  %v3043 = vunpack.c.l.b16 %v2907
  %v3044 = vunpack.c.l.b16 %v2908
  %v3045 = vunpack.c.l.b16 %v2909
  %v3046 = vunpack.c.l.b16 %v2910
  %v3047 = vunpack.c.l.b16 %v2911
  %v3048 = vunpack.c.l.b16 %v2912
  %v3049 = vunpack.c.l.b16 %v2913
  %v3050 = vunpack.c.l.b16 %v2914
  %v3051 = vunpack.c.l.b16 %v2915
  %v3052 = vunpack.c.l.b16 %v2916
  %v3053 = vunpack.c.l.b16 %v2917
  %v3054 = vunpack.c.l.b16 %v2918
  %v3055 = vunpack.c.l.b16 %v2919
  %v3056 = vunpack.c.l.b16 %v2920
  %v3057 = vunpack.c.l.b16 %v2921
  %v3058 = vunpack.c.l.b16 %v2922
  %v3059 = vunpack.c.l.b16 %v2923
  %v3060 = vunpack.c.l.b16 %v2924
  %v3061 = vunpack.c.l.b16 %v2925
  %v3062 = vunpack.c.l.b16 %v2926
  %v3063 = vunpack.c.l.b16 %v2927
  %v3064 = vunpack.c.l.b16 %v2928
  %v3065 = vunpack.c.l.b16 %v2929
  %v3066 = vunpack.c.l.b16 %v2930
  %v3067 = vunpack.c.l.b16 %v2931
  %v3068 = vunpack.c.l.b16 %v2932
  %v3069 = vunpack.c.l.b16 %v2933
  %v3070 = vunpack.c.l.b16 %v2934
  %v3071 = vunpack.c.l.b16 %v2935
  %v3072 = vunpack.c.l.b16 %v2936
  %v3073 = vunpack.c.l.b16 %v2937
  %v3074 = vunpack.c.l.b16 %v2938
  %v3075 = vunpack.c.l.b16 %v2939
  %v3076 = vunpack.c.l.b16 %v2940
  %v3077 = vpack.c.b16 %v3014, %v3013
  %v3078 = vpack.c.b16 %v3016, %v3015
  %v3079 = vpack.c.b16 %v3018, %v3017
  %v3080 = vpack.c.b16 %v3020, %v3019
  %v3081 = vpack.c.b16 %v3022, %v3021
  %v3082 = vpack.c.b16 %v3024, %v3023
  %v3083 = vpack.c.b16 %v3026, %v3025
  %v3084 = vpack.c.b16 %v3028, %v3027
  %v3085 = vpack.c.b16 %v3030, %v3029
  %v3086 = vpack.c.b16 %v3032, %v3031
  %v3087 = vpack.c.b16 %v3034, %v3033
  %v3088 = vpack.c.b16 %v3036, %v3035
  %v3089 = vpack.c.b16 %v3038, %v3037
  %v3090 = vpack.c.b16 %v3040, %v3039
  %v3091 = vpack.c.b16 %v3042, %v3041
  %v3092 = vpack.c.b16 %v3044, %v3043
  %v3093 = vpack.c.b16 %v3046, %v3045
  %v3094 = vpack.c.b16 %v3048, %v3047
  %v3095 = vpack.c.b16 %v3050, %v3049
  %v3096 = vpack.c.b16 %v3052, %v3051
  %v3097 = vpack.c.b16 %v3054, %v3053
  %v3098 = vpack.c.b16 %v3056, %v3055
  %v3099 = vpack.c.b16 %v3058, %v3057
  %v3100 = vpack.c.b16 %v3060, %v3059
  %v3101 = vpack.c.b16 %v3062, %v3061
  %v3102 = vpack.c.b16 %v3064, %v3063
  %v3103 = vpack.c.b16 %v3066, %v3065
  %v3104 = vpack.c.b16 %v3068, %v3067
  %v3105 = vpack.c.b16 %v3070, %v3069
  %v3106 = vpack.c.b16 %v3072, %v3071
  %v3107 = vpack.c.b16 %v3074, %v3073
  %v3108 = vpack.c.b16 %v3076, %v3075
  %3141 = vmatpush.bf16.msra.mxu0 %v3084
  %3142 = vmatpush.bf16.msra.mxu0 %v3083
  %3143 = vmatpush.bf16.msra.mxu0 %v3082
  %3144 = vmatpush.bf16.msra.mxu0 %v3081
  %3145 = vmatpush.bf16.msra.mxu0 %v3080
  %3146 = vmatpush.bf16.msra.mxu0 %v3079
  %3147 = vmatpush.bf16.msra.mxu0 %v3078
  %3148 = vmatpush.bf16.msra.mxu0 %v3077
  %3149 = vmatmul.bf16.gmra.mxu0 %v2941
  %v3150 = vpop.f32.mrf.mxu0
  %v3151 = vadd.f32 0.0, %v3150
  %v3152 = vpop.f32.mrf.mxu0
  %3153 = vdwg.mxu0
  %3154 = vmatpush.bf16.msra.mxu0 %v3092
  %3155 = vmatpush.bf16.msra.mxu0 %v3091
  %3156 = vmatpush.bf16.msra.mxu0 %v3090
  %3157 = vmatpush.bf16.msra.mxu0 %v3089
  %3158 = vmatpush.bf16.msra.mxu0 %v3088
  %3159 = vmatpush.bf16.msra.mxu0 %v3087
  %3160 = vmatpush.bf16.msra.mxu0 %v3086
  %3161 = vmatpush.bf16.msra.mxu0 %v3085
  %3162 = vmatmul.bf16.gmra.mxu0 %v2942
  %v3163 = vpop.f32.mrf.mxu0
  %v3164 = vadd.f32 %v3151, %v3163
  %v3165 = vpop.f32.mrf.mxu0
  %3166 = vdwg.mxu0
  %3167 = vmatpush.bf16.msra.mxu0 %v3100
  %3168 = vmatpush.bf16.msra.mxu0 %v3099
  %3169 = vmatpush.bf16.msra.mxu0 %v3098
  %3170 = vmatpush.bf16.msra.mxu0 %v3097
  %3171 = vmatpush.bf16.msra.mxu0 %v3096
  %3172 = vmatpush.bf16.msra.mxu0 %v3095
  %3173 = vmatpush.bf16.msra.mxu0 %v3094
  %3174 = vmatpush.bf16.msra.mxu0 %v3093
  %3175 = vmatmul.bf16.gmra.mxu0 %v2943
  %v3176 = vpop.f32.mrf.mxu0
  %v3177 = vadd.f32 %v3164, %v3176
  %v3178 = vpop.f32.mrf.mxu0
  %3179 = vdwg.mxu0
  %3180 = vmatpush.bf16.msra.mxu0 %v3108
  %3181 = vmatpush.bf16.msra.mxu0 %v3107
  %3182 = vmatpush.bf16.msra.mxu0 %v3106
  %3183 = vmatpush.bf16.msra.mxu0 %v3105
  %3184 = vmatpush.bf16.msra.mxu0 %v3104
  %3185 = vmatpush.bf16.msra.mxu0 %v3103
  %3186 = vmatpush.bf16.msra.mxu0 %v3102
  %3187 = vmatpush.bf16.msra.mxu0 %v3101
  %3188 = vmatmul.bf16.gmra.mxu0 %v2944
  %v3189 = vpop.f32.mrf.mxu0
  %v3190 = vadd.f32 %v3177, %v3189
  %v3191 = vpop.f32.mrf.mxu0
  %3192 = vdwg.mxu0
  %v3193 = vadd.f32 %v2875, %v3190
  %vm3194 = vcmask 254976
  %v3195 = vsel %vm3194, %v3193, 0.0
  %v3196 = vrot.slane %v3195, 4
  %v3197 = vadd.f32 %v3195, %v3196
  %v3198 = vrot.slane %v3197, 2
  %v3199 = vadd.f32 %v3197, %v3198
  %v3200 = vrot.slane %v3199, 1
  %v3201 = vadd.f32 %v3199, %v3200
  %v3202 = vrcp.pop 2.0
  %v3203 = vmul.f32 2.0, %v3202
  %v3204 = vsub.f32 1.0, %v3203
  %v3205 = vmul.f32 %v3202, %v3204
  %v3206 = vadd.f32 %v3202, %v3205
  %vm3207 = vweird.f32 %v3202
  %v3208 = vsel %vm3207, %v3202, %v3206
  %v3209 = vmul.f32 %v3201, %v3208
  %v3210 = vsub.f32 %v3193, %v3209
  %v3211 = vmul.f32 %v3210, %v3210
  %v3212 = vsel %vm3194, %v3211, 0.0
  %v3213 = vrot.slane %v3212, 4
  %v3214 = vadd.f32 %v3212, %v3213
  %v3215 = vrot.slane %v3214, 2
  %v3216 = vadd.f32 %v3214, %v3215
  %v3217 = vrot.slane %v3216, 1
  %v3218 = vadd.f32 %v3216, %v3217
  %v3219 = vmul.f32 %v3218, %v3208
  %v3220 = vadd.f32 %v3219, 0.8
  %v3221 = vrsqrt.pop %v3220
  %v3222 = vmul.f32 %v3221, %v3220
  %v3223 = vmul.f32 %v3222, %v3221
  %v3224 = vmul.f32 0.5, %v3223
  %v3225 = vsub.f32 1.5, %v3224
  %v3226 = vmul.f32 %v3221, %v3225
  %vm3227 = vweird.f32 %v3220
  %vm3228 = vweird.f32 %v3221
  %vm3229 = vmor %vm3227, %vm3228
  %v3230 = vsel %vm3229, %v3221, %v3226
  %v3231 = vmul.f32 %v3210, %v3230
  %v3232 = vld [vmem:[%s4] sm:$0x1]
  %v3234 = vperm.slane %v3232, 0
  %v3236 = vmul.f32 %v3231, %v3234
  %v3237 = vld [vmem:[%s5] sm:$0x1]
  %v3239 = vperm.slane %v3237, 0
  %v3241 = vadd.f32 %v3236, %v3239
  %v3242 = vmax.f32 %v3241, 0.0
  %v3243 = vpack.c.bf16 %v3242, %v3242
  %3244 = vst [vmem:[#allocation2] sm:$0xff] 0
  %3245 = vst [vmem:[#allocation2 + $0x8] sm:$0xff] 0
  %3246 = vst [vmem:[#allocation2 + $0x10] sm:$0xff] 0
  %3247 = vst [vmem:[#allocation2 + $0x18] sm:$0xff] 0
  %3248 = vst [vmem:[#allocation2 + $0x20] sm:$0x33] 0
  %3249 = vst [vmem:[#allocation2 + $0x28] sm:$0x33] 0
  %v3250 = vld [vmem:[%s6] sm:$0xff]
  %v3251 = vld [vmem:[%s6 + $0x8] sm:$0xff]
  %v3252 = vld [vmem:[%s6 + $0x10] sm:$0xff]
  %v3253 = vld [vmem:[%s6 + $0x18] sm:$0xff]
  %v3254 = vld [vmem:[%s6 + $0x20] sm:$0xff]
  %v3255 = vld [vmem:[%s6 + $0x28] sm:$0xff]
  %v3256 = vld [vmem:[%s6 + $0x30] sm:$0xff]
  %v3257 = vld [vmem:[%s6 + $0x38] sm:$0xff]
  %v3266 = vunpack.c.l.b16 %v3250
  %v3267 = vunpack.c.h.b16 %v3250
  %v3268 = vunpack.c.l.b16 %v3251
  %v3269 = vunpack.c.h.b16 %v3251
  %v3270 = vunpack.c.l.b16 %v3252
  %v3271 = vunpack.c.h.b16 %v3252
  %v3272 = vunpack.c.l.b16 %v3253
  %v3273 = vunpack.c.h.b16 %v3253
  %v3274 = vunpack.c.l.b16 %v3254
  %v3275 = vunpack.c.h.b16 %v3254
  %v3276 = vunpack.c.l.b16 %v3255
  %v3277 = vunpack.c.h.b16 %v3255
  %v3278 = vunpack.c.l.b16 %v3256
  %v3279 = vunpack.c.h.b16 %v3256
  %v3280 = vunpack.c.l.b16 %v3257
  %v3281 = vunpack.c.h.b16 %v3257
  %v3282 = vpack.c.b16 %v3270, %v3266
  %v3283 = vpack.c.b16 %v3271, %v3267
  %v3284 = vpack.c.b16 %v3272, %v3268
  %v3285 = vpack.c.b16 %v3273, %v3269
  %v3286 = vpack.c.b16 %v3278, %v3274
  %v3287 = vpack.c.b16 %v3279, %v3275
  %v3288 = vpack.c.b16 %v3280, %v3276
  %v3289 = vpack.c.b16 %v3281, %v3277
  %vm3298 = vcmask 261120
  %v3300 = vsel %vm3298, %v3243, 0
  %3302 = vmatpush.bf16.msra.mxu0 0
  %3303 = vmatpush.bf16.msra.mxu0 0
  %3304 = vmatpush.bf16.msra.mxu0 0
  %3305 = vmatpush.bf16.msra.mxu0 0
  %3306 = vmatpush.bf16.msra.mxu0 0
  %3307 = vmatpush.bf16.msra.mxu0 0
  %3308 = vmatpush.bf16.msra.mxu0 %v3286
  %3309 = vmatpush.bf16.msra.mxu0 %v3282
  %3310 = vmatmul.bf16.gmra.mxu0 %v3300
  %v3311 = vpop.f32.mrf.mxu0
  %v3312 = vadd.f32 0.0, %v3311
  %v3313 = vpop.f32.mrf.mxu0
  %3314 = vdwg.mxu0
  %3315 = vmatpush.bf16.msra.mxu0 0
  %3316 = vmatpush.bf16.msra.mxu0 0
  %3317 = vmatpush.bf16.msra.mxu0 0
  %3318 = vmatpush.bf16.msra.mxu0 0
  %3319 = vmatpush.bf16.msra.mxu0 0
  %3320 = vmatpush.bf16.msra.mxu0 0
  %3321 = vmatpush.bf16.msra.mxu0 %v3287
  %3322 = vmatpush.bf16.msra.mxu0 %v3283
  %3323 = vmatmul.bf16.gmra.mxu0 %v3300
  %v3324 = vpop.f32.mrf.mxu0
  %v3325 = vadd.f32 0.0, %v3324
  %v3326 = vpop.f32.mrf.mxu0
  %3327 = vdwg.mxu0
  %3328 = vmatpush.bf16.msra.mxu0 0
  %3329 = vmatpush.bf16.msra.mxu0 0
  %3330 = vmatpush.bf16.msra.mxu0 0
  %3331 = vmatpush.bf16.msra.mxu0 0
  %3332 = vmatpush.bf16.msra.mxu0 0
  %3333 = vmatpush.bf16.msra.mxu0 0
  %3334 = vmatpush.bf16.msra.mxu0 %v3288
  %3335 = vmatpush.bf16.msra.mxu0 %v3284
  %3336 = vmatmul.bf16.gmra.mxu0 %v3300
  %v3337 = vpop.f32.mrf.mxu0
  %v3338 = vadd.f32 0.0, %v3337
  %v3339 = vpop.f32.mrf.mxu0
  %3340 = vdwg.mxu0
  %3341 = vmatpush.bf16.msra.mxu0 0
  %3342 = vmatpush.bf16.msra.mxu0 0
  %3343 = vmatpush.bf16.msra.mxu0 0
  %3344 = vmatpush.bf16.msra.mxu0 0
  %3345 = vmatpush.bf16.msra.mxu0 0
  %3346 = vmatpush.bf16.msra.mxu0 0
  %3347 = vmatpush.bf16.msra.mxu0 %v3289
  %3348 = vmatpush.bf16.msra.mxu0 %v3285
  %3349 = vmatmul.bf16.gmra.mxu0 %v3300
  %v3350 = vpop.f32.mrf.mxu0
  %v3351 = vadd.f32 0.0, %v3350
  %v3352 = vpop.f32.mrf.mxu0
  %3353 = vdwg.mxu0
  %vm3354 = vcmask 1041408
  %v3355 = vsel %vm3354, %v3312, 0.0
  %v3356 = vrot.slane %v3355, 4
  %v3357 = vadd.f32 %v3355, %v3356
  %v3358 = vrot.slane %v3357, 2
  %v3359 = vadd.f32 %v3357, %v3358
  %v3360 = vrot.slane %v3359, 1
  %v3361 = vadd.f32 %v3359, %v3360
  %v3362 = vsel %vm3354, %v3325, 0.0
  %v3363 = vrot.slane %v3362, 4
  %v3364 = vadd.f32 %v3362, %v3363
  %v3365 = vrot.slane %v3364, 2
  %v3366 = vadd.f32 %v3364, %v3365
  %v3367 = vrot.slane %v3366, 1
  %v3368 = vadd.f32 %v3366, %v3367
  %v3369 = vsel %vm3354, %v3338, 0.0
  %v3370 = vrot.slane %v3369, 4
  %v3371 = vadd.f32 %v3369, %v3370
  %v3372 = vrot.slane %v3371, 2
  %v3373 = vadd.f32 %v3371, %v3372
  %v3374 = vrot.slane %v3373, 1
  %v3375 = vadd.f32 %v3373, %v3374
  %v3376 = vsel %vm3354, %v3351, 0.0
  %v3377 = vrot.slane %v3376, 4
  %v3378 = vadd.f32 %v3376, %v3377
  %v3379 = vrot.slane %v3378, 2
  %v3380 = vadd.f32 %v3378, %v3379
  %v3381 = vrot.slane %v3380, 1
  %v3382 = vadd.f32 %v3380, %v3381
  %v3383 = vmul.f32 %v3361, %v3208
  %v3384 = vmul.f32 %v3368, %v3208
  %v3385 = vmul.f32 %v3375, %v3208
  %v3386 = vmul.f32 %v3382, %v3208
  %v3387 = vsub.f32 %v3312, %v3383
  %v3388 = vsub.f32 %v3325, %v3384
  %v3389 = vsub.f32 %v3338, %v3385
  %v3390 = vsub.f32 %v3351, %v3386
  %v3391 = vmul.f32 %v3387, %v3387
  %v3392 = vmul.f32 %v3388, %v3388
  %v3393 = vmul.f32 %v3389, %v3389
  %v3394 = vmul.f32 %v3390, %v3390
  %v3395 = vsel %vm3354, %v3391, 0.0
  %v3396 = vrot.slane %v3395, 4
  %v3397 = vadd.f32 %v3395, %v3396
  %v3398 = vrot.slane %v3397, 2
  %v3399 = vadd.f32 %v3397, %v3398
  %v3400 = vrot.slane %v3399, 1
  %v3401 = vadd.f32 %v3399, %v3400
  %v3402 = vsel %vm3354, %v3392, 0.0
  %v3403 = vrot.slane %v3402, 4
  %v3404 = vadd.f32 %v3402, %v3403
  %v3405 = vrot.slane %v3404, 2
  %v3406 = vadd.f32 %v3404, %v3405
  %v3407 = vrot.slane %v3406, 1
  %v3408 = vadd.f32 %v3406, %v3407
  %v3409 = vsel %vm3354, %v3393, 0.0
  %v3410 = vrot.slane %v3409, 4
  %v3411 = vadd.f32 %v3409, %v3410
  %v3412 = vrot.slane %v3411, 2
  %v3413 = vadd.f32 %v3411, %v3412
  %v3414 = vrot.slane %v3413, 1
  %v3415 = vadd.f32 %v3413, %v3414
  %v3416 = vsel %vm3354, %v3394, 0.0
  %v3417 = vrot.slane %v3416, 4
  %v3418 = vadd.f32 %v3416, %v3417
  %v3419 = vrot.slane %v3418, 2
  %v3420 = vadd.f32 %v3418, %v3419
  %v3421 = vrot.slane %v3420, 1
  %v3422 = vadd.f32 %v3420, %v3421
  %v3423 = vmul.f32 %v3401, %v3208
  %v3424 = vmul.f32 %v3408, %v3208
  %v3425 = vmul.f32 %v3415, %v3208
  %v3426 = vmul.f32 %v3422, %v3208
  %v3427 = vadd.f32 %v3423, 1e-05
  %v3428 = vadd.f32 %v3424, 1e-05
  %v3429 = vadd.f32 %v3425, 1e-05
  %v3430 = vadd.f32 %v3426, 1e-05
  %v3431 = vrsqrt.pop %v3427
  %v3432 = vmul.f32 %v3431, %v3427
  %v3433 = vmul.f32 %v3432, %v3431
  %v3434 = vmul.f32 0.5, %v3433
  %v3435 = vsub.f32 1.5, %v3434
  %v3436 = vmul.f32 %v3431, %v3435
  %vm3437 = vweird.f32 %v3427
  %vm3438 = vweird.f32 %v3431
  %vm3439 = vmor %vm3437, %vm3438
  %v3440 = vsel %vm3439, %v3431, %v3436
  %v3441 = vrsqrt.pop %v3428
  %v3442 = vmul.f32 %v3441, %v3428
  %v3443 = vmul.f32 %v3442, %v3441
  %v3444 = vmul.f32 0.5, %v3443
  %v3445 = vsub.f32 1.5, %v3444
  %v3446 = vmul.f32 %v3441, %v3445
  %vm3447 = vweird.f32 %v3428
  %vm3448 = vweird.f32 %v3441
  %vm3449 = vmor %vm3447, %vm3448
  %v3450 = vsel %vm3449, %v3441, %v3446
  %v3451 = vrsqrt.pop %v3429
  %v3452 = vmul.f32 %v3451, %v3429
  %v3453 = vmul.f32 %v3452, %v3451
  %v3454 = vmul.f32 0.5, %v3453
  %v3455 = vsub.f32 1.5, %v3454
  %v3456 = vmul.f32 %v3451, %v3455
  %vm3457 = vweird.f32 %v3429
  %vm3458 = vweird.f32 %v3451
  %vm3459 = vmor %vm3457, %vm3458
  %v3460 = vsel %vm3459, %v3451, %v3456
  %v3461 = vrsqrt.pop %v3430
  %v3462 = vmul.f32 %v3461, %v3430
  %v3463 = vmul.f32 %v3462, %v3461
  %v3464 = vmul.f32 0.5, %v3463
  %v3465 = vsub.f32 1.5, %v3464
  %v3466 = vmul.f32 %v3461, %v3465
  %vm3467 = vweird.f32 %v3430
  %vm3468 = vweird.f32 %v3461
  %vm3469 = vmor %vm3467, %vm3468
  %v3470 = vsel %vm3469, %v3461, %v3466
  %v3471 = vmul.f32 %v3387, %v3440
  %v3472 = vmul.f32 %v3388, %v3450
  %v3473 = vmul.f32 %v3389, %v3460
  %v3474 = vmul.f32 %v3390, %v3470
  %v3475 = vld [vmem:[%s7] sm:$0xf]
  %v3477 = vperm.slane %v3475, 0
  %v3478 = vperm.slane %v3475, 1
  %v3479 = vperm.slane %v3475, 2
  %v3480 = vperm.slane %v3475, 3
  %v3485 = vmul.f32 %v3471, %v3477
  %v3486 = vmul.f32 %v3472, %v3478
  %v3487 = vmul.f32 %v3473, %v3479
  %v3488 = vmul.f32 %v3474, %v3480
  %v3489 = vld [vmem:[%s8] sm:$0xf]
  %v3491 = vperm.slane %v3489, 0
  %v3492 = vperm.slane %v3489, 1
  %v3493 = vperm.slane %v3489, 2
  %v3494 = vperm.slane %v3489, 3
  %v3499 = vadd.f32 %v3485, %v3491
  %v3500 = vadd.f32 %v3486, %v3492
  %v3501 = vadd.f32 %v3487, %v3493
  %v3502 = vadd.f32 %v3488, %v3494
  %v3503 = vmax.f32 %v3499, 0.0
  %v3504 = vmax.f32 %v3500, 0.0
  %v3505 = vmax.f32 %v3501, 0.0
  %v3506 = vmax.f32 %v3502, 0.0
  %v3507 = vpack.c.bf16 %v3504, %v3503
  %v3508 = vpack.c.bf16 %v3506, %v3505
  %v3510 = vshll.u32 %v3507, 16
  %v3513 = vshll.u32 %v3508, 16
  %vm3517 = vcmask 1040384
  %vm3518 = vsmask.f32 7938
  %vm3519 = vmand %vm3517, %vm3518
  %vm3520 = vcmask 1044484
  %vm3521 = vsmask.f32 7954
  %vm3522 = vmand %vm3520, %vm3521
  %vm3523 = vmor %vm3522, %vm3519
  %v3524 = vld [vmem:[#allocation2] sm:$0x11]
  %v3525 = vsel %vm3523, %v3510, %v3524
  %3526 = vst [vmem:[#allocation2] sm:$0x11] %v3525
  %v3527 = vld [vmem:[#allocation2 + $0x8] sm:$0x11]
  %v3528 = vsel %vm3523, %v3513, %v3527
  %3529 = vst [vmem:[#allocation2 + $0x8] sm:$0x11] %v3528
  %v3532 = vrot.slane %v3507, 7
  %v3533 = vrot.slane %v3508, 7
  %vm3536 = vcmask 1041409
  %vm3537 = vsmask.f32 7942
  %vm3538 = vmand %vm3536, %vm3537
  %vm3539 = vcmask 1045509
  %vm3540 = vsmask.f32 7958
  %vm3541 = vmand %vm3539, %vm3540
  %vm3542 = vmor %vm3541, %vm3538
  %v3543 = vld [vmem:[#allocation2 + $0x10] sm:$0x22]
  %v3544 = vsel %vm3542, %v3532, %v3543
  %3545 = vst [vmem:[#allocation2 + $0x10] sm:$0x22] %v3544
  %v3546 = vld [vmem:[#allocation2 + $0x18] sm:$0x22]
  %v3547 = vsel %vm3542, %v3533, %v3546
  %3548 = vst [vmem:[#allocation2 + $0x18] sm:$0x22] %v3547
  %s3549 = scalar_lea.vmem %s6, 64
  %v3550 = vld [vmem:[%s3549] sm:$0xff]
  %v3551 = vld [vmem:[%s3549 + $0x8] sm:$0xff]
  %v3552 = vld [vmem:[%s3549 + $0x10] sm:$0xff]
  %v3553 = vld [vmem:[%s3549 + $0x18] sm:$0xff]
  %v3554 = vld [vmem:[%s3549 + $0x20] sm:$0xff]
  %v3555 = vld [vmem:[%s3549 + $0x28] sm:$0xff]
  %v3556 = vld [vmem:[%s3549 + $0x30] sm:$0xff]
  %v3557 = vld [vmem:[%s3549 + $0x38] sm:$0xff]
  %v3566 = vunpack.c.l.b16 %v3550
  %v3567 = vunpack.c.h.b16 %v3550
  %v3568 = vunpack.c.l.b16 %v3551
  %v3569 = vunpack.c.h.b16 %v3551
  %v3570 = vunpack.c.l.b16 %v3552
  %v3571 = vunpack.c.h.b16 %v3552
  %v3572 = vunpack.c.l.b16 %v3553
  %v3573 = vunpack.c.h.b16 %v3553
  %v3574 = vunpack.c.l.b16 %v3554
  %v3575 = vunpack.c.h.b16 %v3554
  %v3576 = vunpack.c.l.b16 %v3555
  %v3577 = vunpack.c.h.b16 %v3555
  %v3578 = vunpack.c.l.b16 %v3556
  %v3579 = vunpack.c.h.b16 %v3556
  %v3580 = vunpack.c.l.b16 %v3557
  %v3581 = vunpack.c.h.b16 %v3557
  %v3582 = vpack.c.b16 %v3570, %v3566
  %v3583 = vpack.c.b16 %v3571, %v3567
  %v3584 = vpack.c.b16 %v3572, %v3568
  %v3585 = vpack.c.b16 %v3573, %v3569
  %v3586 = vpack.c.b16 %v3578, %v3574
  %v3587 = vpack.c.b16 %v3579, %v3575
  %v3588 = vpack.c.b16 %v3580, %v3576
  %v3589 = vpack.c.b16 %v3581, %v3577
  %3598 = vmatpush.bf16.msra.mxu0 0
  %3599 = vmatpush.bf16.msra.mxu0 0
  %3600 = vmatpush.bf16.msra.mxu0 0
  %3601 = vmatpush.bf16.msra.mxu0 0
  %3602 = vmatpush.bf16.msra.mxu0 0
  %3603 = vmatpush.bf16.msra.mxu0 0
  %3604 = vmatpush.bf16.msra.mxu0 %v3586
  %3605 = vmatpush.bf16.msra.mxu0 %v3582
  %3606 = vmatmul.bf16.gmra.mxu0 %v3300
  %v3607 = vpop.f32.mrf.mxu0
  %v3608 = vadd.f32 0.0, %v3607
  %v3609 = vpop.f32.mrf.mxu0
  %3610 = vdwg.mxu0
  %3611 = vmatpush.bf16.msra.mxu0 0
  %3612 = vmatpush.bf16.msra.mxu0 0
  %3613 = vmatpush.bf16.msra.mxu0 0
  %3614 = vmatpush.bf16.msra.mxu0 0
  %3615 = vmatpush.bf16.msra.mxu0 0
  %3616 = vmatpush.bf16.msra.mxu0 0
  %3617 = vmatpush.bf16.msra.mxu0 %v3587
  %3618 = vmatpush.bf16.msra.mxu0 %v3583
  %3619 = vmatmul.bf16.gmra.mxu0 %v3300
  %v3620 = vpop.f32.mrf.mxu0
  %v3621 = vadd.f32 0.0, %v3620
  %v3622 = vpop.f32.mrf.mxu0
  %3623 = vdwg.mxu0
  %3624 = vmatpush.bf16.msra.mxu0 0
  %3625 = vmatpush.bf16.msra.mxu0 0
  %3626 = vmatpush.bf16.msra.mxu0 0
  %3627 = vmatpush.bf16.msra.mxu0 0
  %3628 = vmatpush.bf16.msra.mxu0 0
  %3629 = vmatpush.bf16.msra.mxu0 0
  %3630 = vmatpush.bf16.msra.mxu0 %v3588
  %3631 = vmatpush.bf16.msra.mxu0 %v3584
  %3632 = vmatmul.bf16.gmra.mxu0 %v3300
  %v3633 = vpop.f32.mrf.mxu0
  %v3634 = vadd.f32 0.0, %v3633
  %v3635 = vpop.f32.mrf.mxu0
  %3636 = vdwg.mxu0
  %3637 = vmatpush.bf16.msra.mxu0 0
  %3638 = vmatpush.bf16.msra.mxu0 0
  %3639 = vmatpush.bf16.msra.mxu0 0
  %3640 = vmatpush.bf16.msra.mxu0 0
  %3641 = vmatpush.bf16.msra.mxu0 0
  %3642 = vmatpush.bf16.msra.mxu0 0
  %3643 = vmatpush.bf16.msra.mxu0 %v3589
  %3644 = vmatpush.bf16.msra.mxu0 %v3585
  %3645 = vmatmul.bf16.gmra.mxu0 %v3300
  %v3646 = vpop.f32.mrf.mxu0
  %v3647 = vadd.f32 0.0, %v3646
  %v3648 = vpop.f32.mrf.mxu0
  %3649 = vdwg.mxu0
  %v3650 = vsel %vm3354, %v3608, 0.0
  %v3651 = vrot.slane %v3650, 4
  %v3652 = vadd.f32 %v3650, %v3651
  %v3653 = vrot.slane %v3652, 2
  %v3654 = vadd.f32 %v3652, %v3653
  %v3655 = vrot.slane %v3654, 1
  %v3656 = vadd.f32 %v3654, %v3655
  %v3657 = vsel %vm3354, %v3621, 0.0
  %v3658 = vrot.slane %v3657, 4
  %v3659 = vadd.f32 %v3657, %v3658
  %v3660 = vrot.slane %v3659, 2
  %v3661 = vadd.f32 %v3659, %v3660
  %v3662 = vrot.slane %v3661, 1
  %v3663 = vadd.f32 %v3661, %v3662
  %v3664 = vsel %vm3354, %v3634, 0.0
  %v3665 = vrot.slane %v3664, 4
  %v3666 = vadd.f32 %v3664, %v3665
  %v3667 = vrot.slane %v3666, 2
  %v3668 = vadd.f32 %v3666, %v3667
  %v3669 = vrot.slane %v3668, 1
  %v3670 = vadd.f32 %v3668, %v3669
  %v3671 = vsel %vm3354, %v3647, 0.0
  %v3672 = vrot.slane %v3671, 4
  %v3673 = vadd.f32 %v3671, %v3672
  %v3674 = vrot.slane %v3673, 2
  %v3675 = vadd.f32 %v3673, %v3674
  %v3676 = vrot.slane %v3675, 1
  %v3677 = vadd.f32 %v3675, %v3676
  %v3678 = vmul.f32 %v3656, %v3208
  %v3679 = vmul.f32 %v3663, %v3208
  %v3680 = vmul.f32 %v3670, %v3208
  %v3681 = vmul.f32 %v3677, %v3208
  %v3682 = vsub.f32 %v3608, %v3678
  %v3683 = vsub.f32 %v3621, %v3679
  %v3684 = vsub.f32 %v3634, %v3680
  %v3685 = vsub.f32 %v3647, %v3681
  %v3686 = vmul.f32 %v3682, %v3682
  %v3687 = vmul.f32 %v3683, %v3683
  %v3688 = vmul.f32 %v3684, %v3684
  %v3689 = vmul.f32 %v3685, %v3685
  %v3690 = vsel %vm3354, %v3686, 0.0
  %v3691 = vrot.slane %v3690, 4
  %v3692 = vadd.f32 %v3690, %v3691
  %v3693 = vrot.slane %v3692, 2
  %v3694 = vadd.f32 %v3692, %v3693
  %v3695 = vrot.slane %v3694, 1
  %v3696 = vadd.f32 %v3694, %v3695
  %v3697 = vsel %vm3354, %v3687, 0.0
  %v3698 = vrot.slane %v3697, 4
  %v3699 = vadd.f32 %v3697, %v3698
  %v3700 = vrot.slane %v3699, 2
  %v3701 = vadd.f32 %v3699, %v3700
  %v3702 = vrot.slane %v3701, 1
  %v3703 = vadd.f32 %v3701, %v3702
  %v3704 = vsel %vm3354, %v3688, 0.0
  %v3705 = vrot.slane %v3704, 4
  %v3706 = vadd.f32 %v3704, %v3705
  %v3707 = vrot.slane %v3706, 2
  %v3708 = vadd.f32 %v3706, %v3707
  %v3709 = vrot.slane %v3708, 1
  %v3710 = vadd.f32 %v3708, %v3709
  %v3711 = vsel %vm3354, %v3689, 0.0
  %v3712 = vrot.slane %v3711, 4
  %v3713 = vadd.f32 %v3711, %v3712
  %v3714 = vrot.slane %v3713, 2
  %v3715 = vadd.f32 %v3713, %v3714
  %v3716 = vrot.slane %v3715, 1
  %v3717 = vadd.f32 %v3715, %v3716
  %v3718 = vmul.f32 %v3696, %v3208
  %v3719 = vmul.f32 %v3703, %v3208
  %v3720 = vmul.f32 %v3710, %v3208
  %v3721 = vmul.f32 %v3717, %v3208
  %v3722 = vadd.f32 %v3718, 1e-05
  %v3723 = vadd.f32 %v3719, 1e-05
  %v3724 = vadd.f32 %v3720, 1e-05
  %v3725 = vadd.f32 %v3721, 1e-05
  %v3726 = vrsqrt.pop %v3722
  %v3727 = vmul.f32 %v3726, %v3722
  %v3728 = vmul.f32 %v3727, %v3726
  %v3729 = vmul.f32 0.5, %v3728
  %v3730 = vsub.f32 1.5, %v3729
  %v3731 = vmul.f32 %v3726, %v3730
  %vm3732 = vweird.f32 %v3722
  %vm3733 = vweird.f32 %v3726
  %vm3734 = vmor %vm3732, %vm3733
  %v3735 = vsel %vm3734, %v3726, %v3731
  %v3736 = vrsqrt.pop %v3723
  %v3737 = vmul.f32 %v3736, %v3723
  %v3738 = vmul.f32 %v3737, %v3736
  %v3739 = vmul.f32 0.5, %v3738
  %v3740 = vsub.f32 1.5, %v3739
  %v3741 = vmul.f32 %v3736, %v3740
  %vm3742 = vweird.f32 %v3723
  %vm3743 = vweird.f32 %v3736
  %vm3744 = vmor %vm3742, %vm3743
  %v3745 = vsel %vm3744, %v3736, %v3741
  %v3746 = vrsqrt.pop %v3724
  %v3747 = vmul.f32 %v3746, %v3724
  %v3748 = vmul.f32 %v3747, %v3746
  %v3749 = vmul.f32 0.5, %v3748
  %v3750 = vsub.f32 1.5, %v3749
  %v3751 = vmul.f32 %v3746, %v3750
  %vm3752 = vweird.f32 %v3724
  %vm3753 = vweird.f32 %v3746
  %vm3754 = vmor %vm3752, %vm3753
  %v3755 = vsel %vm3754, %v3746, %v3751
  %v3756 = vrsqrt.pop %v3725
  %v3757 = vmul.f32 %v3756, %v3725
  %v3758 = vmul.f32 %v3757, %v3756
  %v3759 = vmul.f32 0.5, %v3758
  %v3760 = vsub.f32 1.5, %v3759
  %v3761 = vmul.f32 %v3756, %v3760
  %vm3762 = vweird.f32 %v3725
  %vm3763 = vweird.f32 %v3756
  %vm3764 = vmor %vm3762, %vm3763
  %v3765 = vsel %vm3764, %v3756, %v3761
  %v3766 = vmul.f32 %v3682, %v3735
  %v3767 = vmul.f32 %v3683, %v3745
  %v3768 = vmul.f32 %v3684, %v3755
  %v3769 = vmul.f32 %v3685, %v3765
  %s3770 = scalar_lea.vmem %s7, 4
  %v3771 = vld [vmem:[%s3770] sm:$0xf]
  %v3773 = vperm.slane %v3771, 0
  %v3774 = vperm.slane %v3771, 1
  %v3775 = vperm.slane %v3771, 2
  %v3776 = vperm.slane %v3771, 3
  %v3781 = vmul.f32 %v3766, %v3773
  %v3782 = vmul.f32 %v3767, %v3774
  %v3783 = vmul.f32 %v3768, %v3775
  %v3784 = vmul.f32 %v3769, %v3776
  %s3785 = scalar_lea.vmem %s8, 4
  %v3786 = vld [vmem:[%s3785] sm:$0xf]
  %v3788 = vperm.slane %v3786, 0
  %v3789 = vperm.slane %v3786, 1
  %v3790 = vperm.slane %v3786, 2
  %v3791 = vperm.slane %v3786, 3
  %v3796 = vadd.f32 %v3781, %v3788
  %v3797 = vadd.f32 %v3782, %v3789
  %v3798 = vadd.f32 %v3783, %v3790
  %v3799 = vadd.f32 %v3784, %v3791
  %v3800 = vmax.f32 %v3796, 0.0
  %v3801 = vmax.f32 %v3797, 0.0
  %v3802 = vmax.f32 %v3798, 0.0
  %v3803 = vmax.f32 %v3799, 0.0
  %v3804 = vpack.c.bf16 %v3801, %v3800
  %v3805 = vpack.c.bf16 %v3803, %v3802
  %v3808 = vrot.slane %v3804, 7
  %v3809 = vrot.slane %v3805, 7
  %vm3812 = vsmask.f32 1280
  %vm3813 = vmand %vm3536, %vm3812
  %vm3814 = vsmask.f32 5376
  %vm3815 = vmand %vm3539, %vm3814
  %vm3816 = vmor %vm3815, %vm3813
  %v3817 = vld [vmem:[#allocation2] sm:$0x22]
  %v3818 = vsel %vm3816, %v3808, %v3817
  %3819 = vst [vmem:[#allocation2] sm:$0x22] %v3818
  %v3820 = vld [vmem:[#allocation2 + $0x8] sm:$0x22]
  %v3821 = vsel %vm3816, %v3809, %v3820
  %3822 = vst [vmem:[#allocation2 + $0x8] sm:$0x22] %v3821
  %v3824 = vshrl.u32 %v3804, 16
  %v3826 = vrot.slane %v3824, 6
  %v3828 = vshrl.u32 %v3805, 16
  %v3830 = vrot.slane %v3828, 6
  %vm3833 = vcmask 1042434
  %vm3834 = vsmask.f32 2304
  %vm3835 = vmand %vm3833, %vm3834
  %vm3836 = vcmask 1046534
  %vm3837 = vsmask.f32 6400
  %vm3838 = vmand %vm3836, %vm3837
  %vm3839 = vmor %vm3838, %vm3835
  %v3840 = vld [vmem:[#allocation2 + $0x10] sm:$0x44]
  %v3841 = vsel %vm3839, %v3826, %v3840
  %3842 = vst [vmem:[#allocation2 + $0x10] sm:$0x44] %v3841
  %v3843 = vld [vmem:[#allocation2 + $0x18] sm:$0x44]
  %v3844 = vsel %vm3839, %v3830, %v3843
  %3845 = vst [vmem:[#allocation2 + $0x18] sm:$0x44] %v3844
  %s3846 = scalar_lea.vmem %s6, 128
  %v3847 = vld [vmem:[%s3846] sm:$0xff]
  %v3848 = vld [vmem:[%s3846 + $0x8] sm:$0xff]
  %v3849 = vld [vmem:[%s3846 + $0x10] sm:$0xff]
  %v3850 = vld [vmem:[%s3846 + $0x18] sm:$0xff]
  %v3851 = vld [vmem:[%s3846 + $0x20] sm:$0xff]
  %v3852 = vld [vmem:[%s3846 + $0x28] sm:$0xff]
  %v3853 = vld [vmem:[%s3846 + $0x30] sm:$0xff]
  %v3854 = vld [vmem:[%s3846 + $0x38] sm:$0xff]
  %v3863 = vunpack.c.l.b16 %v3847
  %v3864 = vunpack.c.h.b16 %v3847
  %v3865 = vunpack.c.l.b16 %v3848
  %v3866 = vunpack.c.h.b16 %v3848
  %v3867 = vunpack.c.l.b16 %v3849
  %v3868 = vunpack.c.h.b16 %v3849
  %v3869 = vunpack.c.l.b16 %v3850
  %v3870 = vunpack.c.h.b16 %v3850
  %v3871 = vunpack.c.l.b16 %v3851
  %v3872 = vunpack.c.h.b16 %v3851
  %v3873 = vunpack.c.l.b16 %v3852
  %v3874 = vunpack.c.h.b16 %v3852
  %v3875 = vunpack.c.l.b16 %v3853
  %v3876 = vunpack.c.h.b16 %v3853
  %v3877 = vunpack.c.l.b16 %v3854
  %v3878 = vunpack.c.h.b16 %v3854
  %v3879 = vpack.c.b16 %v3867, %v3863
  %v3880 = vpack.c.b16 %v3868, %v3864
  %v3881 = vpack.c.b16 %v3869, %v3865
  %v3882 = vpack.c.b16 %v3870, %v3866
  %v3883 = vpack.c.b16 %v3875, %v3871
  %v3884 = vpack.c.b16 %v3876, %v3872
  %v3885 = vpack.c.b16 %v3877, %v3873
  %v3886 = vpack.c.b16 %v3878, %v3874
  %3895 = vmatpush.bf16.msra.mxu0 0
  %3896 = vmatpush.bf16.msra.mxu0 0
  %3897 = vmatpush.bf16.msra.mxu0 0
  %3898 = vmatpush.bf16.msra.mxu0 0
  %3899 = vmatpush.bf16.msra.mxu0 0
  %3900 = vmatpush.bf16.msra.mxu0 0
  %3901 = vmatpush.bf16.msra.mxu0 %v3883
  %3902 = vmatpush.bf16.msra.mxu0 %v3879
  %3903 = vmatmul.bf16.gmra.mxu0 %v3300
  %v3904 = vpop.f32.mrf.mxu0
  %v3905 = vadd.f32 0.0, %v3904
  %v3906 = vpop.f32.mrf.mxu0
  %3907 = vdwg.mxu0
  %3908 = vmatpush.bf16.msra.mxu0 0
  %3909 = vmatpush.bf16.msra.mxu0 0
  %3910 = vmatpush.bf16.msra.mxu0 0
  %3911 = vmatpush.bf16.msra.mxu0 0
  %3912 = vmatpush.bf16.msra.mxu0 0
  %3913 = vmatpush.bf16.msra.mxu0 0
  %3914 = vmatpush.bf16.msra.mxu0 %v3884
  %3915 = vmatpush.bf16.msra.mxu0 %v3880
  %3916 = vmatmul.bf16.gmra.mxu0 %v3300
  %v3917 = vpop.f32.mrf.mxu0
  %v3918 = vadd.f32 0.0, %v3917
  %v3919 = vpop.f32.mrf.mxu0
  %3920 = vdwg.mxu0
  %3921 = vmatpush.bf16.msra.mxu0 0
  %3922 = vmatpush.bf16.msra.mxu0 0
  %3923 = vmatpush.bf16.msra.mxu0 0
  %3924 = vmatpush.bf16.msra.mxu0 0
  %3925 = vmatpush.bf16.msra.mxu0 0
  %3926 = vmatpush.bf16.msra.mxu0 0
  %3927 = vmatpush.bf16.msra.mxu0 %v3885
  %3928 = vmatpush.bf16.msra.mxu0 %v3881
  %3929 = vmatmul.bf16.gmra.mxu0 %v3300
  %v3930 = vpop.f32.mrf.mxu0
  %v3931 = vadd.f32 0.0, %v3930
  %v3932 = vpop.f32.mrf.mxu0
  %3933 = vdwg.mxu0
  %3934 = vmatpush.bf16.msra.mxu0 0
  %3935 = vmatpush.bf16.msra.mxu0 0
  %3936 = vmatpush.bf16.msra.mxu0 0
  %3937 = vmatpush.bf16.msra.mxu0 0
  %3938 = vmatpush.bf16.msra.mxu0 0
  %3939 = vmatpush.bf16.msra.mxu0 0
  %3940 = vmatpush.bf16.msra.mxu0 %v3886
  %3941 = vmatpush.bf16.msra.mxu0 %v3882
  %3942 = vmatmul.bf16.gmra.mxu0 %v3300
  %v3943 = vpop.f32.mrf.mxu0
  %v3944 = vadd.f32 0.0, %v3943
  %v3945 = vpop.f32.mrf.mxu0
  %3946 = vdwg.mxu0
  %v3947 = vsel %vm3354, %v3905, 0.0
  %v3948 = vrot.slane %v3947, 4
  %v3949 = vadd.f32 %v3947, %v3948
  %v3950 = vrot.slane %v3949, 2
  %v3951 = vadd.f32 %v3949, %v3950
  %v3952 = vrot.slane %v3951, 1
  %v3953 = vadd.f32 %v3951, %v3952
  %v3954 = vsel %vm3354, %v3918, 0.0
  %v3955 = vrot.slane %v3954, 4
  %v3956 = vadd.f32 %v3954, %v3955
  %v3957 = vrot.slane %v3956, 2
  %v3958 = vadd.f32 %v3956, %v3957
  %v3959 = vrot.slane %v3958, 1
  %v3960 = vadd.f32 %v3958, %v3959
  %v3961 = vsel %vm3354, %v3931, 0.0
  %v3962 = vrot.slane %v3961, 4
  %v3963 = vadd.f32 %v3961, %v3962
  %v3964 = vrot.slane %v3963, 2
  %v3965 = vadd.f32 %v3963, %v3964
  %v3966 = vrot.slane %v3965, 1
  %v3967 = vadd.f32 %v3965, %v3966
  %v3968 = vsel %vm3354, %v3944, 0.0
  %v3969 = vrot.slane %v3968, 4
  %v3970 = vadd.f32 %v3968, %v3969
  %v3971 = vrot.slane %v3970, 2
  %v3972 = vadd.f32 %v3970, %v3971
  %v3973 = vrot.slane %v3972, 1
  %v3974 = vadd.f32 %v3972, %v3973
  %v3975 = vmul.f32 %v3953, %v3208
  %v3976 = vmul.f32 %v3960, %v3208
  %v3977 = vmul.f32 %v3967, %v3208
  %v3978 = vmul.f32 %v3974, %v3208
  %v3979 = vsub.f32 %v3905, %v3975
  %v3980 = vsub.f32 %v3918, %v3976
  %v3981 = vsub.f32 %v3931, %v3977
  %v3982 = vsub.f32 %v3944, %v3978
  %v3983 = vmul.f32 %v3979, %v3979
  %v3984 = vmul.f32 %v3980, %v3980
  %v3985 = vmul.f32 %v3981, %v3981
  %v3986 = vmul.f32 %v3982, %v3982
  %v3987 = vsel %vm3354, %v3983, 0.0
  %v3988 = vrot.slane %v3987, 4
  %v3989 = vadd.f32 %v3987, %v3988
  %v3990 = vrot.slane %v3989, 2
  %v3991 = vadd.f32 %v3989, %v3990
  %v3992 = vrot.slane %v3991, 1
  %v3993 = vadd.f32 %v3991, %v3992
  %v3994 = vsel %vm3354, %v3984, 0.0
  %v3995 = vrot.slane %v3994, 4
  %v3996 = vadd.f32 %v3994, %v3995
  %v3997 = vrot.slane %v3996, 2
  %v3998 = vadd.f32 %v3996, %v3997
  %v3999 = vrot.slane %v3998, 1
  %v4000 = vadd.f32 %v3998, %v3999
  %v4001 = vsel %vm3354, %v3985, 0.0
  %v4002 = vrot.slane %v4001, 4
  %v4003 = vadd.f32 %v4001, %v4002
  %v4004 = vrot.slane %v4003, 2
  %v4005 = vadd.f32 %v4003, %v4004
  %v4006 = vrot.slane %v4005, 1
  %v4007 = vadd.f32 %v4005, %v4006
  %v4008 = vsel %vm3354, %v3986, 0.0
  %v4009 = vrot.slane %v4008, 4
  %v4010 = vadd.f32 %v4008, %v4009
  %v4011 = vrot.slane %v4010, 2
  %v4012 = vadd.f32 %v4010, %v4011
  %v4013 = vrot.slane %v4012, 1
  %v4014 = vadd.f32 %v4012, %v4013
  %v4015 = vmul.f32 %v3993, %v3208
  %v4016 = vmul.f32 %v4000, %v3208
  %v4017 = vmul.f32 %v4007, %v3208
  %v4018 = vmul.f32 %v4014, %v3208
  %v4019 = vadd.f32 %v4015, 1e-05
  %v4020 = vadd.f32 %v4016, 1e-05
  %v4021 = vadd.f32 %v4017, 1e-05
  %v4022 = vadd.f32 %v4018, 1e-05
  %v4023 = vrsqrt.pop %v4019
  %v4024 = vmul.f32 %v4023, %v4019
  %v4025 = vmul.f32 %v4024, %v4023
  %v4026 = vmul.f32 0.5, %v4025
  %v4027 = vsub.f32 1.5, %v4026
  %v4028 = vmul.f32 %v4023, %v4027
  %vm4029 = vweird.f32 %v4019
  %vm4030 = vweird.f32 %v4023
  %vm4031 = vmor %vm4029, %vm4030
  %v4032 = vsel %vm4031, %v4023, %v4028
  %v4033 = vrsqrt.pop %v4020
  %v4034 = vmul.f32 %v4033, %v4020
  %v4035 = vmul.f32 %v4034, %v4033
  %v4036 = vmul.f32 0.5, %v4035
  %v4037 = vsub.f32 1.5, %v4036
  %v4038 = vmul.f32 %v4033, %v4037
  %vm4039 = vweird.f32 %v4020
  %vm4040 = vweird.f32 %v4033
  %vm4041 = vmor %vm4039, %vm4040
  %v4042 = vsel %vm4041, %v4033, %v4038
  %v4043 = vrsqrt.pop %v4021
  %v4044 = vmul.f32 %v4043, %v4021
  %v4045 = vmul.f32 %v4044, %v4043
  %v4046 = vmul.f32 0.5, %v4045
  %v4047 = vsub.f32 1.5, %v4046
  %v4048 = vmul.f32 %v4043, %v4047
  %vm4049 = vweird.f32 %v4021
  %vm4050 = vweird.f32 %v4043
  %vm4051 = vmor %vm4049, %vm4050
  %v4052 = vsel %vm4051, %v4043, %v4048
  %v4053 = vrsqrt.pop %v4022
  %v4054 = vmul.f32 %v4053, %v4022
  %v4055 = vmul.f32 %v4054, %v4053
  %v4056 = vmul.f32 0.5, %v4055
  %v4057 = vsub.f32 1.5, %v4056
  %v4058 = vmul.f32 %v4053, %v4057
  %vm4059 = vweird.f32 %v4022
  %vm4060 = vweird.f32 %v4053
  %vm4061 = vmor %vm4059, %vm4060
  %v4062 = vsel %vm4061, %v4053, %v4058
  %v4063 = vmul.f32 %v3979, %v4032
  %v4064 = vmul.f32 %v3980, %v4042
  %v4065 = vmul.f32 %v3981, %v4052
  %v4066 = vmul.f32 %v3982, %v4062
  %s4067 = scalar_lea.vmem %s7, 8
  %v4068 = vld [vmem:[%s4067] sm:$0xf]
  %v4070 = vperm.slane %v4068, 0
  %v4071 = vperm.slane %v4068, 1
  %v4072 = vperm.slane %v4068, 2
  %v4073 = vperm.slane %v4068, 3
  %v4078 = vmul.f32 %v4063, %v4070
  %v4079 = vmul.f32 %v4064, %v4071
  %v4080 = vmul.f32 %v4065, %v4072
  %v4081 = vmul.f32 %v4066, %v4073
  %s4082 = scalar_lea.vmem %s8, 8
  %v4083 = vld [vmem:[%s4082] sm:$0xf]
  %v4085 = vperm.slane %v4083, 0
  %v4086 = vperm.slane %v4083, 1
  %v4087 = vperm.slane %v4083, 2
  %v4088 = vperm.slane %v4083, 3
  %v4093 = vadd.f32 %v4078, %v4085
  %v4094 = vadd.f32 %v4079, %v4086
  %v4095 = vadd.f32 %v4080, %v4087
  %v4096 = vadd.f32 %v4081, %v4088
  %v4097 = vmax.f32 %v4093, 0.0
  %v4098 = vmax.f32 %v4094, 0.0
  %v4099 = vmax.f32 %v4095, 0.0
  %v4100 = vmax.f32 %v4096, 0.0
  %v4101 = vpack.c.bf16 %v4098, %v4097
  %v4102 = vpack.c.bf16 %v4100, %v4099
  %v4104 = vshll.u32 %v4101, 16
  %v4106 = vrot.slane %v4104, 7
  %v4108 = vshll.u32 %v4102, 16
  %v4110 = vrot.slane %v4108, 7
  %v4113 = vld [vmem:[#allocation2] sm:$0x22]
  %v4114 = vsel %vm3542, %v4106, %v4113
  %4115 = vst [vmem:[#allocation2] sm:$0x22] %v4114
  %v4116 = vld [vmem:[#allocation2 + $0x8] sm:$0x22]
  %v4117 = vsel %vm3542, %v4110, %v4116
  %4118 = vst [vmem:[#allocation2 + $0x8] sm:$0x22] %v4117
  %v4121 = vrot.slane %v4101, 6
  %v4122 = vrot.slane %v4102, 6
  %vm4125 = vsmask.f32 7946
  %vm4126 = vmand %vm3833, %vm4125
  %vm4127 = vsmask.f32 7962
  %vm4128 = vmand %vm3836, %vm4127
  %vm4129 = vmor %vm4128, %vm4126
  %v4130 = vld [vmem:[#allocation2 + $0x10] sm:$0x44]
  %v4131 = vsel %vm4129, %v4121, %v4130
  %4132 = vst [vmem:[#allocation2 + $0x10] sm:$0x44] %v4131
  %v4133 = vld [vmem:[#allocation2 + $0x18] sm:$0x44]
  %v4134 = vsel %vm4129, %v4122, %v4133
  %4135 = vst [vmem:[#allocation2 + $0x18] sm:$0x44] %v4134
  %s4136 = scalar_lea.vmem %s6, 192
  %v4137 = vld [vmem:[%s4136] sm:$0xff]
  %v4138 = vld [vmem:[%s4136 + $0x8] sm:$0xff]
  %v4139 = vld [vmem:[%s4136 + $0x10] sm:$0xff]
  %v4140 = vld [vmem:[%s4136 + $0x18] sm:$0xff]
  %v4141 = vld [vmem:[%s4136 + $0x20] sm:$0xff]
  %v4142 = vld [vmem:[%s4136 + $0x28] sm:$0xff]
  %v4143 = vld [vmem:[%s4136 + $0x30] sm:$0xff]
  %v4144 = vld [vmem:[%s4136 + $0x38] sm:$0xff]
  %v4153 = vunpack.c.l.b16 %v4137
  %v4154 = vunpack.c.h.b16 %v4137
  %v4155 = vunpack.c.l.b16 %v4138
  %v4156 = vunpack.c.h.b16 %v4138
  %v4157 = vunpack.c.l.b16 %v4139
  %v4158 = vunpack.c.h.b16 %v4139
  %v4159 = vunpack.c.l.b16 %v4140
  %v4160 = vunpack.c.h.b16 %v4140
  %v4161 = vunpack.c.l.b16 %v4141
  %v4162 = vunpack.c.h.b16 %v4141
  %v4163 = vunpack.c.l.b16 %v4142
  %v4164 = vunpack.c.h.b16 %v4142
  %v4165 = vunpack.c.l.b16 %v4143
  %v4166 = vunpack.c.h.b16 %v4143
  %v4167 = vunpack.c.l.b16 %v4144
  %v4168 = vunpack.c.h.b16 %v4144
  %v4169 = vpack.c.b16 %v4157, %v4153
  %v4170 = vpack.c.b16 %v4158, %v4154
  %v4171 = vpack.c.b16 %v4159, %v4155
  %v4172 = vpack.c.b16 %v4160, %v4156
  %v4173 = vpack.c.b16 %v4165, %v4161
  %v4174 = vpack.c.b16 %v4166, %v4162
  %v4175 = vpack.c.b16 %v4167, %v4163
  %v4176 = vpack.c.b16 %v4168, %v4164
  %4185 = vmatpush.bf16.msra.mxu0 0
  %4186 = vmatpush.bf16.msra.mxu0 0
  %4187 = vmatpush.bf16.msra.mxu0 0
  %4188 = vmatpush.bf16.msra.mxu0 0
  %4189 = vmatpush.bf16.msra.mxu0 0
  %4190 = vmatpush.bf16.msra.mxu0 0
  %4191 = vmatpush.bf16.msra.mxu0 %v4173
  %4192 = vmatpush.bf16.msra.mxu0 %v4169
  %4193 = vmatmul.bf16.gmra.mxu0 %v3300
  %v4194 = vpop.f32.mrf.mxu0
  %v4195 = vadd.f32 0.0, %v4194
  %v4196 = vpop.f32.mrf.mxu0
  %4197 = vdwg.mxu0
  %4198 = vmatpush.bf16.msra.mxu0 0
  %4199 = vmatpush.bf16.msra.mxu0 0
  %4200 = vmatpush.bf16.msra.mxu0 0
  %4201 = vmatpush.bf16.msra.mxu0 0
  %4202 = vmatpush.bf16.msra.mxu0 0
  %4203 = vmatpush.bf16.msra.mxu0 0
  %4204 = vmatpush.bf16.msra.mxu0 %v4174
  %4205 = vmatpush.bf16.msra.mxu0 %v4170
  %4206 = vmatmul.bf16.gmra.mxu0 %v3300
  %v4207 = vpop.f32.mrf.mxu0
  %v4208 = vadd.f32 0.0, %v4207
  %v4209 = vpop.f32.mrf.mxu0
  %4210 = vdwg.mxu0
  %4211 = vmatpush.bf16.msra.mxu0 0
  %4212 = vmatpush.bf16.msra.mxu0 0
  %4213 = vmatpush.bf16.msra.mxu0 0
  %4214 = vmatpush.bf16.msra.mxu0 0
  %4215 = vmatpush.bf16.msra.mxu0 0
  %4216 = vmatpush.bf16.msra.mxu0 0
  %4217 = vmatpush.bf16.msra.mxu0 %v4175
  %4218 = vmatpush.bf16.msra.mxu0 %v4171
  %4219 = vmatmul.bf16.gmra.mxu0 %v3300
  %v4220 = vpop.f32.mrf.mxu0
  %v4221 = vadd.f32 0.0, %v4220
  %v4222 = vpop.f32.mrf.mxu0
  %4223 = vdwg.mxu0
  %4224 = vmatpush.bf16.msra.mxu0 0
  %4225 = vmatpush.bf16.msra.mxu0 0
  %4226 = vmatpush.bf16.msra.mxu0 0
  %4227 = vmatpush.bf16.msra.mxu0 0
  %4228 = vmatpush.bf16.msra.mxu0 0
  %4229 = vmatpush.bf16.msra.mxu0 0
  %4230 = vmatpush.bf16.msra.mxu0 %v4176
  %4231 = vmatpush.bf16.msra.mxu0 %v4172
  %4232 = vmatmul.bf16.gmra.mxu0 %v3300
  %v4233 = vpop.f32.mrf.mxu0
  %v4234 = vadd.f32 0.0, %v4233
  %v4235 = vpop.f32.mrf.mxu0
  %4236 = vdwg.mxu0
  %v4237 = vsel %vm3354, %v4195, 0.0
  %v4238 = vrot.slane %v4237, 4
  %v4239 = vadd.f32 %v4237, %v4238
  %v4240 = vrot.slane %v4239, 2
  %v4241 = vadd.f32 %v4239, %v4240
  %v4242 = vrot.slane %v4241, 1
  %v4243 = vadd.f32 %v4241, %v4242
  %v4244 = vsel %vm3354, %v4208, 0.0
  %v4245 = vrot.slane %v4244, 4
  %v4246 = vadd.f32 %v4244, %v4245
  %v4247 = vrot.slane %v4246, 2
  %v4248 = vadd.f32 %v4246, %v4247
  %v4249 = vrot.slane %v4248, 1
  %v4250 = vadd.f32 %v4248, %v4249
  %v4251 = vsel %vm3354, %v4221, 0.0
  %v4252 = vrot.slane %v4251, 4
  %v4253 = vadd.f32 %v4251, %v4252
  %v4254 = vrot.slane %v4253, 2
  %v4255 = vadd.f32 %v4253, %v4254
  %v4256 = vrot.slane %v4255, 1
  %v4257 = vadd.f32 %v4255, %v4256
  %v4258 = vsel %vm3354, %v4234, 0.0
  %v4259 = vrot.slane %v4258, 4
  %v4260 = vadd.f32 %v4258, %v4259
  %v4261 = vrot.slane %v4260, 2
  %v4262 = vadd.f32 %v4260, %v4261
  %v4263 = vrot.slane %v4262, 1
  %v4264 = vadd.f32 %v4262, %v4263
  %v4265 = vmul.f32 %v4243, %v3208
  %v4266 = vmul.f32 %v4250, %v3208
  %v4267 = vmul.f32 %v4257, %v3208
  %v4268 = vmul.f32 %v4264, %v3208
  %v4269 = vsub.f32 %v4195, %v4265
  %v4270 = vsub.f32 %v4208, %v4266
  %v4271 = vsub.f32 %v4221, %v4267
  %v4272 = vsub.f32 %v4234, %v4268
  %v4273 = vmul.f32 %v4269, %v4269
  %v4274 = vmul.f32 %v4270, %v4270
  %v4275 = vmul.f32 %v4271, %v4271
  %v4276 = vmul.f32 %v4272, %v4272
  %v4277 = vsel %vm3354, %v4273, 0.0
  %v4278 = vrot.slane %v4277, 4
  %v4279 = vadd.f32 %v4277, %v4278
  %v4280 = vrot.slane %v4279, 2
  %v4281 = vadd.f32 %v4279, %v4280
  %v4282 = vrot.slane %v4281, 1
  %v4283 = vadd.f32 %v4281, %v4282
  %v4284 = vsel %vm3354, %v4274, 0.0
  %v4285 = vrot.slane %v4284, 4
  %v4286 = vadd.f32 %v4284, %v4285
  %v4287 = vrot.slane %v4286, 2
  %v4288 = vadd.f32 %v4286, %v4287
  %v4289 = vrot.slane %v4288, 1
  %v4290 = vadd.f32 %v4288, %v4289
  %v4291 = vsel %vm3354, %v4275, 0.0
  %v4292 = vrot.slane %v4291, 4
  %v4293 = vadd.f32 %v4291, %v4292
  %v4294 = vrot.slane %v4293, 2
  %v4295 = vadd.f32 %v4293, %v4294
  %v4296 = vrot.slane %v4295, 1
  %v4297 = vadd.f32 %v4295, %v4296
  %v4298 = vsel %vm3354, %v4276, 0.0
  %v4299 = vrot.slane %v4298, 4
  %v4300 = vadd.f32 %v4298, %v4299
  %v4301 = vrot.slane %v4300, 2
  %v4302 = vadd.f32 %v4300, %v4301
  %v4303 = vrot.slane %v4302, 1
  %v4304 = vadd.f32 %v4302, %v4303
  %v4305 = vmul.f32 %v4283, %v3208
  %v4306 = vmul.f32 %v4290, %v3208
  %v4307 = vmul.f32 %v4297, %v3208
  %v4308 = vmul.f32 %v4304, %v3208
  %v4309 = vadd.f32 %v4305, 1e-05
  %v4310 = vadd.f32 %v4306, 1e-05
  %v4311 = vadd.f32 %v4307, 1e-05
  %v4312 = vadd.f32 %v4308, 1e-05
  %v4313 = vrsqrt.pop %v4309
  %v4314 = vmul.f32 %v4313, %v4309
  %v4315 = vmul.f32 %v4314, %v4313
  %v4316 = vmul.f32 0.5, %v4315
  %v4317 = vsub.f32 1.5, %v4316
  %v4318 = vmul.f32 %v4313, %v4317
  %vm4319 = vweird.f32 %v4309
  %vm4320 = vweird.f32 %v4313
  %vm4321 = vmor %vm4319, %vm4320
  %v4322 = vsel %vm4321, %v4313, %v4318
  %v4323 = vrsqrt.pop %v4310
  %v4324 = vmul.f32 %v4323, %v4310
  %v4325 = vmul.f32 %v4324, %v4323
  %v4326 = vmul.f32 0.5, %v4325
  %v4327 = vsub.f32 1.5, %v4326
  %v4328 = vmul.f32 %v4323, %v4327
  %vm4329 = vweird.f32 %v4310
  %vm4330 = vweird.f32 %v4323
  %vm4331 = vmor %vm4329, %vm4330
  %v4332 = vsel %vm4331, %v4323, %v4328
  %v4333 = vrsqrt.pop %v4311
  %v4334 = vmul.f32 %v4333, %v4311
  %v4335 = vmul.f32 %v4334, %v4333
  %v4336 = vmul.f32 0.5, %v4335
  %v4337 = vsub.f32 1.5, %v4336
  %v4338 = vmul.f32 %v4333, %v4337
  %vm4339 = vweird.f32 %v4311
  %vm4340 = vweird.f32 %v4333
  %vm4341 = vmor %vm4339, %vm4340
  %v4342 = vsel %vm4341, %v4333, %v4338
  %v4343 = vrsqrt.pop %v4312
  %v4344 = vmul.f32 %v4343, %v4312
  %v4345 = vmul.f32 %v4344, %v4343
  %v4346 = vmul.f32 0.5, %v4345
  %v4347 = vsub.f32 1.5, %v4346
  %v4348 = vmul.f32 %v4343, %v4347
  %vm4349 = vweird.f32 %v4312
  %vm4350 = vweird.f32 %v4343
  %vm4351 = vmor %vm4349, %vm4350
  %v4352 = vsel %vm4351, %v4343, %v4348
  %v4353 = vmul.f32 %v4269, %v4322
  %v4354 = vmul.f32 %v4270, %v4332
  %v4355 = vmul.f32 %v4271, %v4342
  %v4356 = vmul.f32 %v4272, %v4352
  %s4357 = scalar_lea.vmem %s7, 12
  %v4358 = vld [vmem:[%s4357] sm:$0xf]
  %v4360 = vperm.slane %v4358, 0
  %v4361 = vperm.slane %v4358, 1
  %v4362 = vperm.slane %v4358, 2
  %v4363 = vperm.slane %v4358, 3
  %v4368 = vmul.f32 %v4353, %v4360
  %v4369 = vmul.f32 %v4354, %v4361
  %v4370 = vmul.f32 %v4355, %v4362
  %v4371 = vmul.f32 %v4356, %v4363
  %s4372 = scalar_lea.vmem %s8, 12
  %v4373 = vld [vmem:[%s4372] sm:$0xf]
  %v4375 = vperm.slane %v4373, 0
  %v4376 = vperm.slane %v4373, 1
  %v4377 = vperm.slane %v4373, 2
  %v4378 = vperm.slane %v4373, 3
  %v4383 = vadd.f32 %v4368, %v4375
  %v4384 = vadd.f32 %v4369, %v4376
  %v4385 = vadd.f32 %v4370, %v4377
  %v4386 = vadd.f32 %v4371, %v4378
  %v4387 = vmax.f32 %v4383, 0.0
  %v4388 = vmax.f32 %v4384, 0.0
  %v4389 = vmax.f32 %v4385, 0.0
  %v4390 = vmax.f32 %v4386, 0.0
  %v4391 = vpack.c.bf16 %v4388, %v4387
  %v4392 = vpack.c.bf16 %v4390, %v4389
  %v4395 = vrot.slane %v4391, 6
  %v4396 = vrot.slane %v4392, 6
  %v4399 = vld [vmem:[#allocation2] sm:$0x44]
  %v4400 = vsel %vm3839, %v4395, %v4399
  %4401 = vst [vmem:[#allocation2] sm:$0x44] %v4400
  %v4402 = vld [vmem:[#allocation2 + $0x8] sm:$0x44]
  %v4403 = vsel %vm3839, %v4396, %v4402
  %4404 = vst [vmem:[#allocation2 + $0x8] sm:$0x44] %v4403
  %v4406 = vshrl.u32 %v4391, 16
  %v4408 = vrot.slane %v4406, 5
  %v4410 = vshrl.u32 %v4392, 16
  %v4412 = vrot.slane %v4410, 5
  %vm4415 = vcmask 1043459
  %vm4416 = vsmask.f32 3328
  %vm4417 = vmand %vm4415, %vm4416
  %vm4418 = vcmask 1047559
  %vm4419 = vsmask.f32 7424
  %vm4420 = vmand %vm4418, %vm4419
  %vm4421 = vmor %vm4420, %vm4417
  %v4422 = vld [vmem:[#allocation2 + $0x10] sm:$0x88]
  %v4423 = vsel %vm4421, %v4408, %v4422
  %4424 = vst [vmem:[#allocation2 + $0x10] sm:$0x88] %v4423
  %v4425 = vld [vmem:[#allocation2 + $0x18] sm:$0x88]
  %v4426 = vsel %vm4421, %v4412, %v4425
  %4427 = vst [vmem:[#allocation2 + $0x18] sm:$0x88] %v4426
  %s4428 = scalar_lea.vmem %s6, 256
  %v4429 = vld [vmem:[%s4428] sm:$0xff]
  %v4430 = vld [vmem:[%s4428 + $0x8] sm:$0xff]
  %v4431 = vld [vmem:[%s4428 + $0x10] sm:$0xff]
  %v4432 = vld [vmem:[%s4428 + $0x18] sm:$0xff]
  %v4433 = vld [vmem:[%s4428 + $0x20] sm:$0xff]
  %v4434 = vld [vmem:[%s4428 + $0x28] sm:$0xff]
  %v4435 = vld [vmem:[%s4428 + $0x30] sm:$0xff]
  %v4436 = vld [vmem:[%s4428 + $0x38] sm:$0xff]
  %v4445 = vunpack.c.l.b16 %v4429
  %v4446 = vunpack.c.h.b16 %v4429
  %v4447 = vunpack.c.l.b16 %v4430
  %v4448 = vunpack.c.h.b16 %v4430
  %v4449 = vunpack.c.l.b16 %v4431
  %v4450 = vunpack.c.h.b16 %v4431
  %v4451 = vunpack.c.l.b16 %v4432
  %v4452 = vunpack.c.h.b16 %v4432
  %v4453 = vunpack.c.l.b16 %v4433
  %v4454 = vunpack.c.h.b16 %v4433
  %v4455 = vunpack.c.l.b16 %v4434
  %v4456 = vunpack.c.h.b16 %v4434
  %v4457 = vunpack.c.l.b16 %v4435
  %v4458 = vunpack.c.h.b16 %v4435
  %v4459 = vunpack.c.l.b16 %v4436
  %v4460 = vunpack.c.h.b16 %v4436
  %v4461 = vpack.c.b16 %v4449, %v4445
  %v4462 = vpack.c.b16 %v4450, %v4446
  %v4463 = vpack.c.b16 %v4451, %v4447
  %v4464 = vpack.c.b16 %v4452, %v4448
  %v4465 = vpack.c.b16 %v4457, %v4453
  %v4466 = vpack.c.b16 %v4458, %v4454
  %v4467 = vpack.c.b16 %v4459, %v4455
  %v4468 = vpack.c.b16 %v4460, %v4456
  %4477 = vmatpush.bf16.msra.mxu0 0
  %4478 = vmatpush.bf16.msra.mxu0 0
  %4479 = vmatpush.bf16.msra.mxu0 0
  %4480 = vmatpush.bf16.msra.mxu0 0
  %4481 = vmatpush.bf16.msra.mxu0 0
  %4482 = vmatpush.bf16.msra.mxu0 0
  %4483 = vmatpush.bf16.msra.mxu0 %v4465
  %4484 = vmatpush.bf16.msra.mxu0 %v4461
  %4485 = vmatmul.bf16.gmra.mxu0 %v3300
  %v4486 = vpop.f32.mrf.mxu0
  %v4487 = vadd.f32 0.0, %v4486
  %v4488 = vpop.f32.mrf.mxu0
  %4489 = vdwg.mxu0
  %4490 = vmatpush.bf16.msra.mxu0 0
  %4491 = vmatpush.bf16.msra.mxu0 0
  %4492 = vmatpush.bf16.msra.mxu0 0
  %4493 = vmatpush.bf16.msra.mxu0 0
  %4494 = vmatpush.bf16.msra.mxu0 0
  %4495 = vmatpush.bf16.msra.mxu0 0
  %4496 = vmatpush.bf16.msra.mxu0 %v4466
  %4497 = vmatpush.bf16.msra.mxu0 %v4462
  %4498 = vmatmul.bf16.gmra.mxu0 %v3300
  %v4499 = vpop.f32.mrf.mxu0
  %v4500 = vadd.f32 0.0, %v4499
  %v4501 = vpop.f32.mrf.mxu0
  %4502 = vdwg.mxu0
  %4503 = vmatpush.bf16.msra.mxu0 0
  %4504 = vmatpush.bf16.msra.mxu0 0
  %4505 = vmatpush.bf16.msra.mxu0 0
  %4506 = vmatpush.bf16.msra.mxu0 0
  %4507 = vmatpush.bf16.msra.mxu0 0
  %4508 = vmatpush.bf16.msra.mxu0 0
  %4509 = vmatpush.bf16.msra.mxu0 %v4467
  %4510 = vmatpush.bf16.msra.mxu0 %v4463
  %4511 = vmatmul.bf16.gmra.mxu0 %v3300
  %v4512 = vpop.f32.mrf.mxu0
  %v4513 = vadd.f32 0.0, %v4512
  %v4514 = vpop.f32.mrf.mxu0
  %4515 = vdwg.mxu0
  %4516 = vmatpush.bf16.msra.mxu0 0
  %4517 = vmatpush.bf16.msra.mxu0 0
  %4518 = vmatpush.bf16.msra.mxu0 0
  %4519 = vmatpush.bf16.msra.mxu0 0
  %4520 = vmatpush.bf16.msra.mxu0 0
  %4521 = vmatpush.bf16.msra.mxu0 0
  %4522 = vmatpush.bf16.msra.mxu0 %v4468
  %4523 = vmatpush.bf16.msra.mxu0 %v4464
  %4524 = vmatmul.bf16.gmra.mxu0 %v3300
  %v4525 = vpop.f32.mrf.mxu0
  %v4526 = vadd.f32 0.0, %v4525
  %v4527 = vpop.f32.mrf.mxu0
  %4528 = vdwg.mxu0
  %v4529 = vsel %vm3354, %v4487, 0.0
  %v4530 = vrot.slane %v4529, 4
  %v4531 = vadd.f32 %v4529, %v4530
  %v4532 = vrot.slane %v4531, 2
  %v4533 = vadd.f32 %v4531, %v4532
  %v4534 = vrot.slane %v4533, 1
  %v4535 = vadd.f32 %v4533, %v4534
  %v4536 = vsel %vm3354, %v4500, 0.0
  %v4537 = vrot.slane %v4536, 4
  %v4538 = vadd.f32 %v4536, %v4537
  %v4539 = vrot.slane %v4538, 2
  %v4540 = vadd.f32 %v4538, %v4539
  %v4541 = vrot.slane %v4540, 1
  %v4542 = vadd.f32 %v4540, %v4541
  %v4543 = vsel %vm3354, %v4513, 0.0
  %v4544 = vrot.slane %v4543, 4
  %v4545 = vadd.f32 %v4543, %v4544
  %v4546 = vrot.slane %v4545, 2
  %v4547 = vadd.f32 %v4545, %v4546
  %v4548 = vrot.slane %v4547, 1
  %v4549 = vadd.f32 %v4547, %v4548
  %v4550 = vsel %vm3354, %v4526, 0.0
  %v4551 = vrot.slane %v4550, 4
  %v4552 = vadd.f32 %v4550, %v4551
  %v4553 = vrot.slane %v4552, 2
  %v4554 = vadd.f32 %v4552, %v4553
  %v4555 = vrot.slane %v4554, 1
  %v4556 = vadd.f32 %v4554, %v4555
  %v4557 = vmul.f32 %v4535, %v3208
  %v4558 = vmul.f32 %v4542, %v3208
  %v4559 = vmul.f32 %v4549, %v3208
  %v4560 = vmul.f32 %v4556, %v3208
  %v4561 = vsub.f32 %v4487, %v4557
  %v4562 = vsub.f32 %v4500, %v4558
  %v4563 = vsub.f32 %v4513, %v4559
  %v4564 = vsub.f32 %v4526, %v4560
  %v4565 = vmul.f32 %v4561, %v4561
  %v4566 = vmul.f32 %v4562, %v4562
  %v4567 = vmul.f32 %v4563, %v4563
  %v4568 = vmul.f32 %v4564, %v4564
  %v4569 = vsel %vm3354, %v4565, 0.0
  %v4570 = vrot.slane %v4569, 4
  %v4571 = vadd.f32 %v4569, %v4570
  %v4572 = vrot.slane %v4571, 2
  %v4573 = vadd.f32 %v4571, %v4572
  %v4574 = vrot.slane %v4573, 1
  %v4575 = vadd.f32 %v4573, %v4574
  %v4576 = vsel %vm3354, %v4566, 0.0
  %v4577 = vrot.slane %v4576, 4
  %v4578 = vadd.f32 %v4576, %v4577
  %v4579 = vrot.slane %v4578, 2
  %v4580 = vadd.f32 %v4578, %v4579
  %v4581 = vrot.slane %v4580, 1
  %v4582 = vadd.f32 %v4580, %v4581
  %v4583 = vsel %vm3354, %v4567, 0.0
  %v4584 = vrot.slane %v4583, 4
  %v4585 = vadd.f32 %v4583, %v4584
  %v4586 = vrot.slane %v4585, 2
  %v4587 = vadd.f32 %v4585, %v4586
  %v4588 = vrot.slane %v4587, 1
  %v4589 = vadd.f32 %v4587, %v4588
  %v4590 = vsel %vm3354, %v4568, 0.0
  %v4591 = vrot.slane %v4590, 4
  %v4592 = vadd.f32 %v4590, %v4591
  %v4593 = vrot.slane %v4592, 2
  %v4594 = vadd.f32 %v4592, %v4593
  %v4595 = vrot.slane %v4594, 1
  %v4596 = vadd.f32 %v4594, %v4595
  %v4597 = vmul.f32 %v4575, %v3208
  %v4598 = vmul.f32 %v4582, %v3208
  %v4599 = vmul.f32 %v4589, %v3208
  %v4600 = vmul.f32 %v4596, %v3208
  %v4601 = vadd.f32 %v4597, 1e-05
  %v4602 = vadd.f32 %v4598, 1e-05
  %v4603 = vadd.f32 %v4599, 1e-05
  %v4604 = vadd.f32 %v4600, 1e-05
  %v4605 = vrsqrt.pop %v4601
  %v4606 = vmul.f32 %v4605, %v4601
  %v4607 = vmul.f32 %v4606, %v4605
  %v4608 = vmul.f32 0.5, %v4607
  %v4609 = vsub.f32 1.5, %v4608
  %v4610 = vmul.f32 %v4605, %v4609
  %vm4611 = vweird.f32 %v4601
  %vm4612 = vweird.f32 %v4605
  %vm4613 = vmor %vm4611, %vm4612
  %v4614 = vsel %vm4613, %v4605, %v4610
  %v4615 = vrsqrt.pop %v4602
  %v4616 = vmul.f32 %v4615, %v4602
  %v4617 = vmul.f32 %v4616, %v4615
  %v4618 = vmul.f32 0.5, %v4617
  %v4619 = vsub.f32 1.5, %v4618
  %v4620 = vmul.f32 %v4615, %v4619
  %vm4621 = vweird.f32 %v4602
  %vm4622 = vweird.f32 %v4615
  %vm4623 = vmor %vm4621, %vm4622
  %v4624 = vsel %vm4623, %v4615, %v4620
  %v4625 = vrsqrt.pop %v4603
  %v4626 = vmul.f32 %v4625, %v4603
  %v4627 = vmul.f32 %v4626, %v4625
  %v4628 = vmul.f32 0.5, %v4627
  %v4629 = vsub.f32 1.5, %v4628
  %v4630 = vmul.f32 %v4625, %v4629
  %vm4631 = vweird.f32 %v4603
  %vm4632 = vweird.f32 %v4625
  %vm4633 = vmor %vm4631, %vm4632
  %v4634 = vsel %vm4633, %v4625, %v4630
  %v4635 = vrsqrt.pop %v4604
  %v4636 = vmul.f32 %v4635, %v4604
  %v4637 = vmul.f32 %v4636, %v4635
  %v4638 = vmul.f32 0.5, %v4637
  %v4639 = vsub.f32 1.5, %v4638
  %v4640 = vmul.f32 %v4635, %v4639
  %vm4641 = vweird.f32 %v4604
  %vm4642 = vweird.f32 %v4635
  %vm4643 = vmor %vm4641, %vm4642
  %v4644 = vsel %vm4643, %v4635, %v4640
  %v4645 = vmul.f32 %v4561, %v4614
  %v4646 = vmul.f32 %v4562, %v4624
  %v4647 = vmul.f32 %v4563, %v4634
  %v4648 = vmul.f32 %v4564, %v4644
  %s4649 = scalar_lea.vmem %s7, 16
  %v4650 = vld [vmem:[%s4649] sm:$0xf]
  %v4652 = vperm.slane %v4650, 0
  %v4653 = vperm.slane %v4650, 1
  %v4654 = vperm.slane %v4650, 2
  %v4655 = vperm.slane %v4650, 3
  %v4660 = vmul.f32 %v4645, %v4652
  %v4661 = vmul.f32 %v4646, %v4653
  %v4662 = vmul.f32 %v4647, %v4654
  %v4663 = vmul.f32 %v4648, %v4655
  %s4664 = scalar_lea.vmem %s8, 16
  %v4665 = vld [vmem:[%s4664] sm:$0xf]
  %v4667 = vperm.slane %v4665, 0
  %v4668 = vperm.slane %v4665, 1
  %v4669 = vperm.slane %v4665, 2
  %v4670 = vperm.slane %v4665, 3
  %v4675 = vadd.f32 %v4660, %v4667
  %v4676 = vadd.f32 %v4661, %v4668
  %v4677 = vadd.f32 %v4662, %v4669
  %v4678 = vadd.f32 %v4663, %v4670
  %v4679 = vmax.f32 %v4675, 0.0
  %v4680 = vmax.f32 %v4676, 0.0
  %v4681 = vmax.f32 %v4677, 0.0
  %v4682 = vmax.f32 %v4678, 0.0
  %v4683 = vpack.c.bf16 %v4680, %v4679
  %v4684 = vpack.c.bf16 %v4682, %v4681
  %v4686 = vshll.u32 %v4683, 16
  %v4688 = vrot.slane %v4686, 6
  %v4690 = vshll.u32 %v4684, 16
  %v4692 = vrot.slane %v4690, 6
  %v4695 = vld [vmem:[#allocation2] sm:$0x44]
  %v4696 = vsel %vm4129, %v4688, %v4695
  %4697 = vst [vmem:[#allocation2] sm:$0x44] %v4696
  %v4698 = vld [vmem:[#allocation2 + $0x8] sm:$0x44]
  %v4699 = vsel %vm4129, %v4692, %v4698
  %4700 = vst [vmem:[#allocation2 + $0x8] sm:$0x44] %v4699
  %v4703 = vrot.slane %v4683, 5
  %v4704 = vrot.slane %v4684, 5
  %vm4707 = vsmask.f32 7950
  %vm4708 = vmand %vm4415, %vm4707
  %vm4709 = vsmask.f32 7966
  %vm4710 = vmand %vm4418, %vm4709
  %vm4711 = vmor %vm4710, %vm4708
  %v4712 = vld [vmem:[#allocation2 + $0x10] sm:$0x88]
  %v4713 = vsel %vm4711, %v4703, %v4712
  %4714 = vst [vmem:[#allocation2 + $0x10] sm:$0x88] %v4713
  %v4715 = vld [vmem:[#allocation2 + $0x18] sm:$0x88]
  %v4716 = vsel %vm4711, %v4704, %v4715
  %4717 = vst [vmem:[#allocation2 + $0x18] sm:$0x88] %v4716
  %s4718 = scalar_lea.vmem %s6, 320
  %v4719 = vld [vmem:[%s4718] sm:$0xff]
  %v4720 = vld [vmem:[%s4718 + $0x8] sm:$0xff]
  %v4721 = vld [vmem:[%s4718 + $0x10] sm:$0xff]
  %v4722 = vld [vmem:[%s4718 + $0x18] sm:$0xff]
  %v4723 = vld [vmem:[%s4718 + $0x20] sm:$0xff]
  %v4724 = vld [vmem:[%s4718 + $0x28] sm:$0xff]
  %v4725 = vld [vmem:[%s4718 + $0x30] sm:$0xff]
  %v4726 = vld [vmem:[%s4718 + $0x38] sm:$0xff]
  %v4735 = vunpack.c.l.b16 %v4719
  %v4736 = vunpack.c.h.b16 %v4719
  %v4737 = vunpack.c.l.b16 %v4720
  %v4738 = vunpack.c.h.b16 %v4720
  %v4739 = vunpack.c.l.b16 %v4721
  %v4740 = vunpack.c.h.b16 %v4721
  %v4741 = vunpack.c.l.b16 %v4722
  %v4742 = vunpack.c.h.b16 %v4722
  %v4743 = vunpack.c.l.b16 %v4723
  %v4744 = vunpack.c.h.b16 %v4723
  %v4745 = vunpack.c.l.b16 %v4724
  %v4746 = vunpack.c.h.b16 %v4724
  %v4747 = vunpack.c.l.b16 %v4725
  %v4748 = vunpack.c.h.b16 %v4725
  %v4749 = vunpack.c.l.b16 %v4726
  %v4750 = vunpack.c.h.b16 %v4726
  %v4751 = vpack.c.b16 %v4739, %v4735
  %v4752 = vpack.c.b16 %v4740, %v4736
  %v4753 = vpack.c.b16 %v4741, %v4737
  %v4754 = vpack.c.b16 %v4742, %v4738
  %v4755 = vpack.c.b16 %v4747, %v4743
  %v4756 = vpack.c.b16 %v4748, %v4744
  %v4757 = vpack.c.b16 %v4749, %v4745
  %v4758 = vpack.c.b16 %v4750, %v4746
  %4767 = vmatpush.bf16.msra.mxu0 0
  %4768 = vmatpush.bf16.msra.mxu0 0
  %4769 = vmatpush.bf16.msra.mxu0 0
  %4770 = vmatpush.bf16.msra.mxu0 0
  %4771 = vmatpush.bf16.msra.mxu0 0
  %4772 = vmatpush.bf16.msra.mxu0 0
  %4773 = vmatpush.bf16.msra.mxu0 %v4755
  %4774 = vmatpush.bf16.msra.mxu0 %v4751
  %4775 = vmatmul.bf16.gmra.mxu0 %v3300
  %v4776 = vpop.f32.mrf.mxu0
  %v4777 = vadd.f32 0.0, %v4776
  %v4778 = vpop.f32.mrf.mxu0
  %4779 = vdwg.mxu0
  %4780 = vmatpush.bf16.msra.mxu0 0
  %4781 = vmatpush.bf16.msra.mxu0 0
  %4782 = vmatpush.bf16.msra.mxu0 0
  %4783 = vmatpush.bf16.msra.mxu0 0
  %4784 = vmatpush.bf16.msra.mxu0 0
  %4785 = vmatpush.bf16.msra.mxu0 0
  %4786 = vmatpush.bf16.msra.mxu0 %v4756
  %4787 = vmatpush.bf16.msra.mxu0 %v4752
  %4788 = vmatmul.bf16.gmra.mxu0 %v3300
  %v4789 = vpop.f32.mrf.mxu0
  %v4790 = vadd.f32 0.0, %v4789
  %v4791 = vpop.f32.mrf.mxu0
  %4792 = vdwg.mxu0
  %4793 = vmatpush.bf16.msra.mxu0 0
  %4794 = vmatpush.bf16.msra.mxu0 0
  %4795 = vmatpush.bf16.msra.mxu0 0
  %4796 = vmatpush.bf16.msra.mxu0 0
  %4797 = vmatpush.bf16.msra.mxu0 0
  %4798 = vmatpush.bf16.msra.mxu0 0
  %4799 = vmatpush.bf16.msra.mxu0 %v4757
  %4800 = vmatpush.bf16.msra.mxu0 %v4753
  %4801 = vmatmul.bf16.gmra.mxu0 %v3300
  %v4802 = vpop.f32.mrf.mxu0
  %v4803 = vadd.f32 0.0, %v4802
  %v4804 = vpop.f32.mrf.mxu0
  %4805 = vdwg.mxu0
  %4806 = vmatpush.bf16.msra.mxu0 0
  %4807 = vmatpush.bf16.msra.mxu0 0
  %4808 = vmatpush.bf16.msra.mxu0 0
  %4809 = vmatpush.bf16.msra.mxu0 0
  %4810 = vmatpush.bf16.msra.mxu0 0
  %4811 = vmatpush.bf16.msra.mxu0 0
  %4812 = vmatpush.bf16.msra.mxu0 %v4758
  %4813 = vmatpush.bf16.msra.mxu0 %v4754
  %4814 = vmatmul.bf16.gmra.mxu0 %v3300
  %v4815 = vpop.f32.mrf.mxu0
  %v4816 = vadd.f32 0.0, %v4815
  %v4817 = vpop.f32.mrf.mxu0
  %4818 = vdwg.mxu0
  %v4819 = vsel %vm3354, %v4777, 0.0
  %v4820 = vrot.slane %v4819, 4
  %v4821 = vadd.f32 %v4819, %v4820
  %v4822 = vrot.slane %v4821, 2
  %v4823 = vadd.f32 %v4821, %v4822
  %v4824 = vrot.slane %v4823, 1
  %v4825 = vadd.f32 %v4823, %v4824
  %v4826 = vsel %vm3354, %v4790, 0.0
  %v4827 = vrot.slane %v4826, 4
  %v4828 = vadd.f32 %v4826, %v4827
  %v4829 = vrot.slane %v4828, 2
  %v4830 = vadd.f32 %v4828, %v4829
  %v4831 = vrot.slane %v4830, 1
  %v4832 = vadd.f32 %v4830, %v4831
  %v4833 = vsel %vm3354, %v4803, 0.0
  %v4834 = vrot.slane %v4833, 4
  %v4835 = vadd.f32 %v4833, %v4834
  %v4836 = vrot.slane %v4835, 2
  %v4837 = vadd.f32 %v4835, %v4836
  %v4838 = vrot.slane %v4837, 1
  %v4839 = vadd.f32 %v4837, %v4838
  %v4840 = vsel %vm3354, %v4816, 0.0
  %v4841 = vrot.slane %v4840, 4
  %v4842 = vadd.f32 %v4840, %v4841
  %v4843 = vrot.slane %v4842, 2
  %v4844 = vadd.f32 %v4842, %v4843
  %v4845 = vrot.slane %v4844, 1
  %v4846 = vadd.f32 %v4844, %v4845
  %v4847 = vmul.f32 %v4825, %v3208
  %v4848 = vmul.f32 %v4832, %v3208
  %v4849 = vmul.f32 %v4839, %v3208
  %v4850 = vmul.f32 %v4846, %v3208
  %v4851 = vsub.f32 %v4777, %v4847
  %v4852 = vsub.f32 %v4790, %v4848
  %v4853 = vsub.f32 %v4803, %v4849
  %v4854 = vsub.f32 %v4816, %v4850
  %v4855 = vmul.f32 %v4851, %v4851
  %v4856 = vmul.f32 %v4852, %v4852
  %v4857 = vmul.f32 %v4853, %v4853
  %v4858 = vmul.f32 %v4854, %v4854
  %v4859 = vsel %vm3354, %v4855, 0.0
  %v4860 = vrot.slane %v4859, 4
  %v4861 = vadd.f32 %v4859, %v4860
  %v4862 = vrot.slane %v4861, 2
  %v4863 = vadd.f32 %v4861, %v4862
  %v4864 = vrot.slane %v4863, 1
  %v4865 = vadd.f32 %v4863, %v4864
  %v4866 = vsel %vm3354, %v4856, 0.0
  %v4867 = vrot.slane %v4866, 4
  %v4868 = vadd.f32 %v4866, %v4867
  %v4869 = vrot.slane %v4868, 2
  %v4870 = vadd.f32 %v4868, %v4869
  %v4871 = vrot.slane %v4870, 1
  %v4872 = vadd.f32 %v4870, %v4871
  %v4873 = vsel %vm3354, %v4857, 0.0
  %v4874 = vrot.slane %v4873, 4
  %v4875 = vadd.f32 %v4873, %v4874
  %v4876 = vrot.slane %v4875, 2
  %v4877 = vadd.f32 %v4875, %v4876
  %v4878 = vrot.slane %v4877, 1
  %v4879 = vadd.f32 %v4877, %v4878
  %v4880 = vsel %vm3354, %v4858, 0.0
  %v4881 = vrot.slane %v4880, 4
  %v4882 = vadd.f32 %v4880, %v4881
  %v4883 = vrot.slane %v4882, 2
  %v4884 = vadd.f32 %v4882, %v4883
  %v4885 = vrot.slane %v4884, 1
  %v4886 = vadd.f32 %v4884, %v4885
  %v4887 = vmul.f32 %v4865, %v3208
  %v4888 = vmul.f32 %v4872, %v3208
  %v4889 = vmul.f32 %v4879, %v3208
  %v4890 = vmul.f32 %v4886, %v3208
  %v4891 = vadd.f32 %v4887, 1e-05
  %v4892 = vadd.f32 %v4888, 1e-05
  %v4893 = vadd.f32 %v4889, 1e-05
  %v4894 = vadd.f32 %v4890, 1e-05
  %v4895 = vrsqrt.pop %v4891
  %v4896 = vmul.f32 %v4895, %v4891
  %v4897 = vmul.f32 %v4896, %v4895
  %v4898 = vmul.f32 0.5, %v4897
  %v4899 = vsub.f32 1.5, %v4898
  %v4900 = vmul.f32 %v4895, %v4899
  %vm4901 = vweird.f32 %v4891
  %vm4902 = vweird.f32 %v4895
  %vm4903 = vmor %vm4901, %vm4902
  %v4904 = vsel %vm4903, %v4895, %v4900
  %v4905 = vrsqrt.pop %v4892
  %v4906 = vmul.f32 %v4905, %v4892
  %v4907 = vmul.f32 %v4906, %v4905
  %v4908 = vmul.f32 0.5, %v4907
  %v4909 = vsub.f32 1.5, %v4908
  %v4910 = vmul.f32 %v4905, %v4909
  %vm4911 = vweird.f32 %v4892
  %vm4912 = vweird.f32 %v4905
  %vm4913 = vmor %vm4911, %vm4912
  %v4914 = vsel %vm4913, %v4905, %v4910
  %v4915 = vrsqrt.pop %v4893
  %v4916 = vmul.f32 %v4915, %v4893
  %v4917 = vmul.f32 %v4916, %v4915
  %v4918 = vmul.f32 0.5, %v4917
  %v4919 = vsub.f32 1.5, %v4918
  %v4920 = vmul.f32 %v4915, %v4919
  %vm4921 = vweird.f32 %v4893
  %vm4922 = vweird.f32 %v4915
  %vm4923 = vmor %vm4921, %vm4922
  %v4924 = vsel %vm4923, %v4915, %v4920
  %v4925 = vrsqrt.pop %v4894
  %v4926 = vmul.f32 %v4925, %v4894
  %v4927 = vmul.f32 %v4926, %v4925
  %v4928 = vmul.f32 0.5, %v4927
  %v4929 = vsub.f32 1.5, %v4928
  %v4930 = vmul.f32 %v4925, %v4929
  %vm4931 = vweird.f32 %v4894
  %vm4932 = vweird.f32 %v4925
  %vm4933 = vmor %vm4931, %vm4932
  %v4934 = vsel %vm4933, %v4925, %v4930
  %v4935 = vmul.f32 %v4851, %v4904
  %v4936 = vmul.f32 %v4852, %v4914
  %v4937 = vmul.f32 %v4853, %v4924
  %v4938 = vmul.f32 %v4854, %v4934
  %s4939 = scalar_lea.vmem %s7, 20
  %v4940 = vld [vmem:[%s4939] sm:$0xf]
  %v4942 = vperm.slane %v4940, 0
  %v4943 = vperm.slane %v4940, 1
  %v4944 = vperm.slane %v4940, 2
  %v4945 = vperm.slane %v4940, 3
  %v4950 = vmul.f32 %v4935, %v4942
  %v4951 = vmul.f32 %v4936, %v4943
  %v4952 = vmul.f32 %v4937, %v4944
  %v4953 = vmul.f32 %v4938, %v4945
  %s4954 = scalar_lea.vmem %s8, 20
  %v4955 = vld [vmem:[%s4954] sm:$0xf]
  %v4957 = vperm.slane %v4955, 0
  %v4958 = vperm.slane %v4955, 1
  %v4959 = vperm.slane %v4955, 2
  %v4960 = vperm.slane %v4955, 3
  %v4965 = vadd.f32 %v4950, %v4957
  %v4966 = vadd.f32 %v4951, %v4958
  %v4967 = vadd.f32 %v4952, %v4959
  %v4968 = vadd.f32 %v4953, %v4960
  %v4969 = vmax.f32 %v4965, 0.0
  %v4970 = vmax.f32 %v4966, 0.0
  %v4971 = vmax.f32 %v4967, 0.0
  %v4972 = vmax.f32 %v4968, 0.0
  %v4973 = vpack.c.bf16 %v4970, %v4969
  %v4974 = vpack.c.bf16 %v4972, %v4971
  %v4977 = vrot.slane %v4973, 5
  %v4978 = vrot.slane %v4974, 5
  %v4981 = vld [vmem:[#allocation2] sm:$0x88]
  %v4982 = vsel %vm4421, %v4977, %v4981
  %4983 = vst [vmem:[#allocation2] sm:$0x88] %v4982
  %v4984 = vld [vmem:[#allocation2 + $0x8] sm:$0x88]
  %v4985 = vsel %vm4421, %v4978, %v4984
  %4986 = vst [vmem:[#allocation2 + $0x8] sm:$0x88] %v4985
  %v4988 = vshrl.u32 %v4973, 16
  %v4990 = vrot.slane %v4988, 4
  %v4991 = vrot.slane %v4990, 4
  %v4993 = vshrl.u32 %v4974, 16
  %v4995 = vrot.slane %v4993, 4
  %v4996 = vrot.slane %v4995, 4
  %vm4999 = vsmask.f32 256
  %vm5000 = vmand %vm3517, %vm4999
  %vm5001 = vsmask.f32 4352
  %vm5002 = vmand %vm3520, %vm5001
  %vm5003 = vmor %vm5002, %vm5000
  %v5004 = vld [vmem:[#allocation2 + $0x20] sm:$0x11]
  %v5005 = vsel %vm5003, %v4991, %v5004
  %5006 = vst [vmem:[#allocation2 + $0x20] sm:$0x11] %v5005
  %v5007 = vld [vmem:[#allocation2 + $0x28] sm:$0x11]
  %v5008 = vsel %vm5003, %v4996, %v5007
  %5009 = vst [vmem:[#allocation2 + $0x28] sm:$0x11] %v5008
  %s5010 = scalar_lea.vmem %s6, 384
  %v5011 = vld [vmem:[%s5010] sm:$0xff]
  %v5012 = vld [vmem:[%s5010 + $0x8] sm:$0xff]
  %v5013 = vld [vmem:[%s5010 + $0x10] sm:$0xff]
  %v5014 = vld [vmem:[%s5010 + $0x18] sm:$0xff]
  %v5015 = vld [vmem:[%s5010 + $0x20] sm:$0xff]
  %v5016 = vld [vmem:[%s5010 + $0x28] sm:$0xff]
  %v5017 = vld [vmem:[%s5010 + $0x30] sm:$0xff]
  %v5018 = vld [vmem:[%s5010 + $0x38] sm:$0xff]
  %v5027 = vunpack.c.l.b16 %v5011
  %v5028 = vunpack.c.h.b16 %v5011
  %v5029 = vunpack.c.l.b16 %v5012
  %v5030 = vunpack.c.h.b16 %v5012
  %v5031 = vunpack.c.l.b16 %v5013
  %v5032 = vunpack.c.h.b16 %v5013
  %v5033 = vunpack.c.l.b16 %v5014
  %v5034 = vunpack.c.h.b16 %v5014
  %v5035 = vunpack.c.l.b16 %v5015
  %v5036 = vunpack.c.h.b16 %v5015
  %v5037 = vunpack.c.l.b16 %v5016
  %v5038 = vunpack.c.h.b16 %v5016
  %v5039 = vunpack.c.l.b16 %v5017
  %v5040 = vunpack.c.h.b16 %v5017
  %v5041 = vunpack.c.l.b16 %v5018
  %v5042 = vunpack.c.h.b16 %v5018
  %v5043 = vpack.c.b16 %v5031, %v5027
  %v5044 = vpack.c.b16 %v5032, %v5028
  %v5045 = vpack.c.b16 %v5033, %v5029
  %v5046 = vpack.c.b16 %v5034, %v5030
  %v5047 = vpack.c.b16 %v5039, %v5035
  %v5048 = vpack.c.b16 %v5040, %v5036
  %v5049 = vpack.c.b16 %v5041, %v5037
  %v5050 = vpack.c.b16 %v5042, %v5038
  %5059 = vmatpush.bf16.msra.mxu0 0
  %5060 = vmatpush.bf16.msra.mxu0 0
  %5061 = vmatpush.bf16.msra.mxu0 0
  %5062 = vmatpush.bf16.msra.mxu0 0
  %5063 = vmatpush.bf16.msra.mxu0 0
  %5064 = vmatpush.bf16.msra.mxu0 0
  %5065 = vmatpush.bf16.msra.mxu0 %v5047
  %5066 = vmatpush.bf16.msra.mxu0 %v5043
  %5067 = vmatmul.bf16.gmra.mxu0 %v3300
  %v5068 = vpop.f32.mrf.mxu0
  %v5069 = vadd.f32 0.0, %v5068
  %v5070 = vpop.f32.mrf.mxu0
  %5071 = vdwg.mxu0
  %5072 = vmatpush.bf16.msra.mxu0 0
  %5073 = vmatpush.bf16.msra.mxu0 0
  %5074 = vmatpush.bf16.msra.mxu0 0
  %5075 = vmatpush.bf16.msra.mxu0 0
  %5076 = vmatpush.bf16.msra.mxu0 0
  %5077 = vmatpush.bf16.msra.mxu0 0
  %5078 = vmatpush.bf16.msra.mxu0 %v5048
  %5079 = vmatpush.bf16.msra.mxu0 %v5044
  %5080 = vmatmul.bf16.gmra.mxu0 %v3300
  %v5081 = vpop.f32.mrf.mxu0
  %v5082 = vadd.f32 0.0, %v5081
  %v5083 = vpop.f32.mrf.mxu0
  %5084 = vdwg.mxu0
  %5085 = vmatpush.bf16.msra.mxu0 0
  %5086 = vmatpush.bf16.msra.mxu0 0
  %5087 = vmatpush.bf16.msra.mxu0 0
  %5088 = vmatpush.bf16.msra.mxu0 0
  %5089 = vmatpush.bf16.msra.mxu0 0
  %5090 = vmatpush.bf16.msra.mxu0 0
  %5091 = vmatpush.bf16.msra.mxu0 %v5049
  %5092 = vmatpush.bf16.msra.mxu0 %v5045
  %5093 = vmatmul.bf16.gmra.mxu0 %v3300
  %v5094 = vpop.f32.mrf.mxu0
  %v5095 = vadd.f32 0.0, %v5094
  %v5096 = vpop.f32.mrf.mxu0
  %5097 = vdwg.mxu0
  %5098 = vmatpush.bf16.msra.mxu0 0
  %5099 = vmatpush.bf16.msra.mxu0 0
  %5100 = vmatpush.bf16.msra.mxu0 0
  %5101 = vmatpush.bf16.msra.mxu0 0
  %5102 = vmatpush.bf16.msra.mxu0 0
  %5103 = vmatpush.bf16.msra.mxu0 0
  %5104 = vmatpush.bf16.msra.mxu0 %v5050
  %5105 = vmatpush.bf16.msra.mxu0 %v5046
  %5106 = vmatmul.bf16.gmra.mxu0 %v3300
  %v5107 = vpop.f32.mrf.mxu0
  %v5108 = vadd.f32 0.0, %v5107
  %v5109 = vpop.f32.mrf.mxu0
  %5110 = vdwg.mxu0
  %v5111 = vsel %vm3354, %v5069, 0.0
  %v5112 = vrot.slane %v5111, 4
  %v5113 = vadd.f32 %v5111, %v5112
  %v5114 = vrot.slane %v5113, 2
  %v5115 = vadd.f32 %v5113, %v5114
  %v5116 = vrot.slane %v5115, 1
  %v5117 = vadd.f32 %v5115, %v5116
  %v5118 = vsel %vm3354, %v5082, 0.0
  %v5119 = vrot.slane %v5118, 4
  %v5120 = vadd.f32 %v5118, %v5119
  %v5121 = vrot.slane %v5120, 2
  %v5122 = vadd.f32 %v5120, %v5121
  %v5123 = vrot.slane %v5122, 1
  %v5124 = vadd.f32 %v5122, %v5123
  %v5125 = vsel %vm3354, %v5095, 0.0
  %v5126 = vrot.slane %v5125, 4
  %v5127 = vadd.f32 %v5125, %v5126
  %v5128 = vrot.slane %v5127, 2
  %v5129 = vadd.f32 %v5127, %v5128
  %v5130 = vrot.slane %v5129, 1
  %v5131 = vadd.f32 %v5129, %v5130
  %v5132 = vsel %vm3354, %v5108, 0.0
  %v5133 = vrot.slane %v5132, 4
  %v5134 = vadd.f32 %v5132, %v5133
  %v5135 = vrot.slane %v5134, 2
  %v5136 = vadd.f32 %v5134, %v5135
  %v5137 = vrot.slane %v5136, 1
  %v5138 = vadd.f32 %v5136, %v5137
  %v5139 = vmul.f32 %v5117, %v3208
  %v5140 = vmul.f32 %v5124, %v3208
  %v5141 = vmul.f32 %v5131, %v3208
  %v5142 = vmul.f32 %v5138, %v3208
  %v5143 = vsub.f32 %v5069, %v5139
  %v5144 = vsub.f32 %v5082, %v5140
  %v5145 = vsub.f32 %v5095, %v5141
  %v5146 = vsub.f32 %v5108, %v5142
  %v5147 = vmul.f32 %v5143, %v5143
  %v5148 = vmul.f32 %v5144, %v5144
  %v5149 = vmul.f32 %v5145, %v5145
  %v5150 = vmul.f32 %v5146, %v5146
  %v5151 = vsel %vm3354, %v5147, 0.0
  %v5152 = vrot.slane %v5151, 4
  %v5153 = vadd.f32 %v5151, %v5152
  %v5154 = vrot.slane %v5153, 2
  %v5155 = vadd.f32 %v5153, %v5154
  %v5156 = vrot.slane %v5155, 1
  %v5157 = vadd.f32 %v5155, %v5156
  %v5158 = vsel %vm3354, %v5148, 0.0
  %v5159 = vrot.slane %v5158, 4
  %v5160 = vadd.f32 %v5158, %v5159
  %v5161 = vrot.slane %v5160, 2
  %v5162 = vadd.f32 %v5160, %v5161
  %v5163 = vrot.slane %v5162, 1
  %v5164 = vadd.f32 %v5162, %v5163
  %v5165 = vsel %vm3354, %v5149, 0.0
  %v5166 = vrot.slane %v5165, 4
  %v5167 = vadd.f32 %v5165, %v5166
  %v5168 = vrot.slane %v5167, 2
  %v5169 = vadd.f32 %v5167, %v5168
  %v5170 = vrot.slane %v5169, 1
  %v5171 = vadd.f32 %v5169, %v5170
  %v5172 = vsel %vm3354, %v5150, 0.0
  %v5173 = vrot.slane %v5172, 4
  %v5174 = vadd.f32 %v5172, %v5173
  %v5175 = vrot.slane %v5174, 2
  %v5176 = vadd.f32 %v5174, %v5175
  %v5177 = vrot.slane %v5176, 1
  %v5178 = vadd.f32 %v5176, %v5177
  %v5179 = vmul.f32 %v5157, %v3208
  %v5180 = vmul.f32 %v5164, %v3208
  %v5181 = vmul.f32 %v5171, %v3208
  %v5182 = vmul.f32 %v5178, %v3208
  %v5183 = vadd.f32 %v5179, 1e-05
  %v5184 = vadd.f32 %v5180, 1e-05
  %v5185 = vadd.f32 %v5181, 1e-05
  %v5186 = vadd.f32 %v5182, 1e-05
  %v5187 = vrsqrt.pop %v5183
  %v5188 = vmul.f32 %v5187, %v5183
  %v5189 = vmul.f32 %v5188, %v5187
  %v5190 = vmul.f32 0.5, %v5189
  %v5191 = vsub.f32 1.5, %v5190
  %v5192 = vmul.f32 %v5187, %v5191
  %vm5193 = vweird.f32 %v5183
  %vm5194 = vweird.f32 %v5187
  %vm5195 = vmor %vm5193, %vm5194
  %v5196 = vsel %vm5195, %v5187, %v5192
  %v5197 = vrsqrt.pop %v5184
  %v5198 = vmul.f32 %v5197, %v5184
  %v5199 = vmul.f32 %v5198, %v5197
  %v5200 = vmul.f32 0.5, %v5199
  %v5201 = vsub.f32 1.5, %v5200
  %v5202 = vmul.f32 %v5197, %v5201
  %vm5203 = vweird.f32 %v5184
  %vm5204 = vweird.f32 %v5197
  %vm5205 = vmor %vm5203, %vm5204
  %v5206 = vsel %vm5205, %v5197, %v5202
  %v5207 = vrsqrt.pop %v5185
  %v5208 = vmul.f32 %v5207, %v5185
  %v5209 = vmul.f32 %v5208, %v5207
  %v5210 = vmul.f32 0.5, %v5209
  %v5211 = vsub.f32 1.5, %v5210
  %v5212 = vmul.f32 %v5207, %v5211
  %vm5213 = vweird.f32 %v5185
  %vm5214 = vweird.f32 %v5207
  %vm5215 = vmor %vm5213, %vm5214
  %v5216 = vsel %vm5215, %v5207, %v5212
  %v5217 = vrsqrt.pop %v5186
  %v5218 = vmul.f32 %v5217, %v5186
  %v5219 = vmul.f32 %v5218, %v5217
  %v5220 = vmul.f32 0.5, %v5219
  %v5221 = vsub.f32 1.5, %v5220
  %v5222 = vmul.f32 %v5217, %v5221
  %vm5223 = vweird.f32 %v5186
  %vm5224 = vweird.f32 %v5217
  %vm5225 = vmor %vm5223, %vm5224
  %v5226 = vsel %vm5225, %v5217, %v5222
  %v5227 = vmul.f32 %v5143, %v5196
  %v5228 = vmul.f32 %v5144, %v5206
  %v5229 = vmul.f32 %v5145, %v5216
  %v5230 = vmul.f32 %v5146, %v5226
  %s5231 = scalar_lea.vmem %s7, 24
  %v5232 = vld [vmem:[%s5231] sm:$0xf]
  %v5234 = vperm.slane %v5232, 0
  %v5235 = vperm.slane %v5232, 1
  %v5236 = vperm.slane %v5232, 2
  %v5237 = vperm.slane %v5232, 3
  %v5242 = vmul.f32 %v5227, %v5234
  %v5243 = vmul.f32 %v5228, %v5235
  %v5244 = vmul.f32 %v5229, %v5236
  %v5245 = vmul.f32 %v5230, %v5237
  %s5246 = scalar_lea.vmem %s8, 24
  %v5247 = vld [vmem:[%s5246] sm:$0xf]
  %v5249 = vperm.slane %v5247, 0
  %v5250 = vperm.slane %v5247, 1
  %v5251 = vperm.slane %v5247, 2
  %v5252 = vperm.slane %v5247, 3
  %v5257 = vadd.f32 %v5242, %v5249
  %v5258 = vadd.f32 %v5243, %v5250
  %v5259 = vadd.f32 %v5244, %v5251
  %v5260 = vadd.f32 %v5245, %v5252
  %v5261 = vmax.f32 %v5257, 0.0
  %v5262 = vmax.f32 %v5258, 0.0
  %v5263 = vmax.f32 %v5259, 0.0
  %v5264 = vmax.f32 %v5260, 0.0
  %v5265 = vpack.c.bf16 %v5262, %v5261
  %v5266 = vpack.c.bf16 %v5264, %v5263
  %v5268 = vshll.u32 %v5265, 16
  %v5270 = vrot.slane %v5268, 5
  %v5272 = vshll.u32 %v5266, 16
  %v5274 = vrot.slane %v5272, 5
  %v5277 = vld [vmem:[#allocation2] sm:$0x88]
  %v5278 = vsel %vm4711, %v5270, %v5277
  %5279 = vst [vmem:[#allocation2] sm:$0x88] %v5278
  %v5280 = vld [vmem:[#allocation2 + $0x8] sm:$0x88]
  %v5281 = vsel %vm4711, %v5274, %v5280
  %5282 = vst [vmem:[#allocation2 + $0x8] sm:$0x88] %v5281
  %v5283 = vld [vmem:[#allocation2 + $0x20] sm:$0x11]
  %v5284 = vsel %vm3523, %v5265, %v5283
  %5285 = vst [vmem:[#allocation2 + $0x20] sm:$0x11] %v5284
  %v5286 = vld [vmem:[#allocation2 + $0x28] sm:$0x11]
  %v5287 = vsel %vm3523, %v5266, %v5286
  %5288 = vst [vmem:[#allocation2 + $0x28] sm:$0x11] %v5287
  %s5289 = scalar_lea.vmem %s6, 448
  %v5290 = vld [vmem:[%s5289] sm:$0xff]
  %v5291 = vld [vmem:[%s5289 + $0x8] sm:$0xff]
  %v5292 = vld [vmem:[%s5289 + $0x10] sm:$0xff]
  %v5293 = vld [vmem:[%s5289 + $0x18] sm:$0xff]
  %v5294 = vld [vmem:[%s5289 + $0x20] sm:$0xff]
  %v5295 = vld [vmem:[%s5289 + $0x28] sm:$0xff]
  %v5296 = vld [vmem:[%s5289 + $0x30] sm:$0xff]
  %v5297 = vld [vmem:[%s5289 + $0x38] sm:$0xff]
  %v5306 = vunpack.c.l.b16 %v5290
  %v5307 = vunpack.c.h.b16 %v5290
  %v5308 = vunpack.c.l.b16 %v5291
  %v5309 = vunpack.c.h.b16 %v5291
  %v5310 = vunpack.c.l.b16 %v5292
  %v5311 = vunpack.c.h.b16 %v5292
  %v5312 = vunpack.c.l.b16 %v5293
  %v5313 = vunpack.c.h.b16 %v5293
  %v5314 = vunpack.c.l.b16 %v5294
  %v5315 = vunpack.c.h.b16 %v5294
  %v5316 = vunpack.c.l.b16 %v5295
  %v5317 = vunpack.c.h.b16 %v5295
  %v5318 = vunpack.c.l.b16 %v5296
  %v5319 = vunpack.c.h.b16 %v5296
  %v5320 = vunpack.c.l.b16 %v5297
  %v5321 = vunpack.c.h.b16 %v5297
  %v5322 = vpack.c.b16 %v5310, %v5306
  %v5323 = vpack.c.b16 %v5311, %v5307
  %v5324 = vpack.c.b16 %v5312, %v5308
  %v5325 = vpack.c.b16 %v5313, %v5309
  %v5326 = vpack.c.b16 %v5318, %v5314
  %v5327 = vpack.c.b16 %v5319, %v5315
  %v5328 = vpack.c.b16 %v5320, %v5316
  %v5329 = vpack.c.b16 %v5321, %v5317
  %5338 = vmatpush.bf16.msra.mxu0 0
  %5339 = vmatpush.bf16.msra.mxu0 0
  %5340 = vmatpush.bf16.msra.mxu0 0
  %5341 = vmatpush.bf16.msra.mxu0 0
  %5342 = vmatpush.bf16.msra.mxu0 0
  %5343 = vmatpush.bf16.msra.mxu0 0
  %5344 = vmatpush.bf16.msra.mxu0 %v5326
  %5345 = vmatpush.bf16.msra.mxu0 %v5322
  %5346 = vmatmul.bf16.gmra.mxu0 %v3300
  %v5347 = vpop.f32.mrf.mxu0
  %v5348 = vadd.f32 0.0, %v5347
  %v5349 = vpop.f32.mrf.mxu0
  %5350 = vdwg.mxu0
  %5351 = vmatpush.bf16.msra.mxu0 0
  %5352 = vmatpush.bf16.msra.mxu0 0
  %5353 = vmatpush.bf16.msra.mxu0 0
  %5354 = vmatpush.bf16.msra.mxu0 0
  %5355 = vmatpush.bf16.msra.mxu0 0
  %5356 = vmatpush.bf16.msra.mxu0 0
  %5357 = vmatpush.bf16.msra.mxu0 %v5327
  %5358 = vmatpush.bf16.msra.mxu0 %v5323
  %5359 = vmatmul.bf16.gmra.mxu0 %v3300
  %v5360 = vpop.f32.mrf.mxu0
  %v5361 = vadd.f32 0.0, %v5360
  %v5362 = vpop.f32.mrf.mxu0
  %5363 = vdwg.mxu0
  %5364 = vmatpush.bf16.msra.mxu0 0
  %5365 = vmatpush.bf16.msra.mxu0 0
  %5366 = vmatpush.bf16.msra.mxu0 0
  %5367 = vmatpush.bf16.msra.mxu0 0
  %5368 = vmatpush.bf16.msra.mxu0 0
  %5369 = vmatpush.bf16.msra.mxu0 0
  %5370 = vmatpush.bf16.msra.mxu0 %v5328
  %5371 = vmatpush.bf16.msra.mxu0 %v5324
  %5372 = vmatmul.bf16.gmra.mxu0 %v3300
  %v5373 = vpop.f32.mrf.mxu0
  %v5374 = vadd.f32 0.0, %v5373
  %v5375 = vpop.f32.mrf.mxu0
  %5376 = vdwg.mxu0
  %5377 = vmatpush.bf16.msra.mxu0 0
  %5378 = vmatpush.bf16.msra.mxu0 0
  %5379 = vmatpush.bf16.msra.mxu0 0
  %5380 = vmatpush.bf16.msra.mxu0 0
  %5381 = vmatpush.bf16.msra.mxu0 0
  %5382 = vmatpush.bf16.msra.mxu0 0
  %5383 = vmatpush.bf16.msra.mxu0 %v5329
  %5384 = vmatpush.bf16.msra.mxu0 %v5325
  %5385 = vmatmul.bf16.gmra.mxu0 %v3300
  %v5386 = vpop.f32.mrf.mxu0
  %v5387 = vadd.f32 0.0, %v5386
  %v5388 = vpop.f32.mrf.mxu0
  %5389 = vdwg.mxu0
  %v5390 = vsel %vm3354, %v5348, 0.0
  %v5391 = vrot.slane %v5390, 4
  %v5392 = vadd.f32 %v5390, %v5391
  %v5393 = vrot.slane %v5392, 2
  %v5394 = vadd.f32 %v5392, %v5393
  %v5395 = vrot.slane %v5394, 1
  %v5396 = vadd.f32 %v5394, %v5395
  %v5397 = vsel %vm3354, %v5361, 0.0
  %v5398 = vrot.slane %v5397, 4
  %v5399 = vadd.f32 %v5397, %v5398
  %v5400 = vrot.slane %v5399, 2
  %v5401 = vadd.f32 %v5399, %v5400
  %v5402 = vrot.slane %v5401, 1
  %v5403 = vadd.f32 %v5401, %v5402
  %v5404 = vsel %vm3354, %v5374, 0.0
  %v5405 = vrot.slane %v5404, 4
  %v5406 = vadd.f32 %v5404, %v5405
  %v5407 = vrot.slane %v5406, 2
  %v5408 = vadd.f32 %v5406, %v5407
  %v5409 = vrot.slane %v5408, 1
  %v5410 = vadd.f32 %v5408, %v5409
  %v5411 = vsel %vm3354, %v5387, 0.0
  %v5412 = vrot.slane %v5411, 4
  %v5413 = vadd.f32 %v5411, %v5412
  %v5414 = vrot.slane %v5413, 2
  %v5415 = vadd.f32 %v5413, %v5414
  %v5416 = vrot.slane %v5415, 1
  %v5417 = vadd.f32 %v5415, %v5416
  %v5418 = vmul.f32 %v5396, %v3208
  %v5419 = vmul.f32 %v5403, %v3208
  %v5420 = vmul.f32 %v5410, %v3208
  %v5421 = vmul.f32 %v5417, %v3208
  %v5422 = vsub.f32 %v5348, %v5418
  %v5423 = vsub.f32 %v5361, %v5419
  %v5424 = vsub.f32 %v5374, %v5420
  %v5425 = vsub.f32 %v5387, %v5421
  %v5426 = vmul.f32 %v5422, %v5422
  %v5427 = vmul.f32 %v5423, %v5423
  %v5428 = vmul.f32 %v5424, %v5424
  %v5429 = vmul.f32 %v5425, %v5425
  %v5430 = vsel %vm3354, %v5426, 0.0
  %v5431 = vrot.slane %v5430, 4
  %v5432 = vadd.f32 %v5430, %v5431
  %v5433 = vrot.slane %v5432, 2
  %v5434 = vadd.f32 %v5432, %v5433
  %v5435 = vrot.slane %v5434, 1
  %v5436 = vadd.f32 %v5434, %v5435
  %v5437 = vsel %vm3354, %v5427, 0.0
  %v5438 = vrot.slane %v5437, 4
  %v5439 = vadd.f32 %v5437, %v5438
  %v5440 = vrot.slane %v5439, 2
  %v5441 = vadd.f32 %v5439, %v5440
  %v5442 = vrot.slane %v5441, 1
  %v5443 = vadd.f32 %v5441, %v5442
  %v5444 = vsel %vm3354, %v5428, 0.0
  %v5445 = vrot.slane %v5444, 4
  %v5446 = vadd.f32 %v5444, %v5445
  %v5447 = vrot.slane %v5446, 2
  %v5448 = vadd.f32 %v5446, %v5447
  %v5449 = vrot.slane %v5448, 1
  %v5450 = vadd.f32 %v5448, %v5449
  %v5451 = vsel %vm3354, %v5429, 0.0
  %v5452 = vrot.slane %v5451, 4
  %v5453 = vadd.f32 %v5451, %v5452
  %v5454 = vrot.slane %v5453, 2
  %v5455 = vadd.f32 %v5453, %v5454
  %v5456 = vrot.slane %v5455, 1
  %v5457 = vadd.f32 %v5455, %v5456
  %v5458 = vmul.f32 %v5436, %v3208
  %v5459 = vmul.f32 %v5443, %v3208
  %v5460 = vmul.f32 %v5450, %v3208
  %v5461 = vmul.f32 %v5457, %v3208
  %v5462 = vadd.f32 %v5458, 1e-05
  %v5463 = vadd.f32 %v5459, 1e-05
  %v5464 = vadd.f32 %v5460, 1e-05
  %v5465 = vadd.f32 %v5461, 1e-05
  %v5466 = vrsqrt.pop %v5462
  %v5467 = vmul.f32 %v5466, %v5462
  %v5468 = vmul.f32 %v5467, %v5466
  %v5469 = vmul.f32 0.5, %v5468
  %v5470 = vsub.f32 1.5, %v5469
  %v5471 = vmul.f32 %v5466, %v5470
  %vm5472 = vweird.f32 %v5462
  %vm5473 = vweird.f32 %v5466
  %vm5474 = vmor %vm5472, %vm5473
  %v5475 = vsel %vm5474, %v5466, %v5471
  %v5476 = vrsqrt.pop %v5463
  %v5477 = vmul.f32 %v5476, %v5463
  %v5478 = vmul.f32 %v5477, %v5476
  %v5479 = vmul.f32 0.5, %v5478
  %v5480 = vsub.f32 1.5, %v5479
  %v5481 = vmul.f32 %v5476, %v5480
  %vm5482 = vweird.f32 %v5463
  %vm5483 = vweird.f32 %v5476
  %vm5484 = vmor %vm5482, %vm5483
  %v5485 = vsel %vm5484, %v5476, %v5481
  %v5486 = vrsqrt.pop %v5464
  %v5487 = vmul.f32 %v5486, %v5464
  %v5488 = vmul.f32 %v5487, %v5486
  %v5489 = vmul.f32 0.5, %v5488
  %v5490 = vsub.f32 1.5, %v5489
  %v5491 = vmul.f32 %v5486, %v5490
  %vm5492 = vweird.f32 %v5464
  %vm5493 = vweird.f32 %v5486
  %vm5494 = vmor %vm5492, %vm5493
  %v5495 = vsel %vm5494, %v5486, %v5491
  %v5496 = vrsqrt.pop %v5465
  %v5497 = vmul.f32 %v5496, %v5465
  %v5498 = vmul.f32 %v5497, %v5496
  %v5499 = vmul.f32 0.5, %v5498
  %v5500 = vsub.f32 1.5, %v5499
  %v5501 = vmul.f32 %v5496, %v5500
  %vm5502 = vweird.f32 %v5465
  %vm5503 = vweird.f32 %v5496
  %vm5504 = vmor %vm5502, %vm5503
  %v5505 = vsel %vm5504, %v5496, %v5501
  %v5506 = vmul.f32 %v5422, %v5475
  %v5507 = vmul.f32 %v5423, %v5485
  %v5508 = vmul.f32 %v5424, %v5495
  %v5509 = vmul.f32 %v5425, %v5505
  %s5510 = scalar_lea.vmem %s7, 28
  %v5511 = vld [vmem:[%s5510] sm:$0xf]
  %v5513 = vperm.slane %v5511, 0
  %v5514 = vperm.slane %v5511, 1
  %v5515 = vperm.slane %v5511, 2
  %v5516 = vperm.slane %v5511, 3
  %v5521 = vmul.f32 %v5506, %v5513
  %v5522 = vmul.f32 %v5507, %v5514
  %v5523 = vmul.f32 %v5508, %v5515
  %v5524 = vmul.f32 %v5509, %v5516
  %s5525 = scalar_lea.vmem %s8, 28
  %v5526 = vld [vmem:[%s5525] sm:$0xf]
  %v5528 = vperm.slane %v5526, 0
  %v5529 = vperm.slane %v5526, 1
  %v5530 = vperm.slane %v5526, 2
  %v5531 = vperm.slane %v5526, 3
  %v5536 = vadd.f32 %v5521, %v5528
  %v5537 = vadd.f32 %v5522, %v5529
  %v5538 = vadd.f32 %v5523, %v5530
  %v5539 = vadd.f32 %v5524, %v5531
  %v5540 = vmax.f32 %v5536, 0.0
  %v5541 = vmax.f32 %v5537, 0.0
  %v5542 = vmax.f32 %v5538, 0.0
  %v5543 = vmax.f32 %v5539, 0.0
  %v5544 = vpack.c.bf16 %v5541, %v5540
  %v5545 = vpack.c.bf16 %v5543, %v5542
  %v5546 = vld [vmem:[#allocation2 + $0x10] sm:$0x11]
  %v5547 = vsel %vm5003, %v5544, %v5546
  %5548 = vst [vmem:[#allocation2 + $0x10] sm:$0x11] %v5547
  %v5549 = vld [vmem:[#allocation2 + $0x18] sm:$0x11]
  %v5550 = vsel %vm5003, %v5545, %v5549
  %5551 = vst [vmem:[#allocation2 + $0x18] sm:$0x11] %v5550
  %v5553 = vshrl.u32 %v5544, 16
  %v5555 = vrot.slane %v5553, 7
  %v5557 = vshrl.u32 %v5545, 16
  %v5559 = vrot.slane %v5557, 7
  %v5562 = vld [vmem:[#allocation2 + $0x20] sm:$0x22]
  %v5563 = vsel %vm3816, %v5555, %v5562
  %5564 = vst [vmem:[#allocation2 + $0x20] sm:$0x22] %v5563
  %v5565 = vld [vmem:[#allocation2 + $0x28] sm:$0x22]
  %v5566 = vsel %vm3816, %v5559, %v5565
  %5567 = vst [vmem:[#allocation2 + $0x28] sm:$0x22] %v5566
  %v5568 = vld [vmem:[%s9] sm:$0xf]
  %v5569 = vld [vmem:[%s9 + $0x4] sm:$0xf]
  %v5570 = vld [vmem:[%s9 + $0x8] sm:$0xf]
  %v5571 = vld [vmem:[%s9 + $0xc] sm:$0xf]
  %v5572 = vld [vmem:[%s9 + $0x10] sm:$0xf]
  %v5573 = vld [vmem:[%s9 + $0x14] sm:$0xf]
  %v5574 = vld [vmem:[%s9 + $0x18] sm:$0xf]
  %v5575 = vld [vmem:[%s9 + $0x1c] sm:$0xf]
  %v5576 = vld [vmem:[%s9 + $0x20] sm:$0xf]
  %v5577 = vld [vmem:[%s9 + $0x24] sm:$0xf]
  %v5578 = vld [vmem:[%s9 + $0x28] sm:$0xf]
  %v5579 = vld [vmem:[%s9 + $0x2c] sm:$0xf]
  %v5580 = vld [vmem:[%s9 + $0x30] sm:$0xf]
  %v5581 = vld [vmem:[%s9 + $0x34] sm:$0xf]
  %v5582 = vld [vmem:[%s9 + $0x38] sm:$0xf]
  %v5583 = vld [vmem:[%s9 + $0x3c] sm:$0xf]
  %v5584 = vld [vmem:[%s9 + $0x40] sm:$0xf]
  %v5585 = vld [vmem:[%s9 + $0x44] sm:$0xf]
  %v5586 = vld [vmem:[%s9 + $0x48] sm:$0xf]
  %v5587 = vld [vmem:[%s9 + $0x4c] sm:$0xf]
  %v5588 = vld [vmem:[%s9 + $0x50] sm:$0xf]
  %v5589 = vld [vmem:[%s9 + $0x54] sm:$0xf]
  %v5590 = vld [vmem:[%s9 + $0x58] sm:$0xf]
  %v5591 = vld [vmem:[%s9 + $0x5c] sm:$0xf]
  %v5592 = vld [vmem:[%s9 + $0x60] sm:$0xf]
  %v5593 = vld [vmem:[%s9 + $0x64] sm:$0xf]
  %v5594 = vld [vmem:[%s9 + $0x68] sm:$0xf]
  %v5595 = vld [vmem:[%s9 + $0x6c] sm:$0xf]
  %v5596 = vld [vmem:[%s9 + $0x70] sm:$0xf]
  %v5597 = vld [vmem:[%s9 + $0x74] sm:$0xf]
  %v5598 = vld [vmem:[%s9 + $0x78] sm:$0xf]
  %v5599 = vld [vmem:[%s9 + $0x7c] sm:$0xf]
  %v5600 = vld [vmem:[%s9 + $0x80] sm:$0xf]
  %v5601 = vld [vmem:[%s9 + $0x84] sm:$0xf]
  %v5602 = vld [vmem:[%s9 + $0x88] sm:$0xf]
  %v5603 = vld [vmem:[%s9 + $0x8c] sm:$0xf]
  %v5604 = vld [vmem:[%s9 + $0x90] sm:$0xf]
  %v5605 = vld [vmem:[%s9 + $0x94] sm:$0xf]
  %v5606 = vld [vmem:[%s9 + $0x98] sm:$0xf]
  %v5607 = vld [vmem:[%s9 + $0x9c] sm:$0xf]
  %v5608 = vld [vmem:[%s9 + $0xa0] sm:$0xf]
  %v5609 = vld [vmem:[%s9 + $0xa4] sm:$0xf]
  %v5610 = vld [vmem:[%s9 + $0xa8] sm:$0xf]
  %v5611 = vld [vmem:[%s9 + $0xac] sm:$0xf]
  %v5612 = vld [vmem:[%s9 + $0xb0] sm:$0xf]
  %v5613 = vld [vmem:[%s9 + $0xb4] sm:$0xf]
  %v5614 = vld [vmem:[%s9 + $0xb8] sm:$0xf]
  %v5615 = vld [vmem:[%s9 + $0xbc] sm:$0xf]
  %v5616 = vld [vmem:[%s9 + $0xc0] sm:$0xf]
  %v5617 = vld [vmem:[%s9 + $0xc4] sm:$0xf]
  %v5618 = vld [vmem:[%s9 + $0xc8] sm:$0xf]
  %v5619 = vld [vmem:[%s9 + $0xcc] sm:$0xf]
  %v5620 = vld [vmem:[%s9 + $0xd0] sm:$0xf]
  %v5621 = vld [vmem:[%s9 + $0xd4] sm:$0xf]
  %v5622 = vld [vmem:[%s9 + $0xd8] sm:$0xf]
  %v5623 = vld [vmem:[%s9 + $0xdc] sm:$0xf]
  %v5624 = vld [vmem:[%s9 + $0xe0] sm:$0xf]
  %v5625 = vld [vmem:[%s9 + $0xe4] sm:$0xf]
  %v5626 = vld [vmem:[%s9 + $0xe8] sm:$0xf]
  %v5627 = vld [vmem:[%s9 + $0xec] sm:$0xf]
  %v5628 = vld [vmem:[%s9 + $0xf0] sm:$0xf]
  %v5629 = vld [vmem:[%s9 + $0xf4] sm:$0xf]
  %v5630 = vld [vmem:[%s9 + $0xf8] sm:$0xf]
  %v5631 = vld [vmem:[%s9 + $0xfc] sm:$0xf]
  %s5632 = scalar_lea.vmem %s9, 256
  %v5633 = vld [vmem:[%s5632] sm:$0xf]
  %v5634 = vld [vmem:[%s5632 + $0x4] sm:$0xf]
  %v5635 = vld [vmem:[%s5632 + $0x8] sm:$0xf]
  %v5636 = vld [vmem:[%s5632 + $0xc] sm:$0xf]
  %v5637 = vld [vmem:[%s5632 + $0x10] sm:$0xf]
  %v5638 = vld [vmem:[%s5632 + $0x14] sm:$0xf]
  %v5639 = vld [vmem:[%s5632 + $0x18] sm:$0xf]
  %v5640 = vld [vmem:[%s5632 + $0x1c] sm:$0xf]
  %v5641 = vld [vmem:[%s5632 + $0x20] sm:$0xf]
  %v5642 = vld [vmem:[%s5632 + $0x24] sm:$0xf]
  %v5643 = vld [vmem:[%s5632 + $0x28] sm:$0xf]
  %v5644 = vld [vmem:[%s5632 + $0x2c] sm:$0xf]
  %v5645 = vld [vmem:[%s5632 + $0x30] sm:$0xf]
  %v5646 = vld [vmem:[%s5632 + $0x34] sm:$0xf]
  %v5647 = vld [vmem:[%s5632 + $0x38] sm:$0xf]
  %v5648 = vld [vmem:[%s5632 + $0x3c] sm:$0xf]
  %v5649 = vld [vmem:[%s5632 + $0x40] sm:$0xf]
  %v5650 = vld [vmem:[%s5632 + $0x44] sm:$0xf]
  %v5651 = vld [vmem:[%s5632 + $0x48] sm:$0xf]
  %v5652 = vld [vmem:[%s5632 + $0x4c] sm:$0xf]
  %v5653 = vld [vmem:[%s5632 + $0x50] sm:$0xf]
  %v5654 = vld [vmem:[%s5632 + $0x54] sm:$0xf]
  %v5655 = vld [vmem:[%s5632 + $0x58] sm:$0xf]
  %v5656 = vld [vmem:[%s5632 + $0x5c] sm:$0xf]
  %v5657 = vld [vmem:[%s5632 + $0x60] sm:$0xf]
  %v5658 = vld [vmem:[%s5632 + $0x64] sm:$0xf]
  %v5659 = vld [vmem:[%s5632 + $0x68] sm:$0xf]
  %v5660 = vld [vmem:[%s5632 + $0x6c] sm:$0xf]
  %v5661 = vld [vmem:[%s5632 + $0x70] sm:$0xf]
  %v5662 = vld [vmem:[%s5632 + $0x74] sm:$0xf]
  %v5663 = vld [vmem:[%s5632 + $0x78] sm:$0xf]
  %v5664 = vld [vmem:[%s5632 + $0x7c] sm:$0xf]
  %v5665 = vld [vmem:[%s5632 + $0x80] sm:$0xf]
  %v5666 = vld [vmem:[%s5632 + $0x84] sm:$0xf]
  %v5667 = vld [vmem:[%s5632 + $0x88] sm:$0xf]
  %v5668 = vld [vmem:[%s5632 + $0x8c] sm:$0xf]
  %v5669 = vld [vmem:[%s5632 + $0x90] sm:$0xf]
  %v5670 = vld [vmem:[%s5632 + $0x94] sm:$0xf]
  %v5671 = vld [vmem:[%s5632 + $0x98] sm:$0xf]
  %v5672 = vld [vmem:[%s5632 + $0x9c] sm:$0xf]
  %v5673 = vld [vmem:[%s5632 + $0xa0] sm:$0xf]
  %v5674 = vld [vmem:[%s5632 + $0xa4] sm:$0xf]
  %v5675 = vld [vmem:[%s5632 + $0xa8] sm:$0xf]
  %v5676 = vld [vmem:[%s5632 + $0xac] sm:$0xf]
  %v5677 = vld [vmem:[%s5632 + $0xb0] sm:$0xf]
  %v5678 = vld [vmem:[%s5632 + $0xb4] sm:$0xf]
  %v5679 = vld [vmem:[%s5632 + $0xb8] sm:$0xf]
  %v5680 = vld [vmem:[%s5632 + $0xbc] sm:$0xf]
  %v5681 = vld [vmem:[%s5632 + $0xc0] sm:$0xf]
  %v5682 = vld [vmem:[%s5632 + $0xc4] sm:$0xf]
  %v5683 = vld [vmem:[%s5632 + $0xc8] sm:$0xf]
  %v5684 = vld [vmem:[%s5632 + $0xcc] sm:$0xf]
  %v5685 = vld [vmem:[%s5632 + $0xd0] sm:$0xf]
  %v5686 = vld [vmem:[%s5632 + $0xd4] sm:$0xf]
  %v5687 = vld [vmem:[%s5632 + $0xd8] sm:$0xf]
  %v5688 = vld [vmem:[%s5632 + $0xdc] sm:$0xf]
  %v5689 = vld [vmem:[%s5632 + $0xe0] sm:$0xf]
  %v5690 = vld [vmem:[%s5632 + $0xe4] sm:$0xf]
  %v5691 = vld [vmem:[%s5632 + $0xe8] sm:$0xf]
  %v5692 = vld [vmem:[%s5632 + $0xec] sm:$0xf]
  %v5693 = vld [vmem:[%s5632 + $0xf0] sm:$0xf]
  %v5694 = vld [vmem:[%s5632 + $0xf4] sm:$0xf]
  %v5695 = vld [vmem:[%s5632 + $0xf8] sm:$0xf]
  %v5696 = vld [vmem:[%s5632 + $0xfc] sm:$0xf]
  %s5697 = scalar_lea.vmem %s9, 512
  %v5698 = vld [vmem:[%s5697] sm:$0xf]
  %v5699 = vld [vmem:[%s5697 + $0x4] sm:$0xf]
  %v5700 = vld [vmem:[%s5697 + $0x8] sm:$0xf]
  %v5701 = vld [vmem:[%s5697 + $0xc] sm:$0xf]
  %v5702 = vld [vmem:[%s5697 + $0x10] sm:$0xf]
  %v5703 = vld [vmem:[%s5697 + $0x14] sm:$0xf]
  %v5704 = vld [vmem:[%s5697 + $0x18] sm:$0xf]
  %v5705 = vld [vmem:[%s5697 + $0x1c] sm:$0xf]
  %v5706 = vld [vmem:[%s5697 + $0x20] sm:$0xf]
  %v5707 = vld [vmem:[%s5697 + $0x24] sm:$0xf]
  %v5708 = vld [vmem:[%s5697 + $0x28] sm:$0xf]
  %v5709 = vld [vmem:[%s5697 + $0x2c] sm:$0xf]
  %v5710 = vld [vmem:[%s5697 + $0x30] sm:$0xf]
  %v5711 = vld [vmem:[%s5697 + $0x34] sm:$0xf]
  %v5712 = vld [vmem:[%s5697 + $0x38] sm:$0xf]
  %v5713 = vld [vmem:[%s5697 + $0x3c] sm:$0xf]
  %v5714 = vld [vmem:[%s5697 + $0x40] sm:$0xf]
  %v5715 = vld [vmem:[%s5697 + $0x44] sm:$0xf]
  %v5716 = vld [vmem:[%s5697 + $0x48] sm:$0xf]
  %v5717 = vld [vmem:[%s5697 + $0x4c] sm:$0xf]
  %v5718 = vld [vmem:[%s5697 + $0x50] sm:$0xf]
  %v5719 = vld [vmem:[%s5697 + $0x54] sm:$0xf]
  %v5720 = vld [vmem:[%s5697 + $0x58] sm:$0xf]
  %v5721 = vld [vmem:[%s5697 + $0x5c] sm:$0xf]
  %v5722 = vld [vmem:[%s5697 + $0x60] sm:$0xf]
  %v5723 = vld [vmem:[%s5697 + $0x64] sm:$0xf]
  %v5724 = vld [vmem:[%s5697 + $0x68] sm:$0xf]
  %v5725 = vld [vmem:[%s5697 + $0x6c] sm:$0xf]
  %v5726 = vld [vmem:[%s5697 + $0x70] sm:$0xf]
  %v5727 = vld [vmem:[%s5697 + $0x74] sm:$0xf]
  %v5728 = vld [vmem:[%s5697 + $0x78] sm:$0xf]
  %v5729 = vld [vmem:[%s5697 + $0x7c] sm:$0xf]
  %v5730 = vld [vmem:[%s5697 + $0x80] sm:$0xf]
  %v5731 = vld [vmem:[%s5697 + $0x84] sm:$0xf]
  %v5732 = vld [vmem:[%s5697 + $0x88] sm:$0xf]
  %v5733 = vld [vmem:[%s5697 + $0x8c] sm:$0xf]
  %v5734 = vld [vmem:[%s5697 + $0x90] sm:$0xf]
  %v5735 = vld [vmem:[%s5697 + $0x94] sm:$0xf]
  %v5736 = vld [vmem:[%s5697 + $0x98] sm:$0xf]
  %v5737 = vld [vmem:[%s5697 + $0x9c] sm:$0xf]
  %v5738 = vld [vmem:[%s5697 + $0xa0] sm:$0xf]
  %v5739 = vld [vmem:[%s5697 + $0xa4] sm:$0xf]
  %v5740 = vld [vmem:[%s5697 + $0xa8] sm:$0xf]
  %v5741 = vld [vmem:[%s5697 + $0xac] sm:$0xf]
  %v5742 = vld [vmem:[%s5697 + $0xb0] sm:$0xf]
  %v5743 = vld [vmem:[%s5697 + $0xb4] sm:$0xf]
  %v5744 = vld [vmem:[%s5697 + $0xb8] sm:$0xf]
  %v5745 = vld [vmem:[%s5697 + $0xbc] sm:$0xf]
  %v5746 = vld [vmem:[%s5697 + $0xc0] sm:$0xf]
  %v5747 = vld [vmem:[%s5697 + $0xc4] sm:$0xf]
  %v5748 = vld [vmem:[%s5697 + $0xc8] sm:$0xf]
  %v5749 = vld [vmem:[%s5697 + $0xcc] sm:$0xf]
  %v5750 = vld [vmem:[%s5697 + $0xd0] sm:$0xf]
  %v5751 = vld [vmem:[%s5697 + $0xd4] sm:$0xf]
  %v5752 = vld [vmem:[%s5697 + $0xd8] sm:$0xf]
  %v5753 = vld [vmem:[%s5697 + $0xdc] sm:$0xf]
  %v5754 = vld [vmem:[%s5697 + $0xe0] sm:$0xf]
  %v5755 = vld [vmem:[%s5697 + $0xe4] sm:$0xf]
  %v5756 = vld [vmem:[%s5697 + $0xe8] sm:$0xf]
  %v5757 = vld [vmem:[%s5697 + $0xec] sm:$0xf]
  %v5758 = vld [vmem:[%s5697 + $0xf0] sm:$0xf]
  %v5759 = vld [vmem:[%s5697 + $0xf4] sm:$0xf]
  %v5760 = vld [vmem:[%s5697 + $0xf8] sm:$0xf]
  %v5761 = vld [vmem:[%s5697 + $0xfc] sm:$0xf]
  %v5762 = vld [vmem:[%s10] sm:$0x1]
  %v5763 = vld [vmem:[#allocation2] sm:$0xff]
  %v5764 = vld [vmem:[#allocation2 + $0x8] sm:$0xff]
  %v5765 = vld [vmem:[#allocation2 + $0x10] sm:$0x11]
  %v5766 = vld [vmem:[#allocation2 + $0x18] sm:$0x11]
  %v5767 = vld [vmem:[#allocation2] sm:$0xee]
  %v5768 = vld [vmem:[#allocation2 + $0x8] sm:$0xee]
  %v5773 = vunpack.c.l.b16 %v5763
  %v5774 = vunpack.c.h.b16 %v5763
  %v5775 = vunpack.c.l.b16 %v5764
  %v5776 = vunpack.c.h.b16 %v5764
  %v5777 = vunpack.c.l.b16 %v5765
  %v5778 = vunpack.c.h.b16 %v5765
  %v5779 = vunpack.c.l.b16 %v5766
  %v5780 = vunpack.c.h.b16 %v5766
  %v5781 = vpack.c.b16 %v5777, %v5773
  %v5782 = vpack.c.b16 %v5778, %v5774
  %v5783 = vpack.c.b16 %v5779, %v5775
  %v5784 = vpack.c.b16 %v5780, %v5776
  %v5786 = vshrl.u32 %v5781, 16
  %v5788 = vshll.u32 %v5781, 16
  %v5790 = vrot.slane %v5788, 1
  %v5791 = vor.u32 %v5786, %v5790
  %v5793 = vshrl.u32 %v5782, 16
  %v5795 = vshll.u32 %v5782, 16
  %v5797 = vrot.slane %v5795, 1
  %v5798 = vor.u32 %v5793, %v5797
  %v5800 = vshrl.u32 %v5783, 16
  %v5802 = vshll.u32 %v5783, 16
  %v5804 = vrot.slane %v5802, 1
  %v5805 = vor.u32 %v5800, %v5804
  %v5807 = vshrl.u32 %v5784, 16
  %v5809 = vshll.u32 %v5784, 16
  %v5811 = vrot.slane %v5809, 1
  %v5812 = vor.u32 %v5807, %v5811
  %v5881 = vunpack.c.l.b16 %v5633
  %v5882 = vunpack.c.l.b16 %v5634
  %v5883 = vunpack.c.l.b16 %v5635
  %v5884 = vunpack.c.l.b16 %v5636
  %v5885 = vunpack.c.l.b16 %v5637
  %v5886 = vunpack.c.l.b16 %v5638
  %v5887 = vunpack.c.l.b16 %v5639
  %v5888 = vunpack.c.l.b16 %v5640
  %v5889 = vunpack.c.l.b16 %v5641
  %v5890 = vunpack.c.l.b16 %v5642
  %v5891 = vunpack.c.l.b16 %v5643
  %v5892 = vunpack.c.l.b16 %v5644
  %v5893 = vunpack.c.l.b16 %v5645
  %v5894 = vunpack.c.l.b16 %v5646
  %v5895 = vunpack.c.l.b16 %v5647
  %v5896 = vunpack.c.l.b16 %v5648
  %v5897 = vunpack.c.l.b16 %v5649
  %v5898 = vunpack.c.l.b16 %v5650
  %v5899 = vunpack.c.l.b16 %v5651
  %v5900 = vunpack.c.l.b16 %v5652
  %v5901 = vunpack.c.l.b16 %v5653
  %v5902 = vunpack.c.l.b16 %v5654
  %v5903 = vunpack.c.l.b16 %v5655
  %v5904 = vunpack.c.l.b16 %v5656
  %v5905 = vunpack.c.l.b16 %v5657
  %v5906 = vunpack.c.l.b16 %v5658
  %v5907 = vunpack.c.l.b16 %v5659
  %v5908 = vunpack.c.l.b16 %v5660
  %v5909 = vunpack.c.l.b16 %v5661
  %v5910 = vunpack.c.l.b16 %v5662
  %v5911 = vunpack.c.l.b16 %v5663
  %v5912 = vunpack.c.l.b16 %v5664
  %v5913 = vunpack.c.l.b16 %v5665
  %v5914 = vunpack.c.l.b16 %v5666
  %v5915 = vunpack.c.l.b16 %v5667
  %v5916 = vunpack.c.l.b16 %v5668
  %v5917 = vunpack.c.l.b16 %v5669
  %v5918 = vunpack.c.l.b16 %v5670
  %v5919 = vunpack.c.l.b16 %v5671
  %v5920 = vunpack.c.l.b16 %v5672
  %v5921 = vunpack.c.l.b16 %v5673
  %v5922 = vunpack.c.l.b16 %v5674
  %v5923 = vunpack.c.l.b16 %v5675
  %v5924 = vunpack.c.l.b16 %v5676
  %v5925 = vunpack.c.l.b16 %v5677
  %v5926 = vunpack.c.l.b16 %v5678
  %v5927 = vunpack.c.l.b16 %v5679
  %v5928 = vunpack.c.l.b16 %v5680
  %v5929 = vunpack.c.l.b16 %v5681
  %v5930 = vunpack.c.l.b16 %v5682
  %v5931 = vunpack.c.l.b16 %v5683
  %v5932 = vunpack.c.l.b16 %v5684
  %v5933 = vunpack.c.l.b16 %v5685
  %v5934 = vunpack.c.l.b16 %v5686
  %v5935 = vunpack.c.l.b16 %v5687
  %v5936 = vunpack.c.l.b16 %v5688
  %v5937 = vunpack.c.l.b16 %v5689
  %v5938 = vunpack.c.l.b16 %v5690
  %v5939 = vunpack.c.l.b16 %v5691
  %v5940 = vunpack.c.l.b16 %v5692
  %v5941 = vunpack.c.l.b16 %v5693
  %v5942 = vunpack.c.l.b16 %v5694
  %v5943 = vunpack.c.l.b16 %v5695
  %v5944 = vunpack.c.l.b16 %v5696
  %v5945 = vpack.c.b16 %v5882, %v5881
  %v5946 = vpack.c.b16 %v5884, %v5883
  %v5947 = vpack.c.b16 %v5886, %v5885
  %v5948 = vpack.c.b16 %v5888, %v5887
  %v5949 = vpack.c.b16 %v5890, %v5889
  %v5950 = vpack.c.b16 %v5892, %v5891
  %v5951 = vpack.c.b16 %v5894, %v5893
  %v5952 = vpack.c.b16 %v5896, %v5895
  %v5953 = vpack.c.b16 %v5898, %v5897
  %v5954 = vpack.c.b16 %v5900, %v5899
  %v5955 = vpack.c.b16 %v5902, %v5901
  %v5956 = vpack.c.b16 %v5904, %v5903
  %v5957 = vpack.c.b16 %v5906, %v5905
  %v5958 = vpack.c.b16 %v5908, %v5907
  %v5959 = vpack.c.b16 %v5910, %v5909
  %v5960 = vpack.c.b16 %v5912, %v5911
  %v5961 = vpack.c.b16 %v5914, %v5913
  %v5962 = vpack.c.b16 %v5916, %v5915
  %v5963 = vpack.c.b16 %v5918, %v5917
  %v5964 = vpack.c.b16 %v5920, %v5919
  %v5965 = vpack.c.b16 %v5922, %v5921
  %v5966 = vpack.c.b16 %v5924, %v5923
  %v5967 = vpack.c.b16 %v5926, %v5925
  %v5968 = vpack.c.b16 %v5928, %v5927
  %v5969 = vpack.c.b16 %v5930, %v5929
  %v5970 = vpack.c.b16 %v5932, %v5931
  %v5971 = vpack.c.b16 %v5934, %v5933
  %v5972 = vpack.c.b16 %v5936, %v5935
  %v5973 = vpack.c.b16 %v5938, %v5937
  %v5974 = vpack.c.b16 %v5940, %v5939
  %v5975 = vpack.c.b16 %v5942, %v5941
  %v5976 = vpack.c.b16 %v5944, %v5943
  %6009 = vmatpush.bf16.msra.mxu0 %v5952
  %6010 = vmatpush.bf16.msra.mxu0 %v5951
  %6011 = vmatpush.bf16.msra.mxu0 %v5950
  %6012 = vmatpush.bf16.msra.mxu0 %v5949
  %6013 = vmatpush.bf16.msra.mxu0 %v5948
  %6014 = vmatpush.bf16.msra.mxu0 %v5947
  %6015 = vmatpush.bf16.msra.mxu0 %v5946
  %6016 = vmatpush.bf16.msra.mxu0 %v5945
  %6017 = vmatmul.bf16.gmra.mxu0 %v5791
  %v6018 = vpop.f32.mrf.mxu0
  %v6019 = vadd.f32 0.0, %v6018
  %v6020 = vpop.f32.mrf.mxu0
  %6021 = vdwg.mxu0
  %6022 = vmatpush.bf16.msra.mxu0 %v5960
  %6023 = vmatpush.bf16.msra.mxu0 %v5959
  %6024 = vmatpush.bf16.msra.mxu0 %v5958
  %6025 = vmatpush.bf16.msra.mxu0 %v5957
  %6026 = vmatpush.bf16.msra.mxu0 %v5956
  %6027 = vmatpush.bf16.msra.mxu0 %v5955
  %6028 = vmatpush.bf16.msra.mxu0 %v5954
  %6029 = vmatpush.bf16.msra.mxu0 %v5953
  %6030 = vmatmul.bf16.gmra.mxu0 %v5798
  %v6031 = vpop.f32.mrf.mxu0
  %v6032 = vadd.f32 %v6019, %v6031
  %v6033 = vpop.f32.mrf.mxu0
  %6034 = vdwg.mxu0
  %6035 = vmatpush.bf16.msra.mxu0 %v5968
  %6036 = vmatpush.bf16.msra.mxu0 %v5967
  %6037 = vmatpush.bf16.msra.mxu0 %v5966
  %6038 = vmatpush.bf16.msra.mxu0 %v5965
  %6039 = vmatpush.bf16.msra.mxu0 %v5964
  %6040 = vmatpush.bf16.msra.mxu0 %v5963
  %6041 = vmatpush.bf16.msra.mxu0 %v5962
  %6042 = vmatpush.bf16.msra.mxu0 %v5961
  %6043 = vmatmul.bf16.gmra.mxu0 %v5805
  %v6044 = vpop.f32.mrf.mxu0
  %v6045 = vadd.f32 %v6032, %v6044
  %v6046 = vpop.f32.mrf.mxu0
  %6047 = vdwg.mxu0
  %6048 = vmatpush.bf16.msra.mxu0 %v5976
  %6049 = vmatpush.bf16.msra.mxu0 %v5975
  %6050 = vmatpush.bf16.msra.mxu0 %v5974
  %6051 = vmatpush.bf16.msra.mxu0 %v5973
  %6052 = vmatpush.bf16.msra.mxu0 %v5972
  %6053 = vmatpush.bf16.msra.mxu0 %v5971
  %6054 = vmatpush.bf16.msra.mxu0 %v5970
  %6055 = vmatpush.bf16.msra.mxu0 %v5969
  %6056 = vmatmul.bf16.gmra.mxu0 %v5812
  %v6057 = vpop.f32.mrf.mxu0
  %v6058 = vadd.f32 %v6045, %v6057
  %v6059 = vpop.f32.mrf.mxu0
  %6060 = vdwg.mxu0
  %v6061 = vpack.c.b16 %v5773, %v5773
  %v6062 = vpack.c.b16 %v5774, %v5774
  %v6063 = vpack.c.b16 %v5775, %v5775
  %v6064 = vpack.c.b16 %v5776, %v5776
  %v6133 = vunpack.c.l.b16 %v5568
  %v6134 = vunpack.c.l.b16 %v5569
  %v6135 = vunpack.c.l.b16 %v5570
  %v6136 = vunpack.c.l.b16 %v5571
  %v6137 = vunpack.c.l.b16 %v5572
  %v6138 = vunpack.c.l.b16 %v5573
  %v6139 = vunpack.c.l.b16 %v5574
  %v6140 = vunpack.c.l.b16 %v5575
  %v6141 = vunpack.c.l.b16 %v5576
  %v6142 = vunpack.c.l.b16 %v5577
  %v6143 = vunpack.c.l.b16 %v5578
  %v6144 = vunpack.c.l.b16 %v5579
  %v6145 = vunpack.c.l.b16 %v5580
  %v6146 = vunpack.c.l.b16 %v5581
  %v6147 = vunpack.c.l.b16 %v5582
  %v6148 = vunpack.c.l.b16 %v5583
  %v6149 = vunpack.c.l.b16 %v5584
  %v6150 = vunpack.c.l.b16 %v5585
  %v6151 = vunpack.c.l.b16 %v5586
  %v6152 = vunpack.c.l.b16 %v5587
  %v6153 = vunpack.c.l.b16 %v5588
  %v6154 = vunpack.c.l.b16 %v5589
  %v6155 = vunpack.c.l.b16 %v5590
  %v6156 = vunpack.c.l.b16 %v5591
  %v6157 = vunpack.c.l.b16 %v5592
  %v6158 = vunpack.c.l.b16 %v5593
  %v6159 = vunpack.c.l.b16 %v5594
  %v6160 = vunpack.c.l.b16 %v5595
  %v6161 = vunpack.c.l.b16 %v5596
  %v6162 = vunpack.c.l.b16 %v5597
  %v6163 = vunpack.c.l.b16 %v5598
  %v6164 = vunpack.c.l.b16 %v5599
  %v6165 = vunpack.c.l.b16 %v5600
  %v6166 = vunpack.c.l.b16 %v5601
  %v6167 = vunpack.c.l.b16 %v5602
  %v6168 = vunpack.c.l.b16 %v5603
  %v6169 = vunpack.c.l.b16 %v5604
  %v6170 = vunpack.c.l.b16 %v5605
  %v6171 = vunpack.c.l.b16 %v5606
  %v6172 = vunpack.c.l.b16 %v5607
  %v6173 = vunpack.c.l.b16 %v5608
  %v6174 = vunpack.c.l.b16 %v5609
  %v6175 = vunpack.c.l.b16 %v5610
  %v6176 = vunpack.c.l.b16 %v5611
  %v6177 = vunpack.c.l.b16 %v5612
  %v6178 = vunpack.c.l.b16 %v5613
  %v6179 = vunpack.c.l.b16 %v5614
  %v6180 = vunpack.c.l.b16 %v5615
  %v6181 = vunpack.c.l.b16 %v5616
  %v6182 = vunpack.c.l.b16 %v5617
  %v6183 = vunpack.c.l.b16 %v5618
  %v6184 = vunpack.c.l.b16 %v5619
  %v6185 = vunpack.c.l.b16 %v5620
  %v6186 = vunpack.c.l.b16 %v5621
  %v6187 = vunpack.c.l.b16 %v5622
  %v6188 = vunpack.c.l.b16 %v5623
  %v6189 = vunpack.c.l.b16 %v5624
  %v6190 = vunpack.c.l.b16 %v5625
  %v6191 = vunpack.c.l.b16 %v5626
  %v6192 = vunpack.c.l.b16 %v5627
  %v6193 = vunpack.c.l.b16 %v5628
  %v6194 = vunpack.c.l.b16 %v5629
  %v6195 = vunpack.c.l.b16 %v5630
  %v6196 = vunpack.c.l.b16 %v5631
  %v6197 = vpack.c.b16 %v6134, %v6133
  %v6198 = vpack.c.b16 %v6136, %v6135
  %v6199 = vpack.c.b16 %v6138, %v6137
  %v6200 = vpack.c.b16 %v6140, %v6139
  %v6201 = vpack.c.b16 %v6142, %v6141
  %v6202 = vpack.c.b16 %v6144, %v6143
  %v6203 = vpack.c.b16 %v6146, %v6145
  %v6204 = vpack.c.b16 %v6148, %v6147
  %v6205 = vpack.c.b16 %v6150, %v6149
  %v6206 = vpack.c.b16 %v6152, %v6151
  %v6207 = vpack.c.b16 %v6154, %v6153
  %v6208 = vpack.c.b16 %v6156, %v6155
  %v6209 = vpack.c.b16 %v6158, %v6157
  %v6210 = vpack.c.b16 %v6160, %v6159
  %v6211 = vpack.c.b16 %v6162, %v6161
  %v6212 = vpack.c.b16 %v6164, %v6163
  %v6213 = vpack.c.b16 %v6166, %v6165
  %v6214 = vpack.c.b16 %v6168, %v6167
  %v6215 = vpack.c.b16 %v6170, %v6169
  %v6216 = vpack.c.b16 %v6172, %v6171
  %v6217 = vpack.c.b16 %v6174, %v6173
  %v6218 = vpack.c.b16 %v6176, %v6175
  %v6219 = vpack.c.b16 %v6178, %v6177
  %v6220 = vpack.c.b16 %v6180, %v6179
  %v6221 = vpack.c.b16 %v6182, %v6181
  %v6222 = vpack.c.b16 %v6184, %v6183
  %v6223 = vpack.c.b16 %v6186, %v6185
  %v6224 = vpack.c.b16 %v6188, %v6187
  %v6225 = vpack.c.b16 %v6190, %v6189
  %v6226 = vpack.c.b16 %v6192, %v6191
  %v6227 = vpack.c.b16 %v6194, %v6193
  %v6228 = vpack.c.b16 %v6196, %v6195
  %6261 = vmatpush.bf16.msra.mxu0 %v6204
  %6262 = vmatpush.bf16.msra.mxu0 %v6203
  %6263 = vmatpush.bf16.msra.mxu0 %v6202
  %6264 = vmatpush.bf16.msra.mxu0 %v6201
  %6265 = vmatpush.bf16.msra.mxu0 %v6200
  %6266 = vmatpush.bf16.msra.mxu0 %v6199
  %6267 = vmatpush.bf16.msra.mxu0 %v6198
  %6268 = vmatpush.bf16.msra.mxu0 %v6197
  %6269 = vmatmul.bf16.gmra.mxu0 %v6061
  %v6270 = vpop.f32.mrf.mxu0
  %v6271 = vadd.f32 %v6058, %v6270
  %v6272 = vpop.f32.mrf.mxu0
  %6273 = vdwg.mxu0
  %6274 = vmatpush.bf16.msra.mxu0 %v6212
  %6275 = vmatpush.bf16.msra.mxu0 %v6211
  %6276 = vmatpush.bf16.msra.mxu0 %v6210
  %6277 = vmatpush.bf16.msra.mxu0 %v6209
  %6278 = vmatpush.bf16.msra.mxu0 %v6208
  %6279 = vmatpush.bf16.msra.mxu0 %v6207
  %6280 = vmatpush.bf16.msra.mxu0 %v6206
  %6281 = vmatpush.bf16.msra.mxu0 %v6205
  %6282 = vmatmul.bf16.gmra.mxu0 %v6062
  %v6283 = vpop.f32.mrf.mxu0
  %v6284 = vadd.f32 %v6271, %v6283
  %v6285 = vpop.f32.mrf.mxu0
  %6286 = vdwg.mxu0
  %6287 = vmatpush.bf16.msra.mxu0 %v6220
  %6288 = vmatpush.bf16.msra.mxu0 %v6219
  %6289 = vmatpush.bf16.msra.mxu0 %v6218
  %6290 = vmatpush.bf16.msra.mxu0 %v6217
  %6291 = vmatpush.bf16.msra.mxu0 %v6216
  %6292 = vmatpush.bf16.msra.mxu0 %v6215
  %6293 = vmatpush.bf16.msra.mxu0 %v6214
  %6294 = vmatpush.bf16.msra.mxu0 %v6213
  %6295 = vmatmul.bf16.gmra.mxu0 %v6063
  %v6296 = vpop.f32.mrf.mxu0
  %v6297 = vadd.f32 %v6284, %v6296
  %v6298 = vpop.f32.mrf.mxu0
  %6299 = vdwg.mxu0
  %6300 = vmatpush.bf16.msra.mxu0 %v6228
  %6301 = vmatpush.bf16.msra.mxu0 %v6227
  %6302 = vmatpush.bf16.msra.mxu0 %v6226
  %6303 = vmatpush.bf16.msra.mxu0 %v6225
  %6304 = vmatpush.bf16.msra.mxu0 %v6224
  %6305 = vmatpush.bf16.msra.mxu0 %v6223
  %6306 = vmatpush.bf16.msra.mxu0 %v6222
  %6307 = vmatpush.bf16.msra.mxu0 %v6221
  %6308 = vmatmul.bf16.gmra.mxu0 %v6064
  %v6309 = vpop.f32.mrf.mxu0
  %v6310 = vadd.f32 %v6297, %v6309
  %v6311 = vpop.f32.mrf.mxu0
  %6312 = vdwg.mxu0
  %v6315 = vunpack.c.l.b16 %v5767
  %v6316 = vunpack.c.h.b16 %v5767
  %v6317 = vunpack.c.l.b16 %v5768
  %v6318 = vunpack.c.h.b16 %v5768
  %v6319 = vpack.c.b16 %v5777, %v6315
  %v6320 = vpack.c.b16 %v5778, %v6316
  %v6321 = vpack.c.b16 %v5779, %v6317
  %v6322 = vpack.c.b16 %v5780, %v6318
  %v6323 = vrot.slane %v6319, 1
  %v6324 = vrot.slane %v6320, 1
  %v6325 = vrot.slane %v6321, 1
  %v6326 = vrot.slane %v6322, 1
  %v6395 = vunpack.c.l.b16 %v5698
  %v6396 = vunpack.c.l.b16 %v5699
  %v6397 = vunpack.c.l.b16 %v5700
  %v6398 = vunpack.c.l.b16 %v5701
  %v6399 = vunpack.c.l.b16 %v5702
  %v6400 = vunpack.c.l.b16 %v5703
  %v6401 = vunpack.c.l.b16 %v5704
  %v6402 = vunpack.c.l.b16 %v5705
  %v6403 = vunpack.c.l.b16 %v5706
  %v6404 = vunpack.c.l.b16 %v5707
  %v6405 = vunpack.c.l.b16 %v5708
  %v6406 = vunpack.c.l.b16 %v5709
  %v6407 = vunpack.c.l.b16 %v5710
  %v6408 = vunpack.c.l.b16 %v5711
  %v6409 = vunpack.c.l.b16 %v5712
  %v6410 = vunpack.c.l.b16 %v5713
  %v6411 = vunpack.c.l.b16 %v5714
  %v6412 = vunpack.c.l.b16 %v5715
  %v6413 = vunpack.c.l.b16 %v5716
  %v6414 = vunpack.c.l.b16 %v5717
  %v6415 = vunpack.c.l.b16 %v5718
  %v6416 = vunpack.c.l.b16 %v5719
  %v6417 = vunpack.c.l.b16 %v5720
  %v6418 = vunpack.c.l.b16 %v5721
  %v6419 = vunpack.c.l.b16 %v5722
  %v6420 = vunpack.c.l.b16 %v5723
  %v6421 = vunpack.c.l.b16 %v5724
  %v6422 = vunpack.c.l.b16 %v5725
  %v6423 = vunpack.c.l.b16 %v5726
  %v6424 = vunpack.c.l.b16 %v5727
  %v6425 = vunpack.c.l.b16 %v5728
  %v6426 = vunpack.c.l.b16 %v5729
  %v6427 = vunpack.c.l.b16 %v5730
  %v6428 = vunpack.c.l.b16 %v5731
  %v6429 = vunpack.c.l.b16 %v5732
  %v6430 = vunpack.c.l.b16 %v5733
  %v6431 = vunpack.c.l.b16 %v5734
  %v6432 = vunpack.c.l.b16 %v5735
  %v6433 = vunpack.c.l.b16 %v5736
  %v6434 = vunpack.c.l.b16 %v5737
  %v6435 = vunpack.c.l.b16 %v5738
  %v6436 = vunpack.c.l.b16 %v5739
  %v6437 = vunpack.c.l.b16 %v5740
  %v6438 = vunpack.c.l.b16 %v5741
  %v6439 = vunpack.c.l.b16 %v5742
  %v6440 = vunpack.c.l.b16 %v5743
  %v6441 = vunpack.c.l.b16 %v5744
  %v6442 = vunpack.c.l.b16 %v5745
  %v6443 = vunpack.c.l.b16 %v5746
  %v6444 = vunpack.c.l.b16 %v5747
  %v6445 = vunpack.c.l.b16 %v5748
  %v6446 = vunpack.c.l.b16 %v5749
  %v6447 = vunpack.c.l.b16 %v5750
  %v6448 = vunpack.c.l.b16 %v5751
  %v6449 = vunpack.c.l.b16 %v5752
  %v6450 = vunpack.c.l.b16 %v5753
  %v6451 = vunpack.c.l.b16 %v5754
  %v6452 = vunpack.c.l.b16 %v5755
  %v6453 = vunpack.c.l.b16 %v5756
  %v6454 = vunpack.c.l.b16 %v5757
  %v6455 = vunpack.c.l.b16 %v5758
  %v6456 = vunpack.c.l.b16 %v5759
  %v6457 = vunpack.c.l.b16 %v5760
  %v6458 = vunpack.c.l.b16 %v5761
  %v6459 = vpack.c.b16 %v6396, %v6395
  %v6460 = vpack.c.b16 %v6398, %v6397
  %v6461 = vpack.c.b16 %v6400, %v6399
  %v6462 = vpack.c.b16 %v6402, %v6401
  %v6463 = vpack.c.b16 %v6404, %v6403
  %v6464 = vpack.c.b16 %v6406, %v6405
  %v6465 = vpack.c.b16 %v6408, %v6407
  %v6466 = vpack.c.b16 %v6410, %v6409
  %v6467 = vpack.c.b16 %v6412, %v6411
  %v6468 = vpack.c.b16 %v6414, %v6413
  %v6469 = vpack.c.b16 %v6416, %v6415
  %v6470 = vpack.c.b16 %v6418, %v6417
  %v6471 = vpack.c.b16 %v6420, %v6419
  %v6472 = vpack.c.b16 %v6422, %v6421
  %v6473 = vpack.c.b16 %v6424, %v6423
  %v6474 = vpack.c.b16 %v6426, %v6425
  %v6475 = vpack.c.b16 %v6428, %v6427
  %v6476 = vpack.c.b16 %v6430, %v6429
  %v6477 = vpack.c.b16 %v6432, %v6431
  %v6478 = vpack.c.b16 %v6434, %v6433
  %v6479 = vpack.c.b16 %v6436, %v6435
  %v6480 = vpack.c.b16 %v6438, %v6437
  %v6481 = vpack.c.b16 %v6440, %v6439
  %v6482 = vpack.c.b16 %v6442, %v6441
  %v6483 = vpack.c.b16 %v6444, %v6443
  %v6484 = vpack.c.b16 %v6446, %v6445
  %v6485 = vpack.c.b16 %v6448, %v6447
  %v6486 = vpack.c.b16 %v6450, %v6449
  %v6487 = vpack.c.b16 %v6452, %v6451
  %v6488 = vpack.c.b16 %v6454, %v6453
  %v6489 = vpack.c.b16 %v6456, %v6455
  %v6490 = vpack.c.b16 %v6458, %v6457
  %6523 = vmatpush.bf16.msra.mxu0 %v6466
  %6524 = vmatpush.bf16.msra.mxu0 %v6465
  %6525 = vmatpush.bf16.msra.mxu0 %v6464
  %6526 = vmatpush.bf16.msra.mxu0 %v6463
  %6527 = vmatpush.bf16.msra.mxu0 %v6462
  %6528 = vmatpush.bf16.msra.mxu0 %v6461
  %6529 = vmatpush.bf16.msra.mxu0 %v6460
  %6530 = vmatpush.bf16.msra.mxu0 %v6459
  %6531 = vmatmul.bf16.gmra.mxu0 %v6323
  %v6532 = vpop.f32.mrf.mxu0
  %v6533 = vadd.f32 0.0, %v6532
  %v6534 = vpop.f32.mrf.mxu0
  %6535 = vdwg.mxu0
  %6536 = vmatpush.bf16.msra.mxu0 %v6474
  %6537 = vmatpush.bf16.msra.mxu0 %v6473
  %6538 = vmatpush.bf16.msra.mxu0 %v6472
  %6539 = vmatpush.bf16.msra.mxu0 %v6471
  %6540 = vmatpush.bf16.msra.mxu0 %v6470
  %6541 = vmatpush.bf16.msra.mxu0 %v6469
  %6542 = vmatpush.bf16.msra.mxu0 %v6468
  %6543 = vmatpush.bf16.msra.mxu0 %v6467
  %6544 = vmatmul.bf16.gmra.mxu0 %v6324
  %v6545 = vpop.f32.mrf.mxu0
  %v6546 = vadd.f32 %v6533, %v6545
  %v6547 = vpop.f32.mrf.mxu0
  %6548 = vdwg.mxu0
  %6549 = vmatpush.bf16.msra.mxu0 %v6482
  %6550 = vmatpush.bf16.msra.mxu0 %v6481
  %6551 = vmatpush.bf16.msra.mxu0 %v6480
  %6552 = vmatpush.bf16.msra.mxu0 %v6479
  %6553 = vmatpush.bf16.msra.mxu0 %v6478
  %6554 = vmatpush.bf16.msra.mxu0 %v6477
  %6555 = vmatpush.bf16.msra.mxu0 %v6476
  %6556 = vmatpush.bf16.msra.mxu0 %v6475
  %6557 = vmatmul.bf16.gmra.mxu0 %v6325
  %v6558 = vpop.f32.mrf.mxu0
  %v6559 = vadd.f32 %v6546, %v6558
  %v6560 = vpop.f32.mrf.mxu0
  %6561 = vdwg.mxu0
  %6562 = vmatpush.bf16.msra.mxu0 %v6490
  %6563 = vmatpush.bf16.msra.mxu0 %v6489
  %6564 = vmatpush.bf16.msra.mxu0 %v6488
  %6565 = vmatpush.bf16.msra.mxu0 %v6487
  %6566 = vmatpush.bf16.msra.mxu0 %v6486
  %6567 = vmatpush.bf16.msra.mxu0 %v6485
  %6568 = vmatpush.bf16.msra.mxu0 %v6484
  %6569 = vmatpush.bf16.msra.mxu0 %v6483
  %6570 = vmatmul.bf16.gmra.mxu0 %v6326
  %v6571 = vpop.f32.mrf.mxu0
  %v6572 = vadd.f32 %v6559, %v6571
  %v6573 = vpop.f32.mrf.mxu0
  %6574 = vdwg.mxu0
  %v6575 = vadd.f32 %v6310, %v6572
  %v6577 = vperm.slane %v5762, 0
  %v6579 = vadd.f32 %v6575, %v6577
  %6580 = vst.msk [vmem:[%s11] sm:$0xff] %vm3298, %v6579
  %6582 = vrot.lane.b32.xlu0 %v6579, 96
  %v6583 = vpop.permute.xlu0 %6582
  %s6585 = scalar_lea.vmem %s11, 8
  %6586 = vst.msk [vmem:[%s6585] sm:$0xff] %vm3298, %v6583
  %6587 = vrot.lane.b32.xlu0 %v6579, 64
  %v6588 = vpop.permute.xlu0 %6587
  %s6590 = scalar_lea.vmem %s11, 16
  %6591 = vst.msk [vmem:[%s6590] sm:$0xff] %vm3298, %v6588
  %6592 = vrot.lane.b32.xlu0 %v6579, 32
  %v6593 = vpop.permute.xlu0 %6592
  %s6595 = scalar_lea.vmem %s11, 24
  %6596 = vst.msk [vmem:[%s6595] sm:$0xff] %vm3298, %v6593
  %v6597 = vld [vmem:[#allocation2 + $0x10] sm:$0xee]
  %v6598 = vld [vmem:[#allocation2 + $0x18] sm:$0xee]
  %v6599 = vld [vmem:[#allocation2 + $0x20] sm:$0x11]
  %v6600 = vld [vmem:[#allocation2 + $0x28] sm:$0x11]
  %v6601 = vld [vmem:[#allocation2 + $0x20] sm:$0x33]
  %v6602 = vld [vmem:[#allocation2 + $0x28] sm:$0x33]
  %v6603 = vld [vmem:[#allocation2 + $0x10] sm:$0xcc]
  %v6604 = vld [vmem:[#allocation2 + $0x18] sm:$0xcc]
  %v6609 = vunpack.c.l.b16 %v6597
  %v6610 = vunpack.c.h.b16 %v6597
  %v6611 = vunpack.c.l.b16 %v6598
  %v6612 = vunpack.c.h.b16 %v6598
  %v6613 = vunpack.c.l.b16 %v6601
  %v6614 = vunpack.c.h.b16 %v6601
  %v6615 = vunpack.c.l.b16 %v6602
  %v6616 = vunpack.c.h.b16 %v6602
  %v6617 = vpack.c.b16 %v6613, %v6609
  %v6618 = vpack.c.b16 %v6614, %v6610
  %v6619 = vpack.c.b16 %v6615, %v6611
  %v6620 = vpack.c.b16 %v6616, %v6612
  %v6622 = vshrl.u32 %v6617, 16
  %v6624 = vrot.slane %v6622, 1
  %v6625 = vshll.u32 %v6617, 16
  %v6627 = vrot.slane %v6625, 2
  %v6628 = vor.u32 %v6624, %v6627
  %v6630 = vshrl.u32 %v6618, 16
  %v6632 = vrot.slane %v6630, 1
  %v6633 = vshll.u32 %v6618, 16
  %v6635 = vrot.slane %v6633, 2
  %v6636 = vor.u32 %v6632, %v6635
  %v6638 = vshrl.u32 %v6619, 16
  %v6640 = vrot.slane %v6638, 1
  %v6641 = vshll.u32 %v6619, 16
  %v6643 = vrot.slane %v6641, 2
  %v6644 = vor.u32 %v6640, %v6643
  %v6646 = vshrl.u32 %v6620, 16
  %v6648 = vrot.slane %v6646, 1
  %v6649 = vshll.u32 %v6620, 16
  %v6651 = vrot.slane %v6649, 2
  %v6652 = vor.u32 %v6648, %v6651
  %6657 = vmatpush.bf16.msra.mxu0 %v5952
  %6658 = vmatpush.bf16.msra.mxu0 %v5951
  %6659 = vmatpush.bf16.msra.mxu0 %v5950
  %6660 = vmatpush.bf16.msra.mxu0 %v5949
  %6661 = vmatpush.bf16.msra.mxu0 %v5948
  %6662 = vmatpush.bf16.msra.mxu0 %v5947
  %6663 = vmatpush.bf16.msra.mxu0 %v5946
  %6664 = vmatpush.bf16.msra.mxu0 %v5945
  %6665 = vmatmul.bf16.gmra.mxu0 %v6628
  %v6666 = vpop.f32.mrf.mxu0
  %v6667 = vadd.f32 0.0, %v6666
  %v6668 = vpop.f32.mrf.mxu0
  %6669 = vdwg.mxu0
  %6670 = vmatpush.bf16.msra.mxu0 %v5960
  %6671 = vmatpush.bf16.msra.mxu0 %v5959
  %6672 = vmatpush.bf16.msra.mxu0 %v5958
  %6673 = vmatpush.bf16.msra.mxu0 %v5957
  %6674 = vmatpush.bf16.msra.mxu0 %v5956
  %6675 = vmatpush.bf16.msra.mxu0 %v5955
  %6676 = vmatpush.bf16.msra.mxu0 %v5954
  %6677 = vmatpush.bf16.msra.mxu0 %v5953
  %6678 = vmatmul.bf16.gmra.mxu0 %v6636
  %v6679 = vpop.f32.mrf.mxu0
  %v6680 = vadd.f32 %v6667, %v6679
  %v6681 = vpop.f32.mrf.mxu0
  %6682 = vdwg.mxu0
  %6683 = vmatpush.bf16.msra.mxu0 %v5968
  %6684 = vmatpush.bf16.msra.mxu0 %v5967
  %6685 = vmatpush.bf16.msra.mxu0 %v5966
  %6686 = vmatpush.bf16.msra.mxu0 %v5965
  %6687 = vmatpush.bf16.msra.mxu0 %v5964
  %6688 = vmatpush.bf16.msra.mxu0 %v5963
  %6689 = vmatpush.bf16.msra.mxu0 %v5962
  %6690 = vmatpush.bf16.msra.mxu0 %v5961
  %6691 = vmatmul.bf16.gmra.mxu0 %v6644
  %v6692 = vpop.f32.mrf.mxu0
  %v6693 = vadd.f32 %v6680, %v6692
  %v6694 = vpop.f32.mrf.mxu0
  %6695 = vdwg.mxu0
  %6696 = vmatpush.bf16.msra.mxu0 %v5976
  %6697 = vmatpush.bf16.msra.mxu0 %v5975
  %6698 = vmatpush.bf16.msra.mxu0 %v5974
  %6699 = vmatpush.bf16.msra.mxu0 %v5973
  %6700 = vmatpush.bf16.msra.mxu0 %v5972
  %6701 = vmatpush.bf16.msra.mxu0 %v5971
  %6702 = vmatpush.bf16.msra.mxu0 %v5970
  %6703 = vmatpush.bf16.msra.mxu0 %v5969
  %6704 = vmatmul.bf16.gmra.mxu0 %v6652
  %v6705 = vpop.f32.mrf.mxu0
  %v6706 = vadd.f32 %v6693, %v6705
  %v6707 = vpop.f32.mrf.mxu0
  %6708 = vdwg.mxu0
  %v6711 = vunpack.c.l.b16 %v6599
  %v6712 = vunpack.c.h.b16 %v6599
  %v6713 = vunpack.c.l.b16 %v6600
  %v6714 = vunpack.c.h.b16 %v6600
  %v6715 = vpack.c.b16 %v6711, %v6609
  %v6716 = vpack.c.b16 %v6712, %v6610
  %v6717 = vpack.c.b16 %v6713, %v6611
  %v6718 = vpack.c.b16 %v6714, %v6612
  %v6719 = vrot.slane %v6715, 1
  %v6720 = vrot.slane %v6716, 1
  %v6721 = vrot.slane %v6717, 1
  %v6722 = vrot.slane %v6718, 1
  %6727 = vmatpush.bf16.msra.mxu0 %v6204
  %6728 = vmatpush.bf16.msra.mxu0 %v6203
  %6729 = vmatpush.bf16.msra.mxu0 %v6202
  %6730 = vmatpush.bf16.msra.mxu0 %v6201
  %6731 = vmatpush.bf16.msra.mxu0 %v6200
  %6732 = vmatpush.bf16.msra.mxu0 %v6199
  %6733 = vmatpush.bf16.msra.mxu0 %v6198
  %6734 = vmatpush.bf16.msra.mxu0 %v6197
  %6735 = vmatmul.bf16.gmra.mxu0 %v6719
  %v6736 = vpop.f32.mrf.mxu0
  %v6737 = vadd.f32 %v6706, %v6736
  %v6738 = vpop.f32.mrf.mxu0
  %6739 = vdwg.mxu0
  %6740 = vmatpush.bf16.msra.mxu0 %v6212
  %6741 = vmatpush.bf16.msra.mxu0 %v6211
  %6742 = vmatpush.bf16.msra.mxu0 %v6210
  %6743 = vmatpush.bf16.msra.mxu0 %v6209
  %6744 = vmatpush.bf16.msra.mxu0 %v6208
  %6745 = vmatpush.bf16.msra.mxu0 %v6207
  %6746 = vmatpush.bf16.msra.mxu0 %v6206
  %6747 = vmatpush.bf16.msra.mxu0 %v6205
  %6748 = vmatmul.bf16.gmra.mxu0 %v6720
  %v6749 = vpop.f32.mrf.mxu0
  %v6750 = vadd.f32 %v6737, %v6749
  %v6751 = vpop.f32.mrf.mxu0
  %6752 = vdwg.mxu0
  %6753 = vmatpush.bf16.msra.mxu0 %v6220
  %6754 = vmatpush.bf16.msra.mxu0 %v6219
  %6755 = vmatpush.bf16.msra.mxu0 %v6218
  %6756 = vmatpush.bf16.msra.mxu0 %v6217
  %6757 = vmatpush.bf16.msra.mxu0 %v6216
  %6758 = vmatpush.bf16.msra.mxu0 %v6215
  %6759 = vmatpush.bf16.msra.mxu0 %v6214
  %6760 = vmatpush.bf16.msra.mxu0 %v6213
  %6761 = vmatmul.bf16.gmra.mxu0 %v6721
  %v6762 = vpop.f32.mrf.mxu0
  %v6763 = vadd.f32 %v6750, %v6762
  %v6764 = vpop.f32.mrf.mxu0
  %6765 = vdwg.mxu0
  %6766 = vmatpush.bf16.msra.mxu0 %v6228
  %6767 = vmatpush.bf16.msra.mxu0 %v6227
  %6768 = vmatpush.bf16.msra.mxu0 %v6226
  %6769 = vmatpush.bf16.msra.mxu0 %v6225
  %6770 = vmatpush.bf16.msra.mxu0 %v6224
  %6771 = vmatpush.bf16.msra.mxu0 %v6223
  %6772 = vmatpush.bf16.msra.mxu0 %v6222
  %6773 = vmatpush.bf16.msra.mxu0 %v6221
  %6774 = vmatmul.bf16.gmra.mxu0 %v6722
  %v6775 = vpop.f32.mrf.mxu0
  %v6776 = vadd.f32 %v6763, %v6775
  %v6777 = vpop.f32.mrf.mxu0
  %6778 = vdwg.mxu0
  %v6781 = vunpack.c.l.b16 %v6603
  %v6782 = vunpack.c.h.b16 %v6603
  %v6783 = vunpack.c.l.b16 %v6604
  %v6784 = vunpack.c.h.b16 %v6604
  %v6785 = vpack.c.b16 %v6613, %v6781
  %v6786 = vpack.c.b16 %v6614, %v6782
  %v6787 = vpack.c.b16 %v6615, %v6783
  %v6788 = vpack.c.b16 %v6616, %v6784
  %v6789 = vrot.slane %v6785, 2
  %v6790 = vrot.slane %v6786, 2
  %v6791 = vrot.slane %v6787, 2
  %v6792 = vrot.slane %v6788, 2
  %6797 = vmatpush.bf16.msra.mxu0 %v6466
  %6798 = vmatpush.bf16.msra.mxu0 %v6465
  %6799 = vmatpush.bf16.msra.mxu0 %v6464
  %6800 = vmatpush.bf16.msra.mxu0 %v6463
  %6801 = vmatpush.bf16.msra.mxu0 %v6462
  %6802 = vmatpush.bf16.msra.mxu0 %v6461
  %6803 = vmatpush.bf16.msra.mxu0 %v6460
  %6804 = vmatpush.bf16.msra.mxu0 %v6459
  %6805 = vmatmul.bf16.gmra.mxu0 %v6789
  %v6806 = vpop.f32.mrf.mxu0
  %v6807 = vadd.f32 0.0, %v6806
  %v6808 = vpop.f32.mrf.mxu0
  %6809 = vdwg.mxu0
  %6810 = vmatpush.bf16.msra.mxu0 %v6474
  %6811 = vmatpush.bf16.msra.mxu0 %v6473
  %6812 = vmatpush.bf16.msra.mxu0 %v6472
  %6813 = vmatpush.bf16.msra.mxu0 %v6471
  %6814 = vmatpush.bf16.msra.mxu0 %v6470
  %6815 = vmatpush.bf16.msra.mxu0 %v6469
  %6816 = vmatpush.bf16.msra.mxu0 %v6468
  %6817 = vmatpush.bf16.msra.mxu0 %v6467
  %6818 = vmatmul.bf16.gmra.mxu0 %v6790
  %v6819 = vpop.f32.mrf.mxu0
  %v6820 = vadd.f32 %v6807, %v6819
  %v6821 = vpop.f32.mrf.mxu0
  %6822 = vdwg.mxu0
  %6823 = vmatpush.bf16.msra.mxu0 %v6482
  %6824 = vmatpush.bf16.msra.mxu0 %v6481
  %6825 = vmatpush.bf16.msra.mxu0 %v6480
  %6826 = vmatpush.bf16.msra.mxu0 %v6479
  %6827 = vmatpush.bf16.msra.mxu0 %v6478
  %6828 = vmatpush.bf16.msra.mxu0 %v6477
  %6829 = vmatpush.bf16.msra.mxu0 %v6476
  %6830 = vmatpush.bf16.msra.mxu0 %v6475
  %6831 = vmatmul.bf16.gmra.mxu0 %v6791
  %v6832 = vpop.f32.mrf.mxu0
  %v6833 = vadd.f32 %v6820, %v6832
  %v6834 = vpop.f32.mrf.mxu0
  %6835 = vdwg.mxu0
  %6836 = vmatpush.bf16.msra.mxu0 %v6490
  %6837 = vmatpush.bf16.msra.mxu0 %v6489
  %6838 = vmatpush.bf16.msra.mxu0 %v6488
  %6839 = vmatpush.bf16.msra.mxu0 %v6487
  %6840 = vmatpush.bf16.msra.mxu0 %v6486
  %6841 = vmatpush.bf16.msra.mxu0 %v6485
  %6842 = vmatpush.bf16.msra.mxu0 %v6484
  %6843 = vmatpush.bf16.msra.mxu0 %v6483
  %6844 = vmatmul.bf16.gmra.mxu0 %v6792
  %v6845 = vpop.f32.mrf.mxu0
  %v6846 = vadd.f32 %v6833, %v6845
  %v6847 = vpop.f32.mrf.mxu0
  %6848 = vdwg.mxu0
  %v6849 = vadd.f32 %v6776, %v6846
  %v6850 = vadd.f32 %v6849, %v6577
  %s6851 = scalar_lea.vmem %s11, 32
  %6852 = vst.msk [vmem:[%s6851] sm:$0xff] %vm3298, %v6850
  %6854 = vrot.lane.b32.xlu0 %v6850, 96
  %v6855 = vpop.permute.xlu0 %6854
  %s6857 = scalar_lea.vmem %s11, 40
  %6858 = vst.msk [vmem:[%s6857] sm:$0xff] %vm3298, %v6855
  %6859 = vrot.lane.b32.xlu0 %v6850, 64
  %v6860 = vpop.permute.xlu0 %6859
  %s6862 = scalar_lea.vmem %s11, 48
  %6863 = vst.msk [vmem:[%s6862] sm:$0xff] %vm3298, %v6860
  %6864 = vrot.lane.b32.xlu0 %v6850, 32
  %v6865 = vpop.permute.xlu0 %6864
  %s6867 = scalar_lea.vmem %s11, 56
  %6868 = vst.msk [vmem:[%s6867] sm:$0xff] %vm3298, %v6865
  // Predicated region
  $region46: #{discriminator_forward.1} parent=0 // pred_check
    _
  $region47: #{discriminator_forward.1} parent=0 // pred_check_branch
    %6870 = sbr.rel (0) target = $region49
  $region48: #{discriminator_forward.1} parent=0 // pred_region
    _
  $region49: #{discriminator_forward.1} parent=0 // pred_fallthru
    _
  // Predicated region
  $region50: #{discriminator_forward.1} parent=0 // pred_check
    _
  $region51: #{discriminator_forward.1} parent=0 // pred_check_branch
    %6872 = sbr.rel (0) target = $region53
  $region52: #{discriminator_forward.1} parent=0 // pred_region
    _
  $region53: #{discriminator_forward.1} parent=0 // pred_fallthru
    _

</llo_original>
